<compile_context>
chip_gen: v5e
topology: v5e:2x2
jax: 0.10.0
libtpu: 0.0.40
codegen_flags: <defaults>
</compile_context>

<pallas_src>
import math
from functools import partial

import jax
import jax.numpy as jnp
from jax.experimental import pallas as pl
from jax.experimental.pallas import tpu as pltpu


# ----------------------------------------------------------------------------
# Kernel 1: fused 3x3x3 conv (stride 1, pad 1), in-VMEM im2col, kd-accumulation
# ----------------------------------------------------------------------------
def _conv3_slab_kernel(x_ref, w_ref, sh_ref, o_ref, p_ref, acc_ref,
                       *, cin, ho, wo, wp):
    kd = pl.program_id(2)

    @pl.when(kd == 0)
    def _init():
        acc_ref[...] = jnp.zeros_like(acc_ref)

    # In-VMEM im2col: assemble the 9 (kh, kw) taps of this padded depth slab
    # into a (9*cin, ho*wo) patch matrix.  All slices are static; the 27x
    # patch tensor never touches HBM.
    for kh in range(3):
        for kw in range(3):
            t = kh * 3 + kw
            for r in range(ho):
                src = (kh + r) * wp + kw
                p_ref[t * cin:(t + 1) * cin, r * wo:(r + 1) * wo] = \
                    x_ref[:, src:src + wo]

    acc_ref[...] += jnp.dot(w_ref[...], p_ref[...],
                            preferred_element_type=jnp.float32)

    @pl.when(kd == pl.num_programs(2) - 1)
    def _finalize():
        y = acc_ref[...] + sh_ref[...]          # folded BN shift + conv bias
        o_ref[...] = jnp.maximum(y, 0.0).astype(o_ref.dtype)   # ReLU


def conv3x3x3_s1(x, wmat3, shift):
    """x: (N, D, Cin, H, W) bf16; wmat3: (3, Cout, 9*Cin) bf16 (BN-scaled);
    shift: (Cout, 1) f32 -> (N, D, Cout, H, W) bf16 (ReLU applied)."""
    n, d, cin, h, w = x.shape
    cout = wmat3.shape[1]
    hp, wp = h + 2, w + 2
    xp = jnp.pad(x, ((0, 0), (1, 1), (0, 0), (1, 1), (1, 1)))
    xp = xp.reshape(n, d + 2, cin, hp * wp)

    out = pl.pallas_call(
        partial(_conv3_slab_kernel, cin=cin, ho=h, wo=w, wp=wp),
        out_shape=jax.ShapeDtypeStruct((n, d, cout, h * w), jnp.bfloat16),
        grid_spec=pltpu.PrefetchScalarGridSpec(
            num_scalar_prefetch=0,
            grid=(n, d, 3),
            in_specs=[
                pl.BlockSpec((None, None, cin, hp * wp),
                             lambda b, i, kd: (b, i + kd, 0, 0)),
                pl.BlockSpec((None, cout, 9 * cin),
                             lambda b, i, kd: (kd, 0, 0)),
                pl.BlockSpec((cout, 1), lambda b, i, kd: (0, 0)),
            ],
            out_specs=pl.BlockSpec((None, None, cout, h * w),
                                   lambda b, i, kd: (b, i, 0, 0)),
            scratch_shapes=[
                pltpu.VMEM((9 * cin, h * w), jnp.bfloat16),   # patch matrix
                pltpu.VMEM((cout, h * w), jnp.float32),       # f32 accumulator
            ],
        ),
        compiler_params=pltpu.CompilerParams(
            dimension_semantics=("parallel", "parallel", "arbitrary")),
    )(xp, wmat3, shift)
    return out.reshape(n, d, cout, h, w)


# ----------------------------------------------------------------------------
# Kernel 2: generic fused (Cout, K) @ (K, M) + shift + activation
#   (used for the stride-2 downsamples, the 2x2x2 upsample and the 1x1x1 conv)
# ----------------------------------------------------------------------------
def _wx_kernel(x_ref, w_ref, sh_ref, o_ref, *, act):
    y = jnp.dot(w_ref[...], x_ref[...], preferred_element_type=jnp.float32)
    y = y + sh_ref[...]
    if act == "relu":
        y = jnp.maximum(y, 0.0)
    elif act == "sigmoid":
        y = pl.reciprocal(1.0 + jnp.exp(-y), approx=True)   # divide -> EUP
        y = jnp.clip(y, 0.0, 1.0)
    o_ref[...] = y.astype(o_ref.dtype)


def fused_wx(x3, wmat, shift, act, out_dtype):
    """x3: (G, K, M); wmat: (Cout, K); shift: (Cout, 1) -> (G, Cout, M)."""
    g, k, m = x3.shape
    cout = wmat.shape[0]
    return pl.pallas_call(
        partial(_wx_kernel, act=act),
        out_shape=jax.ShapeDtypeStruct((g, cout, m), out_dtype),
        grid_spec=pltpu.PrefetchScalarGridSpec(
            num_scalar_prefetch=0,
            grid=(g,),
            in_specs=[
                pl.BlockSpec((None, k, m), lambda i: (i, 0, 0)),
                pl.BlockSpec((cout, k), lambda i: (0, 0)),
                pl.BlockSpec((cout, 1), lambda i: (0, 0)),
            ],
            out_specs=pl.BlockSpec((None, cout, m), lambda i: (i, 0, 0)),
        ),
        compiler_params=pltpu.CompilerParams(
            dimension_semantics=("parallel",)),
    )(x3, wmat, shift)


# ----------------------------------------------------------------------------
# Layer wrappers (internal activation layout: (N, D, C, H, W), bf16)
# ----------------------------------------------------------------------------
def conv3x3x3_s2_down(x, wmat, shift):
    """Stride-2 pad-1 3x3x3 conv (downsample).  These layers touch only 1/8 of
    the volume, so the (cheap) im2col stays in the wrapper."""
    n, d, cin, h, w = x.shape
    cout = wmat.shape[0]
    do, ho, wo = d // 2, h // 2, w // 2
    xp = jnp.pad(x, ((0, 0), (1, 1), (0, 0), (1, 1), (1, 1)))
    cols = []
    for kd in range(3):
        for kh in range(3):
            for kw in range(3):
                cols.append(xp[:, kd:kd + 2 * do - 1:2, :,
                               kh:kh + 2 * ho - 1:2,
                               kw:kw + 2 * wo - 1:2])
    patches = jnp.stack(cols, axis=2)               # (N, Do, 27, Cin, Ho, Wo)
    x3 = patches.reshape(n * do, 27 * cin, ho * wo)
    out = fused_wx(x3, wmat, shift, "relu", jnp.bfloat16)
    return out.reshape(n, do, cout, ho, wo)


def tconv2x2x2_up(x, w8, shift8):
    """ConvTranspose3d(k=2, s=2) + BN + ReLU (channel-halving upsample)."""
    n, d, cin, h, w = x.shape
    cout = w8.shape[0] // 8
    x3 = x.reshape(n * d, cin, h * w)
    out8 = fused_wx(x3, w8, shift8, "relu", jnp.bfloat16)  # (N*D, 8*Cout, H*W)
    # TODO(synk): this re-interleave is still an XLA transpose over the
    # upsampled activation; writing it interleaved directly from the kernel via
    # the out_spec index_map would save one HBM round trip.
    y = out8.reshape(n, d, 2, 2, 2, cout, h, w)
    y = jnp.transpose(y, (0, 1, 2, 5, 6, 3, 7, 4))
    return y.reshape(n, 2 * d, cout, 2 * h, 2 * w)


def conv1x1x1_sigmoid(x, wmat, shift):
    n, d, cin, h, w = x.shape
    cout = wmat.shape[0]
    x3 = x.reshape(n * d, cin, h * w)
    out = fused_wx(x3, wmat, shift, "sigmoid", jnp.float32)
    return out.reshape(n, d, cout, h, w)


# ----------------------------------------------------------------------------
# Parameters (PyTorch layouts) and kernel-ready preparation (BN scale folded)
# ----------------------------------------------------------------------------
LAYERS = (
    ("conv3", 1, 8),                         # Conv3d(1,8,3,p=1)+BN+ReLU
    ("conv3", 8, 8), ("conv3", 8, 8),        # Conv3dBlock(8) x2
    ("down", 8, 16),                         # Conv3dDownsample(8)
    ("conv3", 16, 16), ("conv3", 16, 16),    # Conv3dBlock(16) x2
    ("down", 16, 32),                        # Conv3dDownsample(16)
    ("conv3", 32, 32), ("conv3", 32, 32),    # Conv3dBlock(32) x2
    ("tconv3", 32, 32), ("tconv3", 32, 32),  # ConvTranspose3dBlock(32) x2
    ("up", 32, 16),                          # ConvTranspose3dUpsample(32)
    ("tconv3", 16, 16), ("tconv3", 16, 16),  # ConvTranspose3dBlock(16) x2
    ("up", 16, 8),                           # ConvTranspose3dUpsample(16)
    ("tconv3", 8, 8), ("tconv3", 8, 8),      # ConvTranspose3dBlock(8) x2
    ("conv1", 8, 1),                         # Conv3d(8,1,1) + Sigmoid
)


def init_params(key):
    params = []
    for idx, (kind, cin, cout) in enumerate(LAYERS):
        k = jax.random.fold_in(key, idx)
        k1, k2, k3, k4 = jax.random.split(k, 4)
        if kind in ("conv3", "down"):
            wshape, fan_in = (cout, cin, 3, 3, 3), cin * 27
        elif kind == "conv1":
            wshape, fan_in = (cout, cin, 1, 1, 1), cin
        elif kind == "tconv3":
            wshape, fan_in = (cin, cout, 3, 3, 3), cin * 27
        else:  # "up"
            wshape, fan_in = (cin, cout, 2, 2, 2), cin * 8
        w = jax.random.normal(k1, wshape, jnp.float32) / math.sqrt(fan_in)
        b = 0.01 * jax.random.normal(k2, (cout,), jnp.float32)
        if kind == "conv1":
            bn = None
        else:
            gamma = 1.0 + 0.1 * jax.random.normal(k3, (cout,), jnp.float32)
            beta = 0.1 * jax.random.normal(k4, (cout,), jnp.float32)
            mean = jnp.zeros((cout,), jnp.float32)
            var = jnp.ones((cout,), jnp.float32)
            bn = (gamma, beta, mean, var)
        params.append(dict(kind=kind, w=w, b=b, bn=bn))
    return params


def fold_bn(bias, bn, eps=1e-5):
    if bn is None:
        return jnp.ones_like(bias), bias
    gamma, beta, mean, var = bn
    scale = gamma / jnp.sqrt(var + eps)
    shift = beta + scale * (bias - mean)
    return scale, shift


def prepare_params(params):
    """Fold BN scale into bf16 weight matrices; build per-layer shift vectors."""
    prepped = []
    for p in params:
        kind = p["kind"]
        scale, shift = fold_bn(p["b"], p["bn"])
        if kind in ("conv3", "tconv3", "down"):
            w = p["w"]
            if kind == "tconv3":
                # ConvTranspose3d(k=3,s=1,p=1) == Conv3d(k=3,p=1) with a
                # flipped, in/out-swapped kernel.
                w = jnp.transpose(jnp.flip(w, axis=(2, 3, 4)), (1, 0, 2, 3, 4))
            cout, cin = w.shape[0], w.shape[1]
            if kind == "down":
                wm = jnp.transpose(w, (0, 2, 3, 4, 1)).reshape(cout, 27 * cin)
                wm = (wm * scale[:, None]).astype(jnp.bfloat16)
            else:
                wm = jnp.transpose(w, (2, 0, 3, 4, 1)).reshape(3, cout, 9 * cin)
                wm = (wm * scale[None, :, None]).astype(jnp.bfloat16)
            sh = shift.reshape(cout, 1).astype(jnp.float32)
            prepped.append(dict(kind=("down" if kind == "down" else "conv3"),
                                w=wm, shift=sh))
        elif kind == "up":
            cin, cout = p["w"].shape[0], p["w"].shape[1]
            w8 = jnp.transpose(p["w"], (2, 3, 4, 1, 0)).reshape(8 * cout, cin)
            w8 = (w8 * jnp.tile(scale, 8)[:, None]).astype(jnp.bfloat16)
            sh8 = jnp.tile(shift, 8).reshape(8 * cout, 1).astype(jnp.float32)
            prepped.append(dict(kind="up", w=w8, shift=sh8))
        else:  # conv1
            cout, cin = p["w"].shape[0], p["w"].shape[1]
            wm = p["w"].reshape(cout, cin).astype(jnp.bfloat16)
            sh = shift.reshape(cout, 1).astype(jnp.float32)
            prepped.append(dict(kind="conv1", w=wm, shift=sh))
    return prepped


# ----------------------------------------------------------------------------
# Forward pass
# ----------------------------------------------------------------------------
def forward(prepped, x):
    """x: (N, D, C, H, W) bf16."""
    for p in prepped:
        kind = p["kind"]
        if kind == "conv3":
            x = conv3x3x3_s1(x, p["w"], p["shift"])
        elif kind == "down":
            x = conv3x3x3_s2_down(x, p["w"], p["shift"])
        elif kind == "up":
            x = tconv2x2x2_up(x, p["w"], p["shift"])
        else:  # conv1 + sigmoid
            x = conv1x1x1_sigmoid(x, p["w"], p["shift"])
    return x


def baseline_forward(prepped, frames_input_ncdhw):
    # PyTorch input is NCDHW; internal layout is (N, D, C, H, W) bf16.
    x = jnp.transpose(frames_input_ncdhw, (0, 2, 1, 3, 4)).astype(jnp.bfloat16)
    y = forward(prepped, x)                       # (N, D, 1, H, W) f32
    return jnp.transpose(y, (0, 2, 1, 3, 4))      # back to NCDHW


if __name__ == "__main__":
    key = jax.random.PRNGKey(0)
    N, D, H, W = 2, 8, 8, 8
    frames_input = jax.random.normal(key, (N, 1, D, H, W), jnp.float32)

    params = init_params(jax.random.PRNGKey(1))
    prepped = prepare_params(params)

    fwd = jax.jit(lambda inp: baseline_forward(prepped, inp))
    out = fwd(frames_input)
    out = jax.block_until_ready(out)

    assert out.shape == (N, 1, D, H, W), out.shape
    assert bool(jnp.all(jnp.isfinite(out)))
    assert bool(jnp.all((out >= 0.0) & (out <= 1.0)))  # sigmoid output range
    print("KERNEL_OK")
</pallas_src>

<mosaic_0001>
module attributes {stable_mosaic.version = 11 : i64} {
  func.func @_conv3_slab_kernel(%arg0: i32, %arg1: i32, %arg2: i32, %arg3: memref<1x1x1x100xbf16, #tpu.memory_space<vmem>>, %arg4: memref<1x8x9xbf16, #tpu.memory_space<vmem>>, %arg5: memref<8x1xf32, #tpu.memory_space<vmem>>, %arg6: memref<1x1x8x64xbf16, #tpu.memory_space<vmem>>, %arg7: memref<9x64xbf16, #tpu.memory_space<vmem>>, %arg8: memref<8x64xf32, #tpu.memory_space<vmem>>) attributes {dimension_semantics = [#tpu.dimension_semantics<parallel>, #tpu.dimension_semantics<parallel>, #tpu.dimension_semantics<arbitrary>], iteration_bounds = array<i64: 2, 8, 3>, scalar_prefetch = 0 : i64, scratch_operands = 2 : i64, tpu.core_type = #tpu.core_type<tc>, window_params = [{transform_indices = @transform_0, window_bounds = array<i64: 1, 1, 1, 100>}, {transform_indices = @transform_1, window_bounds = array<i64: 1, 8, 9>}, {pipeline_mode = #tpu.pipeline_mode<synchronous>, transform_indices = @transform_2, window_bounds = array<i64: 8, 1>}, {transform_indices = @transform_3, window_bounds = array<i64: 1, 1, 8, 64>}]} {
    %c0_i32 = arith.constant 0 : i32
    %0 = arith.cmpi eq, %arg2, %c0_i32 : i32
    %1 = arith.extui %0 : i1 to i32
    %c0_i32_0 = arith.constant 0 : i32
    %2 = arith.cmpi ne, %1, %c0_i32_0 : i32
    scf.if %2 {
      %cst_403 = arith.constant 0.000000e+00 : f32
      %229 = vector.broadcast %cst_403 : f32 to vector<8x64xf32>
      %c0_404 = arith.constant 0 : index
      %c0_405 = arith.constant 0 : index
      %230 = vector.load %arg8[%c0_404, %c0_405] : memref<8x64xf32, #tpu.memory_space<vmem>>, vector<8x64xf32>
      tpu.vector_store %arg8[%c0_404, %c0_405], %229 {strides = array<i32>} : memref<8x64xf32, #tpu.memory_space<vmem>>, vector<8x64xf32>,
    } else {
    }
    %c0 = arith.constant 0 : index
    %c0_1 = arith.constant 0 : index
    %c0_2 = arith.constant 0 : index
    %c0_3 = arith.constant 0 : index
    %3 = vector.load %arg3[%c0, %c0_1, %c0_2, %c0_3] : memref<1x1x1x100xbf16, #tpu.memory_space<vmem>>, vector<1x1x1x8xbf16>
    %4 = vector.shape_cast %3 : vector<1x1x1x8xbf16> to vector<1x8xbf16>
    %c0_4 = arith.constant 0 : index
    %c0_5 = arith.constant 0 : index
    %5 = vector.load %arg7[%c0_4, %c0_5] : memref<9x64xbf16, #tpu.memory_space<vmem>>, vector<1x8xbf16>
    tpu.vector_store %arg7[%c0_4, %c0_5], %4 {strides = array<i32>} : memref<9x64xbf16, #tpu.memory_space<vmem>>, vector<1x8xbf16>,
    %c0_6 = arith.constant 0 : index
    %c0_7 = arith.constant 0 : index
    %c0_8 = arith.constant 0 : index
    %c10 = arith.constant 10 : index
    %6 = vector.load %arg3[%c0_6, %c0_7, %c0_8, %c10] : memref<1x1x1x100xbf16, #tpu.memory_space<vmem>>, vector<1x1x1x8xbf16>
    %7 = vector.shape_cast %6 : vector<1x1x1x8xbf16> to vector<1x8xbf16>
    %c0_9 = arith.constant 0 : index
    %c8 = arith.constant 8 : index
    %8 = vector.load %arg7[%c0_9, %c8] : memref<9x64xbf16, #tpu.memory_space<vmem>>, vector<1x8xbf16>
    tpu.vector_store %arg7[%c0_9, %c8], %7 {strides = array<i32>} : memref<9x64xbf16, #tpu.memory_space<vmem>>, vector<1x8xbf16>,
    %c0_10 = arith.constant 0 : index
    %c0_11 = arith.constant 0 : index
    %c0_12 = arith.constant 0 : index
    %c20 = arith.constant 20 : index
    %9 = vector.load %arg3[%c0_10, %c0_11, %c0_12, %c20] : memref<1x1x1x100xbf16, #tpu.memory_space<vmem>>, vector<1x1x1x8xbf16>
    %10 = vector.shape_cast %9 : vector<1x1x1x8xbf16> to vector<1x8xbf16>
    %c0_13 = arith.constant 0 : index
    %c16 = arith.constant 16 : index
    %11 = vector.load %arg7[%c0_13, %c16] : memref<9x64xbf16, #tpu.memory_space<vmem>>, vector<1x8xbf16>
    tpu.vector_store %arg7[%c0_13, %c16], %10 {strides = array<i32>} : memref<9x64xbf16, #tpu.memory_space<vmem>>, vector<1x8xbf16>,
    %c0_14 = arith.constant 0 : index
    %c0_15 = arith.constant 0 : index
    %c0_16 = arith.constant 0 : index
    %c30 = arith.constant 30 : index
    %12 = vector.load %arg3[%c0_14, %c0_15, %c0_16, %c30] : memref<1x1x1x100xbf16, #tpu.memory_space<vmem>>, vector<1x1x1x8xbf16>
    %13 = vector.shape_cast %12 : vector<1x1x1x8xbf16> to vector<1x8xbf16>
    %c0_17 = arith.constant 0 : index
    %c24 = arith.constant 24 : index
    %14 = vector.load %arg7[%c0_17, %c24] : memref<9x64xbf16, #tpu.memory_space<vmem>>, vector<1x8xbf16>
    tpu.vector_store %arg7[%c0_17, %c24], %13 {strides = array<i32>} : memref<9x64xbf16, #tpu.memory_space<vmem>>, vector<1x8xbf16>,
    %c0_18 = arith.constant 0 : index
    %c0_19 = arith.constant 0 : index
    %c0_20 = arith.constant 0 : index
    %c40 = arith.constant 40 : index
    %15 = vector.load %arg3[%c0_18, %c0_19, %c0_20, %c40] : memref<1x1x1x100xbf16, #tpu.memory_space<vmem>>, vector<1x1x1x8xbf16>
    %16 = vector.shape_cast %15 : vector<1x1x1x8xbf16> to vector<1x8xbf16>
    %c0_21 = arith.constant 0 : index
    %c32 = arith.constant 32 : index
    %17 = vector.load %arg7[%c0_21, %c32] : memref<9x64xbf16, #tpu.memory_space<vmem>>, vector<1x8xbf16>
    tpu.vector_store %arg7[%c0_21, %c32], %16 {strides = array<i32>} : memref<9x64xbf16, #tpu.memory_space<vmem>>, vector<1x8xbf16>,
    %c0_22 = arith.constant 0 : index
    %c0_23 = arith.constant 0 : index
    %c0_24 = arith.constant 0 : index
    %c50 = arith.constant 50 : index
    %18 = vector.load %arg3[%c0_22, %c0_23, %c0_24, %c50] : memref<1x1x1x100xbf16, #tpu.memory_space<vmem>>, vector<1x1x1x8xbf16>
    %19 = vector.shape_cast %18 : vector<1x1x1x8xbf16> to vector<1x8xbf16>
    %c0_25 = arith.constant 0 : index
    %c40_26 = arith.constant 40 : index
    %20 = vector.load %arg7[%c0_25, %c40_26] : memref<9x64xbf16, #tpu.memory_space<vmem>>, vector<1x8xbf16>
    tpu.vector_store %arg7[%c0_25, %c40_26], %19 {strides = array<i32>} : memref<9x64xbf16, #tpu.memory_space<vmem>>, vector<1x8xbf16>,
    %c0_27 = arith.constant 0 : index
    %c0_28 = arith.constant 0 : index
    %c0_29 = arith.constant 0 : index
    %c60 = arith.constant 60 : index
    %21 = vector.load %arg3[%c0_27, %c0_28, %c0_29, %c60] : memref<1x1x1x100xbf16, #tpu.memory_space<vmem>>, vector<1x1x1x8xbf16>
    %22 = vector.shape_cast %21 : vector<1x1x1x8xbf16> to vector<1x8xbf16>
    %c0_30 = arith.constant 0 : index
    %c48 = arith.constant 48 : index
    %23 = vector.load %arg7[%c0_30, %c48] : memref<9x64xbf16, #tpu.memory_space<vmem>>, vector<1x8xbf16>
    tpu.vector_store %arg7[%c0_30, %c48], %22 {strides = array<i32>} : memref<9x64xbf16, #tpu.memory_space<vmem>>, vector<1x8xbf16>,
    %c0_31 = arith.constant 0 : index
    %c0_32 = arith.constant 0 : index
    %c0_33 = arith.constant 0 : index
    %c70 = arith.constant 70 : index
    %24 = vector.load %arg3[%c0_31, %c0_32, %c0_33, %c70] : memref<1x1x1x100xbf16, #tpu.memory_space<vmem>>, vector<1x1x1x8xbf16>
    %25 = vector.shape_cast %24 : vector<1x1x1x8xbf16> to vector<1x8xbf16>
    %c0_34 = arith.constant 0 : index
    %c56 = arith.constant 56 : index
    %26 = vector.load %arg7[%c0_34, %c56] : memref<9x64xbf16, #tpu.memory_space<vmem>>, vector<1x8xbf16>
    tpu.vector_store %arg7[%c0_34, %c56], %25 {strides = array<i32>} : memref<9x64xbf16, #tpu.memory_space<vmem>>, vector<1x8xbf16>,
    %c0_35 = arith.constant 0 : index
    %c0_36 = arith.constant 0 : index
    %c0_37 = arith.constant 0 : index
    %c1 = arith.constant 1 : index
    %27 = vector.load %arg3[%c0_35, %c0_36, %c0_37, %c1] : memref<1x1x1x100xbf16, #tpu.memory_space<vmem>>, vector<1x1x1x8xbf16>
    %28 = vector.shape_cast %27 : vector<1x1x1x8xbf16> to vector<1x8xbf16>
    %c1_38 = arith.constant 1 : index
    %c0_39 = arith.constant 0 : index
    %29 = vector.load %arg7[%c1_38, %c0_39] : memref<9x64xbf16, #tpu.memory_space<vmem>>, vector<1x8xbf16>
    tpu.vector_store %arg7[%c1_38, %c0_39], %28 {strides = array<i32>} : memref<9x64xbf16, #tpu.memory_space<vmem>>, vector<1x8xbf16>,
    %c0_40 = arith.constant 0 : index
    %c0_41 = arith.constant 0 : index
    %c0_42 = arith.constant 0 : index
    %c11 = arith.constant 11 : index
    %30 = vector.load %arg3[%c0_40, %c0_41, %c0_42, %c11] : memref<1x1x1x100xbf16, #tpu.memory_space<vmem>>, vector<1x1x1x8xbf16>
    %31 = vector.shape_cast %30 : vector<1x1x1x8xbf16> to vector<1x8xbf16>
    %c1_43 = arith.constant 1 : index
    %c8_44 = arith.constant 8 : index
    %32 = vector.load %arg7[%c1_43, %c8_44] : memref<9x64xbf16, #tpu.memory_space<vmem>>, vector<1x8xbf16>
    tpu.vector_store %arg7[%c1_43, %c8_44], %31 {strides = array<i32>} : memref<9x64xbf16, #tpu.memory_space<vmem>>, vector<1x8xbf16>,
    %c0_45 = arith.constant 0 : index
    %c0_46 = arith.constant 0 : index
    %c0_47 = arith.constant 0 : index
    %c21 = arith.constant 21 : index
    %33 = vector.load %arg3[%c0_45, %c0_46, %c0_47, %c21] : memref<1x1x1x100xbf16, #tpu.memory_space<vmem>>, vector<1x1x1x8xbf16>
    %34 = vector.shape_cast %33 : vector<1x1x1x8xbf16> to vector<1x8xbf16>
    %c1_48 = arith.constant 1 : index
    %c16_49 = arith.constant 16 : index
    %35 = vector.load %arg7[%c1_48, %c16_49] : memref<9x64xbf16, #tpu.memory_space<vmem>>, vector<1x8xbf16>
    tpu.vector_store %arg7[%c1_48, %c16_49], %34 {strides = array<i32>} : memref<9x64xbf16, #tpu.memory_space<vmem>>, vector<1x8xbf16>,
    %c0_50 = arith.constant 0 : index
    %c0_51 = arith.constant 0 : index
    %c0_52 = arith.constant 0 : index
    %c31 = arith.constant 31 : index
    %36 = vector.load %arg3[%c0_50, %c0_51, %c0_52, %c31] : memref<1x1x1x100xbf16, #tpu.memory_space<vmem>>, vector<1x1x1x8xbf16>
    %37 = vector.shape_cast %36 : vector<1x1x1x8xbf16> to vector<1x8xbf16>
    %c1_53 = arith.constant 1 : index
    %c24_54 = arith.constant 24 : index
    %38 = vector.load %arg7[%c1_53, %c24_54] : memref<9x64xbf16, #tpu.memory_space<vmem>>, vector<1x8xbf16>
    tpu.vector_store %arg7[%c1_53, %c24_54], %37 {strides = array<i32>} : memref<9x64xbf16, #tpu.memory_space<vmem>>, vector<1x8xbf16>,
    %c0_55 = arith.constant 0 : index
    %c0_56 = arith.constant 0 : index
    %c0_57 = arith.constant 0 : index
    %c41 = arith.constant 41 : index
    %39 = vector.load %arg3[%c0_55, %c0_56, %c0_57, %c41] : memref<1x1x1x100xbf16, #tpu.memory_space<vmem>>, vector<1x1x1x8xbf16>
    %40 = vector.shape_cast %39 : vector<1x1x1x8xbf16> to vector<1x8xbf16>
    %c1_58 = arith.constant 1 : index
    %c32_59 = arith.constant 32 : index
    %41 = vector.load %arg7[%c1_58, %c32_59] : memref<9x64xbf16, #tpu.memory_space<vmem>>, vector<1x8xbf16>
    tpu.vector_store %arg7[%c1_58, %c32_59], %40 {strides = array<i32>} : memref<9x64xbf16, #tpu.memory_space<vmem>>, vector<1x8xbf16>,
    %c0_60 = arith.constant 0 : index
    %c0_61 = arith.constant 0 : index
    %c0_62 = arith.constant 0 : index
    %c51 = arith.constant 51 : index
    %42 = vector.load %arg3[%c0_60, %c0_61, %c0_62, %c51] : memref<1x1x1x100xbf16, #tpu.memory_space<vmem>>, vector<1x1x1x8xbf16>
    %43 = vector.shape_cast %42 : vector<1x1x1x8xbf16> to vector<1x8xbf16>
    %c1_63 = arith.constant 1 : index
    %c40_64 = arith.constant 40 : index
    %44 = vector.load %arg7[%c1_63, %c40_64] : memref<9x64xbf16, #tpu.memory_space<vmem>>, vector<1x8xbf16>
    tpu.vector_store %arg7[%c1_63, %c40_64], %43 {strides = array<i32>} : memref<9x64xbf16, #tpu.memory_space<vmem>>, vector<1x8xbf16>,
    %c0_65 = arith.constant 0 : index
    %c0_66 = arith.constant 0 : index
    %c0_67 = arith.constant 0 : index
    %c61 = arith.constant 61 : index
    %45 = vector.load %arg3[%c0_65, %c0_66, %c0_67, %c61] : memref<1x1x1x100xbf16, #tpu.memory_space<vmem>>, vector<1x1x1x8xbf16>
    %46 = vector.shape_cast %45 : vector<1x1x1x8xbf16> to vector<1x8xbf16>
    %c1_68 = arith.constant 1 : index
    %c48_69 = arith.constant 48 : index
    %47 = vector.load %arg7[%c1_68, %c48_69] : memref<9x64xbf16, #tpu.memory_space<vmem>>, vector<1x8xbf16>
    tpu.vector_store %arg7[%c1_68, %c48_69], %46 {strides = array<i32>} : memref<9x64xbf16, #tpu.memory_space<vmem>>, vector<1x8xbf16>,
    %c0_70 = arith.constant 0 : index
    %c0_71 = arith.constant 0 : index
    %c0_72 = arith.constant 0 : index
    %c71 = arith.constant 71 : index
    %48 = vector.load %arg3[%c0_70, %c0_71, %c0_72, %c71] : memref<1x1x1x100xbf16, #tpu.memory_space<vmem>>, vector<1x1x1x8xbf16>
    %49 = vector.shape_cast %48 : vector<1x1x1x8xbf16> to vector<1x8xbf16>
    %c1_73 = arith.constant 1 : index
    %c56_74 = arith.constant 56 : index
    %50 = vector.load %arg7[%c1_73, %c56_74] : memref<9x64xbf16, #tpu.memory_space<vmem>>, vector<1x8xbf16>
    tpu.vector_store %arg7[%c1_73, %c56_74], %49 {strides = array<i32>} : memref<9x64xbf16, #tpu.memory_space<vmem>>, vector<1x8xbf16>,
    %c0_75 = arith.constant 0 : index
    %c0_76 = arith.constant 0 : index
    %c0_77 = arith.constant 0 : index
    %c2 = arith.constant 2 : index
    %51 = vector.load %arg3[%c0_75, %c0_76, %c0_77, %c2] : memref<1x1x1x100xbf16, #tpu.memory_space<vmem>>, vector<1x1x1x8xbf16>
    %52 = vector.shape_cast %51 : vector<1x1x1x8xbf16> to vector<1x8xbf16>
    %c2_78 = arith.constant 2 : index
    %c0_79 = arith.constant 0 : index
    %53 = vector.load %arg7[%c2_78, %c0_79] : memref<9x64xbf16, #tpu.memory_space<vmem>>, vector<1x8xbf16>
    tpu.vector_store %arg7[%c2_78, %c0_79], %52 {strides = array<i32>} : memref<9x64xbf16, #tpu.memory_space<vmem>>, vector<1x8xbf16>,
    %c0_80 = arith.constant 0 : index
    %c0_81 = arith.constant 0 : index
    %c0_82 = arith.constant 0 : index
    %c12 = arith.constant 12 : index
    %54 = vector.load %arg3[%c0_80, %c0_81, %c0_82, %c12] : memref<1x1x1x100xbf16, #tpu.memory_space<vmem>>, vector<1x1x1x8xbf16>
    %55 = vector.shape_cast %54 : vector<1x1x1x8xbf16> to vector<1x8xbf16>
    %c2_83 = arith.constant 2 : index
    %c8_84 = arith.constant 8 : index
    %56 = vector.load %arg7[%c2_83, %c8_84] : memref<9x64xbf16, #tpu.memory_space<vmem>>, vector<1x8xbf16>
    tpu.vector_store %arg7[%c2_83, %c8_84], %55 {strides = array<i32>} : memref<9x64xbf16, #tpu.memory_space<vmem>>, vector<1x8xbf16>,
    %c0_85 = arith.constant 0 : index
    %c0_86 = arith.constant 0 : index
    %c0_87 = arith.constant 0 : index
    %c22 = arith.constant 22 : index
    %57 = vector.load %arg3[%c0_85, %c0_86, %c0_87, %c22] : memref<1x1x1x100xbf16, #tpu.memory_space<vmem>>, vector<1x1x1x8xbf16>
    %58 = vector.shape_cast %57 : vector<1x1x1x8xbf16> to vector<1x8xbf16>
    %c2_88 = arith.constant 2 : index
    %c16_89 = arith.constant 16 : index
    %59 = vector.load %arg7[%c2_88, %c16_89] : memref<9x64xbf16, #tpu.memory_space<vmem>>, vector<1x8xbf16>
    tpu.vector_store %arg7[%c2_88, %c16_89], %58 {strides = array<i32>} : memref<9x64xbf16, #tpu.memory_space<vmem>>, vector<1x8xbf16>,
    %c0_90 = arith.constant 0 : index
    %c0_91 = arith.constant 0 : index
    %c0_92 = arith.constant 0 : index
    %c32_93 = arith.constant 32 : index
    %60 = vector.load %arg3[%c0_90, %c0_91, %c0_92, %c32_93] : memref<1x1x1x100xbf16, #tpu.memory_space<vmem>>, vector<1x1x1x8xbf16>
    %61 = vector.shape_cast %60 : vector<1x1x1x8xbf16> to vector<1x8xbf16>
    %c2_94 = arith.constant 2 : index
    %c24_95 = arith.constant 24 : index
    %62 = vector.load %arg7[%c2_94, %c24_95] : memref<9x64xbf16, #tpu.memory_space<vmem>>, vector<1x8xbf16>
    tpu.vector_store %arg7[%c2_94, %c24_95], %61 {strides = array<i32>} : memref<9x64xbf16, #tpu.memory_space<vmem>>, vector<1x8xbf16>,
    %c0_96 = arith.constant 0 : index
    %c0_97 = arith.constant 0 : index
    %c0_98 = arith.constant 0 : index
    %c42 = arith.constant 42 : index
    %63 = vector.load %arg3[%c0_96, %c0_97, %c0_98, %c42] : memref<1x1x1x100xbf16, #tpu.memory_space<vmem>>, vector<1x1x1x8xbf16>
    %64 = vector.shape_cast %63 : vector<1x1x1x8xbf16> to vector<1x8xbf16>
    %c2_99 = arith.constant 2 : index
    %c32_100 = arith.constant 32 : index
    %65 = vector.load %arg7[%c2_99, %c32_100] : memref<9x64xbf16, #tpu.memory_space<vmem>>, vector<1x8xbf16>
    tpu.vector_store %arg7[%c2_99, %c32_100], %64 {strides = array<i32>} : memref<9x64xbf16, #tpu.memory_space<vmem>>, vector<1x8xbf16>,
    %c0_101 = arith.constant 0 : index
    %c0_102 = arith.constant 0 : index
    %c0_103 = arith.constant 0 : index
    %c52 = arith.constant 52 : index
    %66 = vector.load %arg3[%c0_101, %c0_102, %c0_103, %c52] : memref<1x1x1x100xbf16, #tpu.memory_space<vmem>>, vector<1x1x1x8xbf16>
    %67 = vector.shape_cast %66 : vector<1x1x1x8xbf16> to vector<1x8xbf16>
    %c2_104 = arith.constant 2 : index
    %c40_105 = arith.constant 40 : index
    %68 = vector.load %arg7[%c2_104, %c40_105] : memref<9x64xbf16, #tpu.memory_space<vmem>>, vector<1x8xbf16>
    tpu.vector_store %arg7[%c2_104, %c40_105], %67 {strides = array<i32>} : memref<9x64xbf16, #tpu.memory_space<vmem>>, vector<1x8xbf16>,
    %c0_106 = arith.constant 0 : index
    %c0_107 = arith.constant 0 : index
    %c0_108 = arith.constant 0 : index
    %c62 = arith.constant 62 : index
    %69 = vector.load %arg3[%c0_106, %c0_107, %c0_108, %c62] : memref<1x1x1x100xbf16, #tpu.memory_space<vmem>>, vector<1x1x1x8xbf16>
    %70 = vector.shape_cast %69 : vector<1x1x1x8xbf16> to vector<1x8xbf16>
    %c2_109 = arith.constant 2 : index
    %c48_110 = arith.constant 48 : index
    %71 = vector.load %arg7[%c2_109, %c48_110] : memref<9x64xbf16, #tpu.memory_space<vmem>>, vector<1x8xbf16>
    tpu.vector_store %arg7[%c2_109, %c48_110], %70 {strides = array<i32>} : memref<9x64xbf16, #tpu.memory_space<vmem>>, vector<1x8xbf16>,
    %c0_111 = arith.constant 0 : index
    %c0_112 = arith.constant 0 : index
    %c0_113 = arith.constant 0 : index
    %c72 = arith.constant 72 : index
    %72 = vector.load %arg3[%c0_111, %c0_112, %c0_113, %c72] : memref<1x1x1x100xbf16, #tpu.memory_space<vmem>>, vector<1x1x1x8xbf16>
    %73 = vector.shape_cast %72 : vector<1x1x1x8xbf16> to vector<1x8xbf16>
    %c2_114 = arith.constant 2 : index
    %c56_115 = arith.constant 56 : index
    %74 = vector.load %arg7[%c2_114, %c56_115] : memref<9x64xbf16, #tpu.memory_space<vmem>>, vector<1x8xbf16>
    tpu.vector_store %arg7[%c2_114, %c56_115], %73 {strides = array<i32>} : memref<9x64xbf16, #tpu.memory_space<vmem>>, vector<1x8xbf16>,
    %c0_116 = arith.constant 0 : index
    %c0_117 = arith.constant 0 : index
    %c0_118 = arith.constant 0 : index
    %c10_119 = arith.constant 10 : index
    %75 = vector.load %arg3[%c0_116, %c0_117, %c0_118, %c10_119] : memref<1x1x1x100xbf16, #tpu.memory_space<vmem>>, vector<1x1x1x8xbf16>
    %76 = vector.shape_cast %75 : vector<1x1x1x8xbf16> to vector<1x8xbf16>
    %c3 = arith.constant 3 : index
    %c0_120 = arith.constant 0 : index
    %77 = vector.load %arg7[%c3, %c0_120] : memref<9x64xbf16, #tpu.memory_space<vmem>>, vector<1x8xbf16>
    tpu.vector_store %arg7[%c3, %c0_120], %76 {strides = array<i32>} : memref<9x64xbf16, #tpu.memory_space<vmem>>, vector<1x8xbf16>,
    %c0_121 = arith.constant 0 : index
    %c0_122 = arith.constant 0 : index
    %c0_123 = arith.constant 0 : index
    %c20_124 = arith.constant 20 : index
    %78 = vector.load %arg3[%c0_121, %c0_122, %c0_123, %c20_124] : memref<1x1x1x100xbf16, #tpu.memory_space<vmem>>, vector<1x1x1x8xbf16>
    %79 = vector.shape_cast %78 : vector<1x1x1x8xbf16> to vector<1x8xbf16>
    %c3_125 = arith.constant 3 : index
    %c8_126 = arith.constant 8 : index
    %80 = vector.load %arg7[%c3_125, %c8_126] : memref<9x64xbf16, #tpu.memory_space<vmem>>, vector<1x8xbf16>
    tpu.vector_store %arg7[%c3_125, %c8_126], %79 {strides = array<i32>} : memref<9x64xbf16, #tpu.memory_space<vmem>>, vector<1x8xbf16>,
    %c0_127 = arith.constant 0 : index
    %c0_128 = arith.constant 0 : index
    %c0_129 = arith.constant 0 : index
    %c30_130 = arith.constant 30 : index
    %81 = vector.load %arg3[%c0_127, %c0_128, %c0_129, %c30_130] : memref<1x1x1x100xbf16, #tpu.memory_space<vmem>>, vector<1x1x1x8xbf16>
    %82 = vector.shape_cast %81 : vector<1x1x1x8xbf16> to vector<1x8xbf16>
    %c3_131 = arith.constant 3 : index
    %c16_132 = arith.constant 16 : index
    %83 = vector.load %arg7[%c3_131, %c16_132] : memref<9x64xbf16, #tpu.memory_space<vmem>>, vector<1x8xbf16>
    tpu.vector_store %arg7[%c3_131, %c16_132], %82 {strides = array<i32>} : memref<9x64xbf16, #tpu.memory_space<vmem>>, vector<1x8xbf16>,
    %c0_133 = arith.constant 0 : index
    %c0_134 = arith.constant 0 : index
    %c0_135 = arith.constant 0 : index
    %c40_136 = arith.constant 40 : index
    %84 = vector.load %arg3[%c0_133, %c0_134, %c0_135, %c40_136] : memref<1x1x1x100xbf16, #tpu.memory_space<vmem>>, vector<1x1x1x8xbf16>
    %85 = vector.shape_cast %84 : vector<1x1x1x8xbf16> to vector<1x8xbf16>
    %c3_137 = arith.constant 3 : index
    %c24_138 = arith.constant 24 : index
    %86 = vector.load %arg7[%c3_137, %c24_138] : memref<9x64xbf16, #tpu.memory_space<vmem>>, vector<1x8xbf16>
    tpu.vector_store %arg7[%c3_137, %c24_138], %85 {strides = array<i32>} : memref<9x64xbf16, #tpu.memory_space<vmem>>, vector<1x8xbf16>,
    %c0_139 = arith.constant 0 : index
    %c0_140 = arith.constant 0 : index
    %c0_141 = arith.constant 0 : index
    %c50_142 = arith.constant 50 : index
    %87 = vector.load %arg3[%c0_139, %c0_140, %c0_141, %c50_142] : memref<1x1x1x100xbf16, #tpu.memory_space<vmem>>, vector<1x1x1x8xbf16>
    %88 = vector.shape_cast %87 : vector<1x1x1x8xbf16> to vector<1x8xbf16>
    %c3_143 = arith.constant 3 : index
    %c32_144 = arith.constant 32 : index
    %89 = vector.load %arg7[%c3_143, %c32_144] : memref<9x64xbf16, #tpu.memory_space<vmem>>, vector<1x8xbf16>
    tpu.vector_store %arg7[%c3_143, %c32_144], %88 {strides = array<i32>} : memref<9x64xbf16, #tpu.memory_space<vmem>>, vector<1x8xbf16>,
    %c0_145 = arith.constant 0 : index
    %c0_146 = arith.constant 0 : index
    %c0_147 = arith.constant 0 : index
    %c60_148 = arith.constant 60 : index
    %90 = vector.load %arg3[%c0_145, %c0_146, %c0_147, %c60_148] : memref<1x1x1x100xbf16, #tpu.memory_space<vmem>>, vector<1x1x1x8xbf16>
    %91 = vector.shape_cast %90 : vector<1x1x1x8xbf16> to vector<1x8xbf16>
    %c3_149 = arith.constant 3 : index
    %c40_150 = arith.constant 40 : index
    %92 = vector.load %arg7[%c3_149, %c40_150] : memref<9x64xbf16, #tpu.memory_space<vmem>>, vector<1x8xbf16>
    tpu.vector_store %arg7[%c3_149, %c40_150], %91 {strides = array<i32>} : memref<9x64xbf16, #tpu.memory_space<vmem>>, vector<1x8xbf16>,
    %c0_151 = arith.constant 0 : index
    %c0_152 = arith.constant 0 : index
    %c0_153 = arith.constant 0 : index
    %c70_154 = arith.constant 70 : index
    %93 = vector.load %arg3[%c0_151, %c0_152, %c0_153, %c70_154] : memref<1x1x1x100xbf16, #tpu.memory_space<vmem>>, vector<1x1x1x8xbf16>
    %94 = vector.shape_cast %93 : vector<1x1x1x8xbf16> to vector<1x8xbf16>
    %c3_155 = arith.constant 3 : index
    %c48_156 = arith.constant 48 : index
    %95 = vector.load %arg7[%c3_155, %c48_156] : memref<9x64xbf16, #tpu.memory_space<vmem>>, vector<1x8xbf16>
    tpu.vector_store %arg7[%c3_155, %c48_156], %94 {strides = array<i32>} : memref<9x64xbf16, #tpu.memory_space<vmem>>, vector<1x8xbf16>,
    %c0_157 = arith.constant 0 : index
    %c0_158 = arith.constant 0 : index
    %c0_159 = arith.constant 0 : index
    %c80 = arith.constant 80 : index
    %96 = vector.load %arg3[%c0_157, %c0_158, %c0_159, %c80] : memref<1x1x1x100xbf16, #tpu.memory_space<vmem>>, vector<1x1x1x8xbf16>
    %97 = vector.shape_cast %96 : vector<1x1x1x8xbf16> to vector<1x8xbf16>
    %c3_160 = arith.constant 3 : index
    %c56_161 = arith.constant 56 : index
    %98 = vector.load %arg7[%c3_160, %c56_161] : memref<9x64xbf16, #tpu.memory_space<vmem>>, vector<1x8xbf16>
    tpu.vector_store %arg7[%c3_160, %c56_161], %97 {strides = array<i32>} : memref<9x64xbf16, #tpu.memory_space<vmem>>, vector<1x8xbf16>,
    %c0_162 = arith.constant 0 : index
    %c0_163 = arith.constant 0 : index
    %c0_164 = arith.constant 0 : index
    %c11_165 = arith.constant 11 : index
    %99 = vector.load %arg3[%c0_162, %c0_163, %c0_164, %c11_165] : memref<1x1x1x100xbf16, #tpu.memory_space<vmem>>, vector<1x1x1x8xbf16>
    %100 = vector.shape_cast %99 : vector<1x1x1x8xbf16> to vector<1x8xbf16>
    %c4 = arith.constant 4 : index
    %c0_166 = arith.constant 0 : index
    %101 = vector.load %arg7[%c4, %c0_166] : memref<9x64xbf16, #tpu.memory_space<vmem>>, vector<1x8xbf16>
    tpu.vector_store %arg7[%c4, %c0_166], %100 {strides = array<i32>} : memref<9x64xbf16, #tpu.memory_space<vmem>>, vector<1x8xbf16>,
    %c0_167 = arith.constant 0 : index
    %c0_168 = arith.constant 0 : index
    %c0_169 = arith.constant 0 : index
    %c21_170 = arith.constant 21 : index
    %102 = vector.load %arg3[%c0_167, %c0_168, %c0_169, %c21_170] : memref<1x1x1x100xbf16, #tpu.memory_space<vmem>>, vector<1x1x1x8xbf16>
    %103 = vector.shape_cast %102 : vector<1x1x1x8xbf16> to vector<1x8xbf16>
    %c4_171 = arith.constant 4 : index
    %c8_172 = arith.constant 8 : index
    %104 = vector.load %arg7[%c4_171, %c8_172] : memref<9x64xbf16, #tpu.memory_space<vmem>>, vector<1x8xbf16>
    tpu.vector_store %arg7[%c4_171, %c8_172], %103 {strides = array<i32>} : memref<9x64xbf16, #tpu.memory_space<vmem>>, vector<1x8xbf16>,
    %c0_173 = arith.constant 0 : index
    %c0_174 = arith.constant 0 : index
    %c0_175 = arith.constant 0 : index
    %c31_176 = arith.constant 31 : index
    %105 = vector.load %arg3[%c0_173, %c0_174, %c0_175, %c31_176] : memref<1x1x1x100xbf16, #tpu.memory_space<vmem>>, vector<1x1x1x8xbf16>
    %106 = vector.shape_cast %105 : vector<1x1x1x8xbf16> to vector<1x8xbf16>
    %c4_177 = arith.constant 4 : index
    %c16_178 = arith.constant 16 : index
    %107 = vector.load %arg7[%c4_177, %c16_178] : memref<9x64xbf16, #tpu.memory_space<vmem>>, vector<1x8xbf16>
    tpu.vector_store %arg7[%c4_177, %c16_178], %106 {strides = array<i32>} : memref<9x64xbf16, #tpu.memory_space<vmem>>, vector<1x8xbf16>,
    %c0_179 = arith.constant 0 : index
    %c0_180 = arith.constant 0 : index
    %c0_181 = arith.constant 0 : index
    %c41_182 = arith.constant 41 : index
    %108 = vector.load %arg3[%c0_179, %c0_180, %c0_181, %c41_182] : memref<1x1x1x100xbf16, #tpu.memory_space<vmem>>, vector<1x1x1x8xbf16>
    %109 = vector.shape_cast %108 : vector<1x1x1x8xbf16> to vector<1x8xbf16>
    %c4_183 = arith.constant 4 : index
    %c24_184 = arith.constant 24 : index
    %110 = vector.load %arg7[%c4_183, %c24_184] : memref<9x64xbf16, #tpu.memory_space<vmem>>, vector<1x8xbf16>
    tpu.vector_store %arg7[%c4_183, %c24_184], %109 {strides = array<i32>} : memref<9x64xbf16, #tpu.memory_space<vmem>>, vector<1x8xbf16>,
    %c0_185 = arith.constant 0 : index
    %c0_186 = arith.constant 0 : index
    %c0_187 = arith.constant 0 : index
    %c51_188 = arith.constant 51 : index
    %111 = vector.load %arg3[%c0_185, %c0_186, %c0_187, %c51_188] : memref<1x1x1x100xbf16, #tpu.memory_space<vmem>>, vector<1x1x1x8xbf16>
    %112 = vector.shape_cast %111 : vector<1x1x1x8xbf16> to vector<1x8xbf16>
    %c4_189 = arith.constant 4 : index
    %c32_190 = arith.constant 32 : index
    %113 = vector.load %arg7[%c4_189, %c32_190] : memref<9x64xbf16, #tpu.memory_space<vmem>>, vector<1x8xbf16>
    tpu.vector_store %arg7[%c4_189, %c32_190], %112 {strides = array<i32>} : memref<9x64xbf16, #tpu.memory_space<vmem>>, vector<1x8xbf16>,
    %c0_191 = arith.constant 0 : index
    %c0_192 = arith.constant 0 : index
    %c0_193 = arith.constant 0 : index
    %c61_194 = arith.constant 61 : index
    %114 = vector.load %arg3[%c0_191, %c0_192, %c0_193, %c61_194] : memref<1x1x1x100xbf16, #tpu.memory_space<vmem>>, vector<1x1x1x8xbf16>
    %115 = vector.shape_cast %114 : vector<1x1x1x8xbf16> to vector<1x8xbf16>
    %c4_195 = arith.constant 4 : index
    %c40_196 = arith.constant 40 : index
    %116 = vector.load %arg7[%c4_195, %c40_196] : memref<9x64xbf16, #tpu.memory_space<vmem>>, vector<1x8xbf16>
    tpu.vector_store %arg7[%c4_195, %c40_196], %115 {strides = array<i32>} : memref<9x64xbf16, #tpu.memory_space<vmem>>, vector<1x8xbf16>,
    %c0_197 = arith.constant 0 : index
    %c0_198 = arith.constant 0 : index
    %c0_199 = arith.constant 0 : index
    %c71_200 = arith.constant 71 : index
    %117 = vector.load %arg3[%c0_197, %c0_198, %c0_199, %c71_200] : memref<1x1x1x100xbf16, #tpu.memory_space<vmem>>, vector<1x1x1x8xbf16>
    %118 = vector.shape_cast %117 : vector<1x1x1x8xbf16> to vector<1x8xbf16>
    %c4_201 = arith.constant 4 : index
    %c48_202 = arith.constant 48 : index
    %119 = vector.load %arg7[%c4_201, %c48_202] : memref<9x64xbf16, #tpu.memory_space<vmem>>, vector<1x8xbf16>
    tpu.vector_store %arg7[%c4_201, %c48_202], %118 {strides = array<i32>} : memref<9x64xbf16, #tpu.memory_space<vmem>>, vector<1x8xbf16>,
    %c0_203 = arith.constant 0 : index
    %c0_204 = arith.constant 0 : index
    %c0_205 = arith.constant 0 : index
    %c81 = arith.constant 81 : index
    %120 = vector.load %arg3[%c0_203, %c0_204, %c0_205, %c81] : memref<1x1x1x100xbf16, #tpu.memory_space<vmem>>, vector<1x1x1x8xbf16>
    %121 = vector.shape_cast %120 : vector<1x1x1x8xbf16> to vector<1x8xbf16>
    %c4_206 = arith.constant 4 : index
    %c56_207 = arith.constant 56 : index
    %122 = vector.load %arg7[%c4_206, %c56_207] : memref<9x64xbf16, #tpu.memory_space<vmem>>, vector<1x8xbf16>
    tpu.vector_store %arg7[%c4_206, %c56_207], %121 {strides = array<i32>} : memref<9x64xbf16, #tpu.memory_space<vmem>>, vector<1x8xbf16>,
    %c0_208 = arith.constant 0 : index
    %c0_209 = arith.constant 0 : index
    %c0_210 = arith.constant 0 : index
    %c12_211 = arith.constant 12 : index
    %123 = vector.load %arg3[%c0_208, %c0_209, %c0_210, %c12_211] : memref<1x1x1x100xbf16, #tpu.memory_space<vmem>>, vector<1x1x1x8xbf16>
    %124 = vector.shape_cast %123 : vector<1x1x1x8xbf16> to vector<1x8xbf16>
    %c5 = arith.constant 5 : index
    %c0_212 = arith.constant 0 : index
    %125 = vector.load %arg7[%c5, %c0_212] : memref<9x64xbf16, #tpu.memory_space<vmem>>, vector<1x8xbf16>
    tpu.vector_store %arg7[%c5, %c0_212], %124 {strides = array<i32>} : memref<9x64xbf16, #tpu.memory_space<vmem>>, vector<1x8xbf16>,
    %c0_213 = arith.constant 0 : index
    %c0_214 = arith.constant 0 : index
    %c0_215 = arith.constant 0 : index
    %c22_216 = arith.constant 22 : index
    %126 = vector.load %arg3[%c0_213, %c0_214, %c0_215, %c22_216] : memref<1x1x1x100xbf16, #tpu.memory_space<vmem>>, vector<1x1x1x8xbf16>
    %127 = vector.shape_cast %126 : vector<1x1x1x8xbf16> to vector<1x8xbf16>
    %c5_217 = arith.constant 5 : index
    %c8_218 = arith.constant 8 : index
    %128 = vector.load %arg7[%c5_217, %c8_218] : memref<9x64xbf16, #tpu.memory_space<vmem>>, vector<1x8xbf16>
    tpu.vector_store %arg7[%c5_217, %c8_218], %127 {strides = array<i32>} : memref<9x64xbf16, #tpu.memory_space<vmem>>, vector<1x8xbf16>,
    %c0_219 = arith.constant 0 : index
    %c0_220 = arith.constant 0 : index
    %c0_221 = arith.constant 0 : index
    %c32_222 = arith.constant 32 : index
    %129 = vector.load %arg3[%c0_219, %c0_220, %c0_221, %c32_222] : memref<1x1x1x100xbf16, #tpu.memory_space<vmem>>, vector<1x1x1x8xbf16>
    %130 = vector.shape_cast %129 : vector<1x1x1x8xbf16> to vector<1x8xbf16>
    %c5_223 = arith.constant 5 : index
    %c16_224 = arith.constant 16 : index
    %131 = vector.load %arg7[%c5_223, %c16_224] : memref<9x64xbf16, #tpu.memory_space<vmem>>, vector<1x8xbf16>
    tpu.vector_store %arg7[%c5_223, %c16_224], %130 {strides = array<i32>} : memref<9x64xbf16, #tpu.memory_space<vmem>>, vector<1x8xbf16>,
    %c0_225 = arith.constant 0 : index
    %c0_226 = arith.constant 0 : index
    %c0_227 = arith.constant 0 : index
    %c42_228 = arith.constant 42 : index
    %132 = vector.load %arg3[%c0_225, %c0_226, %c0_227, %c42_228] : memref<1x1x1x100xbf16, #tpu.memory_space<vmem>>, vector<1x1x1x8xbf16>
    %133 = vector.shape_cast %132 : vector<1x1x1x8xbf16> to vector<1x8xbf16>
    %c5_229 = arith.constant 5 : index
    %c24_230 = arith.constant 24 : index
    %134 = vector.load %arg7[%c5_229, %c24_230] : memref<9x64xbf16, #tpu.memory_space<vmem>>, vector<1x8xbf16>
    tpu.vector_store %arg7[%c5_229, %c24_230], %133 {strides = array<i32>} : memref<9x64xbf16, #tpu.memory_space<vmem>>, vector<1x8xbf16>,
    %c0_231 = arith.constant 0 : index
    %c0_232 = arith.constant 0 : index
    %c0_233 = arith.constant 0 : index
    %c52_234 = arith.constant 52 : index
    %135 = vector.load %arg3[%c0_231, %c0_232, %c0_233, %c52_234] : memref<1x1x1x100xbf16, #tpu.memory_space<vmem>>, vector<1x1x1x8xbf16>
    %136 = vector.shape_cast %135 : vector<1x1x1x8xbf16> to vector<1x8xbf16>
    %c5_235 = arith.constant 5 : index
    %c32_236 = arith.constant 32 : index
    %137 = vector.load %arg7[%c5_235, %c32_236] : memref<9x64xbf16, #tpu.memory_space<vmem>>, vector<1x8xbf16>
    tpu.vector_store %arg7[%c5_235, %c32_236], %136 {strides = array<i32>} : memref<9x64xbf16, #tpu.memory_space<vmem>>, vector<1x8xbf16>,
    %c0_237 = arith.constant 0 : index
    %c0_238 = arith.constant 0 : index
    %c0_239 = arith.constant 0 : index
    %c62_240 = arith.constant 62 : index
    %138 = vector.load %arg3[%c0_237, %c0_238, %c0_239, %c62_240] : memref<1x1x1x100xbf16, #tpu.memory_space<vmem>>, vector<1x1x1x8xbf16>
    %139 = vector.shape_cast %138 : vector<1x1x1x8xbf16> to vector<1x8xbf16>
    %c5_241 = arith.constant 5 : index
    %c40_242 = arith.constant 40 : index
    %140 = vector.load %arg7[%c5_241, %c40_242] : memref<9x64xbf16, #tpu.memory_space<vmem>>, vector<1x8xbf16>
    tpu.vector_store %arg7[%c5_241, %c40_242], %139 {strides = array<i32>} : memref<9x64xbf16, #tpu.memory_space<vmem>>, vector<1x8xbf16>,
    %c0_243 = arith.constant 0 : index
    %c0_244 = arith.constant 0 : index
    %c0_245 = arith.constant 0 : index
    %c72_246 = arith.constant 72 : index
    %141 = vector.load %arg3[%c0_243, %c0_244, %c0_245, %c72_246] : memref<1x1x1x100xbf16, #tpu.memory_space<vmem>>, vector<1x1x1x8xbf16>
    %142 = vector.shape_cast %141 : vector<1x1x1x8xbf16> to vector<1x8xbf16>
    %c5_247 = arith.constant 5 : index
    %c48_248 = arith.constant 48 : index
    %143 = vector.load %arg7[%c5_247, %c48_248] : memref<9x64xbf16, #tpu.memory_space<vmem>>, vector<1x8xbf16>
    tpu.vector_store %arg7[%c5_247, %c48_248], %142 {strides = array<i32>} : memref<9x64xbf16, #tpu.memory_space<vmem>>, vector<1x8xbf16>,
    %c0_249 = arith.constant 0 : index
    %c0_250 = arith.constant 0 : index
    %c0_251 = arith.constant 0 : index
    %c82 = arith.constant 82 : index
    %144 = vector.load %arg3[%c0_249, %c0_250, %c0_251, %c82] : memref<1x1x1x100xbf16, #tpu.memory_space<vmem>>, vector<1x1x1x8xbf16>
    %145 = vector.shape_cast %144 : vector<1x1x1x8xbf16> to vector<1x8xbf16>
    %c5_252 = arith.constant 5 : index
    %c56_253 = arith.constant 56 : index
    %146 = vector.load %arg7[%c5_252, %c56_253] : memref<9x64xbf16, #tpu.memory_space<vmem>>, vector<1x8xbf16>
    tpu.vector_store %arg7[%c5_252, %c56_253], %145 {strides = array<i32>} : memref<9x64xbf16, #tpu.memory_space<vmem>>, vector<1x8xbf16>,
    %c0_254 = arith.constant 0 : index
    %c0_255 = arith.constant 0 : index
    %c0_256 = arith.constant 0 : index
    %c20_257 = arith.constant 20 : index
    %147 = vector.load %arg3[%c0_254, %c0_255, %c0_256, %c20_257] : memref<1x1x1x100xbf16, #tpu.memory_space<vmem>>, vector<1x1x1x8xbf16>
    %148 = vector.shape_cast %147 : vector<1x1x1x8xbf16> to vector<1x8xbf16>
    %c6 = arith.constant 6 : index
    %c0_258 = arith.constant 0 : index
    %149 = vector.load %arg7[%c6, %c0_258] : memref<9x64xbf16, #tpu.memory_space<vmem>>, vector<1x8xbf16>
    tpu.vector_store %arg7[%c6, %c0_258], %148 {strides = array<i32>} : memref<9x64xbf16, #tpu.memory_space<vmem>>, vector<1x8xbf16>,
    %c0_259 = arith.constant 0 : index
    %c0_260 = arith.constant 0 : index
    %c0_261 = arith.constant 0 : index
    %c30_262 = arith.constant 30 : index
    %150 = vector.load %arg3[%c0_259, %c0_260, %c0_261, %c30_262] : memref<1x1x1x100xbf16, #tpu.memory_space<vmem>>, vector<1x1x1x8xbf16>
    %151 = vector.shape_cast %150 : vector<1x1x1x8xbf16> to vector<1x8xbf16>
    %c6_263 = arith.constant 6 : index
    %c8_264 = arith.constant 8 : index
    %152 = vector.load %arg7[%c6_263, %c8_264] : memref<9x64xbf16, #tpu.memory_space<vmem>>, vector<1x8xbf16>
    tpu.vector_store %arg7[%c6_263, %c8_264], %151 {strides = array<i32>} : memref<9x64xbf16, #tpu.memory_space<vmem>>, vector<1x8xbf16>,
    %c0_265 = arith.constant 0 : index
    %c0_266 = arith.constant 0 : index
    %c0_267 = arith.constant 0 : index
    %c40_268 = arith.constant 40 : index
    %153 = vector.load %arg3[%c0_265, %c0_266, %c0_267, %c40_268] : memref<1x1x1x100xbf16, #tpu.memory_space<vmem>>, vector<1x1x1x8xbf16>
    %154 = vector.shape_cast %153 : vector<1x1x1x8xbf16> to vector<1x8xbf16>
    %c6_269 = arith.constant 6 : index
    %c16_270 = arith.constant 16 : index
    %155 = vector.load %arg7[%c6_269, %c16_270] : memref<9x64xbf16, #tpu.memory_space<vmem>>, vector<1x8xbf16>
    tpu.vector_store %arg7[%c6_269, %c16_270], %154 {strides = array<i32>} : memref<9x64xbf16, #tpu.memory_space<vmem>>, vector<1x8xbf16>,
    %c0_271 = arith.constant 0 : index
    %c0_272 = arith.constant 0 : index
    %c0_273 = arith.constant 0 : index
    %c50_274 = arith.constant 50 : index
    %156 = vector.load %arg3[%c0_271, %c0_272, %c0_273, %c50_274] : memref<1x1x1x100xbf16, #tpu.memory_space<vmem>>, vector<1x1x1x8xbf16>
    %157 = vector.shape_cast %156 : vector<1x1x1x8xbf16> to vector<1x8xbf16>
    %c6_275 = arith.constant 6 : index
    %c24_276 = arith.constant 24 : index
    %158 = vector.load %arg7[%c6_275, %c24_276] : memref<9x64xbf16, #tpu.memory_space<vmem>>, vector<1x8xbf16>
    tpu.vector_store %arg7[%c6_275, %c24_276], %157 {strides = array<i32>} : memref<9x64xbf16, #tpu.memory_space<vmem>>, vector<1x8xbf16>,
    %c0_277 = arith.constant 0 : index
    %c0_278 = arith.constant 0 : index
    %c0_279 = arith.constant 0 : index
    %c60_280 = arith.constant 60 : index
    %159 = vector.load %arg3[%c0_277, %c0_278, %c0_279, %c60_280] : memref<1x1x1x100xbf16, #tpu.memory_space<vmem>>, vector<1x1x1x8xbf16>
    %160 = vector.shape_cast %159 : vector<1x1x1x8xbf16> to vector<1x8xbf16>
    %c6_281 = arith.constant 6 : index
    %c32_282 = arith.constant 32 : index
    %161 = vector.load %arg7[%c6_281, %c32_282] : memref<9x64xbf16, #tpu.memory_space<vmem>>, vector<1x8xbf16>
    tpu.vector_store %arg7[%c6_281, %c32_282], %160 {strides = array<i32>} : memref<9x64xbf16, #tpu.memory_space<vmem>>, vector<1x8xbf16>,
    %c0_283 = arith.constant 0 : index
    %c0_284 = arith.constant 0 : index
    %c0_285 = arith.constant 0 : index
    %c70_286 = arith.constant 70 : index
    %162 = vector.load %arg3[%c0_283, %c0_284, %c0_285, %c70_286] : memref<1x1x1x100xbf16, #tpu.memory_space<vmem>>, vector<1x1x1x8xbf16>
    %163 = vector.shape_cast %162 : vector<1x1x1x8xbf16> to vector<1x8xbf16>
    %c6_287 = arith.constant 6 : index
    %c40_288 = arith.constant 40 : index
    %164 = vector.load %arg7[%c6_287, %c40_288] : memref<9x64xbf16, #tpu.memory_space<vmem>>, vector<1x8xbf16>
    tpu.vector_store %arg7[%c6_287, %c40_288], %163 {strides = array<i32>} : memref<9x64xbf16, #tpu.memory_space<vmem>>, vector<1x8xbf16>,
    %c0_289 = arith.constant 0 : index
    %c0_290 = arith.constant 0 : index
    %c0_291 = arith.constant 0 : index
    %c80_292 = arith.constant 80 : index
    %165 = vector.load %arg3[%c0_289, %c0_290, %c0_291, %c80_292] : memref<1x1x1x100xbf16, #tpu.memory_space<vmem>>, vector<1x1x1x8xbf16>
    %166 = vector.shape_cast %165 : vector<1x1x1x8xbf16> to vector<1x8xbf16>
    %c6_293 = arith.constant 6 : index
    %c48_294 = arith.constant 48 : index
    %167 = vector.load %arg7[%c6_293, %c48_294] : memref<9x64xbf16, #tpu.memory_space<vmem>>, vector<1x8xbf16>
    tpu.vector_store %arg7[%c6_293, %c48_294], %166 {strides = array<i32>} : memref<9x64xbf16, #tpu.memory_space<vmem>>, vector<1x8xbf16>,
    %c0_295 = arith.constant 0 : index
    %c0_296 = arith.constant 0 : index
    %c0_297 = arith.constant 0 : index
    %c90 = arith.constant 90 : index
    %168 = vector.load %arg3[%c0_295, %c0_296, %c0_297, %c90] : memref<1x1x1x100xbf16, #tpu.memory_space<vmem>>, vector<1x1x1x8xbf16>
    %169 = vector.shape_cast %168 : vector<1x1x1x8xbf16> to vector<1x8xbf16>
    %c6_298 = arith.constant 6 : index
    %c56_299 = arith.constant 56 : index
    %170 = vector.load %arg7[%c6_298, %c56_299] : memref<9x64xbf16, #tpu.memory_space<vmem>>, vector<1x8xbf16>
    tpu.vector_store %arg7[%c6_298, %c56_299], %169 {strides = array<i32>} : memref<9x64xbf16, #tpu.memory_space<vmem>>, vector<1x8xbf16>,
    %c0_300 = arith.constant 0 : index
    %c0_301 = arith.constant 0 : index
    %c0_302 = arith.constant 0 : index
    %c21_303 = arith.constant 21 : index
    %171 = vector.load %arg3[%c0_300, %c0_301, %c0_302, %c21_303] : memref<1x1x1x100xbf16, #tpu.memory_space<vmem>>, vector<1x1x1x8xbf16>
    %172 = vector.shape_cast %171 : vector<1x1x1x8xbf16> to vector<1x8xbf16>
    %c7 = arith.constant 7 : index
    %c0_304 = arith.constant 0 : index
    %173 = vector.load %arg7[%c7, %c0_304] : memref<9x64xbf16, #tpu.memory_space<vmem>>, vector<1x8xbf16>
    tpu.vector_store %arg7[%c7, %c0_304], %172 {strides = array<i32>} : memref<9x64xbf16, #tpu.memory_space<vmem>>, vector<1x8xbf16>,
    %c0_305 = arith.constant 0 : index
    %c0_306 = arith.constant 0 : index
    %c0_307 = arith.constant 0 : index
    %c31_308 = arith.constant 31 : index
    %174 = vector.load %arg3[%c0_305, %c0_306, %c0_307, %c31_308] : memref<1x1x1x100xbf16, #tpu.memory_space<vmem>>, vector<1x1x1x8xbf16>
    %175 = vector.shape_cast %174 : vector<1x1x1x8xbf16> to vector<1x8xbf16>
    %c7_309 = arith.constant 7 : index
    %c8_310 = arith.constant 8 : index
    %176 = vector.load %arg7[%c7_309, %c8_310] : memref<9x64xbf16, #tpu.memory_space<vmem>>, vector<1x8xbf16>
    tpu.vector_store %arg7[%c7_309, %c8_310], %175 {strides = array<i32>} : memref<9x64xbf16, #tpu.memory_space<vmem>>, vector<1x8xbf16>,
    %c0_311 = arith.constant 0 : index
    %c0_312 = arith.constant 0 : index
    %c0_313 = arith.constant 0 : index
    %c41_314 = arith.constant 41 : index
    %177 = vector.load %arg3[%c0_311, %c0_312, %c0_313, %c41_314] : memref<1x1x1x100xbf16, #tpu.memory_space<vmem>>, vector<1x1x1x8xbf16>
    %178 = vector.shape_cast %177 : vector<1x1x1x8xbf16> to vector<1x8xbf16>
    %c7_315 = arith.constant 7 : index
    %c16_316 = arith.constant 16 : index
    %179 = vector.load %arg7[%c7_315, %c16_316] : memref<9x64xbf16, #tpu.memory_space<vmem>>, vector<1x8xbf16>
    tpu.vector_store %arg7[%c7_315, %c16_316], %178 {strides = array<i32>} : memref<9x64xbf16, #tpu.memory_space<vmem>>, vector<1x8xbf16>,
    %c0_317 = arith.constant 0 : index
    %c0_318 = arith.constant 0 : index
    %c0_319 = arith.constant 0 : index
    %c51_320 = arith.constant 51 : index
    %180 = vector.load %arg3[%c0_317, %c0_318, %c0_319, %c51_320] : memref<1x1x1x100xbf16, #tpu.memory_space<vmem>>, vector<1x1x1x8xbf16>
    %181 = vector.shape_cast %180 : vector<1x1x1x8xbf16> to vector<1x8xbf16>
    %c7_321 = arith.constant 7 : index
    %c24_322 = arith.constant 24 : index
    %182 = vector.load %arg7[%c7_321, %c24_322] : memref<9x64xbf16, #tpu.memory_space<vmem>>, vector<1x8xbf16>
    tpu.vector_store %arg7[%c7_321, %c24_322], %181 {strides = array<i32>} : memref<9x64xbf16, #tpu.memory_space<vmem>>, vector<1x8xbf16>,
    %c0_323 = arith.constant 0 : index
    %c0_324 = arith.constant 0 : index
    %c0_325 = arith.constant 0 : index
    %c61_326 = arith.constant 61 : index
    %183 = vector.load %arg3[%c0_323, %c0_324, %c0_325, %c61_326] : memref<1x1x1x100xbf16, #tpu.memory_space<vmem>>, vector<1x1x1x8xbf16>
    %184 = vector.shape_cast %183 : vector<1x1x1x8xbf16> to vector<1x8xbf16>
    %c7_327 = arith.constant 7 : index
    %c32_328 = arith.constant 32 : index
    %185 = vector.load %arg7[%c7_327, %c32_328] : memref<9x64xbf16, #tpu.memory_space<vmem>>, vector<1x8xbf16>
    tpu.vector_store %arg7[%c7_327, %c32_328], %184 {strides = array<i32>} : memref<9x64xbf16, #tpu.memory_space<vmem>>, vector<1x8xbf16>,
    %c0_329 = arith.constant 0 : index
    %c0_330 = arith.constant 0 : index
    %c0_331 = arith.constant 0 : index
    %c71_332 = arith.constant 71 : index
    %186 = vector.load %arg3[%c0_329, %c0_330, %c0_331, %c71_332] : memref<1x1x1x100xbf16, #tpu.memory_space<vmem>>, vector<1x1x1x8xbf16>
    %187 = vector.shape_cast %186 : vector<1x1x1x8xbf16> to vector<1x8xbf16>
    %c7_333 = arith.constant 7 : index
    %c40_334 = arith.constant 40 : index
    %188 = vector.load %arg7[%c7_333, %c40_334] : memref<9x64xbf16, #tpu.memory_space<vmem>>, vector<1x8xbf16>
    tpu.vector_store %arg7[%c7_333, %c40_334], %187 {strides = array<i32>} : memref<9x64xbf16, #tpu.memory_space<vmem>>, vector<1x8xbf16>,
    %c0_335 = arith.constant 0 : index
    %c0_336 = arith.constant 0 : index
    %c0_337 = arith.constant 0 : index
    %c81_338 = arith.constant 81 : index
    %189 = vector.load %arg3[%c0_335, %c0_336, %c0_337, %c81_338] : memref<1x1x1x100xbf16, #tpu.memory_space<vmem>>, vector<1x1x1x8xbf16>
    %190 = vector.shape_cast %189 : vector<1x1x1x8xbf16> to vector<1x8xbf16>
    %c7_339 = arith.constant 7 : index
    %c48_340 = arith.constant 48 : index
    %191 = vector.load %arg7[%c7_339, %c48_340] : memref<9x64xbf16, #tpu.memory_space<vmem>>, vector<1x8xbf16>
    tpu.vector_store %arg7[%c7_339, %c48_340], %190 {strides = array<i32>} : memref<9x64xbf16, #tpu.memory_space<vmem>>, vector<1x8xbf16>,
    %c0_341 = arith.constant 0 : index
    %c0_342 = arith.constant 0 : index
    %c0_343 = arith.constant 0 : index
    %c91 = arith.constant 91 : index
    %192 = vector.load %arg3[%c0_341, %c0_342, %c0_343, %c91] : memref<1x1x1x100xbf16, #tpu.memory_space<vmem>>, vector<1x1x1x8xbf16>
    %193 = vector.shape_cast %192 : vector<1x1x1x8xbf16> to vector<1x8xbf16>
    %c7_344 = arith.constant 7 : index
    %c56_345 = arith.constant 56 : index
    %194 = vector.load %arg7[%c7_344, %c56_345] : memref<9x64xbf16, #tpu.memory_space<vmem>>, vector<1x8xbf16>
    tpu.vector_store %arg7[%c7_344, %c56_345], %193 {strides = array<i32>} : memref<9x64xbf16, #tpu.memory_space<vmem>>, vector<1x8xbf16>,
    %c0_346 = arith.constant 0 : index
    %c0_347 = arith.constant 0 : index
    %c0_348 = arith.constant 0 : index
    %c22_349 = arith.constant 22 : index
    %195 = vector.load %arg3[%c0_346, %c0_347, %c0_348, %c22_349] : memref<1x1x1x100xbf16, #tpu.memory_space<vmem>>, vector<1x1x1x8xbf16>
    %196 = vector.shape_cast %195 : vector<1x1x1x8xbf16> to vector<1x8xbf16>
    %c8_350 = arith.constant 8 : index
    %c0_351 = arith.constant 0 : index
    %197 = vector.load %arg7[%c8_350, %c0_351] : memref<9x64xbf16, #tpu.memory_space<vmem>>, vector<1x8xbf16>
    tpu.vector_store %arg7[%c8_350, %c0_351], %196 {strides = array<i32>} : memref<9x64xbf16, #tpu.memory_space<vmem>>, vector<1x8xbf16>,
    %c0_352 = arith.constant 0 : index
    %c0_353 = arith.constant 0 : index
    %c0_354 = arith.constant 0 : index
    %c32_355 = arith.constant 32 : index
    %198 = vector.load %arg3[%c0_352, %c0_353, %c0_354, %c32_355] : memref<1x1x1x100xbf16, #tpu.memory_space<vmem>>, vector<1x1x1x8xbf16>
    %199 = vector.shape_cast %198 : vector<1x1x1x8xbf16> to vector<1x8xbf16>
    %c8_356 = arith.constant 8 : index
    %c8_357 = arith.constant 8 : index
    %200 = vector.load %arg7[%c8_356, %c8_357] : memref<9x64xbf16, #tpu.memory_space<vmem>>, vector<1x8xbf16>
    tpu.vector_store %arg7[%c8_356, %c8_357], %199 {strides = array<i32>} : memref<9x64xbf16, #tpu.memory_space<vmem>>, vector<1x8xbf16>,
    %c0_358 = arith.constant 0 : index
    %c0_359 = arith.constant 0 : index
    %c0_360 = arith.constant 0 : index
    %c42_361 = arith.constant 42 : index
    %201 = vector.load %arg3[%c0_358, %c0_359, %c0_360, %c42_361] : memref<1x1x1x100xbf16, #tpu.memory_space<vmem>>, vector<1x1x1x8xbf16>
    %202 = vector.shape_cast %201 : vector<1x1x1x8xbf16> to vector<1x8xbf16>
    %c8_362 = arith.constant 8 : index
    %c16_363 = arith.constant 16 : index
    %203 = vector.load %arg7[%c8_362, %c16_363] : memref<9x64xbf16, #tpu.memory_space<vmem>>, vector<1x8xbf16>
    tpu.vector_store %arg7[%c8_362, %c16_363], %202 {strides = array<i32>} : memref<9x64xbf16, #tpu.memory_space<vmem>>, vector<1x8xbf16>,
    %c0_364 = arith.constant 0 : index
    %c0_365 = arith.constant 0 : index
    %c0_366 = arith.constant 0 : index
    %c52_367 = arith.constant 52 : index
    %204 = vector.load %arg3[%c0_364, %c0_365, %c0_366, %c52_367] : memref<1x1x1x100xbf16, #tpu.memory_space<vmem>>, vector<1x1x1x8xbf16>
    %205 = vector.shape_cast %204 : vector<1x1x1x8xbf16> to vector<1x8xbf16>
    %c8_368 = arith.constant 8 : index
    %c24_369 = arith.constant 24 : index
    %206 = vector.load %arg7[%c8_368, %c24_369] : memref<9x64xbf16, #tpu.memory_space<vmem>>, vector<1x8xbf16>
    tpu.vector_store %arg7[%c8_368, %c24_369], %205 {strides = array<i32>} : memref<9x64xbf16, #tpu.memory_space<vmem>>, vector<1x8xbf16>,
    %c0_370 = arith.constant 0 : index
    %c0_371 = arith.constant 0 : index
    %c0_372 = arith.constant 0 : index
    %c62_373 = arith.constant 62 : index
    %207 = vector.load %arg3[%c0_370, %c0_371, %c0_372, %c62_373] : memref<1x1x1x100xbf16, #tpu.memory_space<vmem>>, vector<1x1x1x8xbf16>
    %208 = vector.shape_cast %207 : vector<1x1x1x8xbf16> to vector<1x8xbf16>
    %c8_374 = arith.constant 8 : index
    %c32_375 = arith.constant 32 : index
    %209 = vector.load %arg7[%c8_374, %c32_375] : memref<9x64xbf16, #tpu.memory_space<vmem>>, vector<1x8xbf16>
    tpu.vector_store %arg7[%c8_374, %c32_375], %208 {strides = array<i32>} : memref<9x64xbf16, #tpu.memory_space<vmem>>, vector<1x8xbf16>,
    %c0_376 = arith.constant 0 : index
    %c0_377 = arith.constant 0 : index
    %c0_378 = arith.constant 0 : index
    %c72_379 = arith.constant 72 : index
    %210 = vector.load %arg3[%c0_376, %c0_377, %c0_378, %c72_379] : memref<1x1x1x100xbf16, #tpu.memory_space<vmem>>, vector<1x1x1x8xbf16>
    %211 = vector.shape_cast %210 : vector<1x1x1x8xbf16> to vector<1x8xbf16>
    %c8_380 = arith.constant 8 : index
    %c40_381 = arith.constant 40 : index
    %212 = vector.load %arg7[%c8_380, %c40_381] : memref<9x64xbf16, #tpu.memory_space<vmem>>, vector<1x8xbf16>
    tpu.vector_store %arg7[%c8_380, %c40_381], %211 {strides = array<i32>} : memref<9x64xbf16, #tpu.memory_space<vmem>>, vector<1x8xbf16>,
    %c0_382 = arith.constant 0 : index
    %c0_383 = arith.constant 0 : index
    %c0_384 = arith.constant 0 : index
    %c82_385 = arith.constant 82 : index
    %213 = vector.load %arg3[%c0_382, %c0_383, %c0_384, %c82_385] : memref<1x1x1x100xbf16, #tpu.memory_space<vmem>>, vector<1x1x1x8xbf16>
    %214 = vector.shape_cast %213 : vector<1x1x1x8xbf16> to vector<1x8xbf16>
    %c8_386 = arith.constant 8 : index
    %c48_387 = arith.constant 48 : index
    %215 = vector.load %arg7[%c8_386, %c48_387] : memref<9x64xbf16, #tpu.memory_space<vmem>>, vector<1x8xbf16>
    tpu.vector_store %arg7[%c8_386, %c48_387], %214 {strides = array<i32>} : memref<9x64xbf16, #tpu.memory_space<vmem>>, vector<1x8xbf16>,
    %c0_388 = arith.constant 0 : index
    %c0_389 = arith.constant 0 : index
    %c0_390 = arith.constant 0 : index
    %c92 = arith.constant 92 : index
    %216 = vector.load %arg3[%c0_388, %c0_389, %c0_390, %c92] : memref<1x1x1x100xbf16, #tpu.memory_space<vmem>>, vector<1x1x1x8xbf16>
    %217 = vector.shape_cast %216 : vector<1x1x1x8xbf16> to vector<1x8xbf16>
    %c8_391 = arith.constant 8 : index
    %c56_392 = arith.constant 56 : index
    %218 = vector.load %arg7[%c8_391, %c56_392] : memref<9x64xbf16, #tpu.memory_space<vmem>>, vector<1x8xbf16>
    tpu.vector_store %arg7[%c8_391, %c56_392], %217 {strides = array<i32>} : memref<9x64xbf16, #tpu.memory_space<vmem>>, vector<1x8xbf16>,
    %c0_393 = arith.constant 0 : index
    %c0_394 = arith.constant 0 : index
    %219 = vector.load %arg8[%c0_393, %c0_394] : memref<8x64xf32, #tpu.memory_space<vmem>>, vector<8x64xf32>
    %c0_395 = arith.constant 0 : index
    %c0_396 = arith.constant 0 : index
    %c0_397 = arith.constant 0 : index
    %220 = vector.load %arg4[%c0_395, %c0_396, %c0_397] : memref<1x8x9xbf16, #tpu.memory_space<vmem>>, vector<1x8x9xbf16>
    %221 = vector.shape_cast %220 : vector<1x8x9xbf16> to vector<8x9xbf16>
    %c0_398 = arith.constant 0 : index
    %c0_399 = arith.constant 0 : index
    %222 = vector.load %arg7[%c0_398, %c0_399] : memref<9x64xbf16, #tpu.memory_space<vmem>>, vector<9x64xbf16>
    %cst = arith.constant dense<0.000000e+00> : vector<8x64xf32>
    %223 = tpu.matmul %221, %222, %cst {dimension_numbers = #tpu.dot_dimension_numbers<[1], [0], [0], [1], [0, 0, 1, 1], [], []>} : vector<8x9xbf16>, vector<9x64xbf16>, vector<8x64xf32> -> vector<8x64xf32>
    %224 = arith.addf %219, %223 : vector<8x64xf32>
    %c0_400 = arith.constant 0 : index
    %c0_401 = arith.constant 0 : index
    %225 = vector.load %arg8[%c0_400, %c0_401] : memref<8x64xf32, #tpu.memory_space<vmem>>, vector<8x64xf32>
    tpu.vector_store %arg8[%c0_400, %c0_401], %224 {strides = array<i32>} : memref<8x64xf32, #tpu.memory_space<vmem>>, vector<8x64xf32>,
    %c2_i32 = arith.constant 2 : i32
    %226 = arith.cmpi eq, %arg2, %c2_i32 : i32
    %227 = arith.extui %226 : i1 to i32
    %c0_i32_402 = arith.constant 0 : i32
    %228 = arith.cmpi ne, %227, %c0_i32_402 : i32
    scf.if %228 {
      %c0_403 = arith.constant 0 : index
      %c0_404 = arith.constant 0 : index
      %229 = vector.load %arg8[%c0_403, %c0_404] : memref<8x64xf32, #tpu.memory_space<vmem>>, vector<8x64xf32>
      %c0_405 = arith.constant 0 : index
      %c0_406 = arith.constant 0 : index
      %230 = vector.load %arg5[%c0_405, %c0_406] : memref<8x1xf32, #tpu.memory_space<vmem>>, vector<8x1xf32>
      %231 = vector.broadcast %230 : vector<8x1xf32> to vector<8x64xf32>
      %232 = arith.addf %229, %231 : vector<8x64xf32>
      %cst_407 = arith.constant 0.000000e+00 : f32
      %233 = vector.broadcast %cst_407 : f32 to vector<8x64xf32>
      %234 = arith.maximumf %232, %233 : vector<8x64xf32>
      %235 = arith.truncf %234 : vector<8x64xf32> to vector<8x64xbf16>
      %c0_408 = arith.constant 0 : index
      %c0_409 = arith.constant 0 : index
      %c0_410 = arith.constant 0 : index
      %c0_411 = arith.constant 0 : index
      %236 = vector.load %arg6[%c0_408, %c0_409, %c0_410, %c0_411] : memref<1x1x8x64xbf16, #tpu.memory_space<vmem>>, vector<1x1x8x64xbf16>
      %237 = vector.shape_cast %236 : vector<1x1x8x64xbf16> to vector<8x64xbf16>
      %238 = vector.shape_cast %235 : vector<8x64xbf16> to vector<1x1x8x64xbf16>
      tpu.vector_store %arg6[%c0_408, %c0_409, %c0_410, %c0_411], %238 {strides = array<i32>} : memref<1x1x8x64xbf16, #tpu.memory_space<vmem>>, vector<1x1x8x64xbf16>,
    } else {
    }
    return
  }
  func.func @transform_0(%arg0: i32, %arg1: i32, %arg2: i32) -> (i32, i32, i32, i32) {
    %0 = arith.addi %arg1, %arg2 : i32
    %c0_i32 = arith.constant 0 : i32
    %c0_i32_0 = arith.constant 0 : i32
    %c0_i32_1 = arith.constant 0 : i32
    return %arg0, %0, %c0_i32, %c0_i32_0 : i32, i32, i32, i32
  }
  func.func @transform_1(%arg0: i32, %arg1: i32, %arg2: i32) -> (i32, i32, i32) {
    %c0_i32 = arith.constant 0 : i32
    %c0_i32_0 = arith.constant 0 : i32
    %c0_i32_1 = arith.constant 0 : i32
    return %arg2, %c0_i32, %c0_i32_0 : i32, i32, i32
  }
  func.func @transform_2(%arg0: i32, %arg1: i32, %arg2: i32) -> (i32, i32) {
    %c0_i32 = arith.constant 0 : i32
    %c0_i32_0 = arith.constant 0 : i32
    %c0_i32_1 = arith.constant 0 : i32
    return %c0_i32, %c0_i32_0 : i32, i32
  }
  func.func @transform_3(%arg0: i32, %arg1: i32, %arg2: i32) -> (i32, i32, i32, i32) {
    %c0_i32 = arith.constant 0 : i32
    %c0_i32_0 = arith.constant 0 : i32
    %c0_i32_1 = arith.constant 0 : i32
    return %arg0, %arg1, %c0_i32, %c0_i32_0 : i32, i32, i32, i32
  }
}

module attributes {stable_mosaic.version = 11 : i64} {
  func.func @_conv3_slab_kernel(%arg0: i32, %arg1: i32, %arg2: i32, %arg3: memref<1x1x8x100xbf16, #tpu.memory_space<vmem>>, %arg4: memref<1x8x72xbf16, #tpu.memory_space<vmem>>, %arg5: memref<8x1xf32, #tpu.memory_space<vmem>>, %arg6: memref<1x1x8x64xbf16, #tpu.memory_space<vmem>>, %arg7: memref<72x64xbf16, #tpu.memory_space<vmem>>, %arg8: memref<8x64xf32, #tpu.memory_space<vmem>>) attributes {dimension_semantics = [#tpu.dimension_semantics<parallel>, #tpu.dimension_semantics<parallel>, #tpu.dimension_semantics<arbitrary>], iteration_bounds = array<i64: 2, 8, 3>, scalar_prefetch = 0 : i64, scratch_operands = 2 : i64, tpu.core_type = #tpu.core_type<tc>, window_params = [{transform_indices = @transform_0, window_bounds = array<i64: 1, 1, 8, 100>}, {transform_indices = @transform_1, window_bounds = array<i64: 1, 8, 72>}, {pipeline_mode = #tpu.pipeline_mode<synchronous>, transform_indices = @transform_2, window_bounds = array<i64: 8, 1>}, {transform_indices = @transform_3, window_bounds = array<i64: 1, 1, 8, 64>}]} {
    %c0_i32 = arith.constant 0 : i32
    %0 = arith.cmpi eq, %arg2, %c0_i32 : i32
    %1 = arith.extui %0 : i1 to i32
    %c0_i32_0 = arith.constant 0 : i32
    %2 = arith.cmpi ne, %1, %c0_i32_0 : i32
    scf.if %2 {
      %cst_407 = arith.constant 0.000000e+00 : f32
      %229 = vector.broadcast %cst_407 : f32 to vector<8x64xf32>
      %c0_408 = arith.constant 0 : index
      %c0_409 = arith.constant 0 : index
      %230 = vector.load %arg8[%c0_408, %c0_409] : memref<8x64xf32, #tpu.memory_space<vmem>>, vector<8x64xf32>
      tpu.vector_store %arg8[%c0_408, %c0_409], %229 {strides = array<i32>} : memref<8x64xf32, #tpu.memory_space<vmem>>, vector<8x64xf32>,
    } else {
    }
    %c0 = arith.constant 0 : index
    %c0_1 = arith.constant 0 : index
    %c0_2 = arith.constant 0 : index
    %c0_3 = arith.constant 0 : index
    %3 = vector.load %arg3[%c0, %c0_1, %c0_2, %c0_3] : memref<1x1x8x100xbf16, #tpu.memory_space<vmem>>, vector<1x1x8x8xbf16>
    %4 = vector.shape_cast %3 : vector<1x1x8x8xbf16> to vector<8x8xbf16>
    %c0_4 = arith.constant 0 : index
    %c0_5 = arith.constant 0 : index
    %5 = vector.load %arg7[%c0_4, %c0_5] : memref<72x64xbf16, #tpu.memory_space<vmem>>, vector<8x8xbf16>
    tpu.vector_store %arg7[%c0_4, %c0_5], %4 {strides = array<i32>} : memref<72x64xbf16, #tpu.memory_space<vmem>>, vector<8x8xbf16>,
    %c0_6 = arith.constant 0 : index
    %c0_7 = arith.constant 0 : index
    %c0_8 = arith.constant 0 : index
    %c10 = arith.constant 10 : index
    %6 = vector.load %arg3[%c0_6, %c0_7, %c0_8, %c10] : memref<1x1x8x100xbf16, #tpu.memory_space<vmem>>, vector<1x1x8x8xbf16>
    %7 = vector.shape_cast %6 : vector<1x1x8x8xbf16> to vector<8x8xbf16>
    %c0_9 = arith.constant 0 : index
    %c8 = arith.constant 8 : index
    %8 = vector.load %arg7[%c0_9, %c8] : memref<72x64xbf16, #tpu.memory_space<vmem>>, vector<8x8xbf16>
    tpu.vector_store %arg7[%c0_9, %c8], %7 {strides = array<i32>} : memref<72x64xbf16, #tpu.memory_space<vmem>>, vector<8x8xbf16>,
    %c0_10 = arith.constant 0 : index
    %c0_11 = arith.constant 0 : index
    %c0_12 = arith.constant 0 : index
    %c20 = arith.constant 20 : index
    %9 = vector.load %arg3[%c0_10, %c0_11, %c0_12, %c20] : memref<1x1x8x100xbf16, #tpu.memory_space<vmem>>, vector<1x1x8x8xbf16>
    %10 = vector.shape_cast %9 : vector<1x1x8x8xbf16> to vector<8x8xbf16>
    %c0_13 = arith.constant 0 : index
    %c16 = arith.constant 16 : index
    %11 = vector.load %arg7[%c0_13, %c16] : memref<72x64xbf16, #tpu.memory_space<vmem>>, vector<8x8xbf16>
    tpu.vector_store %arg7[%c0_13, %c16], %10 {strides = array<i32>} : memref<72x64xbf16, #tpu.memory_space<vmem>>, vector<8x8xbf16>,
    %c0_14 = arith.constant 0 : index
    %c0_15 = arith.constant 0 : index
    %c0_16 = arith.constant 0 : index
    %c30 = arith.constant 30 : index
    %12 = vector.load %arg3[%c0_14, %c0_15, %c0_16, %c30] : memref<1x1x8x100xbf16, #tpu.memory_space<vmem>>, vector<1x1x8x8xbf16>
    %13 = vector.shape_cast %12 : vector<1x1x8x8xbf16> to vector<8x8xbf16>
    %c0_17 = arith.constant 0 : index
    %c24 = arith.constant 24 : index
    %14 = vector.load %arg7[%c0_17, %c24] : memref<72x64xbf16, #tpu.memory_space<vmem>>, vector<8x8xbf16>
    tpu.vector_store %arg7[%c0_17, %c24], %13 {strides = array<i32>} : memref<72x64xbf16, #tpu.memory_space<vmem>>, vector<8x8xbf16>,
    %c0_18 = arith.constant 0 : index
    %c0_19 = arith.constant 0 : index
    %c0_20 = arith.constant 0 : index
    %c40 = arith.constant 40 : index
    %15 = vector.load %arg3[%c0_18, %c0_19, %c0_20, %c40] : memref<1x1x8x100xbf16, #tpu.memory_space<vmem>>, vector<1x1x8x8xbf16>
    %16 = vector.shape_cast %15 : vector<1x1x8x8xbf16> to vector<8x8xbf16>
    %c0_21 = arith.constant 0 : index
    %c32 = arith.constant 32 : index
    %17 = vector.load %arg7[%c0_21, %c32] : memref<72x64xbf16, #tpu.memory_space<vmem>>, vector<8x8xbf16>
    tpu.vector_store %arg7[%c0_21, %c32], %16 {strides = array<i32>} : memref<72x64xbf16, #tpu.memory_space<vmem>>, vector<8x8xbf16>,
    %c0_22 = arith.constant 0 : index
    %c0_23 = arith.constant 0 : index
    %c0_24 = arith.constant 0 : index
    %c50 = arith.constant 50 : index
    %18 = vector.load %arg3[%c0_22, %c0_23, %c0_24, %c50] : memref<1x1x8x100xbf16, #tpu.memory_space<vmem>>, vector<1x1x8x8xbf16>
    %19 = vector.shape_cast %18 : vector<1x1x8x8xbf16> to vector<8x8xbf16>
    %c0_25 = arith.constant 0 : index
    %c40_26 = arith.constant 40 : index
    %20 = vector.load %arg7[%c0_25, %c40_26] : memref<72x64xbf16, #tpu.memory_space<vmem>>, vector<8x8xbf16>
    tpu.vector_store %arg7[%c0_25, %c40_26], %19 {strides = array<i32>} : memref<72x64xbf16, #tpu.memory_space<vmem>>, vector<8x8xbf16>,
    %c0_27 = arith.constant 0 : index
    %c0_28 = arith.constant 0 : index
    %c0_29 = arith.constant 0 : index
    %c60 = arith.constant 60 : index
    %21 = vector.load %arg3[%c0_27, %c0_28, %c0_29, %c60] : memref<1x1x8x100xbf16, #tpu.memory_space<vmem>>, vector<1x1x8x8xbf16>
    %22 = vector.shape_cast %21 : vector<1x1x8x8xbf16> to vector<8x8xbf16>
    %c0_30 = arith.constant 0 : index
    %c48 = arith.constant 48 : index
    %23 = vector.load %arg7[%c0_30, %c48] : memref<72x64xbf16, #tpu.memory_space<vmem>>, vector<8x8xbf16>
    tpu.vector_store %arg7[%c0_30, %c48], %22 {strides = array<i32>} : memref<72x64xbf16, #tpu.memory_space<vmem>>, vector<8x8xbf16>,
    %c0_31 = arith.constant 0 : index
    %c0_32 = arith.constant 0 : index
    %c0_33 = arith.constant 0 : index
    %c70 = arith.constant 70 : index
    %24 = vector.load %arg3[%c0_31, %c0_32, %c0_33, %c70] : memref<1x1x8x100xbf16, #tpu.memory_space<vmem>>, vector<1x1x8x8xbf16>
    %25 = vector.shape_cast %24 : vector<1x1x8x8xbf16> to vector<8x8xbf16>
    %c0_34 = arith.constant 0 : index
    %c56 = arith.constant 56 : index
    %26 = vector.load %arg7[%c0_34, %c56] : memref<72x64xbf16, #tpu.memory_space<vmem>>, vector<8x8xbf16>
    tpu.vector_store %arg7[%c0_34, %c56], %25 {strides = array<i32>} : memref<72x64xbf16, #tpu.memory_space<vmem>>, vector<8x8xbf16>,
    %c0_35 = arith.constant 0 : index
    %c0_36 = arith.constant 0 : index
    %c0_37 = arith.constant 0 : index
    %c1 = arith.constant 1 : index
    %27 = vector.load %arg3[%c0_35, %c0_36, %c0_37, %c1] : memref<1x1x8x100xbf16, #tpu.memory_space<vmem>>, vector<1x1x8x8xbf16>
    %28 = vector.shape_cast %27 : vector<1x1x8x8xbf16> to vector<8x8xbf16>
    %c8_38 = arith.constant 8 : index
    %c0_39 = arith.constant 0 : index
    %29 = vector.load %arg7[%c8_38, %c0_39] : memref<72x64xbf16, #tpu.memory_space<vmem>>, vector<8x8xbf16>
    tpu.vector_store %arg7[%c8_38, %c0_39], %28 {strides = array<i32>} : memref<72x64xbf16, #tpu.memory_space<vmem>>, vector<8x8xbf16>,
    %c0_40 = arith.constant 0 : index
    %c0_41 = arith.constant 0 : index
    %c0_42 = arith.constant 0 : index
    %c11 = arith.constant 11 : index
    %30 = vector.load %arg3[%c0_40, %c0_41, %c0_42, %c11] : memref<1x1x8x100xbf16, #tpu.memory_space<vmem>>, vector<1x1x8x8xbf16>
    %31 = vector.shape_cast %30 : vector<1x1x8x8xbf16> to vector<8x8xbf16>
    %c8_43 = arith.constant 8 : index
    %c8_44 = arith.constant 8 : index
    %32 = vector.load %arg7[%c8_43, %c8_44] : memref<72x64xbf16, #tpu.memory_space<vmem>>, vector<8x8xbf16>
    tpu.vector_store %arg7[%c8_43, %c8_44], %31 {strides = array<i32>} : memref<72x64xbf16, #tpu.memory_space<vmem>>, vector<8x8xbf16>,
    %c0_45 = arith.constant 0 : index
    %c0_46 = arith.constant 0 : index
    %c0_47 = arith.constant 0 : index
    %c21 = arith.constant 21 : index
    %33 = vector.load %arg3[%c0_45, %c0_46, %c0_47, %c21] : memref<1x1x8x100xbf16, #tpu.memory_space<vmem>>, vector<1x1x8x8xbf16>
    %34 = vector.shape_cast %33 : vector<1x1x8x8xbf16> to vector<8x8xbf16>
    %c8_48 = arith.constant 8 : index
    %c16_49 = arith.constant 16 : index
    %35 = vector.load %arg7[%c8_48, %c16_49] : memref<72x64xbf16, #tpu.memory_space<vmem>>, vector<8x8xbf16>
    tpu.vector_store %arg7[%c8_48, %c16_49], %34 {strides = array<i32>} : memref<72x64xbf16, #tpu.memory_space<vmem>>, vector<8x8xbf16>,
    %c0_50 = arith.constant 0 : index
    %c0_51 = arith.constant 0 : index
    %c0_52 = arith.constant 0 : index
    %c31 = arith.constant 31 : index
    %36 = vector.load %arg3[%c0_50, %c0_51, %c0_52, %c31] : memref<1x1x8x100xbf16, #tpu.memory_space<vmem>>, vector<1x1x8x8xbf16>
    %37 = vector.shape_cast %36 : vector<1x1x8x8xbf16> to vector<8x8xbf16>
    %c8_53 = arith.constant 8 : index
    %c24_54 = arith.constant 24 : index
    %38 = vector.load %arg7[%c8_53, %c24_54] : memref<72x64xbf16, #tpu.memory_space<vmem>>, vector<8x8xbf16>
    tpu.vector_store %arg7[%c8_53, %c24_54], %37 {strides = array<i32>} : memref<72x64xbf16, #tpu.memory_space<vmem>>, vector<8x8xbf16>,
    %c0_55 = arith.constant 0 : index
    %c0_56 = arith.constant 0 : index
    %c0_57 = arith.constant 0 : index
    %c41 = arith.constant 41 : index
    %39 = vector.load %arg3[%c0_55, %c0_56, %c0_57, %c41] : memref<1x1x8x100xbf16, #tpu.memory_space<vmem>>, vector<1x1x8x8xbf16>
    %40 = vector.shape_cast %39 : vector<1x1x8x8xbf16> to vector<8x8xbf16>
    %c8_58 = arith.constant 8 : index
    %c32_59 = arith.constant 32 : index
    %41 = vector.load %arg7[%c8_58, %c32_59] : memref<72x64xbf16, #tpu.memory_space<vmem>>, vector<8x8xbf16>
    tpu.vector_store %arg7[%c8_58, %c32_59], %40 {strides = array<i32>} : memref<72x64xbf16, #tpu.memory_space<vmem>>, vector<8x8xbf16>,
    %c0_60 = arith.constant 0 : index
    %c0_61 = arith.constant 0 : index
    %c0_62 = arith.constant 0 : index
    %c51 = arith.constant 51 : index
    %42 = vector.load %arg3[%c0_60, %c0_61, %c0_62, %c51] : memref<1x1x8x100xbf16, #tpu.memory_space<vmem>>, vector<1x1x8x8xbf16>
    %43 = vector.shape_cast %42 : vector<1x1x8x8xbf16> to vector<8x8xbf16>
    %c8_63 = arith.constant 8 : index
    %c40_64 = arith.constant 40 : index
    %44 = vector.load %arg7[%c8_63, %c40_64] : memref<72x64xbf16, #tpu.memory_space<vmem>>, vector<8x8xbf16>
    tpu.vector_store %arg7[%c8_63, %c40_64], %43 {strides = array<i32>} : memref<72x64xbf16, #tpu.memory_space<vmem>>, vector<8x8xbf16>,
    %c0_65 = arith.constant 0 : index
    %c0_66 = arith.constant 0 : index
    %c0_67 = arith.constant 0 : index
    %c61 = arith.constant 61 : index
    %45 = vector.load %arg3[%c0_65, %c0_66, %c0_67, %c61] : memref<1x1x8x100xbf16, #tpu.memory_space<vmem>>, vector<1x1x8x8xbf16>
    %46 = vector.shape_cast %45 : vector<1x1x8x8xbf16> to vector<8x8xbf16>
    %c8_68 = arith.constant 8 : index
    %c48_69 = arith.constant 48 : index
    %47 = vector.load %arg7[%c8_68, %c48_69] : memref<72x64xbf16, #tpu.memory_space<vmem>>, vector<8x8xbf16>
    tpu.vector_store %arg7[%c8_68, %c48_69], %46 {strides = array<i32>} : memref<72x64xbf16, #tpu.memory_space<vmem>>, vector<8x8xbf16>,
    %c0_70 = arith.constant 0 : index
    %c0_71 = arith.constant 0 : index
    %c0_72 = arith.constant 0 : index
    %c71 = arith.constant 71 : index
    %48 = vector.load %arg3[%c0_70, %c0_71, %c0_72, %c71] : memref<1x1x8x100xbf16, #tpu.memory_space<vmem>>, vector<1x1x8x8xbf16>
    %49 = vector.shape_cast %48 : vector<1x1x8x8xbf16> to vector<8x8xbf16>
    %c8_73 = arith.constant 8 : index
    %c56_74 = arith.constant 56 : index
    %50 = vector.load %arg7[%c8_73, %c56_74] : memref<72x64xbf16, #tpu.memory_space<vmem>>, vector<8x8xbf16>
    tpu.vector_store %arg7[%c8_73, %c56_74], %49 {strides = array<i32>} : memref<72x64xbf16, #tpu.memory_space<vmem>>, vector<8x8xbf16>,
    %c0_75 = arith.constant 0 : index
    %c0_76 = arith.constant 0 : index
    %c0_77 = arith.constant 0 : index
    %c2 = arith.constant 2 : index
    %51 = vector.load %arg3[%c0_75, %c0_76, %c0_77, %c2] : memref<1x1x8x100xbf16, #tpu.memory_space<vmem>>, vector<1x1x8x8xbf16>
    %52 = vector.shape_cast %51 : vector<1x1x8x8xbf16> to vector<8x8xbf16>
    %c16_78 = arith.constant 16 : index
    %c0_79 = arith.constant 0 : index
    %53 = vector.load %arg7[%c16_78, %c0_79] : memref<72x64xbf16, #tpu.memory_space<vmem>>, vector<8x8xbf16>
    tpu.vector_store %arg7[%c16_78, %c0_79], %52 {strides = array<i32>} : memref<72x64xbf16, #tpu.memory_space<vmem>>, vector<8x8xbf16>,
    %c0_80 = arith.constant 0 : index
    %c0_81 = arith.constant 0 : index
    %c0_82 = arith.constant 0 : index
    %c12 = arith.constant 12 : index
    %54 = vector.load %arg3[%c0_80, %c0_81, %c0_82, %c12] : memref<1x1x8x100xbf16, #tpu.memory_space<vmem>>, vector<1x1x8x8xbf16>
    %55 = vector.shape_cast %54 : vector<1x1x8x8xbf16> to vector<8x8xbf16>
    %c16_83 = arith.constant 16 : index
    %c8_84 = arith.constant 8 : index
    %56 = vector.load %arg7[%c16_83, %c8_84] : memref<72x64xbf16, #tpu.memory_space<vmem>>, vector<8x8xbf16>
    tpu.vector_store %arg7[%c16_83, %c8_84], %55 {strides = array<i32>} : memref<72x64xbf16, #tpu.memory_space<vmem>>, vector<8x8xbf16>,
    %c0_85 = arith.constant 0 : index
    %c0_86 = arith.constant 0 : index
    %c0_87 = arith.constant 0 : index
    %c22 = arith.constant 22 : index
    %57 = vector.load %arg3[%c0_85, %c0_86, %c0_87, %c22] : memref<1x1x8x100xbf16, #tpu.memory_space<vmem>>, vector<1x1x8x8xbf16>
    %58 = vector.shape_cast %57 : vector<1x1x8x8xbf16> to vector<8x8xbf16>
    %c16_88 = arith.constant 16 : index
    %c16_89 = arith.constant 16 : index
    %59 = vector.load %arg7[%c16_88, %c16_89] : memref<72x64xbf16, #tpu.memory_space<vmem>>, vector<8x8xbf16>
    tpu.vector_store %arg7[%c16_88, %c16_89], %58 {strides = array<i32>} : memref<72x64xbf16, #tpu.memory_space<vmem>>, vector<8x8xbf16>,
    %c0_90 = arith.constant 0 : index
    %c0_91 = arith.constant 0 : index
    %c0_92 = arith.constant 0 : index
    %c32_93 = arith.constant 32 : index
    %60 = vector.load %arg3[%c0_90, %c0_91, %c0_92, %c32_93] : memref<1x1x8x100xbf16, #tpu.memory_space<vmem>>, vector<1x1x8x8xbf16>
    %61 = vector.shape_cast %60 : vector<1x1x8x8xbf16> to vector<8x8xbf16>
    %c16_94 = arith.constant 16 : index
    %c24_95 = arith.constant 24 : index
    %62 = vector.load %arg7[%c16_94, %c24_95] : memref<72x64xbf16, #tpu.memory_space<vmem>>, vector<8x8xbf16>
    tpu.vector_store %arg7[%c16_94, %c24_95], %61 {strides = array<i32>} : memref<72x64xbf16, #tpu.memory_space<vmem>>, vector<8x8xbf16>,
    %c0_96 = arith.constant 0 : index
    %c0_97 = arith.constant 0 : index
    %c0_98 = arith.constant 0 : index
    %c42 = arith.constant 42 : index
    %63 = vector.load %arg3[%c0_96, %c0_97, %c0_98, %c42] : memref<1x1x8x100xbf16, #tpu.memory_space<vmem>>, vector<1x1x8x8xbf16>
    %64 = vector.shape_cast %63 : vector<1x1x8x8xbf16> to vector<8x8xbf16>
    %c16_99 = arith.constant 16 : index
    %c32_100 = arith.constant 32 : index
    %65 = vector.load %arg7[%c16_99, %c32_100] : memref<72x64xbf16, #tpu.memory_space<vmem>>, vector<8x8xbf16>
    tpu.vector_store %arg7[%c16_99, %c32_100], %64 {strides = array<i32>} : memref<72x64xbf16, #tpu.memory_space<vmem>>, vector<8x8xbf16>,
    %c0_101 = arith.constant 0 : index
    %c0_102 = arith.constant 0 : index
    %c0_103 = arith.constant 0 : index
    %c52 = arith.constant 52 : index
    %66 = vector.load %arg3[%c0_101, %c0_102, %c0_103, %c52] : memref<1x1x8x100xbf16, #tpu.memory_space<vmem>>, vector<1x1x8x8xbf16>
    %67 = vector.shape_cast %66 : vector<1x1x8x8xbf16> to vector<8x8xbf16>
    %c16_104 = arith.constant 16 : index
    %c40_105 = arith.constant 40 : index
    %68 = vector.load %arg7[%c16_104, %c40_105] : memref<72x64xbf16, #tpu.memory_space<vmem>>, vector<8x8xbf16>
    tpu.vector_store %arg7[%c16_104, %c40_105], %67 {strides = array<i32>} : memref<72x64xbf16, #tpu.memory_space<vmem>>, vector<8x8xbf16>,
    %c0_106 = arith.constant 0 : index
    %c0_107 = arith.constant 0 : index
    %c0_108 = arith.constant 0 : index
    %c62 = arith.constant 62 : index
    %69 = vector.load %arg3[%c0_106, %c0_107, %c0_108, %c62] : memref<1x1x8x100xbf16, #tpu.memory_space<vmem>>, vector<1x1x8x8xbf16>
    %70 = vector.shape_cast %69 : vector<1x1x8x8xbf16> to vector<8x8xbf16>
    %c16_109 = arith.constant 16 : index
    %c48_110 = arith.constant 48 : index
    %71 = vector.load %arg7[%c16_109, %c48_110] : memref<72x64xbf16, #tpu.memory_space<vmem>>, vector<8x8xbf16>
    tpu.vector_store %arg7[%c16_109, %c48_110], %70 {strides = array<i32>} : memref<72x64xbf16, #tpu.memory_space<vmem>>, vector<8x8xbf16>,
    %c0_111 = arith.constant 0 : index
    %c0_112 = arith.constant 0 : index
    %c0_113 = arith.constant 0 : index
    %c72 = arith.constant 72 : index
    %72 = vector.load %arg3[%c0_111, %c0_112, %c0_113, %c72] : memref<1x1x8x100xbf16, #tpu.memory_space<vmem>>, vector<1x1x8x8xbf16>
    %73 = vector.shape_cast %72 : vector<1x1x8x8xbf16> to vector<8x8xbf16>
    %c16_114 = arith.constant 16 : index
    %c56_115 = arith.constant 56 : index
    %74 = vector.load %arg7[%c16_114, %c56_115] : memref<72x64xbf16, #tpu.memory_space<vmem>>, vector<8x8xbf16>
    tpu.vector_store %arg7[%c16_114, %c56_115], %73 {strides = array<i32>} : memref<72x64xbf16, #tpu.memory_space<vmem>>, vector<8x8xbf16>,
    %c0_116 = arith.constant 0 : index
    %c0_117 = arith.constant 0 : index
    %c0_118 = arith.constant 0 : index
    %c10_119 = arith.constant 10 : index
    %75 = vector.load %arg3[%c0_116, %c0_117, %c0_118, %c10_119] : memref<1x1x8x100xbf16, #tpu.memory_space<vmem>>, vector<1x1x8x8xbf16>
    %76 = vector.shape_cast %75 : vector<1x1x8x8xbf16> to vector<8x8xbf16>
    %c24_120 = arith.constant 24 : index
    %c0_121 = arith.constant 0 : index
    %77 = vector.load %arg7[%c24_120, %c0_121] : memref<72x64xbf16, #tpu.memory_space<vmem>>, vector<8x8xbf16>
    tpu.vector_store %arg7[%c24_120, %c0_121], %76 {strides = array<i32>} : memref<72x64xbf16, #tpu.memory_space<vmem>>, vector<8x8xbf16>,
    %c0_122 = arith.constant 0 : index
    %c0_123 = arith.constant 0 : index
    %c0_124 = arith.constant 0 : index
    %c20_125 = arith.constant 20 : index
    %78 = vector.load %arg3[%c0_122, %c0_123, %c0_124, %c20_125] : memref<1x1x8x100xbf16, #tpu.memory_space<vmem>>, vector<1x1x8x8xbf16>
    %79 = vector.shape_cast %78 : vector<1x1x8x8xbf16> to vector<8x8xbf16>
    %c24_126 = arith.constant 24 : index
    %c8_127 = arith.constant 8 : index
    %80 = vector.load %arg7[%c24_126, %c8_127] : memref<72x64xbf16, #tpu.memory_space<vmem>>, vector<8x8xbf16>
    tpu.vector_store %arg7[%c24_126, %c8_127], %79 {strides = array<i32>} : memref<72x64xbf16, #tpu.memory_space<vmem>>, vector<8x8xbf16>,
    %c0_128 = arith.constant 0 : index
    %c0_129 = arith.constant 0 : index
    %c0_130 = arith.constant 0 : index
    %c30_131 = arith.constant 30 : index
    %81 = vector.load %arg3[%c0_128, %c0_129, %c0_130, %c30_131] : memref<1x1x8x100xbf16, #tpu.memory_space<vmem>>, vector<1x1x8x8xbf16>
    %82 = vector.shape_cast %81 : vector<1x1x8x8xbf16> to vector<8x8xbf16>
    %c24_132 = arith.constant 24 : index
    %c16_133 = arith.constant 16 : index
    %83 = vector.load %arg7[%c24_132, %c16_133] : memref<72x64xbf16, #tpu.memory_space<vmem>>, vector<8x8xbf16>
    tpu.vector_store %arg7[%c24_132, %c16_133], %82 {strides = array<i32>} : memref<72x64xbf16, #tpu.memory_space<vmem>>, vector<8x8xbf16>,
    %c0_134 = arith.constant 0 : index
    %c0_135 = arith.constant 0 : index
    %c0_136 = arith.constant 0 : index
    %c40_137 = arith.constant 40 : index
    %84 = vector.load %arg3[%c0_134, %c0_135, %c0_136, %c40_137] : memref<1x1x8x100xbf16, #tpu.memory_space<vmem>>, vector<1x1x8x8xbf16>
    %85 = vector.shape_cast %84 : vector<1x1x8x8xbf16> to vector<8x8xbf16>
    %c24_138 = arith.constant 24 : index
    %c24_139 = arith.constant 24 : index
    %86 = vector.load %arg7[%c24_138, %c24_139] : memref<72x64xbf16, #tpu.memory_space<vmem>>, vector<8x8xbf16>
    tpu.vector_store %arg7[%c24_138, %c24_139], %85 {strides = array<i32>} : memref<72x64xbf16, #tpu.memory_space<vmem>>, vector<8x8xbf16>,
    %c0_140 = arith.constant 0 : index
    %c0_141 = arith.constant 0 : index
    %c0_142 = arith.constant 0 : index
    %c50_143 = arith.constant 50 : index
    %87 = vector.load %arg3[%c0_140, %c0_141, %c0_142, %c50_143] : memref<1x1x8x100xbf16, #tpu.memory_space<vmem>>, vector<1x1x8x8xbf16>
    %88 = vector.shape_cast %87 : vector<1x1x8x8xbf16> to vector<8x8xbf16>
    %c24_144 = arith.constant 24 : index
    %c32_145 = arith.constant 32 : index
    %89 = vector.load %arg7[%c24_144, %c32_145] : memref<72x64xbf16, #tpu.memory_space<vmem>>, vector<8x8xbf16>
    tpu.vector_store %arg7[%c24_144, %c32_145], %88 {strides = array<i32>} : memref<72x64xbf16, #tpu.memory_space<vmem>>, vector<8x8xbf16>,
    %c0_146 = arith.constant 0 : index
    %c0_147 = arith.constant 0 : index
    %c0_148 = arith.constant 0 : index
    %c60_149 = arith.constant 60 : index
    %90 = vector.load %arg3[%c0_146, %c0_147, %c0_148, %c60_149] : memref<1x1x8x100xbf16, #tpu.memory_space<vmem>>, vector<1x1x8x8xbf16>
    %91 = vector.shape_cast %90 : vector<1x1x8x8xbf16> to vector<8x8xbf16>
    %c24_150 = arith.constant 24 : index
    %c40_151 = arith.constant 40 : index
    %92 = vector.load %arg7[%c24_150, %c40_151] : memref<72x64xbf16, #tpu.memory_space<vmem>>, vector<8x8xbf16>
    tpu.vector_store %arg7[%c24_150, %c40_151], %91 {strides = array<i32>} : memref<72x64xbf16, #tpu.memory_space<vmem>>, vector<8x8xbf16>,
    %c0_152 = arith.constant 0 : index
    %c0_153 = arith.constant 0 : index
    %c0_154 = arith.constant 0 : index
    %c70_155 = arith.constant 70 : index
    %93 = vector.load %arg3[%c0_152, %c0_153, %c0_154, %c70_155] : memref<1x1x8x100xbf16, #tpu.memory_space<vmem>>, vector<1x1x8x8xbf16>
    %94 = vector.shape_cast %93 : vector<1x1x8x8xbf16> to vector<8x8xbf16>
    %c24_156 = arith.constant 24 : index
    %c48_157 = arith.constant 48 : index
    %95 = vector.load %arg7[%c24_156, %c48_157] : memref<72x64xbf16, #tpu.memory_space<vmem>>, vector<8x8xbf16>
    tpu.vector_store %arg7[%c24_156, %c48_157], %94 {strides = array<i32>} : memref<72x64xbf16, #tpu.memory_space<vmem>>, vector<8x8xbf16>,
    %c0_158 = arith.constant 0 : index
    %c0_159 = arith.constant 0 : index
    %c0_160 = arith.constant 0 : index
    %c80 = arith.constant 80 : index
    %96 = vector.load %arg3[%c0_158, %c0_159, %c0_160, %c80] : memref<1x1x8x100xbf16, #tpu.memory_space<vmem>>, vector<1x1x8x8xbf16>
    %97 = vector.shape_cast %96 : vector<1x1x8x8xbf16> to vector<8x8xbf16>
    %c24_161 = arith.constant 24 : index
    %c56_162 = arith.constant 56 : index
    %98 = vector.load %arg7[%c24_161, %c56_162] : memref<72x64xbf16, #tpu.memory_space<vmem>>, vector<8x8xbf16>
    tpu.vector_store %arg7[%c24_161, %c56_162], %97 {strides = array<i32>} : memref<72x64xbf16, #tpu.memory_space<vmem>>, vector<8x8xbf16>,
    %c0_163 = arith.constant 0 : index
    %c0_164 = arith.constant 0 : index
    %c0_165 = arith.constant 0 : index
    %c11_166 = arith.constant 11 : index
    %99 = vector.load %arg3[%c0_163, %c0_164, %c0_165, %c11_166] : memref<1x1x8x100xbf16, #tpu.memory_space<vmem>>, vector<1x1x8x8xbf16>
    %100 = vector.shape_cast %99 : vector<1x1x8x8xbf16> to vector<8x8xbf16>
    %c32_167 = arith.constant 32 : index
    %c0_168 = arith.constant 0 : index
    %101 = vector.load %arg7[%c32_167, %c0_168] : memref<72x64xbf16, #tpu.memory_space<vmem>>, vector<8x8xbf16>
    tpu.vector_store %arg7[%c32_167, %c0_168], %100 {strides = array<i32>} : memref<72x64xbf16, #tpu.memory_space<vmem>>, vector<8x8xbf16>,
    %c0_169 = arith.constant 0 : index
    %c0_170 = arith.constant 0 : index
    %c0_171 = arith.constant 0 : index
    %c21_172 = arith.constant 21 : index
    %102 = vector.load %arg3[%c0_169, %c0_170, %c0_171, %c21_172] : memref<1x1x8x100xbf16, #tpu.memory_space<vmem>>, vector<1x1x8x8xbf16>
    %103 = vector.shape_cast %102 : vector<1x1x8x8xbf16> to vector<8x8xbf16>
    %c32_173 = arith.constant 32 : index
    %c8_174 = arith.constant 8 : index
    %104 = vector.load %arg7[%c32_173, %c8_174] : memref<72x64xbf16, #tpu.memory_space<vmem>>, vector<8x8xbf16>
    tpu.vector_store %arg7[%c32_173, %c8_174], %103 {strides = array<i32>} : memref<72x64xbf16, #tpu.memory_space<vmem>>, vector<8x8xbf16>,
    %c0_175 = arith.constant 0 : index
    %c0_176 = arith.constant 0 : index
    %c0_177 = arith.constant 0 : index
    %c31_178 = arith.constant 31 : index
    %105 = vector.load %arg3[%c0_175, %c0_176, %c0_177, %c31_178] : memref<1x1x8x100xbf16, #tpu.memory_space<vmem>>, vector<1x1x8x8xbf16>
    %106 = vector.shape_cast %105 : vector<1x1x8x8xbf16> to vector<8x8xbf16>
    %c32_179 = arith.constant 32 : index
    %c16_180 = arith.constant 16 : index
    %107 = vector.load %arg7[%c32_179, %c16_180] : memref<72x64xbf16, #tpu.memory_space<vmem>>, vector<8x8xbf16>
    tpu.vector_store %arg7[%c32_179, %c16_180], %106 {strides = array<i32>} : memref<72x64xbf16, #tpu.memory_space<vmem>>, vector<8x8xbf16>,
    %c0_181 = arith.constant 0 : index
    %c0_182 = arith.constant 0 : index
    %c0_183 = arith.constant 0 : index
    %c41_184 = arith.constant 41 : index
    %108 = vector.load %arg3[%c0_181, %c0_182, %c0_183, %c41_184] : memref<1x1x8x100xbf16, #tpu.memory_space<vmem>>, vector<1x1x8x8xbf16>
    %109 = vector.shape_cast %108 : vector<1x1x8x8xbf16> to vector<8x8xbf16>
    %c32_185 = arith.constant 32 : index
    %c24_186 = arith.constant 24 : index
    %110 = vector.load %arg7[%c32_185, %c24_186] : memref<72x64xbf16, #tpu.memory_space<vmem>>, vector<8x8xbf16>
    tpu.vector_store %arg7[%c32_185, %c24_186], %109 {strides = array<i32>} : memref<72x64xbf16, #tpu.memory_space<vmem>>, vector<8x8xbf16>,
    %c0_187 = arith.constant 0 : index
    %c0_188 = arith.constant 0 : index
    %c0_189 = arith.constant 0 : index
    %c51_190 = arith.constant 51 : index
    %111 = vector.load %arg3[%c0_187, %c0_188, %c0_189, %c51_190] : memref<1x1x8x100xbf16, #tpu.memory_space<vmem>>, vector<1x1x8x8xbf16>
    %112 = vector.shape_cast %111 : vector<1x1x8x8xbf16> to vector<8x8xbf16>
    %c32_191 = arith.constant 32 : index
    %c32_192 = arith.constant 32 : index
    %113 = vector.load %arg7[%c32_191, %c32_192] : memref<72x64xbf16, #tpu.memory_space<vmem>>, vector<8x8xbf16>
    tpu.vector_store %arg7[%c32_191, %c32_192], %112 {strides = array<i32>} : memref<72x64xbf16, #tpu.memory_space<vmem>>, vector<8x8xbf16>,
    %c0_193 = arith.constant 0 : index
    %c0_194 = arith.constant 0 : index
    %c0_195 = arith.constant 0 : index
    %c61_196 = arith.constant 61 : index
    %114 = vector.load %arg3[%c0_193, %c0_194, %c0_195, %c61_196] : memref<1x1x8x100xbf16, #tpu.memory_space<vmem>>, vector<1x1x8x8xbf16>
    %115 = vector.shape_cast %114 : vector<1x1x8x8xbf16> to vector<8x8xbf16>
    %c32_197 = arith.constant 32 : index
    %c40_198 = arith.constant 40 : index
    %116 = vector.load %arg7[%c32_197, %c40_198] : memref<72x64xbf16, #tpu.memory_space<vmem>>, vector<8x8xbf16>
    tpu.vector_store %arg7[%c32_197, %c40_198], %115 {strides = array<i32>} : memref<72x64xbf16, #tpu.memory_space<vmem>>, vector<8x8xbf16>,
    %c0_199 = arith.constant 0 : index
    %c0_200 = arith.constant 0 : index
    %c0_201 = arith.constant 0 : index
    %c71_202 = arith.constant 71 : index
    %117 = vector.load %arg3[%c0_199, %c0_200, %c0_201, %c71_202] : memref<1x1x8x100xbf16, #tpu.memory_space<vmem>>, vector<1x1x8x8xbf16>
    %118 = vector.shape_cast %117 : vector<1x1x8x8xbf16> to vector<8x8xbf16>
    %c32_203 = arith.constant 32 : index
    %c48_204 = arith.constant 48 : index
    %119 = vector.load %arg7[%c32_203, %c48_204] : memref<72x64xbf16, #tpu.memory_space<vmem>>, vector<8x8xbf16>
    tpu.vector_store %arg7[%c32_203, %c48_204], %118 {strides = array<i32>} : memref<72x64xbf16, #tpu.memory_space<vmem>>, vector<8x8xbf16>,
    %c0_205 = arith.constant 0 : index
    %c0_206 = arith.constant 0 : index
    %c0_207 = arith.constant 0 : index
    %c81 = arith.constant 81 : index
    %120 = vector.load %arg3[%c0_205, %c0_206, %c0_207, %c81] : memref<1x1x8x100xbf16, #tpu.memory_space<vmem>>, vector<1x1x8x8xbf16>
    %121 = vector.shape_cast %120 : vector<1x1x8x8xbf16> to vector<8x8xbf16>
    %c32_208 = arith.constant 32 : index
    %c56_209 = arith.constant 56 : index
    %122 = vector.load %arg7[%c32_208, %c56_209] : memref<72x64xbf16, #tpu.memory_space<vmem>>, vector<8x8xbf16>
    tpu.vector_store %arg7[%c32_208, %c56_209], %121 {strides = array<i32>} : memref<72x64xbf16, #tpu.memory_space<vmem>>, vector<8x8xbf16>,
    %c0_210 = arith.constant 0 : index
    %c0_211 = arith.constant 0 : index
    %c0_212 = arith.constant 0 : index
    %c12_213 = arith.constant 12 : index
    %123 = vector.load %arg3[%c0_210, %c0_211, %c0_212, %c12_213] : memref<1x1x8x100xbf16, #tpu.memory_space<vmem>>, vector<1x1x8x8xbf16>
    %124 = vector.shape_cast %123 : vector<1x1x8x8xbf16> to vector<8x8xbf16>
    %c40_214 = arith.constant 40 : index
    %c0_215 = arith.constant 0 : index
    %125 = vector.load %arg7[%c40_214, %c0_215] : memref<72x64xbf16, #tpu.memory_space<vmem>>, vector<8x8xbf16>
    tpu.vector_store %arg7[%c40_214, %c0_215], %124 {strides = array<i32>} : memref<72x64xbf16, #tpu.memory_space<vmem>>, vector<8x8xbf16>,
    %c0_216 = arith.constant 0 : index
    %c0_217 = arith.constant 0 : index
    %c0_218 = arith.constant 0 : index
    %c22_219 = arith.constant 22 : index
    %126 = vector.load %arg3[%c0_216, %c0_217, %c0_218, %c22_219] : memref<1x1x8x100xbf16, #tpu.memory_space<vmem>>, vector<1x1x8x8xbf16>
    %127 = vector.shape_cast %126 : vector<1x1x8x8xbf16> to vector<8x8xbf16>
    %c40_220 = arith.constant 40 : index
    %c8_221 = arith.constant 8 : index
    %128 = vector.load %arg7[%c40_220, %c8_221] : memref<72x64xbf16, #tpu.memory_space<vmem>>, vector<8x8xbf16>
    tpu.vector_store %arg7[%c40_220, %c8_221], %127 {strides = array<i32>} : memref<72x64xbf16, #tpu.memory_space<vmem>>, vector<8x8xbf16>,
    %c0_222 = arith.constant 0 : index
    %c0_223 = arith.constant 0 : index
    %c0_224 = arith.constant 0 : index
    %c32_225 = arith.constant 32 : index
    %129 = vector.load %arg3[%c0_222, %c0_223, %c0_224, %c32_225] : memref<1x1x8x100xbf16, #tpu.memory_space<vmem>>, vector<1x1x8x8xbf16>
    %130 = vector.shape_cast %129 : vector<1x1x8x8xbf16> to vector<8x8xbf16>
    %c40_226 = arith.constant 40 : index
    %c16_227 = arith.constant 16 : index
    %131 = vector.load %arg7[%c40_226, %c16_227] : memref<72x64xbf16, #tpu.memory_space<vmem>>, vector<8x8xbf16>
    tpu.vector_store %arg7[%c40_226, %c16_227], %130 {strides = array<i32>} : memref<72x64xbf16, #tpu.memory_space<vmem>>, vector<8x8xbf16>,
    %c0_228 = arith.constant 0 : index
    %c0_229 = arith.constant 0 : index
    %c0_230 = arith.constant 0 : index
    %c42_231 = arith.constant 42 : index
    %132 = vector.load %arg3[%c0_228, %c0_229, %c0_230, %c42_231] : memref<1x1x8x100xbf16, #tpu.memory_space<vmem>>, vector<1x1x8x8xbf16>
    %133 = vector.shape_cast %132 : vector<1x1x8x8xbf16> to vector<8x8xbf16>
    %c40_232 = arith.constant 40 : index
    %c24_233 = arith.constant 24 : index
    %134 = vector.load %arg7[%c40_232, %c24_233] : memref<72x64xbf16, #tpu.memory_space<vmem>>, vector<8x8xbf16>
    tpu.vector_store %arg7[%c40_232, %c24_233], %133 {strides = array<i32>} : memref<72x64xbf16, #tpu.memory_space<vmem>>, vector<8x8xbf16>,
    %c0_234 = arith.constant 0 : index
    %c0_235 = arith.constant 0 : index
    %c0_236 = arith.constant 0 : index
    %c52_237 = arith.constant 52 : index
    %135 = vector.load %arg3[%c0_234, %c0_235, %c0_236, %c52_237] : memref<1x1x8x100xbf16, #tpu.memory_space<vmem>>, vector<1x1x8x8xbf16>
    %136 = vector.shape_cast %135 : vector<1x1x8x8xbf16> to vector<8x8xbf16>
    %c40_238 = arith.constant 40 : index
    %c32_239 = arith.constant 32 : index
    %137 = vector.load %arg7[%c40_238, %c32_239] : memref<72x64xbf16, #tpu.memory_space<vmem>>, vector<8x8xbf16>
    tpu.vector_store %arg7[%c40_238, %c32_239], %136 {strides = array<i32>} : memref<72x64xbf16, #tpu.memory_space<vmem>>, vector<8x8xbf16>,
    %c0_240 = arith.constant 0 : index
    %c0_241 = arith.constant 0 : index
    %c0_242 = arith.constant 0 : index
    %c62_243 = arith.constant 62 : index
    %138 = vector.load %arg3[%c0_240, %c0_241, %c0_242, %c62_243] : memref<1x1x8x100xbf16, #tpu.memory_space<vmem>>, vector<1x1x8x8xbf16>
    %139 = vector.shape_cast %138 : vector<1x1x8x8xbf16> to vector<8x8xbf16>
    %c40_244 = arith.constant 40 : index
    %c40_245 = arith.constant 40 : index
    %140 = vector.load %arg7[%c40_244, %c40_245] : memref<72x64xbf16, #tpu.memory_space<vmem>>, vector<8x8xbf16>
    tpu.vector_store %arg7[%c40_244, %c40_245], %139 {strides = array<i32>} : memref<72x64xbf16, #tpu.memory_space<vmem>>, vector<8x8xbf16>,
    %c0_246 = arith.constant 0 : index
    %c0_247 = arith.constant 0 : index
    %c0_248 = arith.constant 0 : index
    %c72_249 = arith.constant 72 : index
    %141 = vector.load %arg3[%c0_246, %c0_247, %c0_248, %c72_249] : memref<1x1x8x100xbf16, #tpu.memory_space<vmem>>, vector<1x1x8x8xbf16>
    %142 = vector.shape_cast %141 : vector<1x1x8x8xbf16> to vector<8x8xbf16>
    %c40_250 = arith.constant 40 : index
    %c48_251 = arith.constant 48 : index
    %143 = vector.load %arg7[%c40_250, %c48_251] : memref<72x64xbf16, #tpu.memory_space<vmem>>, vector<8x8xbf16>
    tpu.vector_store %arg7[%c40_250, %c48_251], %142 {strides = array<i32>} : memref<72x64xbf16, #tpu.memory_space<vmem>>, vector<8x8xbf16>,
    %c0_252 = arith.constant 0 : index
    %c0_253 = arith.constant 0 : index
    %c0_254 = arith.constant 0 : index
    %c82 = arith.constant 82 : index
    %144 = vector.load %arg3[%c0_252, %c0_253, %c0_254, %c82] : memref<1x1x8x100xbf16, #tpu.memory_space<vmem>>, vector<1x1x8x8xbf16>
    %145 = vector.shape_cast %144 : vector<1x1x8x8xbf16> to vector<8x8xbf16>
    %c40_255 = arith.constant 40 : index
    %c56_256 = arith.constant 56 : index
    %146 = vector.load %arg7[%c40_255, %c56_256] : memref<72x64xbf16, #tpu.memory_space<vmem>>, vector<8x8xbf16>
    tpu.vector_store %arg7[%c40_255, %c56_256], %145 {strides = array<i32>} : memref<72x64xbf16, #tpu.memory_space<vmem>>, vector<8x8xbf16>,
    %c0_257 = arith.constant 0 : index
    %c0_258 = arith.constant 0 : index
    %c0_259 = arith.constant 0 : index
    %c20_260 = arith.constant 20 : index
    %147 = vector.load %arg3[%c0_257, %c0_258, %c0_259, %c20_260] : memref<1x1x8x100xbf16, #tpu.memory_space<vmem>>, vector<1x1x8x8xbf16>
    %148 = vector.shape_cast %147 : vector<1x1x8x8xbf16> to vector<8x8xbf16>
    %c48_261 = arith.constant 48 : index
    %c0_262 = arith.constant 0 : index
    %149 = vector.load %arg7[%c48_261, %c0_262] : memref<72x64xbf16, #tpu.memory_space<vmem>>, vector<8x8xbf16>
    tpu.vector_store %arg7[%c48_261, %c0_262], %148 {strides = array<i32>} : memref<72x64xbf16, #tpu.memory_space<vmem>>, vector<8x8xbf16>,
    %c0_263 = arith.constant 0 : index
    %c0_264 = arith.constant 0 : index
    %c0_265 = arith.constant 0 : index
    %c30_266 = arith.constant 30 : index
    %150 = vector.load %arg3[%c0_263, %c0_264, %c0_265, %c30_266] : memref<1x1x8x100xbf16, #tpu.memory_space<vmem>>, vector<1x1x8x8xbf16>
    %151 = vector.shape_cast %150 : vector<1x1x8x8xbf16> to vector<8x8xbf16>
    %c48_267 = arith.constant 48 : index
    %c8_268 = arith.constant 8 : index
    %152 = vector.load %arg7[%c48_267, %c8_268] : memref<72x64xbf16, #tpu.memory_space<vmem>>, vector<8x8xbf16>
    tpu.vector_store %arg7[%c48_267, %c8_268], %151 {strides = array<i32>} : memref<72x64xbf16, #tpu.memory_space<vmem>>, vector<8x8xbf16>,
    %c0_269 = arith.constant 0 : index
    %c0_270 = arith.constant 0 : index
    %c0_271 = arith.constant 0 : index
    %c40_272 = arith.constant 40 : index
    %153 = vector.load %arg3[%c0_269, %c0_270, %c0_271, %c40_272] : memref<1x1x8x100xbf16, #tpu.memory_space<vmem>>, vector<1x1x8x8xbf16>
    %154 = vector.shape_cast %153 : vector<1x1x8x8xbf16> to vector<8x8xbf16>
    %c48_273 = arith.constant 48 : index
    %c16_274 = arith.constant 16 : index
    %155 = vector.load %arg7[%c48_273, %c16_274] : memref<72x64xbf16, #tpu.memory_space<vmem>>, vector<8x8xbf16>
    tpu.vector_store %arg7[%c48_273, %c16_274], %154 {strides = array<i32>} : memref<72x64xbf16, #tpu.memory_space<vmem>>, vector<8x8xbf16>,
    %c0_275 = arith.constant 0 : index
    %c0_276 = arith.constant 0 : index
    %c0_277 = arith.constant 0 : index
    %c50_278 = arith.constant 50 : index
    %156 = vector.load %arg3[%c0_275, %c0_276, %c0_277, %c50_278] : memref<1x1x8x100xbf16, #tpu.memory_space<vmem>>, vector<1x1x8x8xbf16>
    %157 = vector.shape_cast %156 : vector<1x1x8x8xbf16> to vector<8x8xbf16>
    %c48_279 = arith.constant 48 : index
    %c24_280 = arith.constant 24 : index
    %158 = vector.load %arg7[%c48_279, %c24_280] : memref<72x64xbf16, #tpu.memory_space<vmem>>, vector<8x8xbf16>
    tpu.vector_store %arg7[%c48_279, %c24_280], %157 {strides = array<i32>} : memref<72x64xbf16, #tpu.memory_space<vmem>>, vector<8x8xbf16>,
    %c0_281 = arith.constant 0 : index
    %c0_282 = arith.constant 0 : index
    %c0_283 = arith.constant 0 : index
    %c60_284 = arith.constant 60 : index
    %159 = vector.load %arg3[%c0_281, %c0_282, %c0_283, %c60_284] : memref<1x1x8x100xbf16, #tpu.memory_space<vmem>>, vector<1x1x8x8xbf16>
    %160 = vector.shape_cast %159 : vector<1x1x8x8xbf16> to vector<8x8xbf16>
    %c48_285 = arith.constant 48 : index
    %c32_286 = arith.constant 32 : index
    %161 = vector.load %arg7[%c48_285, %c32_286] : memref<72x64xbf16, #tpu.memory_space<vmem>>, vector<8x8xbf16>
    tpu.vector_store %arg7[%c48_285, %c32_286], %160 {strides = array<i32>} : memref<72x64xbf16, #tpu.memory_space<vmem>>, vector<8x8xbf16>,
    %c0_287 = arith.constant 0 : index
    %c0_288 = arith.constant 0 : index
    %c0_289 = arith.constant 0 : index
    %c70_290 = arith.constant 70 : index
    %162 = vector.load %arg3[%c0_287, %c0_288, %c0_289, %c70_290] : memref<1x1x8x100xbf16, #tpu.memory_space<vmem>>, vector<1x1x8x8xbf16>
    %163 = vector.shape_cast %162 : vector<1x1x8x8xbf16> to vector<8x8xbf16>
    %c48_291 = arith.constant 48 : index
    %c40_292 = arith.constant 40 : index
    %164 = vector.load %arg7[%c48_291, %c40_292] : memref<72x64xbf16, #tpu.memory_space<vmem>>, vector<8x8xbf16>
    tpu.vector_store %arg7[%c48_291, %c40_292], %163 {strides = array<i32>} : memref<72x64xbf16, #tpu.memory_space<vmem>>, vector<8x8xbf16>,
    %c0_293 = arith.constant 0 : index
    %c0_294 = arith.constant 0 : index
    %c0_295 = arith.constant 0 : index
    %c80_296 = arith.constant 80 : index
    %165 = vector.load %arg3[%c0_293, %c0_294, %c0_295, %c80_296] : memref<1x1x8x100xbf16, #tpu.memory_space<vmem>>, vector<1x1x8x8xbf16>
    %166 = vector.shape_cast %165 : vector<1x1x8x8xbf16> to vector<8x8xbf16>
    %c48_297 = arith.constant 48 : index
    %c48_298 = arith.constant 48 : index
    %167 = vector.load %arg7[%c48_297, %c48_298] : memref<72x64xbf16, #tpu.memory_space<vmem>>, vector<8x8xbf16>
    tpu.vector_store %arg7[%c48_297, %c48_298], %166 {strides = array<i32>} : memref<72x64xbf16, #tpu.memory_space<vmem>>, vector<8x8xbf16>,
    %c0_299 = arith.constant 0 : index
    %c0_300 = arith.constant 0 : index
    %c0_301 = arith.constant 0 : index
    %c90 = arith.constant 90 : index
    %168 = vector.load %arg3[%c0_299, %c0_300, %c0_301, %c90] : memref<1x1x8x100xbf16, #tpu.memory_space<vmem>>, vector<1x1x8x8xbf16>
    %169 = vector.shape_cast %168 : vector<1x1x8x8xbf16> to vector<8x8xbf16>
    %c48_302 = arith.constant 48 : index
    %c56_303 = arith.constant 56 : index
    %170 = vector.load %arg7[%c48_302, %c56_303] : memref<72x64xbf16, #tpu.memory_space<vmem>>, vector<8x8xbf16>
    tpu.vector_store %arg7[%c48_302, %c56_303], %169 {strides = array<i32>} : memref<72x64xbf16, #tpu.memory_space<vmem>>, vector<8x8xbf16>,
    %c0_304 = arith.constant 0 : index
    %c0_305 = arith.constant 0 : index
    %c0_306 = arith.constant 0 : index
    %c21_307 = arith.constant 21 : index
    %171 = vector.load %arg3[%c0_304, %c0_305, %c0_306, %c21_307] : memref<1x1x8x100xbf16, #tpu.memory_space<vmem>>, vector<1x1x8x8xbf16>
    %172 = vector.shape_cast %171 : vector<1x1x8x8xbf16> to vector<8x8xbf16>
    %c56_308 = arith.constant 56 : index
    %c0_309 = arith.constant 0 : index
    %173 = vector.load %arg7[%c56_308, %c0_309] : memref<72x64xbf16, #tpu.memory_space<vmem>>, vector<8x8xbf16>
    tpu.vector_store %arg7[%c56_308, %c0_309], %172 {strides = array<i32>} : memref<72x64xbf16, #tpu.memory_space<vmem>>, vector<8x8xbf16>,
    %c0_310 = arith.constant 0 : index
    %c0_311 = arith.constant 0 : index
    %c0_312 = arith.constant 0 : index
    %c31_313 = arith.constant 31 : index
    %174 = vector.load %arg3[%c0_310, %c0_311, %c0_312, %c31_313] : memref<1x1x8x100xbf16, #tpu.memory_space<vmem>>, vector<1x1x8x8xbf16>
    %175 = vector.shape_cast %174 : vector<1x1x8x8xbf16> to vector<8x8xbf16>
    %c56_314 = arith.constant 56 : index
    %c8_315 = arith.constant 8 : index
    %176 = vector.load %arg7[%c56_314, %c8_315] : memref<72x64xbf16, #tpu.memory_space<vmem>>, vector<8x8xbf16>
    tpu.vector_store %arg7[%c56_314, %c8_315], %175 {strides = array<i32>} : memref<72x64xbf16, #tpu.memory_space<vmem>>, vector<8x8xbf16>,
    %c0_316 = arith.constant 0 : index
    %c0_317 = arith.constant 0 : index
    %c0_318 = arith.constant 0 : index
    %c41_319 = arith.constant 41 : index
    %177 = vector.load %arg3[%c0_316, %c0_317, %c0_318, %c41_319] : memref<1x1x8x100xbf16, #tpu.memory_space<vmem>>, vector<1x1x8x8xbf16>
    %178 = vector.shape_cast %177 : vector<1x1x8x8xbf16> to vector<8x8xbf16>
    %c56_320 = arith.constant 56 : index
    %c16_321 = arith.constant 16 : index
    %179 = vector.load %arg7[%c56_320, %c16_321] : memref<72x64xbf16, #tpu.memory_space<vmem>>, vector<8x8xbf16>
    tpu.vector_store %arg7[%c56_320, %c16_321], %178 {strides = array<i32>} : memref<72x64xbf16, #tpu.memory_space<vmem>>, vector<8x8xbf16>,
    %c0_322 = arith.constant 0 : index
    %c0_323 = arith.constant 0 : index
    %c0_324 = arith.constant 0 : index
    %c51_325 = arith.constant 51 : index
    %180 = vector.load %arg3[%c0_322, %c0_323, %c0_324, %c51_325] : memref<1x1x8x100xbf16, #tpu.memory_space<vmem>>, vector<1x1x8x8xbf16>
    %181 = vector.shape_cast %180 : vector<1x1x8x8xbf16> to vector<8x8xbf16>
    %c56_326 = arith.constant 56 : index
    %c24_327 = arith.constant 24 : index
    %182 = vector.load %arg7[%c56_326, %c24_327] : memref<72x64xbf16, #tpu.memory_space<vmem>>, vector<8x8xbf16>
    tpu.vector_store %arg7[%c56_326, %c24_327], %181 {strides = array<i32>} : memref<72x64xbf16, #tpu.memory_space<vmem>>, vector<8x8xbf16>,
    %c0_328 = arith.constant 0 : index
    %c0_329 = arith.constant 0 : index
    %c0_330 = arith.constant 0 : index
    %c61_331 = arith.constant 61 : index
    %183 = vector.load %arg3[%c0_328, %c0_329, %c0_330, %c61_331] : memref<1x1x8x100xbf16, #tpu.memory_space<vmem>>, vector<1x1x8x8xbf16>
    %184 = vector.shape_cast %183 : vector<1x1x8x8xbf16> to vector<8x8xbf16>
    %c56_332 = arith.constant 56 : index
    %c32_333 = arith.constant 32 : index
    %185 = vector.load %arg7[%c56_332, %c32_333] : memref<72x64xbf16, #tpu.memory_space<vmem>>, vector<8x8xbf16>
    tpu.vector_store %arg7[%c56_332, %c32_333], %184 {strides = array<i32>} : memref<72x64xbf16, #tpu.memory_space<vmem>>, vector<8x8xbf16>,
    %c0_334 = arith.constant 0 : index
    %c0_335 = arith.constant 0 : index
    %c0_336 = arith.constant 0 : index
    %c71_337 = arith.constant 71 : index
    %186 = vector.load %arg3[%c0_334, %c0_335, %c0_336, %c71_337] : memref<1x1x8x100xbf16, #tpu.memory_space<vmem>>, vector<1x1x8x8xbf16>
    %187 = vector.shape_cast %186 : vector<1x1x8x8xbf16> to vector<8x8xbf16>
    %c56_338 = arith.constant 56 : index
    %c40_339 = arith.constant 40 : index
    %188 = vector.load %arg7[%c56_338, %c40_339] : memref<72x64xbf16, #tpu.memory_space<vmem>>, vector<8x8xbf16>
    tpu.vector_store %arg7[%c56_338, %c40_339], %187 {strides = array<i32>} : memref<72x64xbf16, #tpu.memory_space<vmem>>, vector<8x8xbf16>,
    %c0_340 = arith.constant 0 : index
    %c0_341 = arith.constant 0 : index
    %c0_342 = arith.constant 0 : index
    %c81_343 = arith.constant 81 : index
    %189 = vector.load %arg3[%c0_340, %c0_341, %c0_342, %c81_343] : memref<1x1x8x100xbf16, #tpu.memory_space<vmem>>, vector<1x1x8x8xbf16>
    %190 = vector.shape_cast %189 : vector<1x1x8x8xbf16> to vector<8x8xbf16>
    %c56_344 = arith.constant 56 : index
    %c48_345 = arith.constant 48 : index
    %191 = vector.load %arg7[%c56_344, %c48_345] : memref<72x64xbf16, #tpu.memory_space<vmem>>, vector<8x8xbf16>
    tpu.vector_store %arg7[%c56_344, %c48_345], %190 {strides = array<i32>} : memref<72x64xbf16, #tpu.memory_space<vmem>>, vector<8x8xbf16>,
    %c0_346 = arith.constant 0 : index
    %c0_347 = arith.constant 0 : index
    %c0_348 = arith.constant 0 : index
    %c91 = arith.constant 91 : index
    %192 = vector.load %arg3[%c0_346, %c0_347, %c0_348, %c91] : memref<1x1x8x100xbf16, #tpu.memory_space<vmem>>, vector<1x1x8x8xbf16>
    %193 = vector.shape_cast %192 : vector<1x1x8x8xbf16> to vector<8x8xbf16>
    %c56_349 = arith.constant 56 : index
    %c56_350 = arith.constant 56 : index
    %194 = vector.load %arg7[%c56_349, %c56_350] : memref<72x64xbf16, #tpu.memory_space<vmem>>, vector<8x8xbf16>
    tpu.vector_store %arg7[%c56_349, %c56_350], %193 {strides = array<i32>} : memref<72x64xbf16, #tpu.memory_space<vmem>>, vector<8x8xbf16>,
    %c0_351 = arith.constant 0 : index
    %c0_352 = arith.constant 0 : index
    %c0_353 = arith.constant 0 : index
    %c22_354 = arith.constant 22 : index
    %195 = vector.load %arg3[%c0_351, %c0_352, %c0_353, %c22_354] : memref<1x1x8x100xbf16, #tpu.memory_space<vmem>>, vector<1x1x8x8xbf16>
    %196 = vector.shape_cast %195 : vector<1x1x8x8xbf16> to vector<8x8xbf16>
    %c64 = arith.constant 64 : index
    %c0_355 = arith.constant 0 : index
    %197 = vector.load %arg7[%c64, %c0_355] : memref<72x64xbf16, #tpu.memory_space<vmem>>, vector<8x8xbf16>
    tpu.vector_store %arg7[%c64, %c0_355], %196 {strides = array<i32>} : memref<72x64xbf16, #tpu.memory_space<vmem>>, vector<8x8xbf16>,
    %c0_356 = arith.constant 0 : index
    %c0_357 = arith.constant 0 : index
    %c0_358 = arith.constant 0 : index
    %c32_359 = arith.constant 32 : index
    %198 = vector.load %arg3[%c0_356, %c0_357, %c0_358, %c32_359] : memref<1x1x8x100xbf16, #tpu.memory_space<vmem>>, vector<1x1x8x8xbf16>
    %199 = vector.shape_cast %198 : vector<1x1x8x8xbf16> to vector<8x8xbf16>
    %c64_360 = arith.constant 64 : index
    %c8_361 = arith.constant 8 : index
    %200 = vector.load %arg7[%c64_360, %c8_361] : memref<72x64xbf16, #tpu.memory_space<vmem>>, vector<8x8xbf16>
    tpu.vector_store %arg7[%c64_360, %c8_361], %199 {strides = array<i32>} : memref<72x64xbf16, #tpu.memory_space<vmem>>, vector<8x8xbf16>,
    %c0_362 = arith.constant 0 : index
    %c0_363 = arith.constant 0 : index
    %c0_364 = arith.constant 0 : index
    %c42_365 = arith.constant 42 : index
    %201 = vector.load %arg3[%c0_362, %c0_363, %c0_364, %c42_365] : memref<1x1x8x100xbf16, #tpu.memory_space<vmem>>, vector<1x1x8x8xbf16>
    %202 = vector.shape_cast %201 : vector<1x1x8x8xbf16> to vector<8x8xbf16>
    %c64_366 = arith.constant 64 : index
    %c16_367 = arith.constant 16 : index
    %203 = vector.load %arg7[%c64_366, %c16_367] : memref<72x64xbf16, #tpu.memory_space<vmem>>, vector<8x8xbf16>
    tpu.vector_store %arg7[%c64_366, %c16_367], %202 {strides = array<i32>} : memref<72x64xbf16, #tpu.memory_space<vmem>>, vector<8x8xbf16>,
    %c0_368 = arith.constant 0 : index
    %c0_369 = arith.constant 0 : index
    %c0_370 = arith.constant 0 : index
    %c52_371 = arith.constant 52 : index
    %204 = vector.load %arg3[%c0_368, %c0_369, %c0_370, %c52_371] : memref<1x1x8x100xbf16, #tpu.memory_space<vmem>>, vector<1x1x8x8xbf16>
    %205 = vector.shape_cast %204 : vector<1x1x8x8xbf16> to vector<8x8xbf16>
    %c64_372 = arith.constant 64 : index
    %c24_373 = arith.constant 24 : index
    %206 = vector.load %arg7[%c64_372, %c24_373] : memref<72x64xbf16, #tpu.memory_space<vmem>>, vector<8x8xbf16>
    tpu.vector_store %arg7[%c64_372, %c24_373], %205 {strides = array<i32>} : memref<72x64xbf16, #tpu.memory_space<vmem>>, vector<8x8xbf16>,
    %c0_374 = arith.constant 0 : index
    %c0_375 = arith.constant 0 : index
    %c0_376 = arith.constant 0 : index
    %c62_377 = arith.constant 62 : index
    %207 = vector.load %arg3[%c0_374, %c0_375, %c0_376, %c62_377] : memref<1x1x8x100xbf16, #tpu.memory_space<vmem>>, vector<1x1x8x8xbf16>
    %208 = vector.shape_cast %207 : vector<1x1x8x8xbf16> to vector<8x8xbf16>
    %c64_378 = arith.constant 64 : index
    %c32_379 = arith.constant 32 : index
    %209 = vector.load %arg7[%c64_378, %c32_379] : memref<72x64xbf16, #tpu.memory_space<vmem>>, vector<8x8xbf16>
    tpu.vector_store %arg7[%c64_378, %c32_379], %208 {strides = array<i32>} : memref<72x64xbf16, #tpu.memory_space<vmem>>, vector<8x8xbf16>,
    %c0_380 = arith.constant 0 : index
    %c0_381 = arith.constant 0 : index
    %c0_382 = arith.constant 0 : index
    %c72_383 = arith.constant 72 : index
    %210 = vector.load %arg3[%c0_380, %c0_381, %c0_382, %c72_383] : memref<1x1x8x100xbf16, #tpu.memory_space<vmem>>, vector<1x1x8x8xbf16>
    %211 = vector.shape_cast %210 : vector<1x1x8x8xbf16> to vector<8x8xbf16>
    %c64_384 = arith.constant 64 : index
    %c40_385 = arith.constant 40 : index
    %212 = vector.load %arg7[%c64_384, %c40_385] : memref<72x64xbf16, #tpu.memory_space<vmem>>, vector<8x8xbf16>
    tpu.vector_store %arg7[%c64_384, %c40_385], %211 {strides = array<i32>} : memref<72x64xbf16, #tpu.memory_space<vmem>>, vector<8x8xbf16>,
    %c0_386 = arith.constant 0 : index
    %c0_387 = arith.constant 0 : index
    %c0_388 = arith.constant 0 : index
    %c82_389 = arith.constant 82 : index
    %213 = vector.load %arg3[%c0_386, %c0_387, %c0_388, %c82_389] : memref<1x1x8x100xbf16, #tpu.memory_space<vmem>>, vector<1x1x8x8xbf16>
    %214 = vector.shape_cast %213 : vector<1x1x8x8xbf16> to vector<8x8xbf16>
    %c64_390 = arith.constant 64 : index
    %c48_391 = arith.constant 48 : index
    %215 = vector.load %arg7[%c64_390, %c48_391] : memref<72x64xbf16, #tpu.memory_space<vmem>>, vector<8x8xbf16>
    tpu.vector_store %arg7[%c64_390, %c48_391], %214 {strides = array<i32>} : memref<72x64xbf16, #tpu.memory_space<vmem>>, vector<8x8xbf16>,
    %c0_392 = arith.constant 0 : index
    %c0_393 = arith.constant 0 : index
    %c0_394 = arith.constant 0 : index
    %c92 = arith.constant 92 : index
    %216 = vector.load %arg3[%c0_392, %c0_393, %c0_394, %c92] : memref<1x1x8x100xbf16, #tpu.memory_space<vmem>>, vector<1x1x8x8xbf16>
    %217 = vector.shape_cast %216 : vector<1x1x8x8xbf16> to vector<8x8xbf16>
    %c64_395 = arith.constant 64 : index
    %c56_396 = arith.constant 56 : index
    %218 = vector.load %arg7[%c64_395, %c56_396] : memref<72x64xbf16, #tpu.memory_space<vmem>>, vector<8x8xbf16>
    tpu.vector_store %arg7[%c64_395, %c56_396], %217 {strides = array<i32>} : memref<72x64xbf16, #tpu.memory_space<vmem>>, vector<8x8xbf16>,
    %c0_397 = arith.constant 0 : index
    %c0_398 = arith.constant 0 : index
    %219 = vector.load %arg8[%c0_397, %c0_398] : memref<8x64xf32, #tpu.memory_space<vmem>>, vector<8x64xf32>
    %c0_399 = arith.constant 0 : index
    %c0_400 = arith.constant 0 : index
    %c0_401 = arith.constant 0 : index
    %220 = vector.load %arg4[%c0_399, %c0_400, %c0_401] : memref<1x8x72xbf16, #tpu.memory_space<vmem>>, vector<1x8x72xbf16>
    %221 = vector.shape_cast %220 : vector<1x8x72xbf16> to vector<8x72xbf16>
    %c0_402 = arith.constant 0 : index
    %c0_403 = arith.constant 0 : index
    %222 = vector.load %arg7[%c0_402, %c0_403] : memref<72x64xbf16, #tpu.memory_space<vmem>>, vector<72x64xbf16>
    %cst = arith.constant dense<0.000000e+00> : vector<8x64xf32>
    %223 = tpu.matmul %221, %222, %cst {dimension_numbers = #tpu.dot_dimension_numbers<[1], [0], [0], [1], [0, 0, 1, 1], [], []>} : vector<8x72xbf16>, vector<72x64xbf16>, vector<8x64xf32> -> vector<8x64xf32>
    %224 = arith.addf %219, %223 : vector<8x64xf32>
    %c0_404 = arith.constant 0 : index
    %c0_405 = arith.constant 0 : index
    %225 = vector.load %arg8[%c0_404, %c0_405] : memref<8x64xf32, #tpu.memory_space<vmem>>, vector<8x64xf32>
    tpu.vector_store %arg8[%c0_404, %c0_405], %224 {strides = array<i32>} : memref<8x64xf32, #tpu.memory_space<vmem>>, vector<8x64xf32>,
    %c2_i32 = arith.constant 2 : i32
    %226 = arith.cmpi eq, %arg2, %c2_i32 : i32
    %227 = arith.extui %226 : i1 to i32
    %c0_i32_406 = arith.constant 0 : i32
    %228 = arith.cmpi ne, %227, %c0_i32_406 : i32
    scf.if %228 {
      %c0_407 = arith.constant 0 : index
      %c0_408 = arith.constant 0 : index
      %229 = vector.load %arg8[%c0_407, %c0_408] : memref<8x64xf32, #tpu.memory_space<vmem>>, vector<8x64xf32>
      %c0_409 = arith.constant 0 : index
      %c0_410 = arith.constant 0 : index
      %230 = vector.load %arg5[%c0_409, %c0_410] : memref<8x1xf32, #tpu.memory_space<vmem>>, vector<8x1xf32>
      %231 = vector.broadcast %230 : vector<8x1xf32> to vector<8x64xf32>
      %232 = arith.addf %229, %231 : vector<8x64xf32>
      %cst_411 = arith.constant 0.000000e+00 : f32
      %233 = vector.broadcast %cst_411 : f32 to vector<8x64xf32>
      %234 = arith.maximumf %232, %233 : vector<8x64xf32>
      %235 = arith.truncf %234 : vector<8x64xf32> to vector<8x64xbf16>
      %c0_412 = arith.constant 0 : index
      %c0_413 = arith.constant 0 : index
      %c0_414 = arith.constant 0 : index
      %c0_415 = arith.constant 0 : index
      %236 = vector.load %arg6[%c0_412, %c0_413, %c0_414, %c0_415] : memref<1x1x8x64xbf16, #tpu.memory_space<vmem>>, vector<1x1x8x64xbf16>
      %237 = vector.shape_cast %236 : vector<1x1x8x64xbf16> to vector<8x64xbf16>
      %238 = vector.shape_cast %235 : vector<8x64xbf16> to vector<1x1x8x64xbf16>
      tpu.vector_store %arg6[%c0_412, %c0_413, %c0_414, %c0_415], %238 {strides = array<i32>} : memref<1x1x8x64xbf16, #tpu.memory_space<vmem>>, vector<1x1x8x64xbf16>,
    } else {
    }
    return
  }
  func.func @transform_0(%arg0: i32, %arg1: i32, %arg2: i32) -> (i32, i32, i32, i32) {
    %0 = arith.addi %arg1, %arg2 : i32
    %c0_i32 = arith.constant 0 : i32
    %c0_i32_0 = arith.constant 0 : i32
    %c0_i32_1 = arith.constant 0 : i32
    return %arg0, %0, %c0_i32, %c0_i32_0 : i32, i32, i32, i32
  }
  func.func @transform_1(%arg0: i32, %arg1: i32, %arg2: i32) -> (i32, i32, i32) {
    %c0_i32 = arith.constant 0 : i32
    %c0_i32_0 = arith.constant 0 : i32
    %c0_i32_1 = arith.constant 0 : i32
    return %arg2, %c0_i32, %c0_i32_0 : i32, i32, i32
  }
  func.func @transform_2(%arg0: i32, %arg1: i32, %arg2: i32) -> (i32, i32) {
    %c0_i32 = arith.constant 0 : i32
    %c0_i32_0 = arith.constant 0 : i32
    %c0_i32_1 = arith.constant 0 : i32
    return %c0_i32, %c0_i32_0 : i32, i32
  }
  func.func @transform_3(%arg0: i32, %arg1: i32, %arg2: i32) -> (i32, i32, i32, i32) {
    %c0_i32 = arith.constant 0 : i32
    %c0_i32_0 = arith.constant 0 : i32
    %c0_i32_1 = arith.constant 0 : i32
    return %arg0, %arg1, %c0_i32, %c0_i32_0 : i32, i32, i32, i32
  }
}

module attributes {stable_mosaic.version = 11 : i64} {
  func.func @_wx_kernel(%arg0: i32, %arg1: memref<1x216x16xbf16, #tpu.memory_space<vmem>>, %arg2: memref<16x216xbf16, #tpu.memory_space<vmem>>, %arg3: memref<16x1xf32, #tpu.memory_space<vmem>>, %arg4: memref<1x16x16xbf16, #tpu.memory_space<vmem>>) attributes {dimension_semantics = [#tpu.dimension_semantics<parallel>], iteration_bounds = array<i64: 8>, scalar_prefetch = 0 : i64, scratch_operands = 0 : i64, tpu.core_type = #tpu.core_type<tc>, window_params = [{transform_indices = @transform_0, window_bounds = array<i64: 1, 216, 16>}, {pipeline_mode = #tpu.pipeline_mode<synchronous>, transform_indices = @transform_1, window_bounds = array<i64: 16, 216>}, {pipeline_mode = #tpu.pipeline_mode<synchronous>, transform_indices = @transform_2, window_bounds = array<i64: 16, 1>}, {transform_indices = @transform_3, window_bounds = array<i64: 1, 16, 16>}]} {
    %c0 = arith.constant 0 : index
    %c0_0 = arith.constant 0 : index
    %0 = vector.load %arg2[%c0, %c0_0] : memref<16x216xbf16, #tpu.memory_space<vmem>>, vector<16x216xbf16>
    %c0_1 = arith.constant 0 : index
    %c0_2 = arith.constant 0 : index
    %c0_3 = arith.constant 0 : index
    %1 = vector.load %arg1[%c0_1, %c0_2, %c0_3] : memref<1x216x16xbf16, #tpu.memory_space<vmem>>, vector<1x216x16xbf16>
    %2 = vector.shape_cast %1 : vector<1x216x16xbf16> to vector<216x16xbf16>
    %cst = arith.constant dense<0.000000e+00> : vector<16x16xf32>
    %3 = tpu.matmul %0, %2, %cst {dimension_numbers = #tpu.dot_dimension_numbers<[1], [0], [0], [1], [0, 0, 1, 1], [], []>} : vector<16x216xbf16>, vector<216x16xbf16>, vector<16x16xf32> -> vector<16x16xf32>
    %c0_4 = arith.constant 0 : index
    %c0_5 = arith.constant 0 : index
    %4 = vector.load %arg3[%c0_4, %c0_5] : memref<16x1xf32, #tpu.memory_space<vmem>>, vector<16x1xf32>
    %5 = vector.broadcast %4 : vector<16x1xf32> to vector<16x16xf32>
    %6 = arith.addf %3, %5 : vector<16x16xf32>
    %cst_6 = arith.constant 0.000000e+00 : f32
    %7 = vector.broadcast %cst_6 : f32 to vector<16x16xf32>
    %8 = arith.maximumf %6, %7 : vector<16x16xf32>
    %9 = arith.truncf %8 : vector<16x16xf32> to vector<16x16xbf16>
    %c0_7 = arith.constant 0 : index
    %c0_8 = arith.constant 0 : index
    %c0_9 = arith.constant 0 : index
    %10 = vector.load %arg4[%c0_7, %c0_8, %c0_9] : memref<1x16x16xbf16, #tpu.memory_space<vmem>>, vector<1x16x16xbf16>
    %11 = vector.shape_cast %10 : vector<1x16x16xbf16> to vector<16x16xbf16>
    %12 = vector.shape_cast %9 : vector<16x16xbf16> to vector<1x16x16xbf16>
    tpu.vector_store %arg4[%c0_7, %c0_8, %c0_9], %12 {strides = array<i32>} : memref<1x16x16xbf16, #tpu.memory_space<vmem>>, vector<1x16x16xbf16>,
    return
  }
  func.func @transform_0(%arg0: i32) -> (i32, i32, i32) {
    %c0_i32 = arith.constant 0 : i32
    %c0_i32_0 = arith.constant 0 : i32
    %c0_i32_1 = arith.constant 0 : i32
    return %arg0, %c0_i32, %c0_i32_0 : i32, i32, i32
  }
  func.func @transform_1(%arg0: i32) -> (i32, i32) {
    %c0_i32 = arith.constant 0 : i32
    %c0_i32_0 = arith.constant 0 : i32
    %c0_i32_1 = arith.constant 0 : i32
    return %c0_i32, %c0_i32_0 : i32, i32
  }
  func.func @transform_2(%arg0: i32) -> (i32, i32) {
    %c0_i32 = arith.constant 0 : i32
    %c0_i32_0 = arith.constant 0 : i32
    %c0_i32_1 = arith.constant 0 : i32
    return %c0_i32, %c0_i32_0 : i32, i32
  }
  func.func @transform_3(%arg0: i32) -> (i32, i32, i32) {
    %c0_i32 = arith.constant 0 : i32
    %c0_i32_0 = arith.constant 0 : i32
    %c0_i32_1 = arith.constant 0 : i32
    return %arg0, %c0_i32, %c0_i32_0 : i32, i32, i32
  }
}

module attributes {stable_mosaic.version = 11 : i64} {
  func.func @_conv3_slab_kernel(%arg0: i32, %arg1: i32, %arg2: i32, %arg3: memref<1x1x16x36xbf16, #tpu.memory_space<vmem>>, %arg4: memref<1x16x144xbf16, #tpu.memory_space<vmem>>, %arg5: memref<16x1xf32, #tpu.memory_space<vmem>>, %arg6: memref<1x1x16x16xbf16, #tpu.memory_space<vmem>>, %arg7: memref<144x16xbf16, #tpu.memory_space<vmem>>, %arg8: memref<16x16xf32, #tpu.memory_space<vmem>>) attributes {dimension_semantics = [#tpu.dimension_semantics<parallel>, #tpu.dimension_semantics<parallel>, #tpu.dimension_semantics<arbitrary>], iteration_bounds = array<i64: 2, 4, 3>, scalar_prefetch = 0 : i64, scratch_operands = 2 : i64, tpu.core_type = #tpu.core_type<tc>, window_params = [{transform_indices = @transform_0, window_bounds = array<i64: 1, 1, 16, 36>}, {transform_indices = @transform_1, window_bounds = array<i64: 1, 16, 144>}, {pipeline_mode = #tpu.pipeline_mode<synchronous>, transform_indices = @transform_2, window_bounds = array<i64: 16, 1>}, {transform_indices = @transform_3, window_bounds = array<i64: 1, 1, 16, 16>}]} {
    %c0_i32 = arith.constant 0 : i32
    %0 = arith.cmpi eq, %arg2, %c0_i32 : i32
    %1 = arith.extui %0 : i1 to i32
    %c0_i32_0 = arith.constant 0 : i32
    %2 = arith.cmpi ne, %1, %c0_i32_0 : i32
    scf.if %2 {
      %cst_201 = arith.constant 0.000000e+00 : f32
      %121 = vector.broadcast %cst_201 : f32 to vector<16x16xf32>
      %c0_202 = arith.constant 0 : index
      %c0_203 = arith.constant 0 : index
      %122 = vector.load %arg8[%c0_202, %c0_203] : memref<16x16xf32, #tpu.memory_space<vmem>>, vector<16x16xf32>
      tpu.vector_store %arg8[%c0_202, %c0_203], %121 {strides = array<i32>} : memref<16x16xf32, #tpu.memory_space<vmem>>, vector<16x16xf32>,
    } else {
    }
    %c0 = arith.constant 0 : index
    %c0_1 = arith.constant 0 : index
    %c0_2 = arith.constant 0 : index
    %c0_3 = arith.constant 0 : index
    %3 = vector.load %arg3[%c0, %c0_1, %c0_2, %c0_3] : memref<1x1x16x36xbf16, #tpu.memory_space<vmem>>, vector<1x1x16x4xbf16>
    %4 = vector.shape_cast %3 : vector<1x1x16x4xbf16> to vector<16x4xbf16>
    %c0_4 = arith.constant 0 : index
    %c0_5 = arith.constant 0 : index
    %5 = vector.load %arg7[%c0_4, %c0_5] : memref<144x16xbf16, #tpu.memory_space<vmem>>, vector<16x4xbf16>
    tpu.vector_store %arg7[%c0_4, %c0_5], %4 {strides = array<i32>} : memref<144x16xbf16, #tpu.memory_space<vmem>>, vector<16x4xbf16>,
    %c0_6 = arith.constant 0 : index
    %c0_7 = arith.constant 0 : index
    %c0_8 = arith.constant 0 : index
    %c6 = arith.constant 6 : index
    %6 = vector.load %arg3[%c0_6, %c0_7, %c0_8, %c6] : memref<1x1x16x36xbf16, #tpu.memory_space<vmem>>, vector<1x1x16x4xbf16>
    %7 = vector.shape_cast %6 : vector<1x1x16x4xbf16> to vector<16x4xbf16>
    %c0_9 = arith.constant 0 : index
    %c4 = arith.constant 4 : index
    %8 = vector.load %arg7[%c0_9, %c4] : memref<144x16xbf16, #tpu.memory_space<vmem>>, vector<16x4xbf16>
    tpu.vector_store %arg7[%c0_9, %c4], %7 {strides = array<i32>} : memref<144x16xbf16, #tpu.memory_space<vmem>>, vector<16x4xbf16>,
    %c0_10 = arith.constant 0 : index
    %c0_11 = arith.constant 0 : index
    %c0_12 = arith.constant 0 : index
    %c12 = arith.constant 12 : index
    %9 = vector.load %arg3[%c0_10, %c0_11, %c0_12, %c12] : memref<1x1x16x36xbf16, #tpu.memory_space<vmem>>, vector<1x1x16x4xbf16>
    %10 = vector.shape_cast %9 : vector<1x1x16x4xbf16> to vector<16x4xbf16>
    %c0_13 = arith.constant 0 : index
    %c8 = arith.constant 8 : index
    %11 = vector.load %arg7[%c0_13, %c8] : memref<144x16xbf16, #tpu.memory_space<vmem>>, vector<16x4xbf16>
    tpu.vector_store %arg7[%c0_13, %c8], %10 {strides = array<i32>} : memref<144x16xbf16, #tpu.memory_space<vmem>>, vector<16x4xbf16>,
    %c0_14 = arith.constant 0 : index
    %c0_15 = arith.constant 0 : index
    %c0_16 = arith.constant 0 : index
    %c18 = arith.constant 18 : index
    %12 = vector.load %arg3[%c0_14, %c0_15, %c0_16, %c18] : memref<1x1x16x36xbf16, #tpu.memory_space<vmem>>, vector<1x1x16x4xbf16>
    %13 = vector.shape_cast %12 : vector<1x1x16x4xbf16> to vector<16x4xbf16>
    %c0_17 = arith.constant 0 : index
    %c12_18 = arith.constant 12 : index
    %14 = vector.load %arg7[%c0_17, %c12_18] : memref<144x16xbf16, #tpu.memory_space<vmem>>, vector<16x4xbf16>
    tpu.vector_store %arg7[%c0_17, %c12_18], %13 {strides = array<i32>} : memref<144x16xbf16, #tpu.memory_space<vmem>>, vector<16x4xbf16>,
    %c0_19 = arith.constant 0 : index
    %c0_20 = arith.constant 0 : index
    %c0_21 = arith.constant 0 : index
    %c1 = arith.constant 1 : index
    %15 = vector.load %arg3[%c0_19, %c0_20, %c0_21, %c1] : memref<1x1x16x36xbf16, #tpu.memory_space<vmem>>, vector<1x1x16x4xbf16>
    %16 = vector.shape_cast %15 : vector<1x1x16x4xbf16> to vector<16x4xbf16>
    %c16 = arith.constant 16 : index
    %c0_22 = arith.constant 0 : index
    %17 = vector.load %arg7[%c16, %c0_22] : memref<144x16xbf16, #tpu.memory_space<vmem>>, vector<16x4xbf16>
    tpu.vector_store %arg7[%c16, %c0_22], %16 {strides = array<i32>} : memref<144x16xbf16, #tpu.memory_space<vmem>>, vector<16x4xbf16>,
    %c0_23 = arith.constant 0 : index
    %c0_24 = arith.constant 0 : index
    %c0_25 = arith.constant 0 : index
    %c7 = arith.constant 7 : index
    %18 = vector.load %arg3[%c0_23, %c0_24, %c0_25, %c7] : memref<1x1x16x36xbf16, #tpu.memory_space<vmem>>, vector<1x1x16x4xbf16>
    %19 = vector.shape_cast %18 : vector<1x1x16x4xbf16> to vector<16x4xbf16>
    %c16_26 = arith.constant 16 : index
    %c4_27 = arith.constant 4 : index
    %20 = vector.load %arg7[%c16_26, %c4_27] : memref<144x16xbf16, #tpu.memory_space<vmem>>, vector<16x4xbf16>
    tpu.vector_store %arg7[%c16_26, %c4_27], %19 {strides = array<i32>} : memref<144x16xbf16, #tpu.memory_space<vmem>>, vector<16x4xbf16>,
    %c0_28 = arith.constant 0 : index
    %c0_29 = arith.constant 0 : index
    %c0_30 = arith.constant 0 : index
    %c13 = arith.constant 13 : index
    %21 = vector.load %arg3[%c0_28, %c0_29, %c0_30, %c13] : memref<1x1x16x36xbf16, #tpu.memory_space<vmem>>, vector<1x1x16x4xbf16>
    %22 = vector.shape_cast %21 : vector<1x1x16x4xbf16> to vector<16x4xbf16>
    %c16_31 = arith.constant 16 : index
    %c8_32 = arith.constant 8 : index
    %23 = vector.load %arg7[%c16_31, %c8_32] : memref<144x16xbf16, #tpu.memory_space<vmem>>, vector<16x4xbf16>
    tpu.vector_store %arg7[%c16_31, %c8_32], %22 {strides = array<i32>} : memref<144x16xbf16, #tpu.memory_space<vmem>>, vector<16x4xbf16>,
    %c0_33 = arith.constant 0 : index
    %c0_34 = arith.constant 0 : index
    %c0_35 = arith.constant 0 : index
    %c19 = arith.constant 19 : index
    %24 = vector.load %arg3[%c0_33, %c0_34, %c0_35, %c19] : memref<1x1x16x36xbf16, #tpu.memory_space<vmem>>, vector<1x1x16x4xbf16>
    %25 = vector.shape_cast %24 : vector<1x1x16x4xbf16> to vector<16x4xbf16>
    %c16_36 = arith.constant 16 : index
    %c12_37 = arith.constant 12 : index
    %26 = vector.load %arg7[%c16_36, %c12_37] : memref<144x16xbf16, #tpu.memory_space<vmem>>, vector<16x4xbf16>
    tpu.vector_store %arg7[%c16_36, %c12_37], %25 {strides = array<i32>} : memref<144x16xbf16, #tpu.memory_space<vmem>>, vector<16x4xbf16>,
    %c0_38 = arith.constant 0 : index
    %c0_39 = arith.constant 0 : index
    %c0_40 = arith.constant 0 : index
    %c2 = arith.constant 2 : index
    %27 = vector.load %arg3[%c0_38, %c0_39, %c0_40, %c2] : memref<1x1x16x36xbf16, #tpu.memory_space<vmem>>, vector<1x1x16x4xbf16>
    %28 = vector.shape_cast %27 : vector<1x1x16x4xbf16> to vector<16x4xbf16>
    %c32 = arith.constant 32 : index
    %c0_41 = arith.constant 0 : index
    %29 = vector.load %arg7[%c32, %c0_41] : memref<144x16xbf16, #tpu.memory_space<vmem>>, vector<16x4xbf16>
    tpu.vector_store %arg7[%c32, %c0_41], %28 {strides = array<i32>} : memref<144x16xbf16, #tpu.memory_space<vmem>>, vector<16x4xbf16>,
    %c0_42 = arith.constant 0 : index
    %c0_43 = arith.constant 0 : index
    %c0_44 = arith.constant 0 : index
    %c8_45 = arith.constant 8 : index
    %30 = vector.load %arg3[%c0_42, %c0_43, %c0_44, %c8_45] : memref<1x1x16x36xbf16, #tpu.memory_space<vmem>>, vector<1x1x16x4xbf16>
    %31 = vector.shape_cast %30 : vector<1x1x16x4xbf16> to vector<16x4xbf16>
    %c32_46 = arith.constant 32 : index
    %c4_47 = arith.constant 4 : index
    %32 = vector.load %arg7[%c32_46, %c4_47] : memref<144x16xbf16, #tpu.memory_space<vmem>>, vector<16x4xbf16>
    tpu.vector_store %arg7[%c32_46, %c4_47], %31 {strides = array<i32>} : memref<144x16xbf16, #tpu.memory_space<vmem>>, vector<16x4xbf16>,
    %c0_48 = arith.constant 0 : index
    %c0_49 = arith.constant 0 : index
    %c0_50 = arith.constant 0 : index
    %c14 = arith.constant 14 : index
    %33 = vector.load %arg3[%c0_48, %c0_49, %c0_50, %c14] : memref<1x1x16x36xbf16, #tpu.memory_space<vmem>>, vector<1x1x16x4xbf16>
    %34 = vector.shape_cast %33 : vector<1x1x16x4xbf16> to vector<16x4xbf16>
    %c32_51 = arith.constant 32 : index
    %c8_52 = arith.constant 8 : index
    %35 = vector.load %arg7[%c32_51, %c8_52] : memref<144x16xbf16, #tpu.memory_space<vmem>>, vector<16x4xbf16>
    tpu.vector_store %arg7[%c32_51, %c8_52], %34 {strides = array<i32>} : memref<144x16xbf16, #tpu.memory_space<vmem>>, vector<16x4xbf16>,
    %c0_53 = arith.constant 0 : index
    %c0_54 = arith.constant 0 : index
    %c0_55 = arith.constant 0 : index
    %c20 = arith.constant 20 : index
    %36 = vector.load %arg3[%c0_53, %c0_54, %c0_55, %c20] : memref<1x1x16x36xbf16, #tpu.memory_space<vmem>>, vector<1x1x16x4xbf16>
    %37 = vector.shape_cast %36 : vector<1x1x16x4xbf16> to vector<16x4xbf16>
    %c32_56 = arith.constant 32 : index
    %c12_57 = arith.constant 12 : index
    %38 = vector.load %arg7[%c32_56, %c12_57] : memref<144x16xbf16, #tpu.memory_space<vmem>>, vector<16x4xbf16>
    tpu.vector_store %arg7[%c32_56, %c12_57], %37 {strides = array<i32>} : memref<144x16xbf16, #tpu.memory_space<vmem>>, vector<16x4xbf16>,
    %c0_58 = arith.constant 0 : index
    %c0_59 = arith.constant 0 : index
    %c0_60 = arith.constant 0 : index
    %c6_61 = arith.constant 6 : index
    %39 = vector.load %arg3[%c0_58, %c0_59, %c0_60, %c6_61] : memref<1x1x16x36xbf16, #tpu.memory_space<vmem>>, vector<1x1x16x4xbf16>
    %40 = vector.shape_cast %39 : vector<1x1x16x4xbf16> to vector<16x4xbf16>
    %c48 = arith.constant 48 : index
    %c0_62 = arith.constant 0 : index
    %41 = vector.load %arg7[%c48, %c0_62] : memref<144x16xbf16, #tpu.memory_space<vmem>>, vector<16x4xbf16>
    tpu.vector_store %arg7[%c48, %c0_62], %40 {strides = array<i32>} : memref<144x16xbf16, #tpu.memory_space<vmem>>, vector<16x4xbf16>,
    %c0_63 = arith.constant 0 : index
    %c0_64 = arith.constant 0 : index
    %c0_65 = arith.constant 0 : index
    %c12_66 = arith.constant 12 : index
    %42 = vector.load %arg3[%c0_63, %c0_64, %c0_65, %c12_66] : memref<1x1x16x36xbf16, #tpu.memory_space<vmem>>, vector<1x1x16x4xbf16>
    %43 = vector.shape_cast %42 : vector<1x1x16x4xbf16> to vector<16x4xbf16>
    %c48_67 = arith.constant 48 : index
    %c4_68 = arith.constant 4 : index
    %44 = vector.load %arg7[%c48_67, %c4_68] : memref<144x16xbf16, #tpu.memory_space<vmem>>, vector<16x4xbf16>
    tpu.vector_store %arg7[%c48_67, %c4_68], %43 {strides = array<i32>} : memref<144x16xbf16, #tpu.memory_space<vmem>>, vector<16x4xbf16>,
    %c0_69 = arith.constant 0 : index
    %c0_70 = arith.constant 0 : index
    %c0_71 = arith.constant 0 : index
    %c18_72 = arith.constant 18 : index
    %45 = vector.load %arg3[%c0_69, %c0_70, %c0_71, %c18_72] : memref<1x1x16x36xbf16, #tpu.memory_space<vmem>>, vector<1x1x16x4xbf16>
    %46 = vector.shape_cast %45 : vector<1x1x16x4xbf16> to vector<16x4xbf16>
    %c48_73 = arith.constant 48 : index
    %c8_74 = arith.constant 8 : index
    %47 = vector.load %arg7[%c48_73, %c8_74] : memref<144x16xbf16, #tpu.memory_space<vmem>>, vector<16x4xbf16>
    tpu.vector_store %arg7[%c48_73, %c8_74], %46 {strides = array<i32>} : memref<144x16xbf16, #tpu.memory_space<vmem>>, vector<16x4xbf16>,
    %c0_75 = arith.constant 0 : index
    %c0_76 = arith.constant 0 : index
    %c0_77 = arith.constant 0 : index
    %c24 = arith.constant 24 : index
    %48 = vector.load %arg3[%c0_75, %c0_76, %c0_77, %c24] : memref<1x1x16x36xbf16, #tpu.memory_space<vmem>>, vector<1x1x16x4xbf16>
    %49 = vector.shape_cast %48 : vector<1x1x16x4xbf16> to vector<16x4xbf16>
    %c48_78 = arith.constant 48 : index
    %c12_79 = arith.constant 12 : index
    %50 = vector.load %arg7[%c48_78, %c12_79] : memref<144x16xbf16, #tpu.memory_space<vmem>>, vector<16x4xbf16>
    tpu.vector_store %arg7[%c48_78, %c12_79], %49 {strides = array<i32>} : memref<144x16xbf16, #tpu.memory_space<vmem>>, vector<16x4xbf16>,
    %c0_80 = arith.constant 0 : index
    %c0_81 = arith.constant 0 : index
    %c0_82 = arith.constant 0 : index
    %c7_83 = arith.constant 7 : index
    %51 = vector.load %arg3[%c0_80, %c0_81, %c0_82, %c7_83] : memref<1x1x16x36xbf16, #tpu.memory_space<vmem>>, vector<1x1x16x4xbf16>
    %52 = vector.shape_cast %51 : vector<1x1x16x4xbf16> to vector<16x4xbf16>
    %c64 = arith.constant 64 : index
    %c0_84 = arith.constant 0 : index
    %53 = vector.load %arg7[%c64, %c0_84] : memref<144x16xbf16, #tpu.memory_space<vmem>>, vector<16x4xbf16>
    tpu.vector_store %arg7[%c64, %c0_84], %52 {strides = array<i32>} : memref<144x16xbf16, #tpu.memory_space<vmem>>, vector<16x4xbf16>,
    %c0_85 = arith.constant 0 : index
    %c0_86 = arith.constant 0 : index
    %c0_87 = arith.constant 0 : index
    %c13_88 = arith.constant 13 : index
    %54 = vector.load %arg3[%c0_85, %c0_86, %c0_87, %c13_88] : memref<1x1x16x36xbf16, #tpu.memory_space<vmem>>, vector<1x1x16x4xbf16>
    %55 = vector.shape_cast %54 : vector<1x1x16x4xbf16> to vector<16x4xbf16>
    %c64_89 = arith.constant 64 : index
    %c4_90 = arith.constant 4 : index
    %56 = vector.load %arg7[%c64_89, %c4_90] : memref<144x16xbf16, #tpu.memory_space<vmem>>, vector<16x4xbf16>
    tpu.vector_store %arg7[%c64_89, %c4_90], %55 {strides = array<i32>} : memref<144x16xbf16, #tpu.memory_space<vmem>>, vector<16x4xbf16>,
    %c0_91 = arith.constant 0 : index
    %c0_92 = arith.constant 0 : index
    %c0_93 = arith.constant 0 : index
    %c19_94 = arith.constant 19 : index
    %57 = vector.load %arg3[%c0_91, %c0_92, %c0_93, %c19_94] : memref<1x1x16x36xbf16, #tpu.memory_space<vmem>>, vector<1x1x16x4xbf16>
    %58 = vector.shape_cast %57 : vector<1x1x16x4xbf16> to vector<16x4xbf16>
    %c64_95 = arith.constant 64 : index
    %c8_96 = arith.constant 8 : index
    %59 = vector.load %arg7[%c64_95, %c8_96] : memref<144x16xbf16, #tpu.memory_space<vmem>>, vector<16x4xbf16>
    tpu.vector_store %arg7[%c64_95, %c8_96], %58 {strides = array<i32>} : memref<144x16xbf16, #tpu.memory_space<vmem>>, vector<16x4xbf16>,
    %c0_97 = arith.constant 0 : index
    %c0_98 = arith.constant 0 : index
    %c0_99 = arith.constant 0 : index
    %c25 = arith.constant 25 : index
    %60 = vector.load %arg3[%c0_97, %c0_98, %c0_99, %c25] : memref<1x1x16x36xbf16, #tpu.memory_space<vmem>>, vector<1x1x16x4xbf16>
    %61 = vector.shape_cast %60 : vector<1x1x16x4xbf16> to vector<16x4xbf16>
    %c64_100 = arith.constant 64 : index
    %c12_101 = arith.constant 12 : index
    %62 = vector.load %arg7[%c64_100, %c12_101] : memref<144x16xbf16, #tpu.memory_space<vmem>>, vector<16x4xbf16>
    tpu.vector_store %arg7[%c64_100, %c12_101], %61 {strides = array<i32>} : memref<144x16xbf16, #tpu.memory_space<vmem>>, vector<16x4xbf16>,
    %c0_102 = arith.constant 0 : index
    %c0_103 = arith.constant 0 : index
    %c0_104 = arith.constant 0 : index
    %c8_105 = arith.constant 8 : index
    %63 = vector.load %arg3[%c0_102, %c0_103, %c0_104, %c8_105] : memref<1x1x16x36xbf16, #tpu.memory_space<vmem>>, vector<1x1x16x4xbf16>
    %64 = vector.shape_cast %63 : vector<1x1x16x4xbf16> to vector<16x4xbf16>
    %c80 = arith.constant 80 : index
    %c0_106 = arith.constant 0 : index
    %65 = vector.load %arg7[%c80, %c0_106] : memref<144x16xbf16, #tpu.memory_space<vmem>>, vector<16x4xbf16>
    tpu.vector_store %arg7[%c80, %c0_106], %64 {strides = array<i32>} : memref<144x16xbf16, #tpu.memory_space<vmem>>, vector<16x4xbf16>,
    %c0_107 = arith.constant 0 : index
    %c0_108 = arith.constant 0 : index
    %c0_109 = arith.constant 0 : index
    %c14_110 = arith.constant 14 : index
    %66 = vector.load %arg3[%c0_107, %c0_108, %c0_109, %c14_110] : memref<1x1x16x36xbf16, #tpu.memory_space<vmem>>, vector<1x1x16x4xbf16>
    %67 = vector.shape_cast %66 : vector<1x1x16x4xbf16> to vector<16x4xbf16>
    %c80_111 = arith.constant 80 : index
    %c4_112 = arith.constant 4 : index
    %68 = vector.load %arg7[%c80_111, %c4_112] : memref<144x16xbf16, #tpu.memory_space<vmem>>, vector<16x4xbf16>
    tpu.vector_store %arg7[%c80_111, %c4_112], %67 {strides = array<i32>} : memref<144x16xbf16, #tpu.memory_space<vmem>>, vector<16x4xbf16>,
    %c0_113 = arith.constant 0 : index
    %c0_114 = arith.constant 0 : index
    %c0_115 = arith.constant 0 : index
    %c20_116 = arith.constant 20 : index
    %69 = vector.load %arg3[%c0_113, %c0_114, %c0_115, %c20_116] : memref<1x1x16x36xbf16, #tpu.memory_space<vmem>>, vector<1x1x16x4xbf16>
    %70 = vector.shape_cast %69 : vector<1x1x16x4xbf16> to vector<16x4xbf16>
    %c80_117 = arith.constant 80 : index
    %c8_118 = arith.constant 8 : index
    %71 = vector.load %arg7[%c80_117, %c8_118] : memref<144x16xbf16, #tpu.memory_space<vmem>>, vector<16x4xbf16>
    tpu.vector_store %arg7[%c80_117, %c8_118], %70 {strides = array<i32>} : memref<144x16xbf16, #tpu.memory_space<vmem>>, vector<16x4xbf16>,
    %c0_119 = arith.constant 0 : index
    %c0_120 = arith.constant 0 : index
    %c0_121 = arith.constant 0 : index
    %c26 = arith.constant 26 : index
    %72 = vector.load %arg3[%c0_119, %c0_120, %c0_121, %c26] : memref<1x1x16x36xbf16, #tpu.memory_space<vmem>>, vector<1x1x16x4xbf16>
    %73 = vector.shape_cast %72 : vector<1x1x16x4xbf16> to vector<16x4xbf16>
    %c80_122 = arith.constant 80 : index
    %c12_123 = arith.constant 12 : index
    %74 = vector.load %arg7[%c80_122, %c12_123] : memref<144x16xbf16, #tpu.memory_space<vmem>>, vector<16x4xbf16>
    tpu.vector_store %arg7[%c80_122, %c12_123], %73 {strides = array<i32>} : memref<144x16xbf16, #tpu.memory_space<vmem>>, vector<16x4xbf16>,
    %c0_124 = arith.constant 0 : index
    %c0_125 = arith.constant 0 : index
    %c0_126 = arith.constant 0 : index
    %c12_127 = arith.constant 12 : index
    %75 = vector.load %arg3[%c0_124, %c0_125, %c0_126, %c12_127] : memref<1x1x16x36xbf16, #tpu.memory_space<vmem>>, vector<1x1x16x4xbf16>
    %76 = vector.shape_cast %75 : vector<1x1x16x4xbf16> to vector<16x4xbf16>
    %c96 = arith.constant 96 : index
    %c0_128 = arith.constant 0 : index
    %77 = vector.load %arg7[%c96, %c0_128] : memref<144x16xbf16, #tpu.memory_space<vmem>>, vector<16x4xbf16>
    tpu.vector_store %arg7[%c96, %c0_128], %76 {strides = array<i32>} : memref<144x16xbf16, #tpu.memory_space<vmem>>, vector<16x4xbf16>,
    %c0_129 = arith.constant 0 : index
    %c0_130 = arith.constant 0 : index
    %c0_131 = arith.constant 0 : index
    %c18_132 = arith.constant 18 : index
    %78 = vector.load %arg3[%c0_129, %c0_130, %c0_131, %c18_132] : memref<1x1x16x36xbf16, #tpu.memory_space<vmem>>, vector<1x1x16x4xbf16>
    %79 = vector.shape_cast %78 : vector<1x1x16x4xbf16> to vector<16x4xbf16>
    %c96_133 = arith.constant 96 : index
    %c4_134 = arith.constant 4 : index
    %80 = vector.load %arg7[%c96_133, %c4_134] : memref<144x16xbf16, #tpu.memory_space<vmem>>, vector<16x4xbf16>
    tpu.vector_store %arg7[%c96_133, %c4_134], %79 {strides = array<i32>} : memref<144x16xbf16, #tpu.memory_space<vmem>>, vector<16x4xbf16>,
    %c0_135 = arith.constant 0 : index
    %c0_136 = arith.constant 0 : index
    %c0_137 = arith.constant 0 : index
    %c24_138 = arith.constant 24 : index
    %81 = vector.load %arg3[%c0_135, %c0_136, %c0_137, %c24_138] : memref<1x1x16x36xbf16, #tpu.memory_space<vmem>>, vector<1x1x16x4xbf16>
    %82 = vector.shape_cast %81 : vector<1x1x16x4xbf16> to vector<16x4xbf16>
    %c96_139 = arith.constant 96 : index
    %c8_140 = arith.constant 8 : index
    %83 = vector.load %arg7[%c96_139, %c8_140] : memref<144x16xbf16, #tpu.memory_space<vmem>>, vector<16x4xbf16>
    tpu.vector_store %arg7[%c96_139, %c8_140], %82 {strides = array<i32>} : memref<144x16xbf16, #tpu.memory_space<vmem>>, vector<16x4xbf16>,
    %c0_141 = arith.constant 0 : index
    %c0_142 = arith.constant 0 : index
    %c0_143 = arith.constant 0 : index
    %c30 = arith.constant 30 : index
    %84 = vector.load %arg3[%c0_141, %c0_142, %c0_143, %c30] : memref<1x1x16x36xbf16, #tpu.memory_space<vmem>>, vector<1x1x16x4xbf16>
    %85 = vector.shape_cast %84 : vector<1x1x16x4xbf16> to vector<16x4xbf16>
    %c96_144 = arith.constant 96 : index
    %c12_145 = arith.constant 12 : index
    %86 = vector.load %arg7[%c96_144, %c12_145] : memref<144x16xbf16, #tpu.memory_space<vmem>>, vector<16x4xbf16>
    tpu.vector_store %arg7[%c96_144, %c12_145], %85 {strides = array<i32>} : memref<144x16xbf16, #tpu.memory_space<vmem>>, vector<16x4xbf16>,
    %c0_146 = arith.constant 0 : index
    %c0_147 = arith.constant 0 : index
    %c0_148 = arith.constant 0 : index
    %c13_149 = arith.constant 13 : index
    %87 = vector.load %arg3[%c0_146, %c0_147, %c0_148, %c13_149] : memref<1x1x16x36xbf16, #tpu.memory_space<vmem>>, vector<1x1x16x4xbf16>
    %88 = vector.shape_cast %87 : vector<1x1x16x4xbf16> to vector<16x4xbf16>
    %c112 = arith.constant 112 : index
    %c0_150 = arith.constant 0 : index
    %89 = vector.load %arg7[%c112, %c0_150] : memref<144x16xbf16, #tpu.memory_space<vmem>>, vector<16x4xbf16>
    tpu.vector_store %arg7[%c112, %c0_150], %88 {strides = array<i32>} : memref<144x16xbf16, #tpu.memory_space<vmem>>, vector<16x4xbf16>,
    %c0_151 = arith.constant 0 : index
    %c0_152 = arith.constant 0 : index
    %c0_153 = arith.constant 0 : index
    %c19_154 = arith.constant 19 : index
    %90 = vector.load %arg3[%c0_151, %c0_152, %c0_153, %c19_154] : memref<1x1x16x36xbf16, #tpu.memory_space<vmem>>, vector<1x1x16x4xbf16>
    %91 = vector.shape_cast %90 : vector<1x1x16x4xbf16> to vector<16x4xbf16>
    %c112_155 = arith.constant 112 : index
    %c4_156 = arith.constant 4 : index
    %92 = vector.load %arg7[%c112_155, %c4_156] : memref<144x16xbf16, #tpu.memory_space<vmem>>, vector<16x4xbf16>
    tpu.vector_store %arg7[%c112_155, %c4_156], %91 {strides = array<i32>} : memref<144x16xbf16, #tpu.memory_space<vmem>>, vector<16x4xbf16>,
    %c0_157 = arith.constant 0 : index
    %c0_158 = arith.constant 0 : index
    %c0_159 = arith.constant 0 : index
    %c25_160 = arith.constant 25 : index
    %93 = vector.load %arg3[%c0_157, %c0_158, %c0_159, %c25_160] : memref<1x1x16x36xbf16, #tpu.memory_space<vmem>>, vector<1x1x16x4xbf16>
    %94 = vector.shape_cast %93 : vector<1x1x16x4xbf16> to vector<16x4xbf16>
    %c112_161 = arith.constant 112 : index
    %c8_162 = arith.constant 8 : index
    %95 = vector.load %arg7[%c112_161, %c8_162] : memref<144x16xbf16, #tpu.memory_space<vmem>>, vector<16x4xbf16>
    tpu.vector_store %arg7[%c112_161, %c8_162], %94 {strides = array<i32>} : memref<144x16xbf16, #tpu.memory_space<vmem>>, vector<16x4xbf16>,
    %c0_163 = arith.constant 0 : index
    %c0_164 = arith.constant 0 : index
    %c0_165 = arith.constant 0 : index
    %c31 = arith.constant 31 : index
    %96 = vector.load %arg3[%c0_163, %c0_164, %c0_165, %c31] : memref<1x1x16x36xbf16, #tpu.memory_space<vmem>>, vector<1x1x16x4xbf16>
    %97 = vector.shape_cast %96 : vector<1x1x16x4xbf16> to vector<16x4xbf16>
    %c112_166 = arith.constant 112 : index
    %c12_167 = arith.constant 12 : index
    %98 = vector.load %arg7[%c112_166, %c12_167] : memref<144x16xbf16, #tpu.memory_space<vmem>>, vector<16x4xbf16>
    tpu.vector_store %arg7[%c112_166, %c12_167], %97 {strides = array<i32>} : memref<144x16xbf16, #tpu.memory_space<vmem>>, vector<16x4xbf16>,
    %c0_168 = arith.constant 0 : index
    %c0_169 = arith.constant 0 : index
    %c0_170 = arith.constant 0 : index
    %c14_171 = arith.constant 14 : index
    %99 = vector.load %arg3[%c0_168, %c0_169, %c0_170, %c14_171] : memref<1x1x16x36xbf16, #tpu.memory_space<vmem>>, vector<1x1x16x4xbf16>
    %100 = vector.shape_cast %99 : vector<1x1x16x4xbf16> to vector<16x4xbf16>
    %c128 = arith.constant 128 : index
    %c0_172 = arith.constant 0 : index
    %101 = vector.load %arg7[%c128, %c0_172] : memref<144x16xbf16, #tpu.memory_space<vmem>>, vector<16x4xbf16>
    tpu.vector_store %arg7[%c128, %c0_172], %100 {strides = array<i32>} : memref<144x16xbf16, #tpu.memory_space<vmem>>, vector<16x4xbf16>,
    %c0_173 = arith.constant 0 : index
    %c0_174 = arith.constant 0 : index
    %c0_175 = arith.constant 0 : index
    %c20_176 = arith.constant 20 : index
    %102 = vector.load %arg3[%c0_173, %c0_174, %c0_175, %c20_176] : memref<1x1x16x36xbf16, #tpu.memory_space<vmem>>, vector<1x1x16x4xbf16>
    %103 = vector.shape_cast %102 : vector<1x1x16x4xbf16> to vector<16x4xbf16>
    %c128_177 = arith.constant 128 : index
    %c4_178 = arith.constant 4 : index
    %104 = vector.load %arg7[%c128_177, %c4_178] : memref<144x16xbf16, #tpu.memory_space<vmem>>, vector<16x4xbf16>
    tpu.vector_store %arg7[%c128_177, %c4_178], %103 {strides = array<i32>} : memref<144x16xbf16, #tpu.memory_space<vmem>>, vector<16x4xbf16>,
    %c0_179 = arith.constant 0 : index
    %c0_180 = arith.constant 0 : index
    %c0_181 = arith.constant 0 : index
    %c26_182 = arith.constant 26 : index
    %105 = vector.load %arg3[%c0_179, %c0_180, %c0_181, %c26_182] : memref<1x1x16x36xbf16, #tpu.memory_space<vmem>>, vector<1x1x16x4xbf16>
    %106 = vector.shape_cast %105 : vector<1x1x16x4xbf16> to vector<16x4xbf16>
    %c128_183 = arith.constant 128 : index
    %c8_184 = arith.constant 8 : index
    %107 = vector.load %arg7[%c128_183, %c8_184] : memref<144x16xbf16, #tpu.memory_space<vmem>>, vector<16x4xbf16>
    tpu.vector_store %arg7[%c128_183, %c8_184], %106 {strides = array<i32>} : memref<144x16xbf16, #tpu.memory_space<vmem>>, vector<16x4xbf16>,
    %c0_185 = arith.constant 0 : index
    %c0_186 = arith.constant 0 : index
    %c0_187 = arith.constant 0 : index
    %c32_188 = arith.constant 32 : index
    %108 = vector.load %arg3[%c0_185, %c0_186, %c0_187, %c32_188] : memref<1x1x16x36xbf16, #tpu.memory_space<vmem>>, vector<1x1x16x4xbf16>
    %109 = vector.shape_cast %108 : vector<1x1x16x4xbf16> to vector<16x4xbf16>
    %c128_189 = arith.constant 128 : index
    %c12_190 = arith.constant 12 : index
    %110 = vector.load %arg7[%c128_189, %c12_190] : memref<144x16xbf16, #tpu.memory_space<vmem>>, vector<16x4xbf16>
    tpu.vector_store %arg7[%c128_189, %c12_190], %109 {strides = array<i32>} : memref<144x16xbf16, #tpu.memory_space<vmem>>, vector<16x4xbf16>,
    %c0_191 = arith.constant 0 : index
    %c0_192 = arith.constant 0 : index
    %111 = vector.load %arg8[%c0_191, %c0_192] : memref<16x16xf32, #tpu.memory_space<vmem>>, vector<16x16xf32>
    %c0_193 = arith.constant 0 : index
    %c0_194 = arith.constant 0 : index
    %c0_195 = arith.constant 0 : index
    %112 = vector.load %arg4[%c0_193, %c0_194, %c0_195] : memref<1x16x144xbf16, #tpu.memory_space<vmem>>, vector<1x16x144xbf16>
    %113 = vector.shape_cast %112 : vector<1x16x144xbf16> to vector<16x144xbf16>
    %c0_196 = arith.constant 0 : index
    %c0_197 = arith.constant 0 : index
    %114 = vector.load %arg7[%c0_196, %c0_197] : memref<144x16xbf16, #tpu.memory_space<vmem>>, vector<144x16xbf16>
    %cst = arith.constant dense<0.000000e+00> : vector<16x16xf32>
    %115 = tpu.matmul %113, %114, %cst {dimension_numbers = #tpu.dot_dimension_numbers<[1], [0], [0], [1], [0, 0, 1, 1], [], []>} : vector<16x144xbf16>, vector<144x16xbf16>, vector<16x16xf32> -> vector<16x16xf32>
    %116 = arith.addf %111, %115 : vector<16x16xf32>
    %c0_198 = arith.constant 0 : index
    %c0_199 = arith.constant 0 : index
    %117 = vector.load %arg8[%c0_198, %c0_199] : memref<16x16xf32, #tpu.memory_space<vmem>>, vector<16x16xf32>
    tpu.vector_store %arg8[%c0_198, %c0_199], %116 {strides = array<i32>} : memref<16x16xf32, #tpu.memory_space<vmem>>, vector<16x16xf32>,
    %c2_i32 = arith.constant 2 : i32
    %118 = arith.cmpi eq, %arg2, %c2_i32 : i32
    %119 = arith.extui %118 : i1 to i32
    %c0_i32_200 = arith.constant 0 : i32
    %120 = arith.cmpi ne, %119, %c0_i32_200 : i32
    scf.if %120 {
      %c0_201 = arith.constant 0 : index
      %c0_202 = arith.constant 0 : index
      %121 = vector.load %arg8[%c0_201, %c0_202] : memref<16x16xf32, #tpu.memory_space<vmem>>, vector<16x16xf32>
      %c0_203 = arith.constant 0 : index
      %c0_204 = arith.constant 0 : index
      %122 = vector.load %arg5[%c0_203, %c0_204] : memref<16x1xf32, #tpu.memory_space<vmem>>, vector<16x1xf32>
      %123 = vector.broadcast %122 : vector<16x1xf32> to vector<16x16xf32>
      %124 = arith.addf %121, %123 : vector<16x16xf32>
      %cst_205 = arith.constant 0.000000e+00 : f32
      %125 = vector.broadcast %cst_205 : f32 to vector<16x16xf32>
      %126 = arith.maximumf %124, %125 : vector<16x16xf32>
      %127 = arith.truncf %126 : vector<16x16xf32> to vector<16x16xbf16>
      %c0_206 = arith.constant 0 : index
      %c0_207 = arith.constant 0 : index
      %c0_208 = arith.constant 0 : index
      %c0_209 = arith.constant 0 : index
      %128 = vector.load %arg6[%c0_206, %c0_207, %c0_208, %c0_209] : memref<1x1x16x16xbf16, #tpu.memory_space<vmem>>, vector<1x1x16x16xbf16>
      %129 = vector.shape_cast %128 : vector<1x1x16x16xbf16> to vector<16x16xbf16>
      %130 = vector.shape_cast %127 : vector<16x16xbf16> to vector<1x1x16x16xbf16>
      tpu.vector_store %arg6[%c0_206, %c0_207, %c0_208, %c0_209], %130 {strides = array<i32>} : memref<1x1x16x16xbf16, #tpu.memory_space<vmem>>, vector<1x1x16x16xbf16>,
    } else {
    }
    return
  }
  func.func @transform_0(%arg0: i32, %arg1: i32, %arg2: i32) -> (i32, i32, i32, i32) {
    %0 = arith.addi %arg1, %arg2 : i32
    %c0_i32 = arith.constant 0 : i32
    %c0_i32_0 = arith.constant 0 : i32
    %c0_i32_1 = arith.constant 0 : i32
    return %arg0, %0, %c0_i32, %c0_i32_0 : i32, i32, i32, i32
  }
  func.func @transform_1(%arg0: i32, %arg1: i32, %arg2: i32) -> (i32, i32, i32) {
    %c0_i32 = arith.constant 0 : i32
    %c0_i32_0 = arith.constant 0 : i32
    %c0_i32_1 = arith.constant 0 : i32
    return %arg2, %c0_i32, %c0_i32_0 : i32, i32, i32
  }
  func.func @transform_2(%arg0: i32, %arg1: i32, %arg2: i32) -> (i32, i32) {
    %c0_i32 = arith.constant 0 : i32
    %c0_i32_0 = arith.constant 0 : i32
    %c0_i32_1 = arith.constant 0 : i32
    return %c0_i32, %c0_i32_0 : i32, i32
  }
  func.func @transform_3(%arg0: i32, %arg1: i32, %arg2: i32) -> (i32, i32, i32, i32) {
    %c0_i32 = arith.constant 0 : i32
    %c0_i32_0 = arith.constant 0 : i32
    %c0_i32_1 = arith.constant 0 : i32
    return %arg0, %arg1, %c0_i32, %c0_i32_0 : i32, i32, i32, i32
  }
}

module attributes {stable_mosaic.version = 11 : i64} {
  func.func @_wx_kernel(%arg0: i32, %arg1: memref<1x432x4xbf16, #tpu.memory_space<vmem>>, %arg2: memref<32x432xbf16, #tpu.memory_space<vmem>>, %arg3: memref<32x1xf32, #tpu.memory_space<vmem>>, %arg4: memref<1x32x4xbf16, #tpu.memory_space<vmem>>) attributes {dimension_semantics = [#tpu.dimension_semantics<parallel>], iteration_bounds = array<i64: 4>, scalar_prefetch = 0 : i64, scratch_operands = 0 : i64, tpu.core_type = #tpu.core_type<tc>, window_params = [{transform_indices = @transform_0, window_bounds = array<i64: 1, 432, 4>}, {pipeline_mode = #tpu.pipeline_mode<synchronous>, transform_indices = @transform_1, window_bounds = array<i64: 32, 432>}, {pipeline_mode = #tpu.pipeline_mode<synchronous>, transform_indices = @transform_2, window_bounds = array<i64: 32, 1>}, {transform_indices = @transform_3, window_bounds = array<i64: 1, 32, 4>}]} {
    %c0 = arith.constant 0 : index
    %c0_0 = arith.constant 0 : index
    %0 = vector.load %arg2[%c0, %c0_0] : memref<32x432xbf16, #tpu.memory_space<vmem>>, vector<32x432xbf16>
    %c0_1 = arith.constant 0 : index
    %c0_2 = arith.constant 0 : index
    %c0_3 = arith.constant 0 : index
    %1 = vector.load %arg1[%c0_1, %c0_2, %c0_3] : memref<1x432x4xbf16, #tpu.memory_space<vmem>>, vector<1x432x4xbf16>
    %2 = vector.shape_cast %1 : vector<1x432x4xbf16> to vector<432x4xbf16>
    %cst = arith.constant dense<0.000000e+00> : vector<32x4xf32>
    %3 = tpu.matmul %0, %2, %cst {dimension_numbers = #tpu.dot_dimension_numbers<[1], [0], [0], [1], [0, 0, 1, 1], [], []>} : vector<32x432xbf16>, vector<432x4xbf16>, vector<32x4xf32> -> vector<32x4xf32>
    %c0_4 = arith.constant 0 : index
    %c0_5 = arith.constant 0 : index
    %4 = vector.load %arg3[%c0_4, %c0_5] : memref<32x1xf32, #tpu.memory_space<vmem>>, vector<32x1xf32>
    %5 = vector.broadcast %4 : vector<32x1xf32> to vector<32x4xf32>
    %6 = arith.addf %3, %5 : vector<32x4xf32>
    %cst_6 = arith.constant 0.000000e+00 : f32
    %7 = vector.broadcast %cst_6 : f32 to vector<32x4xf32>
    %8 = arith.maximumf %6, %7 : vector<32x4xf32>
    %9 = arith.truncf %8 : vector<32x4xf32> to vector<32x4xbf16>
    %c0_7 = arith.constant 0 : index
    %c0_8 = arith.constant 0 : index
    %c0_9 = arith.constant 0 : index
    %10 = vector.load %arg4[%c0_7, %c0_8, %c0_9] : memref<1x32x4xbf16, #tpu.memory_space<vmem>>, vector<1x32x4xbf16>
    %11 = vector.shape_cast %10 : vector<1x32x4xbf16> to vector<32x4xbf16>
    %12 = vector.shape_cast %9 : vector<32x4xbf16> to vector<1x32x4xbf16>
    tpu.vector_store %arg4[%c0_7, %c0_8, %c0_9], %12 {strides = array<i32>} : memref<1x32x4xbf16, #tpu.memory_space<vmem>>, vector<1x32x4xbf16>,
    return
  }
  func.func @transform_0(%arg0: i32) -> (i32, i32, i32) {
    %c0_i32 = arith.constant 0 : i32
    %c0_i32_0 = arith.constant 0 : i32
    %c0_i32_1 = arith.constant 0 : i32
    return %arg0, %c0_i32, %c0_i32_0 : i32, i32, i32
  }
  func.func @transform_1(%arg0: i32) -> (i32, i32) {
    %c0_i32 = arith.constant 0 : i32
    %c0_i32_0 = arith.constant 0 : i32
    %c0_i32_1 = arith.constant 0 : i32
    return %c0_i32, %c0_i32_0 : i32, i32
  }
  func.func @transform_2(%arg0: i32) -> (i32, i32) {
    %c0_i32 = arith.constant 0 : i32
    %c0_i32_0 = arith.constant 0 : i32
    %c0_i32_1 = arith.constant 0 : i32
    return %c0_i32, %c0_i32_0 : i32, i32
  }
  func.func @transform_3(%arg0: i32) -> (i32, i32, i32) {
    %c0_i32 = arith.constant 0 : i32
    %c0_i32_0 = arith.constant 0 : i32
    %c0_i32_1 = arith.constant 0 : i32
    return %arg0, %c0_i32, %c0_i32_0 : i32, i32, i32
  }
}

module attributes {stable_mosaic.version = 11 : i64} {
  func.func @_conv3_slab_kernel(%arg0: i32, %arg1: i32, %arg2: i32, %arg3: memref<1x1x32x16xbf16, #tpu.memory_space<vmem>>, %arg4: memref<1x32x288xbf16, #tpu.memory_space<vmem>>, %arg5: memref<32x1xf32, #tpu.memory_space<vmem>>, %arg6: memref<1x1x32x4xbf16, #tpu.memory_space<vmem>>, %arg7: memref<288x4xbf16, #tpu.memory_space<vmem>>, %arg8: memref<32x4xf32, #tpu.memory_space<vmem>>) attributes {dimension_semantics = [#tpu.dimension_semantics<parallel>, #tpu.dimension_semantics<parallel>, #tpu.dimension_semantics<arbitrary>], iteration_bounds = array<i64: 2, 2, 3>, scalar_prefetch = 0 : i64, scratch_operands = 2 : i64, tpu.core_type = #tpu.core_type<tc>, window_params = [{transform_indices = @transform_0, window_bounds = array<i64: 1, 1, 32, 16>}, {transform_indices = @transform_1, window_bounds = array<i64: 1, 32, 288>}, {pipeline_mode = #tpu.pipeline_mode<synchronous>, transform_indices = @transform_2, window_bounds = array<i64: 32, 1>}, {transform_indices = @transform_3, window_bounds = array<i64: 1, 1, 32, 4>}]} {
    %c0_i32 = arith.constant 0 : i32
    %0 = arith.cmpi eq, %arg2, %c0_i32 : i32
    %1 = arith.extui %0 : i1 to i32
    %c0_i32_0 = arith.constant 0 : i32
    %2 = arith.cmpi ne, %1, %c0_i32_0 : i32
    scf.if %2 {
      %cst_99 = arith.constant 0.000000e+00 : f32
      %67 = vector.broadcast %cst_99 : f32 to vector<32x4xf32>
      %c0_100 = arith.constant 0 : index
      %c0_101 = arith.constant 0 : index
      %68 = vector.load %arg8[%c0_100, %c0_101] : memref<32x4xf32, #tpu.memory_space<vmem>>, vector<32x4xf32>
      tpu.vector_store %arg8[%c0_100, %c0_101], %67 {strides = array<i32>} : memref<32x4xf32, #tpu.memory_space<vmem>>, vector<32x4xf32>,
    } else {
    }
    %c0 = arith.constant 0 : index
    %c0_1 = arith.constant 0 : index
    %c0_2 = arith.constant 0 : index
    %c0_3 = arith.constant 0 : index
    %3 = vector.load %arg3[%c0, %c0_1, %c0_2, %c0_3] : memref<1x1x32x16xbf16, #tpu.memory_space<vmem>>, vector<1x1x32x2xbf16>
    %4 = vector.shape_cast %3 : vector<1x1x32x2xbf16> to vector<32x2xbf16>
    %c0_4 = arith.constant 0 : index
    %c0_5 = arith.constant 0 : index
    %5 = vector.load %arg7[%c0_4, %c0_5] : memref<288x4xbf16, #tpu.memory_space<vmem>>, vector<32x2xbf16>
    tpu.vector_store %arg7[%c0_4, %c0_5], %4 {strides = array<i32>} : memref<288x4xbf16, #tpu.memory_space<vmem>>, vector<32x2xbf16>,
    %c0_6 = arith.constant 0 : index
    %c0_7 = arith.constant 0 : index
    %c0_8 = arith.constant 0 : index
    %c4 = arith.constant 4 : index
    %6 = vector.load %arg3[%c0_6, %c0_7, %c0_8, %c4] : memref<1x1x32x16xbf16, #tpu.memory_space<vmem>>, vector<1x1x32x2xbf16>
    %7 = vector.shape_cast %6 : vector<1x1x32x2xbf16> to vector<32x2xbf16>
    %c0_9 = arith.constant 0 : index
    %c2 = arith.constant 2 : index
    %8 = vector.load %arg7[%c0_9, %c2] : memref<288x4xbf16, #tpu.memory_space<vmem>>, vector<32x2xbf16>
    tpu.vector_store %arg7[%c0_9, %c2], %7 {strides = array<i32>} : memref<288x4xbf16, #tpu.memory_space<vmem>>, vector<32x2xbf16>,
    %c0_10 = arith.constant 0 : index
    %c0_11 = arith.constant 0 : index
    %c0_12 = arith.constant 0 : index
    %c1 = arith.constant 1 : index
    %9 = vector.load %arg3[%c0_10, %c0_11, %c0_12, %c1] : memref<1x1x32x16xbf16, #tpu.memory_space<vmem>>, vector<1x1x32x2xbf16>
    %10 = vector.shape_cast %9 : vector<1x1x32x2xbf16> to vector<32x2xbf16>
    %c32 = arith.constant 32 : index
    %c0_13 = arith.constant 0 : index
    %11 = vector.load %arg7[%c32, %c0_13] : memref<288x4xbf16, #tpu.memory_space<vmem>>, vector<32x2xbf16>
    tpu.vector_store %arg7[%c32, %c0_13], %10 {strides = array<i32>} : memref<288x4xbf16, #tpu.memory_space<vmem>>, vector<32x2xbf16>,
    %c0_14 = arith.constant 0 : index
    %c0_15 = arith.constant 0 : index
    %c0_16 = arith.constant 0 : index
    %c5 = arith.constant 5 : index
    %12 = vector.load %arg3[%c0_14, %c0_15, %c0_16, %c5] : memref<1x1x32x16xbf16, #tpu.memory_space<vmem>>, vector<1x1x32x2xbf16>
    %13 = vector.shape_cast %12 : vector<1x1x32x2xbf16> to vector<32x2xbf16>
    %c32_17 = arith.constant 32 : index
    %c2_18 = arith.constant 2 : index
    %14 = vector.load %arg7[%c32_17, %c2_18] : memref<288x4xbf16, #tpu.memory_space<vmem>>, vector<32x2xbf16>
    tpu.vector_store %arg7[%c32_17, %c2_18], %13 {strides = array<i32>} : memref<288x4xbf16, #tpu.memory_space<vmem>>, vector<32x2xbf16>,
    %c0_19 = arith.constant 0 : index
    %c0_20 = arith.constant 0 : index
    %c0_21 = arith.constant 0 : index
    %c2_22 = arith.constant 2 : index
    %15 = vector.load %arg3[%c0_19, %c0_20, %c0_21, %c2_22] : memref<1x1x32x16xbf16, #tpu.memory_space<vmem>>, vector<1x1x32x2xbf16>
    %16 = vector.shape_cast %15 : vector<1x1x32x2xbf16> to vector<32x2xbf16>
    %c64 = arith.constant 64 : index
    %c0_23 = arith.constant 0 : index
    %17 = vector.load %arg7[%c64, %c0_23] : memref<288x4xbf16, #tpu.memory_space<vmem>>, vector<32x2xbf16>
    tpu.vector_store %arg7[%c64, %c0_23], %16 {strides = array<i32>} : memref<288x4xbf16, #tpu.memory_space<vmem>>, vector<32x2xbf16>,
    %c0_24 = arith.constant 0 : index
    %c0_25 = arith.constant 0 : index
    %c0_26 = arith.constant 0 : index
    %c6 = arith.constant 6 : index
    %18 = vector.load %arg3[%c0_24, %c0_25, %c0_26, %c6] : memref<1x1x32x16xbf16, #tpu.memory_space<vmem>>, vector<1x1x32x2xbf16>
    %19 = vector.shape_cast %18 : vector<1x1x32x2xbf16> to vector<32x2xbf16>
    %c64_27 = arith.constant 64 : index
    %c2_28 = arith.constant 2 : index
    %20 = vector.load %arg7[%c64_27, %c2_28] : memref<288x4xbf16, #tpu.memory_space<vmem>>, vector<32x2xbf16>
    tpu.vector_store %arg7[%c64_27, %c2_28], %19 {strides = array<i32>} : memref<288x4xbf16, #tpu.memory_space<vmem>>, vector<32x2xbf16>,
    %c0_29 = arith.constant 0 : index
    %c0_30 = arith.constant 0 : index
    %c0_31 = arith.constant 0 : index
    %c4_32 = arith.constant 4 : index
    %21 = vector.load %arg3[%c0_29, %c0_30, %c0_31, %c4_32] : memref<1x1x32x16xbf16, #tpu.memory_space<vmem>>, vector<1x1x32x2xbf16>
    %22 = vector.shape_cast %21 : vector<1x1x32x2xbf16> to vector<32x2xbf16>
    %c96 = arith.constant 96 : index
    %c0_33 = arith.constant 0 : index
    %23 = vector.load %arg7[%c96, %c0_33] : memref<288x4xbf16, #tpu.memory_space<vmem>>, vector<32x2xbf16>
    tpu.vector_store %arg7[%c96, %c0_33], %22 {strides = array<i32>} : memref<288x4xbf16, #tpu.memory_space<vmem>>, vector<32x2xbf16>,
    %c0_34 = arith.constant 0 : index
    %c0_35 = arith.constant 0 : index
    %c0_36 = arith.constant 0 : index
    %c8 = arith.constant 8 : index
    %24 = vector.load %arg3[%c0_34, %c0_35, %c0_36, %c8] : memref<1x1x32x16xbf16, #tpu.memory_space<vmem>>, vector<1x1x32x2xbf16>
    %25 = vector.shape_cast %24 : vector<1x1x32x2xbf16> to vector<32x2xbf16>
    %c96_37 = arith.constant 96 : index
    %c2_38 = arith.constant 2 : index
    %26 = vector.load %arg7[%c96_37, %c2_38] : memref<288x4xbf16, #tpu.memory_space<vmem>>, vector<32x2xbf16>
    tpu.vector_store %arg7[%c96_37, %c2_38], %25 {strides = array<i32>} : memref<288x4xbf16, #tpu.memory_space<vmem>>, vector<32x2xbf16>,
    %c0_39 = arith.constant 0 : index
    %c0_40 = arith.constant 0 : index
    %c0_41 = arith.constant 0 : index
    %c5_42 = arith.constant 5 : index
    %27 = vector.load %arg3[%c0_39, %c0_40, %c0_41, %c5_42] : memref<1x1x32x16xbf16, #tpu.memory_space<vmem>>, vector<1x1x32x2xbf16>
    %28 = vector.shape_cast %27 : vector<1x1x32x2xbf16> to vector<32x2xbf16>
    %c128 = arith.constant 128 : index
    %c0_43 = arith.constant 0 : index
    %29 = vector.load %arg7[%c128, %c0_43] : memref<288x4xbf16, #tpu.memory_space<vmem>>, vector<32x2xbf16>
    tpu.vector_store %arg7[%c128, %c0_43], %28 {strides = array<i32>} : memref<288x4xbf16, #tpu.memory_space<vmem>>, vector<32x2xbf16>,
    %c0_44 = arith.constant 0 : index
    %c0_45 = arith.constant 0 : index
    %c0_46 = arith.constant 0 : index
    %c9 = arith.constant 9 : index
    %30 = vector.load %arg3[%c0_44, %c0_45, %c0_46, %c9] : memref<1x1x32x16xbf16, #tpu.memory_space<vmem>>, vector<1x1x32x2xbf16>
    %31 = vector.shape_cast %30 : vector<1x1x32x2xbf16> to vector<32x2xbf16>
    %c128_47 = arith.constant 128 : index
    %c2_48 = arith.constant 2 : index
    %32 = vector.load %arg7[%c128_47, %c2_48] : memref<288x4xbf16, #tpu.memory_space<vmem>>, vector<32x2xbf16>
    tpu.vector_store %arg7[%c128_47, %c2_48], %31 {strides = array<i32>} : memref<288x4xbf16, #tpu.memory_space<vmem>>, vector<32x2xbf16>,
    %c0_49 = arith.constant 0 : index
    %c0_50 = arith.constant 0 : index
    %c0_51 = arith.constant 0 : index
    %c6_52 = arith.constant 6 : index
    %33 = vector.load %arg3[%c0_49, %c0_50, %c0_51, %c6_52] : memref<1x1x32x16xbf16, #tpu.memory_space<vmem>>, vector<1x1x32x2xbf16>
    %34 = vector.shape_cast %33 : vector<1x1x32x2xbf16> to vector<32x2xbf16>
    %c160 = arith.constant 160 : index
    %c0_53 = arith.constant 0 : index
    %35 = vector.load %arg7[%c160, %c0_53] : memref<288x4xbf16, #tpu.memory_space<vmem>>, vector<32x2xbf16>
    tpu.vector_store %arg7[%c160, %c0_53], %34 {strides = array<i32>} : memref<288x4xbf16, #tpu.memory_space<vmem>>, vector<32x2xbf16>,
    %c0_54 = arith.constant 0 : index
    %c0_55 = arith.constant 0 : index
    %c0_56 = arith.constant 0 : index
    %c10 = arith.constant 10 : index
    %36 = vector.load %arg3[%c0_54, %c0_55, %c0_56, %c10] : memref<1x1x32x16xbf16, #tpu.memory_space<vmem>>, vector<1x1x32x2xbf16>
    %37 = vector.shape_cast %36 : vector<1x1x32x2xbf16> to vector<32x2xbf16>
    %c160_57 = arith.constant 160 : index
    %c2_58 = arith.constant 2 : index
    %38 = vector.load %arg7[%c160_57, %c2_58] : memref<288x4xbf16, #tpu.memory_space<vmem>>, vector<32x2xbf16>
    tpu.vector_store %arg7[%c160_57, %c2_58], %37 {strides = array<i32>} : memref<288x4xbf16, #tpu.memory_space<vmem>>, vector<32x2xbf16>,
    %c0_59 = arith.constant 0 : index
    %c0_60 = arith.constant 0 : index
    %c0_61 = arith.constant 0 : index
    %c8_62 = arith.constant 8 : index
    %39 = vector.load %arg3[%c0_59, %c0_60, %c0_61, %c8_62] : memref<1x1x32x16xbf16, #tpu.memory_space<vmem>>, vector<1x1x32x2xbf16>
    %40 = vector.shape_cast %39 : vector<1x1x32x2xbf16> to vector<32x2xbf16>
    %c192 = arith.constant 192 : index
    %c0_63 = arith.constant 0 : index
    %41 = vector.load %arg7[%c192, %c0_63] : memref<288x4xbf16, #tpu.memory_space<vmem>>, vector<32x2xbf16>
    tpu.vector_store %arg7[%c192, %c0_63], %40 {strides = array<i32>} : memref<288x4xbf16, #tpu.memory_space<vmem>>, vector<32x2xbf16>,
    %c0_64 = arith.constant 0 : index
    %c0_65 = arith.constant 0 : index
    %c0_66 = arith.constant 0 : index
    %c12 = arith.constant 12 : index
    %42 = vector.load %arg3[%c0_64, %c0_65, %c0_66, %c12] : memref<1x1x32x16xbf16, #tpu.memory_space<vmem>>, vector<1x1x32x2xbf16>
    %43 = vector.shape_cast %42 : vector<1x1x32x2xbf16> to vector<32x2xbf16>
    %c192_67 = arith.constant 192 : index
    %c2_68 = arith.constant 2 : index
    %44 = vector.load %arg7[%c192_67, %c2_68] : memref<288x4xbf16, #tpu.memory_space<vmem>>, vector<32x2xbf16>
    tpu.vector_store %arg7[%c192_67, %c2_68], %43 {strides = array<i32>} : memref<288x4xbf16, #tpu.memory_space<vmem>>, vector<32x2xbf16>,
    %c0_69 = arith.constant 0 : index
    %c0_70 = arith.constant 0 : index
    %c0_71 = arith.constant 0 : index
    %c9_72 = arith.constant 9 : index
    %45 = vector.load %arg3[%c0_69, %c0_70, %c0_71, %c9_72] : memref<1x1x32x16xbf16, #tpu.memory_space<vmem>>, vector<1x1x32x2xbf16>
    %46 = vector.shape_cast %45 : vector<1x1x32x2xbf16> to vector<32x2xbf16>
    %c224 = arith.constant 224 : index
    %c0_73 = arith.constant 0 : index
    %47 = vector.load %arg7[%c224, %c0_73] : memref<288x4xbf16, #tpu.memory_space<vmem>>, vector<32x2xbf16>
    tpu.vector_store %arg7[%c224, %c0_73], %46 {strides = array<i32>} : memref<288x4xbf16, #tpu.memory_space<vmem>>, vector<32x2xbf16>,
    %c0_74 = arith.constant 0 : index
    %c0_75 = arith.constant 0 : index
    %c0_76 = arith.constant 0 : index
    %c13 = arith.constant 13 : index
    %48 = vector.load %arg3[%c0_74, %c0_75, %c0_76, %c13] : memref<1x1x32x16xbf16, #tpu.memory_space<vmem>>, vector<1x1x32x2xbf16>
    %49 = vector.shape_cast %48 : vector<1x1x32x2xbf16> to vector<32x2xbf16>
    %c224_77 = arith.constant 224 : index
    %c2_78 = arith.constant 2 : index
    %50 = vector.load %arg7[%c224_77, %c2_78] : memref<288x4xbf16, #tpu.memory_space<vmem>>, vector<32x2xbf16>
    tpu.vector_store %arg7[%c224_77, %c2_78], %49 {strides = array<i32>} : memref<288x4xbf16, #tpu.memory_space<vmem>>, vector<32x2xbf16>,
    %c0_79 = arith.constant 0 : index
    %c0_80 = arith.constant 0 : index
    %c0_81 = arith.constant 0 : index
    %c10_82 = arith.constant 10 : index
    %51 = vector.load %arg3[%c0_79, %c0_80, %c0_81, %c10_82] : memref<1x1x32x16xbf16, #tpu.memory_space<vmem>>, vector<1x1x32x2xbf16>
    %52 = vector.shape_cast %51 : vector<1x1x32x2xbf16> to vector<32x2xbf16>
    %c256 = arith.constant 256 : index
    %c0_83 = arith.constant 0 : index
    %53 = vector.load %arg7[%c256, %c0_83] : memref<288x4xbf16, #tpu.memory_space<vmem>>, vector<32x2xbf16>
    tpu.vector_store %arg7[%c256, %c0_83], %52 {strides = array<i32>} : memref<288x4xbf16, #tpu.memory_space<vmem>>, vector<32x2xbf16>,
    %c0_84 = arith.constant 0 : index
    %c0_85 = arith.constant 0 : index
    %c0_86 = arith.constant 0 : index
    %c14 = arith.constant 14 : index
    %54 = vector.load %arg3[%c0_84, %c0_85, %c0_86, %c14] : memref<1x1x32x16xbf16, #tpu.memory_space<vmem>>, vector<1x1x32x2xbf16>
    %55 = vector.shape_cast %54 : vector<1x1x32x2xbf16> to vector<32x2xbf16>
    %c256_87 = arith.constant 256 : index
    %c2_88 = arith.constant 2 : index
    %56 = vector.load %arg7[%c256_87, %c2_88] : memref<288x4xbf16, #tpu.memory_space<vmem>>, vector<32x2xbf16>
    tpu.vector_store %arg7[%c256_87, %c2_88], %55 {strides = array<i32>} : memref<288x4xbf16, #tpu.memory_space<vmem>>, vector<32x2xbf16>,
    %c0_89 = arith.constant 0 : index
    %c0_90 = arith.constant 0 : index
    %57 = vector.load %arg8[%c0_89, %c0_90] : memref<32x4xf32, #tpu.memory_space<vmem>>, vector<32x4xf32>
    %c0_91 = arith.constant 0 : index
    %c0_92 = arith.constant 0 : index
    %c0_93 = arith.constant 0 : index
    %58 = vector.load %arg4[%c0_91, %c0_92, %c0_93] : memref<1x32x288xbf16, #tpu.memory_space<vmem>>, vector<1x32x288xbf16>
    %59 = vector.shape_cast %58 : vector<1x32x288xbf16> to vector<32x288xbf16>
    %c0_94 = arith.constant 0 : index
    %c0_95 = arith.constant 0 : index
    %60 = vector.load %arg7[%c0_94, %c0_95] : memref<288x4xbf16, #tpu.memory_space<vmem>>, vector<288x4xbf16>
    %cst = arith.constant dense<0.000000e+00> : vector<32x4xf32>
    %61 = tpu.matmul %59, %60, %cst {dimension_numbers = #tpu.dot_dimension_numbers<[1], [0], [0], [1], [0, 0, 1, 1], [], []>} : vector<32x288xbf16>, vector<288x4xbf16>, vector<32x4xf32> -> vector<32x4xf32>
    %62 = arith.addf %57, %61 : vector<32x4xf32>
    %c0_96 = arith.constant 0 : index
    %c0_97 = arith.constant 0 : index
    %63 = vector.load %arg8[%c0_96, %c0_97] : memref<32x4xf32, #tpu.memory_space<vmem>>, vector<32x4xf32>
    tpu.vector_store %arg8[%c0_96, %c0_97], %62 {strides = array<i32>} : memref<32x4xf32, #tpu.memory_space<vmem>>, vector<32x4xf32>,
    %c2_i32 = arith.constant 2 : i32
    %64 = arith.cmpi eq, %arg2, %c2_i32 : i32
    %65 = arith.extui %64 : i1 to i32
    %c0_i32_98 = arith.constant 0 : i32
    %66 = arith.cmpi ne, %65, %c0_i32_98 : i32
    scf.if %66 {
      %c0_99 = arith.constant 0 : index
      %c0_100 = arith.constant 0 : index
      %67 = vector.load %arg8[%c0_99, %c0_100] : memref<32x4xf32, #tpu.memory_space<vmem>>, vector<32x4xf32>
      %c0_101 = arith.constant 0 : index
      %c0_102 = arith.constant 0 : index
      %68 = vector.load %arg5[%c0_101, %c0_102] : memref<32x1xf32, #tpu.memory_space<vmem>>, vector<32x1xf32>
      %69 = vector.broadcast %68 : vector<32x1xf32> to vector<32x4xf32>
      %70 = arith.addf %67, %69 : vector<32x4xf32>
      %cst_103 = arith.constant 0.000000e+00 : f32
      %71 = vector.broadcast %cst_103 : f32 to vector<32x4xf32>
      %72 = arith.maximumf %70, %71 : vector<32x4xf32>
      %73 = arith.truncf %72 : vector<32x4xf32> to vector<32x4xbf16>
      %c0_104 = arith.constant 0 : index
      %c0_105 = arith.constant 0 : index
      %c0_106 = arith.constant 0 : index
      %c0_107 = arith.constant 0 : index
      %74 = vector.load %arg6[%c0_104, %c0_105, %c0_106, %c0_107] : memref<1x1x32x4xbf16, #tpu.memory_space<vmem>>, vector<1x1x32x4xbf16>
      %75 = vector.shape_cast %74 : vector<1x1x32x4xbf16> to vector<32x4xbf16>
      %76 = vector.shape_cast %73 : vector<32x4xbf16> to vector<1x1x32x4xbf16>
      tpu.vector_store %arg6[%c0_104, %c0_105, %c0_106, %c0_107], %76 {strides = array<i32>} : memref<1x1x32x4xbf16, #tpu.memory_space<vmem>>, vector<1x1x32x4xbf16>,
    } else {
    }
    return
  }
  func.func @transform_0(%arg0: i32, %arg1: i32, %arg2: i32) -> (i32, i32, i32, i32) {
    %0 = arith.addi %arg1, %arg2 : i32
    %c0_i32 = arith.constant 0 : i32
    %c0_i32_0 = arith.constant 0 : i32
    %c0_i32_1 = arith.constant 0 : i32
    return %arg0, %0, %c0_i32, %c0_i32_0 : i32, i32, i32, i32
  }
  func.func @transform_1(%arg0: i32, %arg1: i32, %arg2: i32) -> (i32, i32, i32) {
    %c0_i32 = arith.constant 0 : i32
    %c0_i32_0 = arith.constant 0 : i32
    %c0_i32_1 = arith.constant 0 : i32
    return %arg2, %c0_i32, %c0_i32_0 : i32, i32, i32
  }
  func.func @transform_2(%arg0: i32, %arg1: i32, %arg2: i32) -> (i32, i32) {
    %c0_i32 = arith.constant 0 : i32
    %c0_i32_0 = arith.constant 0 : i32
    %c0_i32_1 = arith.constant 0 : i32
    return %c0_i32, %c0_i32_0 : i32, i32
  }
  func.func @transform_3(%arg0: i32, %arg1: i32, %arg2: i32) -> (i32, i32, i32, i32) {
    %c0_i32 = arith.constant 0 : i32
    %c0_i32_0 = arith.constant 0 : i32
    %c0_i32_1 = arith.constant 0 : i32
    return %arg0, %arg1, %c0_i32, %c0_i32_0 : i32, i32, i32, i32
  }
}

module attributes {stable_mosaic.version = 11 : i64} {
  func.func @_wx_kernel(%arg0: i32, %arg1: memref<1x32x4xbf16, #tpu.memory_space<vmem>>, %arg2: memref<128x32xbf16, #tpu.memory_space<vmem>>, %arg3: memref<128x1xf32, #tpu.memory_space<vmem>>, %arg4: memref<1x128x4xbf16, #tpu.memory_space<vmem>>) attributes {dimension_semantics = [#tpu.dimension_semantics<parallel>], iteration_bounds = array<i64: 4>, scalar_prefetch = 0 : i64, scratch_operands = 0 : i64, tpu.core_type = #tpu.core_type<tc>, window_params = [{transform_indices = @transform_0, window_bounds = array<i64: 1, 32, 4>}, {pipeline_mode = #tpu.pipeline_mode<synchronous>, transform_indices = @transform_1, window_bounds = array<i64: 128, 32>}, {pipeline_mode = #tpu.pipeline_mode<synchronous>, transform_indices = @transform_2, window_bounds = array<i64: 128, 1>}, {transform_indices = @transform_3, window_bounds = array<i64: 1, 128, 4>}]} {
    %c0 = arith.constant 0 : index
    %c0_0 = arith.constant 0 : index
    %0 = vector.load %arg2[%c0, %c0_0] : memref<128x32xbf16, #tpu.memory_space<vmem>>, vector<128x32xbf16>
    %c0_1 = arith.constant 0 : index
    %c0_2 = arith.constant 0 : index
    %c0_3 = arith.constant 0 : index
    %1 = vector.load %arg1[%c0_1, %c0_2, %c0_3] : memref<1x32x4xbf16, #tpu.memory_space<vmem>>, vector<1x32x4xbf16>
    %2 = vector.shape_cast %1 : vector<1x32x4xbf16> to vector<32x4xbf16>
    %cst = arith.constant dense<0.000000e+00> : vector<128x4xf32>
    %3 = tpu.matmul %0, %2, %cst {dimension_numbers = #tpu.dot_dimension_numbers<[1], [0], [0], [1], [0, 0, 1, 1], [], []>} : vector<128x32xbf16>, vector<32x4xbf16>, vector<128x4xf32> -> vector<128x4xf32>
    %c0_4 = arith.constant 0 : index
    %c0_5 = arith.constant 0 : index
    %4 = vector.load %arg3[%c0_4, %c0_5] : memref<128x1xf32, #tpu.memory_space<vmem>>, vector<128x1xf32>
    %5 = vector.broadcast %4 : vector<128x1xf32> to vector<128x4xf32>
    %6 = arith.addf %3, %5 : vector<128x4xf32>
    %cst_6 = arith.constant 0.000000e+00 : f32
    %7 = vector.broadcast %cst_6 : f32 to vector<128x4xf32>
    %8 = arith.maximumf %6, %7 : vector<128x4xf32>
    %9 = arith.truncf %8 : vector<128x4xf32> to vector<128x4xbf16>
    %c0_7 = arith.constant 0 : index
    %c0_8 = arith.constant 0 : index
    %c0_9 = arith.constant 0 : index
    %10 = vector.load %arg4[%c0_7, %c0_8, %c0_9] : memref<1x128x4xbf16, #tpu.memory_space<vmem>>, vector<1x128x4xbf16>
    %11 = vector.shape_cast %10 : vector<1x128x4xbf16> to vector<128x4xbf16>
    %12 = vector.shape_cast %9 : vector<128x4xbf16> to vector<1x128x4xbf16>
    tpu.vector_store %arg4[%c0_7, %c0_8, %c0_9], %12 {strides = array<i32>} : memref<1x128x4xbf16, #tpu.memory_space<vmem>>, vector<1x128x4xbf16>,
    return
  }
  func.func @transform_0(%arg0: i32) -> (i32, i32, i32) {
    %c0_i32 = arith.constant 0 : i32
    %c0_i32_0 = arith.constant 0 : i32
    %c0_i32_1 = arith.constant 0 : i32
    return %arg0, %c0_i32, %c0_i32_0 : i32, i32, i32
  }
  func.func @transform_1(%arg0: i32) -> (i32, i32) {
    %c0_i32 = arith.constant 0 : i32
    %c0_i32_0 = arith.constant 0 : i32
    %c0_i32_1 = arith.constant 0 : i32
    return %c0_i32, %c0_i32_0 : i32, i32
  }
  func.func @transform_2(%arg0: i32) -> (i32, i32) {
    %c0_i32 = arith.constant 0 : i32
    %c0_i32_0 = arith.constant 0 : i32
    %c0_i32_1 = arith.constant 0 : i32
    return %c0_i32, %c0_i32_0 : i32, i32
  }
  func.func @transform_3(%arg0: i32) -> (i32, i32, i32) {
    %c0_i32 = arith.constant 0 : i32
    %c0_i32_0 = arith.constant 0 : i32
    %c0_i32_1 = arith.constant 0 : i32
    return %arg0, %c0_i32, %c0_i32_0 : i32, i32, i32
  }
}

module attributes {stable_mosaic.version = 11 : i64} {
  func.func @_wx_kernel(%arg0: i32, %arg1: memref<1x16x16xbf16, #tpu.memory_space<vmem>>, %arg2: memref<64x16xbf16, #tpu.memory_space<vmem>>, %arg3: memref<64x1xf32, #tpu.memory_space<vmem>>, %arg4: memref<1x64x16xbf16, #tpu.memory_space<vmem>>) attributes {dimension_semantics = [#tpu.dimension_semantics<parallel>], iteration_bounds = array<i64: 8>, scalar_prefetch = 0 : i64, scratch_operands = 0 : i64, tpu.core_type = #tpu.core_type<tc>, window_params = [{transform_indices = @transform_0, window_bounds = array<i64: 1, 16, 16>}, {pipeline_mode = #tpu.pipeline_mode<synchronous>, transform_indices = @transform_1, window_bounds = array<i64: 64, 16>}, {pipeline_mode = #tpu.pipeline_mode<synchronous>, transform_indices = @transform_2, window_bounds = array<i64: 64, 1>}, {transform_indices = @transform_3, window_bounds = array<i64: 1, 64, 16>}]} {
    %c0 = arith.constant 0 : index
    %c0_0 = arith.constant 0 : index
    %0 = vector.load %arg2[%c0, %c0_0] : memref<64x16xbf16, #tpu.memory_space<vmem>>, vector<64x16xbf16>
    %c0_1 = arith.constant 0 : index
    %c0_2 = arith.constant 0 : index
    %c0_3 = arith.constant 0 : index
    %1 = vector.load %arg1[%c0_1, %c0_2, %c0_3] : memref<1x16x16xbf16, #tpu.memory_space<vmem>>, vector<1x16x16xbf16>
    %2 = vector.shape_cast %1 : vector<1x16x16xbf16> to vector<16x16xbf16>
    %cst = arith.constant dense<0.000000e+00> : vector<64x16xf32>
    %3 = tpu.matmul %0, %2, %cst {dimension_numbers = #tpu.dot_dimension_numbers<[1], [0], [0], [1], [0, 0, 1, 1], [], []>} : vector<64x16xbf16>, vector<16x16xbf16>, vector<64x16xf32> -> vector<64x16xf32>
    %c0_4 = arith.constant 0 : index
    %c0_5 = arith.constant 0 : index
    %4 = vector.load %arg3[%c0_4, %c0_5] : memref<64x1xf32, #tpu.memory_space<vmem>>, vector<64x1xf32>
    %5 = vector.broadcast %4 : vector<64x1xf32> to vector<64x16xf32>
    %6 = arith.addf %3, %5 : vector<64x16xf32>
    %cst_6 = arith.constant 0.000000e+00 : f32
    %7 = vector.broadcast %cst_6 : f32 to vector<64x16xf32>
    %8 = arith.maximumf %6, %7 : vector<64x16xf32>
    %9 = arith.truncf %8 : vector<64x16xf32> to vector<64x16xbf16>
    %c0_7 = arith.constant 0 : index
    %c0_8 = arith.constant 0 : index
    %c0_9 = arith.constant 0 : index
    %10 = vector.load %arg4[%c0_7, %c0_8, %c0_9] : memref<1x64x16xbf16, #tpu.memory_space<vmem>>, vector<1x64x16xbf16>
    %11 = vector.shape_cast %10 : vector<1x64x16xbf16> to vector<64x16xbf16>
    %12 = vector.shape_cast %9 : vector<64x16xbf16> to vector<1x64x16xbf16>
    tpu.vector_store %arg4[%c0_7, %c0_8, %c0_9], %12 {strides = array<i32>} : memref<1x64x16xbf16, #tpu.memory_space<vmem>>, vector<1x64x16xbf16>,
    return
  }
  func.func @transform_0(%arg0: i32) -> (i32, i32, i32) {
    %c0_i32 = arith.constant 0 : i32
    %c0_i32_0 = arith.constant 0 : i32
    %c0_i32_1 = arith.constant 0 : i32
    return %arg0, %c0_i32, %c0_i32_0 : i32, i32, i32
  }
  func.func @transform_1(%arg0: i32) -> (i32, i32) {
    %c0_i32 = arith.constant 0 : i32
    %c0_i32_0 = arith.constant 0 : i32
    %c0_i32_1 = arith.constant 0 : i32
    return %c0_i32, %c0_i32_0 : i32, i32
  }
  func.func @transform_2(%arg0: i32) -> (i32, i32) {
    %c0_i32 = arith.constant 0 : i32
    %c0_i32_0 = arith.constant 0 : i32
    %c0_i32_1 = arith.constant 0 : i32
    return %c0_i32, %c0_i32_0 : i32, i32
  }
  func.func @transform_3(%arg0: i32) -> (i32, i32, i32) {
    %c0_i32 = arith.constant 0 : i32
    %c0_i32_0 = arith.constant 0 : i32
    %c0_i32_1 = arith.constant 0 : i32
    return %arg0, %c0_i32, %c0_i32_0 : i32, i32, i32
  }
}

module attributes {stable_mosaic.version = 11 : i64} {
  func.func @_wx_kernel(%arg0: i32, %arg1: memref<1x8x64xbf16, #tpu.memory_space<vmem>>, %arg2: memref<1x8xbf16, #tpu.memory_space<vmem>>, %arg3: memref<1x1xf32, #tpu.memory_space<vmem>>, %arg4: memref<1x1x64xf32, #tpu.memory_space<vmem>>) attributes {dimension_semantics = [#tpu.dimension_semantics<parallel>], iteration_bounds = array<i64: 16>, scalar_prefetch = 0 : i64, scratch_operands = 0 : i64, tpu.core_type = #tpu.core_type<tc>, window_params = [{transform_indices = @transform_0, window_bounds = array<i64: 1, 8, 64>}, {pipeline_mode = #tpu.pipeline_mode<synchronous>, transform_indices = @transform_1, window_bounds = array<i64: 1, 8>}, {pipeline_mode = #tpu.pipeline_mode<synchronous>, transform_indices = @transform_2, window_bounds = array<i64: 1, 1>}, {transform_indices = @transform_3, window_bounds = array<i64: 1, 1, 64>}]} {
    %c0 = arith.constant 0 : index
    %c0_0 = arith.constant 0 : index
    %0 = vector.load %arg2[%c0, %c0_0] : memref<1x8xbf16, #tpu.memory_space<vmem>>, vector<1x8xbf16>
    %c0_1 = arith.constant 0 : index
    %c0_2 = arith.constant 0 : index
    %c0_3 = arith.constant 0 : index
    %1 = vector.load %arg1[%c0_1, %c0_2, %c0_3] : memref<1x8x64xbf16, #tpu.memory_space<vmem>>, vector<1x8x64xbf16>
    %2 = vector.shape_cast %1 : vector<1x8x64xbf16> to vector<8x64xbf16>
    %cst = arith.constant dense<0.000000e+00> : vector<1x64xf32>
    %3 = tpu.matmul %0, %2, %cst {dimension_numbers = #tpu.dot_dimension_numbers<[1], [0], [0], [1], [0, 0, 1, 1], [], []>} : vector<1x8xbf16>, vector<8x64xbf16>, vector<1x64xf32> -> vector<1x64xf32>
    %c0_4 = arith.constant 0 : index
    %c0_5 = arith.constant 0 : index
    %4 = vector.load %arg3[%c0_4, %c0_5] : memref<1x1xf32, #tpu.memory_space<vmem>>, vector<1x1xf32>
    %5 = vector.broadcast %4 : vector<1x1xf32> to vector<1x64xf32>
    %6 = arith.addf %3, %5 : vector<1x64xf32>
    %cst_6 = arith.constant 0.000000e+00 : f32
    %7 = vector.broadcast %cst_6 : f32 to vector<1x64xf32>
    %8 = arith.subf %7, %6 : vector<1x64xf32>
    %9 = math.exp %8 : vector<1x64xf32>
    %cst_7 = arith.constant 1.000000e+00 : f32
    %10 = vector.broadcast %cst_7 : f32 to vector<1x64xf32>
    %11 = arith.addf %10, %9 : vector<1x64xf32>
    %12 = tpu.reciprocal %11 {approx = true} : vector<1x64xf32> -> vector<1x64xf32>
    %cst_8 = arith.constant 0.000000e+00 : f32
    %cst_9 = arith.constant 1.000000e+00 : f32
    %13 = vector.broadcast %cst_8 : f32 to vector<1x64xf32>
    %14 = arith.maximumf %13, %12 : vector<1x64xf32>
    %15 = vector.broadcast %cst_9 : f32 to vector<1x64xf32>
    %16 = arith.minimumf %15, %14 : vector<1x64xf32>
    %c0_10 = arith.constant 0 : index
    %c0_11 = arith.constant 0 : index
    %c0_12 = arith.constant 0 : index
    %17 = vector.load %arg4[%c0_10, %c0_11, %c0_12] : memref<1x1x64xf32, #tpu.memory_space<vmem>>, vector<1x1x64xf32>
    %18 = vector.shape_cast %17 : vector<1x1x64xf32> to vector<1x64xf32>
    %19 = vector.shape_cast %16 : vector<1x64xf32> to vector<1x1x64xf32>
    tpu.vector_store %arg4[%c0_10, %c0_11, %c0_12], %19 {strides = array<i32>} : memref<1x1x64xf32, #tpu.memory_space<vmem>>, vector<1x1x64xf32>,
    return
  }
  func.func @transform_0(%arg0: i32) -> (i32, i32, i32) {
    %c0_i32 = arith.constant 0 : i32
    %c0_i32_0 = arith.constant 0 : i32
    %c0_i32_1 = arith.constant 0 : i32
    return %arg0, %c0_i32, %c0_i32_0 : i32, i32, i32
  }
  func.func @transform_1(%arg0: i32) -> (i32, i32) {
    %c0_i32 = arith.constant 0 : i32
    %c0_i32_0 = arith.constant 0 : i32
    %c0_i32_1 = arith.constant 0 : i32
    return %c0_i32, %c0_i32_0 : i32, i32
  }
  func.func @transform_2(%arg0: i32) -> (i32, i32) {
    %c0_i32 = arith.constant 0 : i32
    %c0_i32_0 = arith.constant 0 : i32
    %c0_i32_1 = arith.constant 0 : i32
    return %c0_i32, %c0_i32_0 : i32, i32
  }
  func.func @transform_3(%arg0: i32) -> (i32, i32, i32) {
    %c0_i32 = arith.constant 0 : i32
    %c0_i32_0 = arith.constant 0 : i32
    %c0_i32_1 = arith.constant 0 : i32
    return %arg0, %c0_i32, %c0_i32_0 : i32, i32, i32
  }
}

</mosaic_0001>

<llo_original>
// kernel: _lambda_.18
$region0: #{_lambda_.18}
  #allocation0 [shape = 'u32[]', space=smem, size = 0x4, offset = 0x4, fixed_abs, tag = 'smem constant byte address 0x4 - core index']
  #allocation1 [shape = 'u32[72,128]{1,0:T(1,128)}', space=vmem, size = 0x9000, scoped, tag = 'internal scratch']
  #allocation2 [shape = 'bf16[9,64]{1,0:T(8,128)(2,1)}', space=vmem, size = 0x1000, scoped, tag = 'scratch operand']
  #allocation3 [shape = 'f32[8,64]{1,0:T(8,128)}', space=vmem, size = 0x1000, scoped, tag = 'scratch operand']
  %s0 = inlined_call_operand.vmem [shape: bf16[2,10,1,100], index: 0, kind: input, shape index: {}]
  %s1 = inlined_call_operand.vmem [shape: bf16[3,8,9], index: 1, kind: input, shape index: {}]
  %s2 = inlined_call_operand.vmem [shape: f32[8,1], index: 2, kind: input, shape index: {}]
  %s3 = inlined_call_operand.vmem [shape: bf16[2,8,8,64], index: 3, kind: output, shape index: {}]
  %s4 = sld [smem:[#allocation0]]
  $region53: #{_lambda_.18} parent=0
    _
  %s6 = ssub.s32 1, %s4
  %s7 = scalar_select 0, %s6, %s4
  loop: start=0, step=1, limit=50
  $region2: #{_lambda_.18} parent=0 // loop_pre_header
    _
  $region3: #{_lambda_.18} parent=0 // loop_header
    %s9 = sphi 0, %s13
    %p10 = scmp.ge.s32.totalorder %s9, 50
    %s16 = sphi 0, %s35
    %s17 = sphi 0, %s31
    %s18 = sphi 0, %s27
    %s19 = sphi 0, %s16
    %s20 = sphi 0, %s17
    %s21 = sphi 0, %s18
    %s22 = sphi 0, %s19
    %s23 = sphi 0, %s20
    %s24 = sphi 0, %s21
    %s42 = sphi 0, %s44
    %s45 = sphi 0, %s42
    %s46 = sphi 0, %s45
    %s62 = sphi 0, %s46
    %s68 = sphi 0, %s70
    %s71 = sphi 0, %s68
    %s72 = sphi 0, %s71
    %s88 = sphi 0, %s72
    %s92 = sphi 0, %s92
    %s94 = sphi 0, %s92
    %s95 = sphi 0, %s94
    %s109 = sphi 0, %s95
    %s117 = sphi 0, %s119
    %s120 = sphi 0, %s117
    %s121 = sphi 0, %s120
    %s137 = sphi 0, %s121
  $region4: #{_lambda_.18} parent=0 // loop_header_branch
    %12 = sbr.rel (%p10) target = $region8
  $region5: #{_lambda_.18} parent=0 // loop_body
    %s14 = ssub.s32 %s9, 1
    %s15 = ssub.s32 %s9, 2
    %s25 = sadd.s32 1, %s18
    %p26 = scmp.ge.s32.totalorder %s25, 3
    %s27 = scalar_select %p26, 0, %s25
    %s28 = sadd.s32 1, %s17
    %s29 = scalar_select %p26, %s28, %s17
    %p30 = scmp.ge.s32.totalorder %s29, 8
    %s31 = scalar_select %p30, 0, %s29
    %s32 = sadd.s32 1, %s16
    %s33 = scalar_select %p30, %s32, %s16
    %p34 = scmp.ge.s32.totalorder %s33, 2
    %s35 = scalar_select %p34, 0, %s33
    %s36 = sadd.s32 %s17, %s18
    %s37 = sadd.s32 %s31, %s27
    %s38 = ssub.s32 %s16, %s35
    %s39 = ssub.s32 %s36, %s37
    %s40 = sor.u32 %s38, %s39
    %p41 = scmp.eq.s32.totalorder %s40, 0
    %s43 = sadd.s32 %s42, 1
    %s44 = scalar_select %p41, %s42, %s43
    %p47 = pneg %p41
    %p48 = scmp.eq.s32.totalorder %s9, 47
    %p49 = por %p47, %p48
    %p50 = scmp.ne.s32.totalorder %s42, %s45
    %p51 = scmp.eq.s32.totalorder %s9, 0
    %p52 = por %p50, %p51
    %p53 = scmp.ne.s32.totalorder %s42, %s45
    %p54 = scmp.eq.s32.totalorder %s14, 47
    %p55 = por %p53, %p54
    %p56 = scmp.ne.s32.totalorder %s45, %s46
    %p57 = scmp.eq.s32.totalorder %s14, 0
    %p58 = por %p56, %p57
    %p59 = scmp.ne.s32.totalorder %s45, %s46
    %p60 = scmp.eq.s32.totalorder %s15, 47
    %p61 = por %p59, %p60
    %p63 = scmp.ne.s32.totalorder %s46, %s62
    %p64 = scmp.eq.s32.totalorder %s15, 0
    %p65 = por %p63, %p64
    %s66 = ssub.s32 %s18, %s27
    %p67 = scmp.eq.s32.totalorder %s66, 0
    %s69 = sadd.s32 %s68, 1
    %s70 = scalar_select %p67, %s68, %s69
    %p73 = pneg %p67
    %p74 = scmp.eq.s32.totalorder %s9, 47
    %p75 = por %p73, %p74
    %p76 = scmp.ne.s32.totalorder %s68, %s71
    %p77 = scmp.eq.s32.totalorder %s9, 0
    %p78 = por %p76, %p77
    %p79 = scmp.ne.s32.totalorder %s68, %s71
    %p80 = scmp.eq.s32.totalorder %s14, 47
    %p81 = por %p79, %p80
    %p82 = scmp.ne.s32.totalorder %s71, %s72
    %p83 = scmp.eq.s32.totalorder %s14, 0
    %p84 = por %p82, %p83
    %p85 = scmp.ne.s32.totalorder %s71, %s72
    %p86 = scmp.eq.s32.totalorder %s15, 47
    %p87 = por %p85, %p86
    %p89 = scmp.ne.s32.totalorder %s72, %s88
    %p90 = scmp.eq.s32.totalorder %s15, 0
    %p91 = por %p89, %p90
    %s93 = sadd.s32 %s92, 1
    %p96 = scmp.eq.s32.totalorder %s9, 47
    %p97 = scmp.ne.s32.totalorder %s92, %s94
    %p98 = scmp.eq.s32.totalorder %s9, 0
    %p99 = por %p97, %p98
    %p100 = scmp.ne.s32.totalorder %s92, %s94
    %p101 = scmp.eq.s32.totalorder %s14, 47
    %p102 = por %p100, %p101
    %p103 = scmp.ne.s32.totalorder %s94, %s95
    %p104 = scmp.eq.s32.totalorder %s14, 0
    %p105 = por %p103, %p104
    %p106 = scmp.ne.s32.totalorder %s94, %s95
    %p107 = scmp.eq.s32.totalorder %s15, 47
    %p108 = por %p106, %p107
    %p110 = scmp.ne.s32.totalorder %s95, %s109
    %p111 = scmp.eq.s32.totalorder %s15, 0
    %p112 = por %p110, %p111
    %s113 = ssub.s32 %s16, %s35
    %s114 = ssub.s32 %s17, %s31
    %s115 = sor.u32 %s113, %s114
    %p116 = scmp.eq.s32.totalorder %s115, 0
    %s118 = sadd.s32 %s117, 1
    %s119 = scalar_select %p116, %s117, %s118
    %p122 = pneg %p116
    %p123 = scmp.eq.s32.totalorder %s9, 47
    %p124 = por %p122, %p123
    %p125 = scmp.ne.s32.totalorder %s117, %s120
    %p126 = scmp.eq.s32.totalorder %s9, 0
    %p127 = por %p125, %p126
    %p128 = scmp.ne.s32.totalorder %s117, %s120
    %p129 = scmp.eq.s32.totalorder %s14, 47
    %p130 = por %p128, %p129
    %p131 = scmp.ne.s32.totalorder %s120, %s121
    %p132 = scmp.eq.s32.totalorder %s14, 0
    %p133 = por %p131, %p132
    %p134 = scmp.ne.s32.totalorder %s120, %s121
    %p135 = scmp.eq.s32.totalorder %s15, 47
    %p136 = por %p134, %p135
    %p138 = scmp.ne.s32.totalorder %s121, %s137
    %p139 = scmp.eq.s32.totalorder %s15, 0
    %p140 = por %p138, %p139
    %p141 = scmp.le.s32.totalorder 1, %s9
    %p142 = scmp.lt.s32.totalorder %s9, 49
    %p143 = pnand %p141, %p142
    %p144 = pneg %p143
    // Predicated region
    $region9: #{_lambda_.18} parent=5 // pred_check
      _
    $region10: #{_lambda_.18} parent=5 // pred_check_branch
      %146 = sbr.rel (%p143) target = $region12
    $region11: #{_lambda_.18} parent=5 // pred_region
      %s147 = ssub.s32 %s9, 1
      // Predicated region
      $region13: #{_lambda_.18} parent=11 // pred_check
        %p148 = pneg %p105
      $region14: #{_lambda_.18} parent=11 // pred_check_branch
        %150 = sbr.rel (%p148) target = $region16
      $region15: #{_lambda_.18} parent=11 // pred_region
        _
      $region16: #{_lambda_.18} parent=11 // pred_fallthru
        _
    $region12: #{_lambda_.18} parent=5 // pred_fallthru
      _
    %p151 = scmp.lt.s32.totalorder %s9, 48
    // Predicated region
    $region17: #{_lambda_.18} parent=5 // pred_check
      %p152 = pneg %p151
    $region18: #{_lambda_.18} parent=5 // pred_check_branch
      %154 = sbr.rel (%p152) target = $region20
    $region19: #{_lambda_.18} parent=5 // pred_region
      // Predicated region
      $region21: #{_lambda_.18} parent=19 // pred_check
        %p155 = pneg %p52
      $region22: #{_lambda_.18} parent=19 // pred_check_branch
        %157 = sbr.rel (%p155) target = $region24
      $region23: #{_lambda_.18} parent=19 // pred_region
        %s158 = sadd.s32 %s17, %s18
        %p159 = scmp.lt.s32.totalorder %s16, 1
        %s160 = scalar_select %p159, %s16, 1
        %p161 = scmp.lt.s32.totalorder %s158, 9
        %s162 = scalar_select %p161, %s158, 9
        %s163 = smul.addr %s160, 10
        %s164 = sadd.s32 %s162, %s163
        %s165 = scalar_lea.vmem %s0, %s164
        %s166 = sadd.s32 %s17, %s18
      $region24: #{_lambda_.18} parent=19 // pred_fallthru
        _
      // Predicated region
      $region25: #{_lambda_.18} parent=19 // pred_check
        %p167 = pneg %p78
      $region26: #{_lambda_.18} parent=19 // pred_check_branch
        %169 = sbr.rel (%p167) target = $region28
      $region27: #{_lambda_.18} parent=19 // pred_region
        %p170 = scmp.lt.s32.totalorder %s18, 2
        %s171 = scalar_select %p170, %s18, 2
        %s172 = smul.addr %s171, 4
        %s173 = scalar_lea.vmem %s1, %s172
      $region28: #{_lambda_.18} parent=19 // pred_fallthru
        _
    $region20: #{_lambda_.18} parent=5 // pred_fallthru
      _
    %p174 = scmp.le.s32.totalorder 1, %s9
    %p175 = scmp.lt.s32.totalorder %s9, 49
    %p176 = pnand %p174, %p175
    %p177 = pneg %p176
    // Predicated region
    $region29: #{_lambda_.18} parent=5 // pred_check
      _
    $region30: #{_lambda_.18} parent=5 // pred_check_branch
      %179 = sbr.rel (%p176) target = $region32
    $region31: #{_lambda_.18} parent=5 // pred_region
      %s180 = ssub.s32 %s9, 1
      %s181 = sadd.s32 %s20, %s21
      %p182 = scmp.lt.s32.totalorder %s19, 1
      %s183 = scalar_select %p182, %s19, 1
      %p184 = scmp.lt.s32.totalorder %s181, 9
      %s185 = scalar_select %p184, %s181, 9
      %s186 = smul.addr %s183, 10
      %s187 = sadd.s32 %s185, %s186
      %s188 = scalar_lea.vmem %s0, %s187
      %p189 = pneg %p58
      %p190 = pneg %p55
      %p191 = scmp.lt.s32.totalorder %s21, 2
      %s192 = scalar_select %p191, %s21, 2
      %s193 = smul.addr %s192, 4
      %s194 = scalar_lea.vmem %s1, %s193
      %p195 = pneg %p84
      %p196 = pneg %p81
      %p197 = pneg %p105
      %p198 = pneg %p102
      %p199 = pneg %p133
      %p200 = pneg %p130
      %p201 = scmp.lt.s32.totalorder %s19, 1
      %s202 = scalar_select %p201, %s19, 1
      %p203 = scmp.lt.s32.totalorder %s20, 7
      %s204 = scalar_select %p203, %s20, 7
      %s205 = smul.addr %s202, 8
      %s206 = sadd.s32 %s204, %s205
      %s207 = smul.addr %s206, 4
      %s208 = scalar_lea.vmem %s3, %s207
      %s209 = sadd.s32 %s20, %s21
      %p210 = scmp.lt.s32.totalorder %s19, 1
      %s211 = scalar_select %p210, %s19, 1
      %p212 = scmp.lt.s32.totalorder %s209, 9
      %s213 = scalar_select %p212, %s209, 9
      %s214 = smul.addr %s211, 10
      %s215 = sadd.s32 %s213, %s214
      %s216 = scalar_lea.vmem %s0, %s215
      %s217 = sadd.s32 %s20, %s21
      %p218 = scmp.lt.s32.totalorder %s21, 2
      %s219 = scalar_select %p218, %s21, 2
      %s220 = smul.addr %s219, 4
      %s221 = scalar_lea.vmem %s1, %s220
      %p222 = scmp.lt.s32.totalorder %s19, 1
      %s223 = scalar_select %p222, %s19, 1
      %p224 = scmp.lt.s32.totalorder %s20, 7
      %s225 = scalar_select %p224, %s20, 7
      %s226 = smul.addr %s223, 8
      %s227 = sadd.s32 %s225, %s226
      %s228 = smul.addr %s227, 4
      %s229 = scalar_lea.vmem %s3, %s228
      %p231 = scmp.eq.s32.totalorder %s21, 0
      // Predicated region
      $region33: #{_lambda_.18} parent=31 // pred_check
        %p232 = pneg %p231
      $region34: #{_lambda_.18} parent=31 // pred_check_branch
        %234 = sbr.rel (%p232) target = $region36
      $region35: #{_lambda_.18} parent=31 // pred_region
        %vm235 = vcmask 523264
        %236 = vst.msk [vmem:[#allocation3] sm:$0xff] %vm235, 0.0
      $region36: #{_lambda_.18} parent=31 // pred_fallthru
        _
      %v237 = vld [vmem:[%s216] sm:$0x1]
      %vm238 = vcmask 57344
      %vm239 = vsmask.f32 256
      %vm240 = vmand %vm238, %vm239
      %v241 = vld [vmem:[#allocation2] sm:$0x1]
      %v242 = vsel %vm240, %v237, %v241
      %243 = vst [vmem:[#allocation2] sm:$0x1] %v242
      %v244 = vld [vmem:[%s216] sm:$0x1]
      %246 = vst [vmem:[#allocation1] ss:$4 sm:$0xff] %v244
      %v247 = vld [vmem:[#allocation1] sm:$0xff]
      %249 = vrot.lane.b32.xlu0 %v247, 126
      %v250 = vpop.permute.xlu0 %249
      %vm252 = vcmask 122944
      %vm253 = vmand %vm252, %vm239
      %v254 = vld [vmem:[#allocation2] sm:$0x1]
      %v255 = vsel %vm253, %v250, %v254
      %256 = vst [vmem:[#allocation2] sm:$0x1] %v255
      %v257 = vld [vmem:[%s216] sm:$0x1]
      %259 = vst [vmem:[#allocation1] ss:$4 sm:$0xff] %v257
      %v260 = vld [vmem:[#allocation1] sm:$0xff]
      %262 = vrot.lane.b32.xlu0 %v260, 124
      %v263 = vpop.permute.xlu0 %262
      %vm265 = vcmask 188544
      %vm266 = vmand %vm265, %vm239
      %v267 = vld [vmem:[#allocation2] sm:$0x1]
      %v268 = vsel %vm266, %v263, %v267
      %269 = vst [vmem:[#allocation2] sm:$0x1] %v268
      %v270 = vld [vmem:[%s216] sm:$0x1]
      %272 = vst [vmem:[#allocation1] ss:$4 sm:$0xff] %v270
      %v273 = vld [vmem:[#allocation1] sm:$0xff]
      %275 = vrot.lane.b32.xlu0 %v273, 122
      %v276 = vpop.permute.xlu0 %275
      %vm278 = vcmask 254144
      %vm279 = vmand %vm278, %vm239
      %v280 = vld [vmem:[#allocation2] sm:$0x1]
      %v281 = vsel %vm279, %v276, %v280
      %282 = vst [vmem:[#allocation2] sm:$0x1] %v281
      %v283 = vld [vmem:[%s216] sm:$0x1]
      %285 = vst [vmem:[#allocation1] ss:$4 sm:$0xff] %v283
      %v286 = vld [vmem:[#allocation1] sm:$0xff]
      %288 = vrot.lane.b32.xlu0 %v286, 120
      %v289 = vpop.permute.xlu0 %288
      %vm291 = vcmask 319744
      %vm292 = vmand %vm291, %vm239
      %v293 = vld [vmem:[#allocation2] sm:$0x1]
      %v294 = vsel %vm292, %v289, %v293
      %295 = vst [vmem:[#allocation2] sm:$0x1] %v294
      %v296 = vld [vmem:[%s216] sm:$0x1]
      %298 = vst [vmem:[#allocation1] ss:$4 sm:$0xff] %v296
      %v299 = vld [vmem:[#allocation1] sm:$0xff]
      %301 = vrot.lane.b32.xlu0 %v299, 118
      %v302 = vpop.permute.xlu0 %301
      %vm304 = vcmask 385344
      %vm305 = vmand %vm304, %vm239
      %v306 = vld [vmem:[#allocation2] sm:$0x1]
      %v307 = vsel %vm305, %v302, %v306
      %308 = vst [vmem:[#allocation2] sm:$0x1] %v307
      %v309 = vld [vmem:[%s216] sm:$0x1]
      %311 = vst [vmem:[#allocation1] ss:$4 sm:$0xff] %v309
      %v312 = vld [vmem:[#allocation1] sm:$0xff]
      %314 = vrot.lane.b32.xlu0 %v312, 116
      %v315 = vpop.permute.xlu0 %314
      %vm317 = vcmask 450944
      %vm318 = vmand %vm317, %vm239
      %v319 = vld [vmem:[#allocation2] sm:$0x1]
      %v320 = vsel %vm318, %v315, %v319
      %321 = vst [vmem:[#allocation2] sm:$0x1] %v320
      %v322 = vld [vmem:[%s216] sm:$0x1]
      %324 = vst [vmem:[#allocation1] ss:$4 sm:$0xff] %v322
      %v325 = vld [vmem:[#allocation1] sm:$0xff]
      %327 = vrot.lane.b32.xlu0 %v325, 114
      %v328 = vpop.permute.xlu0 %327
      %vm330 = vcmask 516544
      %vm331 = vmand %vm330, %vm239
      %v332 = vld [vmem:[#allocation2] sm:$0x1]
      %v333 = vsel %vm331, %v328, %v332
      %334 = vst [vmem:[#allocation2] sm:$0x1] %v333
      %v335 = vld [vmem:[%s216] sm:$0x1]
      %337 = vst [vmem:[#allocation1] ss:$4 sm:$0xff] %v335
      %v338 = vld [vmem:[#allocation1] sm:$0xff]
      %v339 = vshll.u32 %v338, 16
      %341 = vrot.lane.b32.xlu0 %v339, 127
      %v342 = vpop.permute.xlu0 %341
      %vm344 = vsmask.f32 7938
      %vm345 = vmand %vm238, %vm344
      %v346 = vld [vmem:[#allocation2] sm:$0x1]
      %v347 = vsel %vm345, %v342, %v346
      %348 = vst [vmem:[#allocation2] sm:$0x1] %v347
      %v349 = vld [vmem:[%s216] sm:$0x1]
      %351 = vst [vmem:[#allocation1] ss:$4 sm:$0xff] %v349
      %v352 = vld [vmem:[#allocation1] sm:$0xff]
      %v353 = vshll.u32 %v352, 16
      %355 = vrot.lane.b32.xlu0 %v353, 125
      %v356 = vpop.permute.xlu0 %355
      %vm358 = vmand %vm252, %vm344
      %v359 = vld [vmem:[#allocation2] sm:$0x1]
      %v360 = vsel %vm358, %v356, %v359
      %361 = vst [vmem:[#allocation2] sm:$0x1] %v360
      %v362 = vld [vmem:[%s216] sm:$0x1]
      %364 = vst [vmem:[#allocation1] ss:$4 sm:$0xff] %v362
      %v365 = vld [vmem:[#allocation1] sm:$0xff]
      %v366 = vshll.u32 %v365, 16
      %368 = vrot.lane.b32.xlu0 %v366, 123
      %v369 = vpop.permute.xlu0 %368
      %vm371 = vmand %vm265, %vm344
      %v372 = vld [vmem:[#allocation2] sm:$0x1]
      %v373 = vsel %vm371, %v369, %v372
      %374 = vst [vmem:[#allocation2] sm:$0x1] %v373
      %v375 = vld [vmem:[%s216] sm:$0x1]
      %377 = vst [vmem:[#allocation1] ss:$4 sm:$0xff] %v375
      %v378 = vld [vmem:[#allocation1] sm:$0xff]
      %v379 = vshll.u32 %v378, 16
      %381 = vrot.lane.b32.xlu0 %v379, 121
      %v382 = vpop.permute.xlu0 %381
      %vm384 = vmand %vm278, %vm344
      %v385 = vld [vmem:[#allocation2] sm:$0x1]
      %v386 = vsel %vm384, %v382, %v385
      %387 = vst [vmem:[#allocation2] sm:$0x1] %v386
      %v388 = vld [vmem:[%s216] sm:$0x1]
      %390 = vst [vmem:[#allocation1] ss:$4 sm:$0xff] %v388
      %v391 = vld [vmem:[#allocation1] sm:$0xff]
      %v392 = vshll.u32 %v391, 16
      %394 = vrot.lane.b32.xlu0 %v392, 119
      %v395 = vpop.permute.xlu0 %394
      %vm397 = vmand %vm291, %vm344
      %v398 = vld [vmem:[#allocation2] sm:$0x1]
      %v399 = vsel %vm397, %v395, %v398
      %400 = vst [vmem:[#allocation2] sm:$0x1] %v399
      %v401 = vld [vmem:[%s216] sm:$0x1]
      %403 = vst [vmem:[#allocation1] ss:$4 sm:$0xff] %v401
      %v404 = vld [vmem:[#allocation1] sm:$0xff]
      %v405 = vshll.u32 %v404, 16
      %407 = vrot.lane.b32.xlu0 %v405, 117
      %v408 = vpop.permute.xlu0 %407
      %vm410 = vmand %vm304, %vm344
      %v411 = vld [vmem:[#allocation2] sm:$0x1]
      %v412 = vsel %vm410, %v408, %v411
      %413 = vst [vmem:[#allocation2] sm:$0x1] %v412
      %v414 = vld [vmem:[%s216] sm:$0x1]
      %416 = vst [vmem:[#allocation1] ss:$4 sm:$0xff] %v414
      %v417 = vld [vmem:[#allocation1] sm:$0xff]
      %v418 = vshll.u32 %v417, 16
      %420 = vrot.lane.b32.xlu0 %v418, 115
      %v421 = vpop.permute.xlu0 %420
      %vm423 = vmand %vm317, %vm344
      %v424 = vld [vmem:[#allocation2] sm:$0x1]
      %v425 = vsel %vm423, %v421, %v424
      %426 = vst [vmem:[#allocation2] sm:$0x1] %v425
      %v427 = vld [vmem:[%s216] sm:$0x1]
      %429 = vst [vmem:[#allocation1] ss:$4 sm:$0xff] %v427
      %v430 = vld [vmem:[#allocation1] sm:$0xff]
      %v431 = vshll.u32 %v430, 16
      %433 = vrot.lane.b32.xlu0 %v431, 113
      %v434 = vpop.permute.xlu0 %433
      %vm436 = vmand %vm330, %vm344
      %v437 = vld [vmem:[#allocation2] sm:$0x1]
      %v438 = vsel %vm436, %v434, %v437
      %439 = vst [vmem:[#allocation2] sm:$0x1] %v438
      %v440 = vld [vmem:[%s216] sm:$0x1]
      %s442 = scalar_lea.vmem [#allocation1], 1
      %443 = vst [vmem:[%s442] ss:$4 sm:$0xff] %v440
      %v444 = vld [vmem:[#allocation1] sm:$0xff]
      %446 = vrot.lane.b32.xlu0 %v444, 126
      %v447 = vpop.permute.xlu0 %446
      %vm449 = vcmask 58369
      %vm450 = vsmask.f32 1280
      %vm451 = vmand %vm449, %vm450
      %v452 = vld [vmem:[#allocation2] sm:$0x2]
      %v453 = vsel %vm451, %v447, %v452
      %454 = vst [vmem:[#allocation2] sm:$0x2] %v453
      %v455 = vld [vmem:[%s216] sm:$0x1]
      %s457 = scalar_lea.vmem [#allocation1], 1
      %458 = vst [vmem:[%s457] ss:$4 sm:$0xff] %v455
      %v459 = vld [vmem:[#allocation1] sm:$0xff]
      %461 = vrot.lane.b32.xlu0 %v459, 124
      %v462 = vpop.permute.xlu0 %461
      %vm464 = vcmask 123969
      %vm465 = vmand %vm464, %vm450
      %v466 = vld [vmem:[#allocation2] sm:$0x2]
      %v467 = vsel %vm465, %v462, %v466
      %468 = vst [vmem:[#allocation2] sm:$0x2] %v467
      %v469 = vld [vmem:[%s216] sm:$0x1]
      %s471 = scalar_lea.vmem [#allocation1], 1
      %472 = vst [vmem:[%s471] ss:$4 sm:$0xff] %v469
      %v473 = vld [vmem:[#allocation1] sm:$0xff]
      %475 = vrot.lane.b32.xlu0 %v473, 122
      %v476 = vpop.permute.xlu0 %475
      %vm478 = vcmask 189569
      %vm479 = vmand %vm478, %vm450
      %v480 = vld [vmem:[#allocation2] sm:$0x2]
      %v481 = vsel %vm479, %v476, %v480
      %482 = vst [vmem:[#allocation2] sm:$0x2] %v481
      %v483 = vld [vmem:[%s216] sm:$0x1]
      %s485 = scalar_lea.vmem [#allocation1], 1
      %486 = vst [vmem:[%s485] ss:$4 sm:$0xff] %v483
      %v487 = vld [vmem:[#allocation1] sm:$0xff]
      %489 = vrot.lane.b32.xlu0 %v487, 120
      %v490 = vpop.permute.xlu0 %489
      %vm492 = vcmask 255169
      %vm493 = vmand %vm492, %vm450
      %v494 = vld [vmem:[#allocation2] sm:$0x2]
      %v495 = vsel %vm493, %v490, %v494
      %496 = vst [vmem:[#allocation2] sm:$0x2] %v495
      %v497 = vld [vmem:[%s216] sm:$0x1]
      %s499 = scalar_lea.vmem [#allocation1], 1
      %500 = vst [vmem:[%s499] ss:$4 sm:$0xff] %v497
      %v501 = vld [vmem:[#allocation1] sm:$0xff]
      %503 = vrot.lane.b32.xlu0 %v501, 118
      %v504 = vpop.permute.xlu0 %503
      %vm506 = vcmask 320769
      %vm507 = vmand %vm506, %vm450
      %v508 = vld [vmem:[#allocation2] sm:$0x2]
      %v509 = vsel %vm507, %v504, %v508
      %510 = vst [vmem:[#allocation2] sm:$0x2] %v509
      %v511 = vld [vmem:[%s216] sm:$0x1]
      %s513 = scalar_lea.vmem [#allocation1], 1
      %514 = vst [vmem:[%s513] ss:$4 sm:$0xff] %v511
      %v515 = vld [vmem:[#allocation1] sm:$0xff]
      %517 = vrot.lane.b32.xlu0 %v515, 116
      %v518 = vpop.permute.xlu0 %517
      %vm520 = vcmask 386369
      %vm521 = vmand %vm520, %vm450
      %v522 = vld [vmem:[#allocation2] sm:$0x2]
      %v523 = vsel %vm521, %v518, %v522
      %524 = vst [vmem:[#allocation2] sm:$0x2] %v523
      %v525 = vld [vmem:[%s216] sm:$0x1]
      %s527 = scalar_lea.vmem [#allocation1], 1
      %528 = vst [vmem:[%s527] ss:$4 sm:$0xff] %v525
      %v529 = vld [vmem:[#allocation1] sm:$0xff]
      %531 = vrot.lane.b32.xlu0 %v529, 114
      %v532 = vpop.permute.xlu0 %531
      %vm534 = vcmask 451969
      %vm535 = vmand %vm534, %vm450
      %v536 = vld [vmem:[#allocation2] sm:$0x2]
      %v537 = vsel %vm535, %v532, %v536
      %538 = vst [vmem:[#allocation2] sm:$0x2] %v537
      %v539 = vld [vmem:[%s216] sm:$0x1]
      %s541 = scalar_lea.vmem [#allocation1], 1
      %542 = vst [vmem:[%s541] ss:$4 sm:$0xff] %v539
      %v543 = vld [vmem:[#allocation1] sm:$0xff]
      %545 = vrot.lane.b32.xlu0 %v543, 112
      %v546 = vpop.permute.xlu0 %545
      %vm548 = vcmask 517569
      %vm549 = vmand %vm548, %vm450
      %v550 = vld [vmem:[#allocation2] sm:$0x2]
      %v551 = vsel %vm549, %v546, %v550
      %552 = vst [vmem:[#allocation2] sm:$0x2] %v551
      %v553 = vld [vmem:[%s216] sm:$0x1]
      %555 = vst [vmem:[#allocation1] ss:$4 sm:$0xff] %v553
      %v556 = vld [vmem:[#allocation1] sm:$0xff]
      %v557 = vshll.u32 %v556, 16
      %v559 = vrot.slane %v557, 7
      %560 = vrot.lane.b32.xlu0 %v559, 118
      %v561 = vpop.permute.xlu0 %560
      %vm563 = vsmask.f32 7942
      %vm564 = vmand %vm449, %vm563
      %v565 = vld [vmem:[#allocation2] sm:$0x2]
      %v566 = vsel %vm564, %v561, %v565
      %567 = vst [vmem:[#allocation2] sm:$0x2] %v566
      %v568 = vld [vmem:[%s216] sm:$0x1]
      %570 = vst [vmem:[#allocation1] ss:$4 sm:$0xff] %v568
      %v571 = vld [vmem:[#allocation1] sm:$0xff]
      %v572 = vshll.u32 %v571, 16
      %v574 = vrot.slane %v572, 7
      %575 = vrot.lane.b32.xlu0 %v574, 116
      %v576 = vpop.permute.xlu0 %575
      %vm578 = vmand %vm464, %vm563
      %v579 = vld [vmem:[#allocation2] sm:$0x2]
      %v580 = vsel %vm578, %v576, %v579
      %581 = vst [vmem:[#allocation2] sm:$0x2] %v580
      %v582 = vld [vmem:[%s216] sm:$0x1]
      %584 = vst [vmem:[#allocation1] ss:$4 sm:$0xff] %v582
      %v585 = vld [vmem:[#allocation1] sm:$0xff]
      %v586 = vshll.u32 %v585, 16
      %v588 = vrot.slane %v586, 7
      %589 = vrot.lane.b32.xlu0 %v588, 114
      %v590 = vpop.permute.xlu0 %589
      %vm592 = vmand %vm478, %vm563
      %v593 = vld [vmem:[#allocation2] sm:$0x2]
      %v594 = vsel %vm592, %v590, %v593
      %595 = vst [vmem:[#allocation2] sm:$0x2] %v594
      %v596 = vld [vmem:[%s216] sm:$0x1]
      %598 = vst [vmem:[#allocation1] ss:$4 sm:$0xff] %v596
      %v599 = vld [vmem:[#allocation1] sm:$0xff]
      %v600 = vshll.u32 %v599, 16
      %v602 = vrot.slane %v600, 7
      %603 = vrot.lane.b32.xlu0 %v602, 112
      %v604 = vpop.permute.xlu0 %603
      %vm606 = vmand %vm492, %vm563
      %v607 = vld [vmem:[#allocation2] sm:$0x2]
      %v608 = vsel %vm606, %v604, %v607
      %609 = vst [vmem:[#allocation2] sm:$0x2] %v608
      %v610 = vld [vmem:[%s216] sm:$0x1]
      %612 = vst [vmem:[#allocation1] ss:$4 sm:$0xff] %v610
      %v613 = vld [vmem:[#allocation1] sm:$0xff]
      %v614 = vshll.u32 %v613, 16
      %v616 = vrot.slane %v614, 7
      %617 = vrot.lane.b32.xlu0 %v616, 110
      %v618 = vpop.permute.xlu0 %617
      %vm620 = vmand %vm506, %vm563
      %v621 = vld [vmem:[#allocation2] sm:$0x2]
      %v622 = vsel %vm620, %v618, %v621
      %623 = vst [vmem:[#allocation2] sm:$0x2] %v622
      %v624 = vld [vmem:[%s216] sm:$0x1]
      %626 = vst [vmem:[#allocation1] ss:$4 sm:$0xff] %v624
      %v627 = vld [vmem:[#allocation1] sm:$0xff]
      %v628 = vshll.u32 %v627, 16
      %v630 = vrot.slane %v628, 7
      %631 = vrot.lane.b32.xlu0 %v630, 108
      %v632 = vpop.permute.xlu0 %631
      %vm634 = vmand %vm520, %vm563
      %v635 = vld [vmem:[#allocation2] sm:$0x2]
      %v636 = vsel %vm634, %v632, %v635
      %637 = vst [vmem:[#allocation2] sm:$0x2] %v636
      %v638 = vld [vmem:[%s216] sm:$0x1]
      %640 = vst [vmem:[#allocation1] ss:$4 sm:$0xff] %v638
      %v641 = vld [vmem:[#allocation1] sm:$0xff]
      %v642 = vshll.u32 %v641, 16
      %v644 = vrot.slane %v642, 7
      %645 = vrot.lane.b32.xlu0 %v644, 106
      %v646 = vpop.permute.xlu0 %645
      %vm648 = vmand %vm534, %vm563
      %v649 = vld [vmem:[#allocation2] sm:$0x2]
      %v650 = vsel %vm648, %v646, %v649
      %651 = vst [vmem:[#allocation2] sm:$0x2] %v650
      %v652 = vld [vmem:[%s216] sm:$0x1]
      %654 = vst [vmem:[#allocation1] ss:$4 sm:$0xff] %v652
      %v655 = vld [vmem:[#allocation1] sm:$0xff]
      %v656 = vshll.u32 %v655, 16
      %v658 = vrot.slane %v656, 7
      %659 = vrot.lane.b32.xlu0 %v658, 104
      %v660 = vpop.permute.xlu0 %659
      %vm662 = vmand %vm548, %vm563
      %v663 = vld [vmem:[#allocation2] sm:$0x2]
      %v664 = vsel %vm662, %v660, %v663
      %665 = vst [vmem:[#allocation2] sm:$0x2] %v664
      %v666 = vld [vmem:[%s216] sm:$0x1]
      %s668 = scalar_lea.vmem [#allocation1], 2
      %669 = vst [vmem:[%s668] ss:$4 sm:$0xff] %v666
      %v670 = vld [vmem:[#allocation1] sm:$0xff]
      %672 = vrot.lane.b32.xlu0 %v670, 117
      %v673 = vpop.permute.xlu0 %672
      %vm675 = vcmask 59394
      %vm676 = vsmask.f32 2304
      %vm677 = vmand %vm675, %vm676
      %v678 = vld [vmem:[#allocation2] sm:$0x4]
      %v679 = vsel %vm677, %v673, %v678
      %680 = vst [vmem:[#allocation2] sm:$0x4] %v679
      %v681 = vld [vmem:[%s216] sm:$0x1]
      %s683 = scalar_lea.vmem [#allocation1], 2
      %684 = vst [vmem:[%s683] ss:$4 sm:$0xff] %v681
      %v685 = vld [vmem:[#allocation1] sm:$0xff]
      %687 = vrot.lane.b32.xlu0 %v685, 115
      %v688 = vpop.permute.xlu0 %687
      %vm690 = vcmask 124994
      %vm691 = vmand %vm690, %vm676
      %v692 = vld [vmem:[#allocation2] sm:$0x4]
      %v693 = vsel %vm691, %v688, %v692
      %694 = vst [vmem:[#allocation2] sm:$0x4] %v693
      %v695 = vld [vmem:[%s216] sm:$0x1]
      %s697 = scalar_lea.vmem [#allocation1], 2
      %698 = vst [vmem:[%s697] ss:$4 sm:$0xff] %v695
      %v699 = vld [vmem:[#allocation1] sm:$0xff]
      %701 = vrot.lane.b32.xlu0 %v699, 113
      %v702 = vpop.permute.xlu0 %701
      %vm704 = vcmask 190594
      %vm705 = vmand %vm704, %vm676
      %v706 = vld [vmem:[#allocation2] sm:$0x4]
      %v707 = vsel %vm705, %v702, %v706
      %708 = vst [vmem:[#allocation2] sm:$0x4] %v707
      %v709 = vld [vmem:[%s216] sm:$0x1]
      %s711 = scalar_lea.vmem [#allocation1], 2
      %712 = vst [vmem:[%s711] ss:$4 sm:$0xff] %v709
      %v713 = vld [vmem:[#allocation1] sm:$0xff]
      %715 = vrot.lane.b32.xlu0 %v713, 111
      %v716 = vpop.permute.xlu0 %715
      %vm718 = vcmask 256194
      %vm719 = vmand %vm718, %vm676
      %v720 = vld [vmem:[#allocation2] sm:$0x4]
      %v721 = vsel %vm719, %v716, %v720
      %722 = vst [vmem:[#allocation2] sm:$0x4] %v721
      %v723 = vld [vmem:[%s216] sm:$0x1]
      %s725 = scalar_lea.vmem [#allocation1], 2
      %726 = vst [vmem:[%s725] ss:$4 sm:$0xff] %v723
      %v727 = vld [vmem:[#allocation1] sm:$0xff]
      %729 = vrot.lane.b32.xlu0 %v727, 109
      %v730 = vpop.permute.xlu0 %729
      %vm732 = vcmask 321794
      %vm733 = vmand %vm732, %vm676
      %v734 = vld [vmem:[#allocation2] sm:$0x4]
      %v735 = vsel %vm733, %v730, %v734
      %736 = vst [vmem:[#allocation2] sm:$0x4] %v735
      %v737 = vld [vmem:[%s216] sm:$0x1]
      %s739 = scalar_lea.vmem [#allocation1], 2
      %740 = vst [vmem:[%s739] ss:$4 sm:$0xff] %v737
      %v741 = vld [vmem:[#allocation1] sm:$0xff]
      %743 = vrot.lane.b32.xlu0 %v741, 107
      %v744 = vpop.permute.xlu0 %743
      %vm746 = vcmask 387394
      %vm747 = vmand %vm746, %vm676
      %v748 = vld [vmem:[#allocation2] sm:$0x4]
      %v749 = vsel %vm747, %v744, %v748
      %750 = vst [vmem:[#allocation2] sm:$0x4] %v749
      %v751 = vld [vmem:[%s216] sm:$0x1]
      %s753 = scalar_lea.vmem [#allocation1], 2
      %754 = vst [vmem:[%s753] ss:$4 sm:$0xff] %v751
      %v755 = vld [vmem:[#allocation1] sm:$0xff]
      %757 = vrot.lane.b32.xlu0 %v755, 105
      %v758 = vpop.permute.xlu0 %757
      %vm760 = vcmask 452994
      %vm761 = vmand %vm760, %vm676
      %v762 = vld [vmem:[#allocation2] sm:$0x4]
      %v763 = vsel %vm761, %v758, %v762
      %764 = vst [vmem:[#allocation2] sm:$0x4] %v763
      %v765 = vld [vmem:[%s216] sm:$0x1]
      %s767 = scalar_lea.vmem [#allocation1], 2
      %768 = vst [vmem:[%s767] ss:$4 sm:$0xff] %v765
      %v769 = vld [vmem:[#allocation1] sm:$0xff]
      %771 = vrot.lane.b32.xlu0 %v769, 103
      %v772 = vpop.permute.xlu0 %771
      %vm774 = vcmask 518594
      %vm775 = vmand %vm774, %vm676
      %v776 = vld [vmem:[#allocation2] sm:$0x4]
      %v777 = vsel %vm775, %v772, %v776
      %778 = vst [vmem:[#allocation2] sm:$0x4] %v777
      %v779 = vld [vmem:[%s216] sm:$0x1]
      %781 = vst [vmem:[#allocation1] ss:$4 sm:$0xff] %v779
      %v782 = vld [vmem:[#allocation1] sm:$0xff]
      %v783 = vshll.u32 %v782, 16
      %v785 = vrot.slane %v783, 6
      %786 = vrot.lane.b32.xlu0 %v785, 116
      %v787 = vpop.permute.xlu0 %786
      %vm789 = vsmask.f32 7946
      %vm790 = vmand %vm675, %vm789
      %v791 = vld [vmem:[#allocation2] sm:$0x4]
      %v792 = vsel %vm790, %v787, %v791
      %793 = vst [vmem:[#allocation2] sm:$0x4] %v792
      %v794 = vld [vmem:[%s216] sm:$0x1]
      %796 = vst [vmem:[#allocation1] ss:$4 sm:$0xff] %v794
      %v797 = vld [vmem:[#allocation1] sm:$0xff]
      %v798 = vshll.u32 %v797, 16
      %v800 = vrot.slane %v798, 6
      %801 = vrot.lane.b32.xlu0 %v800, 114
      %v802 = vpop.permute.xlu0 %801
      %vm804 = vmand %vm690, %vm789
      %v805 = vld [vmem:[#allocation2] sm:$0x4]
      %v806 = vsel %vm804, %v802, %v805
      %807 = vst [vmem:[#allocation2] sm:$0x4] %v806
      %v808 = vld [vmem:[%s216] sm:$0x1]
      %810 = vst [vmem:[#allocation1] ss:$4 sm:$0xff] %v808
      %v811 = vld [vmem:[#allocation1] sm:$0xff]
      %v812 = vshll.u32 %v811, 16
      %v814 = vrot.slane %v812, 6
      %815 = vrot.lane.b32.xlu0 %v814, 112
      %v816 = vpop.permute.xlu0 %815
      %vm818 = vmand %vm704, %vm789
      %v819 = vld [vmem:[#allocation2] sm:$0x4]
      %v820 = vsel %vm818, %v816, %v819
      %821 = vst [vmem:[#allocation2] sm:$0x4] %v820
      %v822 = vld [vmem:[%s216] sm:$0x1]
      %824 = vst [vmem:[#allocation1] ss:$4 sm:$0xff] %v822
      %v825 = vld [vmem:[#allocation1] sm:$0xff]
      %v826 = vshll.u32 %v825, 16
      %v828 = vrot.slane %v826, 6
      %829 = vrot.lane.b32.xlu0 %v828, 110
      %v830 = vpop.permute.xlu0 %829
      %vm832 = vmand %vm718, %vm789
      %v833 = vld [vmem:[#allocation2] sm:$0x4]
      %v834 = vsel %vm832, %v830, %v833
      %835 = vst [vmem:[#allocation2] sm:$0x4] %v834
      %v836 = vld [vmem:[%s216] sm:$0x1]
      %838 = vst [vmem:[#allocation1] ss:$4 sm:$0xff] %v836
      %v839 = vld [vmem:[#allocation1] sm:$0xff]
      %v840 = vshll.u32 %v839, 16
      %v842 = vrot.slane %v840, 6
      %843 = vrot.lane.b32.xlu0 %v842, 108
      %v844 = vpop.permute.xlu0 %843
      %vm846 = vmand %vm732, %vm789
      %v847 = vld [vmem:[#allocation2] sm:$0x4]
      %v848 = vsel %vm846, %v844, %v847
      %849 = vst [vmem:[#allocation2] sm:$0x4] %v848
      %v850 = vld [vmem:[%s216] sm:$0x1]
      %852 = vst [vmem:[#allocation1] ss:$4 sm:$0xff] %v850
      %v853 = vld [vmem:[#allocation1] sm:$0xff]
      %v854 = vshll.u32 %v853, 16
      %v856 = vrot.slane %v854, 6
      %857 = vrot.lane.b32.xlu0 %v856, 106
      %v858 = vpop.permute.xlu0 %857
      %vm860 = vmand %vm746, %vm789
      %v861 = vld [vmem:[#allocation2] sm:$0x4]
      %v862 = vsel %vm860, %v858, %v861
      %863 = vst [vmem:[#allocation2] sm:$0x4] %v862
      %v864 = vld [vmem:[%s216] sm:$0x1]
      %866 = vst [vmem:[#allocation1] ss:$4 sm:$0xff] %v864
      %v867 = vld [vmem:[#allocation1] sm:$0xff]
      %v868 = vshll.u32 %v867, 16
      %v870 = vrot.slane %v868, 6
      %871 = vrot.lane.b32.xlu0 %v870, 104
      %v872 = vpop.permute.xlu0 %871
      %vm874 = vmand %vm760, %vm789
      %v875 = vld [vmem:[#allocation2] sm:$0x4]
      %v876 = vsel %vm874, %v872, %v875
      %877 = vst [vmem:[#allocation2] sm:$0x4] %v876
      %v878 = vld [vmem:[%s216] sm:$0x1]
      %880 = vst [vmem:[#allocation1] ss:$4 sm:$0xff] %v878
      %v881 = vld [vmem:[#allocation1] sm:$0xff]
      %v882 = vshll.u32 %v881, 16
      %v884 = vrot.slane %v882, 6
      %885 = vrot.lane.b32.xlu0 %v884, 102
      %v886 = vpop.permute.xlu0 %885
      %vm888 = vmand %vm774, %vm789
      %v889 = vld [vmem:[#allocation2] sm:$0x4]
      %v890 = vsel %vm888, %v886, %v889
      %891 = vst [vmem:[#allocation2] sm:$0x4] %v890
      %v892 = vld [vmem:[%s216] sm:$0x1]
      %s894 = scalar_lea.vmem [#allocation1], 3
      %895 = vst [vmem:[%s894] ss:$4 sm:$0xff] %v892
      %v896 = vld [vmem:[#allocation1] sm:$0xff]
      %898 = vrot.lane.b32.xlu0 %v896, 108
      %v899 = vpop.permute.xlu0 %898
      %vm901 = vcmask 60419
      %vm902 = vsmask.f32 3328
      %vm903 = vmand %vm901, %vm902
      %v904 = vld [vmem:[#allocation2] sm:$0x8]
      %v905 = vsel %vm903, %v899, %v904
      %906 = vst [vmem:[#allocation2] sm:$0x8] %v905
      %v907 = vld [vmem:[%s216] sm:$0x1]
      %s909 = scalar_lea.vmem [#allocation1], 3
      %910 = vst [vmem:[%s909] ss:$4 sm:$0xff] %v907
      %v911 = vld [vmem:[#allocation1] sm:$0xff]
      %913 = vrot.lane.b32.xlu0 %v911, 106
      %v914 = vpop.permute.xlu0 %913
      %vm916 = vcmask 126019
      %vm917 = vmand %vm916, %vm902
      %v918 = vld [vmem:[#allocation2] sm:$0x8]
      %v919 = vsel %vm917, %v914, %v918
      %920 = vst [vmem:[#allocation2] sm:$0x8] %v919
      %v921 = vld [vmem:[%s216] sm:$0x1]
      %s923 = scalar_lea.vmem [#allocation1], 3
      %924 = vst [vmem:[%s923] ss:$4 sm:$0xff] %v921
      %v925 = vld [vmem:[#allocation1] sm:$0xff]
      %927 = vrot.lane.b32.xlu0 %v925, 104
      %v928 = vpop.permute.xlu0 %927
      %vm930 = vcmask 191619
      %vm931 = vmand %vm930, %vm902
      %v932 = vld [vmem:[#allocation2] sm:$0x8]
      %v933 = vsel %vm931, %v928, %v932
      %934 = vst [vmem:[#allocation2] sm:$0x8] %v933
      %v935 = vld [vmem:[%s216] sm:$0x1]
      %s937 = scalar_lea.vmem [#allocation1], 3
      %938 = vst [vmem:[%s937] ss:$4 sm:$0xff] %v935
      %v939 = vld [vmem:[#allocation1] sm:$0xff]
      %941 = vrot.lane.b32.xlu0 %v939, 102
      %v942 = vpop.permute.xlu0 %941
      %vm944 = vcmask 257219
      %vm945 = vmand %vm944, %vm902
      %v946 = vld [vmem:[#allocation2] sm:$0x8]
      %v947 = vsel %vm945, %v942, %v946
      %948 = vst [vmem:[#allocation2] sm:$0x8] %v947
      %v949 = vld [vmem:[%s216] sm:$0x1]
      %s951 = scalar_lea.vmem [#allocation1], 3
      %952 = vst [vmem:[%s951] ss:$4 sm:$0xff] %v949
      %v953 = vld [vmem:[#allocation1] sm:$0xff]
      %955 = vrot.lane.b32.xlu0 %v953, 100
      %v956 = vpop.permute.xlu0 %955
      %vm958 = vcmask 322819
      %vm959 = vmand %vm958, %vm902
      %v960 = vld [vmem:[#allocation2] sm:$0x8]
      %v961 = vsel %vm959, %v956, %v960
      %962 = vst [vmem:[#allocation2] sm:$0x8] %v961
      %v963 = vld [vmem:[%s216] sm:$0x1]
      %s965 = scalar_lea.vmem [#allocation1], 3
      %966 = vst [vmem:[%s965] ss:$4 sm:$0xff] %v963
      %v967 = vld [vmem:[#allocation1] sm:$0xff]
      %969 = vrot.lane.b32.xlu0 %v967, 98
      %v970 = vpop.permute.xlu0 %969
      %vm972 = vcmask 388419
      %vm973 = vmand %vm972, %vm902
      %v974 = vld [vmem:[#allocation2] sm:$0x8]
      %v975 = vsel %vm973, %v970, %v974
      %976 = vst [vmem:[#allocation2] sm:$0x8] %v975
      %v977 = vld [vmem:[%s216] sm:$0x1]
      %s979 = scalar_lea.vmem [#allocation1], 3
      %980 = vst [vmem:[%s979] ss:$4 sm:$0xff] %v977
      %v981 = vld [vmem:[#allocation1] sm:$0xff]
      %983 = vrot.lane.b32.xlu0 %v981, 96
      %v984 = vpop.permute.xlu0 %983
      %vm986 = vcmask 454019
      %vm987 = vmand %vm986, %vm902
      %v988 = vld [vmem:[#allocation2] sm:$0x8]
      %v989 = vsel %vm987, %v984, %v988
      %990 = vst [vmem:[#allocation2] sm:$0x8] %v989
      %v991 = vld [vmem:[%s216] sm:$0x1]
      %s993 = scalar_lea.vmem [#allocation1], 3
      %994 = vst [vmem:[%s993] ss:$4 sm:$0xff] %v991
      %v995 = vld [vmem:[#allocation1] sm:$0xff]
      %997 = vrot.lane.b32.xlu0 %v995, 94
      %v998 = vpop.permute.xlu0 %997
      %vm1000 = vcmask 519619
      %vm1001 = vmand %vm1000, %vm902
      %v1002 = vld [vmem:[#allocation2] sm:$0x8]
      %v1003 = vsel %vm1001, %v998, %v1002
      %1004 = vst [vmem:[#allocation2] sm:$0x8] %v1003
      %v1005 = vld [vmem:[%s216] sm:$0x1]
      %1007 = vst [vmem:[#allocation1] ss:$4 sm:$0xff] %v1005
      %v1008 = vld [vmem:[#allocation1] sm:$0xff]
      %v1009 = vshll.u32 %v1008, 16
      %v1011 = vrot.slane %v1009, 5
      %1012 = vrot.lane.b32.xlu0 %v1011, 107
      %v1013 = vpop.permute.xlu0 %1012
      %vm1015 = vsmask.f32 7950
      %vm1016 = vmand %vm901, %vm1015
      %v1017 = vld [vmem:[#allocation2] sm:$0x8]
      %v1018 = vsel %vm1016, %v1013, %v1017
      %1019 = vst [vmem:[#allocation2] sm:$0x8] %v1018
      %v1020 = vld [vmem:[%s216] sm:$0x1]
      %1022 = vst [vmem:[#allocation1] ss:$4 sm:$0xff] %v1020
      %v1023 = vld [vmem:[#allocation1] sm:$0xff]
      %v1024 = vshll.u32 %v1023, 16
      %v1026 = vrot.slane %v1024, 5
      %1027 = vrot.lane.b32.xlu0 %v1026, 105
      %v1028 = vpop.permute.xlu0 %1027
      %vm1030 = vmand %vm916, %vm1015
      %v1031 = vld [vmem:[#allocation2] sm:$0x8]
      %v1032 = vsel %vm1030, %v1028, %v1031
      %1033 = vst [vmem:[#allocation2] sm:$0x8] %v1032
      %v1034 = vld [vmem:[%s216] sm:$0x1]
      %1036 = vst [vmem:[#allocation1] ss:$4 sm:$0xff] %v1034
      %v1037 = vld [vmem:[#allocation1] sm:$0xff]
      %v1038 = vshll.u32 %v1037, 16
      %v1040 = vrot.slane %v1038, 5
      %1041 = vrot.lane.b32.xlu0 %v1040, 103
      %v1042 = vpop.permute.xlu0 %1041
      %vm1044 = vmand %vm930, %vm1015
      %v1045 = vld [vmem:[#allocation2] sm:$0x8]
      %v1046 = vsel %vm1044, %v1042, %v1045
      %1047 = vst [vmem:[#allocation2] sm:$0x8] %v1046
      %v1048 = vld [vmem:[%s216] sm:$0x1]
      %1050 = vst [vmem:[#allocation1] ss:$4 sm:$0xff] %v1048
      %v1051 = vld [vmem:[#allocation1] sm:$0xff]
      %v1052 = vshll.u32 %v1051, 16
      %v1054 = vrot.slane %v1052, 5
      %1055 = vrot.lane.b32.xlu0 %v1054, 101
      %v1056 = vpop.permute.xlu0 %1055
      %vm1058 = vmand %vm944, %vm1015
      %v1059 = vld [vmem:[#allocation2] sm:$0x8]
      %v1060 = vsel %vm1058, %v1056, %v1059
      %1061 = vst [vmem:[#allocation2] sm:$0x8] %v1060
      %v1062 = vld [vmem:[%s216] sm:$0x1]
      %1064 = vst [vmem:[#allocation1] ss:$4 sm:$0xff] %v1062
      %v1065 = vld [vmem:[#allocation1] sm:$0xff]
      %v1066 = vshll.u32 %v1065, 16
      %v1068 = vrot.slane %v1066, 5
      %1069 = vrot.lane.b32.xlu0 %v1068, 99
      %v1070 = vpop.permute.xlu0 %1069
      %vm1072 = vmand %vm958, %vm1015
      %v1073 = vld [vmem:[#allocation2] sm:$0x8]
      %v1074 = vsel %vm1072, %v1070, %v1073
      %1075 = vst [vmem:[#allocation2] sm:$0x8] %v1074
      %v1076 = vld [vmem:[%s216] sm:$0x1]
      %1078 = vst [vmem:[#allocation1] ss:$4 sm:$0xff] %v1076
      %v1079 = vld [vmem:[#allocation1] sm:$0xff]
      %v1080 = vshll.u32 %v1079, 16
      %v1082 = vrot.slane %v1080, 5
      %1083 = vrot.lane.b32.xlu0 %v1082, 97
      %v1084 = vpop.permute.xlu0 %1083
      %vm1086 = vmand %vm972, %vm1015
      %v1087 = vld [vmem:[#allocation2] sm:$0x8]
      %v1088 = vsel %vm1086, %v1084, %v1087
      %1089 = vst [vmem:[#allocation2] sm:$0x8] %v1088
      %v1090 = vld [vmem:[%s216] sm:$0x1]
      %1092 = vst [vmem:[#allocation1] ss:$4 sm:$0xff] %v1090
      %v1093 = vld [vmem:[#allocation1] sm:$0xff]
      %v1094 = vshll.u32 %v1093, 16
      %v1096 = vrot.slane %v1094, 5
      %1097 = vrot.lane.b32.xlu0 %v1096, 95
      %v1098 = vpop.permute.xlu0 %1097
      %vm1100 = vmand %vm986, %vm1015
      %v1101 = vld [vmem:[#allocation2] sm:$0x8]
      %v1102 = vsel %vm1100, %v1098, %v1101
      %1103 = vst [vmem:[#allocation2] sm:$0x8] %v1102
      %v1104 = vld [vmem:[%s216] sm:$0x1]
      %1106 = vst [vmem:[#allocation1] ss:$4 sm:$0xff] %v1104
      %v1107 = vld [vmem:[#allocation1] sm:$0xff]
      %v1108 = vshll.u32 %v1107, 16
      %v1110 = vrot.slane %v1108, 5
      %1111 = vrot.lane.b32.xlu0 %v1110, 93
      %v1112 = vpop.permute.xlu0 %1111
      %vm1114 = vmand %vm1000, %vm1015
      %v1115 = vld [vmem:[#allocation2] sm:$0x8]
      %v1116 = vsel %vm1114, %v1112, %v1115
      %1117 = vst [vmem:[#allocation2] sm:$0x8] %v1116
      %v1118 = vld [vmem:[%s216] sm:$0x1]
      %1120 = vst [vmem:[#allocation1] ss:$4 sm:$0xff] %v1118
      %v1121 = vld [vmem:[#allocation1] sm:$0xff]
      %1123 = vrot.lane.b32.xlu0 %v1121, 106
      %v1124 = vpop.permute.xlu0 %1123
      %v1126 = vld [vmem:[#allocation2 + $0x4] sm:$0x1]
      %v1127 = vsel %vm240, %v1124, %v1126
      %1128 = vst [vmem:[#allocation2 + $0x4] sm:$0x1] %v1127
      %v1129 = vld [vmem:[%s216] sm:$0x1]
      %1131 = vst [vmem:[#allocation1] ss:$4 sm:$0xff] %v1129
      %v1132 = vld [vmem:[#allocation1] sm:$0xff]
      %1134 = vrot.lane.b32.xlu0 %v1132, 104
      %v1135 = vpop.permute.xlu0 %1134
      %v1137 = vld [vmem:[#allocation2 + $0x4] sm:$0x1]
      %v1138 = vsel %vm253, %v1135, %v1137
      %1139 = vst [vmem:[#allocation2 + $0x4] sm:$0x1] %v1138
      %v1140 = vld [vmem:[%s216] sm:$0x1]
      %1142 = vst [vmem:[#allocation1] ss:$4 sm:$0xff] %v1140
      %v1143 = vld [vmem:[#allocation1] sm:$0xff]
      %1145 = vrot.lane.b32.xlu0 %v1143, 102
      %v1146 = vpop.permute.xlu0 %1145
      %v1148 = vld [vmem:[#allocation2 + $0x4] sm:$0x1]
      %v1149 = vsel %vm266, %v1146, %v1148
      %1150 = vst [vmem:[#allocation2 + $0x4] sm:$0x1] %v1149
      %v1151 = vld [vmem:[%s216] sm:$0x1]
      %1153 = vst [vmem:[#allocation1] ss:$4 sm:$0xff] %v1151
      %v1154 = vld [vmem:[#allocation1] sm:$0xff]
      %1156 = vrot.lane.b32.xlu0 %v1154, 100
      %v1157 = vpop.permute.xlu0 %1156
      %v1159 = vld [vmem:[#allocation2 + $0x4] sm:$0x1]
      %v1160 = vsel %vm279, %v1157, %v1159
      %1161 = vst [vmem:[#allocation2 + $0x4] sm:$0x1] %v1160
      %v1162 = vld [vmem:[%s216] sm:$0x1]
      %1164 = vst [vmem:[#allocation1] ss:$4 sm:$0xff] %v1162
      %v1165 = vld [vmem:[#allocation1] sm:$0xff]
      %1167 = vrot.lane.b32.xlu0 %v1165, 98
      %v1168 = vpop.permute.xlu0 %1167
      %v1170 = vld [vmem:[#allocation2 + $0x4] sm:$0x1]
      %v1171 = vsel %vm292, %v1168, %v1170
      %1172 = vst [vmem:[#allocation2 + $0x4] sm:$0x1] %v1171
      %v1173 = vld [vmem:[%s216] sm:$0x1]
      %1175 = vst [vmem:[#allocation1] ss:$4 sm:$0xff] %v1173
      %v1176 = vld [vmem:[#allocation1] sm:$0xff]
      %1178 = vrot.lane.b32.xlu0 %v1176, 96
      %v1179 = vpop.permute.xlu0 %1178
      %v1181 = vld [vmem:[#allocation2 + $0x4] sm:$0x1]
      %v1182 = vsel %vm305, %v1179, %v1181
      %1183 = vst [vmem:[#allocation2 + $0x4] sm:$0x1] %v1182
      %v1184 = vld [vmem:[%s216] sm:$0x1]
      %1186 = vst [vmem:[#allocation1] ss:$4 sm:$0xff] %v1184
      %v1187 = vld [vmem:[#allocation1] sm:$0xff]
      %1189 = vrot.lane.b32.xlu0 %v1187, 94
      %v1190 = vpop.permute.xlu0 %1189
      %v1192 = vld [vmem:[#allocation2 + $0x4] sm:$0x1]
      %v1193 = vsel %vm318, %v1190, %v1192
      %1194 = vst [vmem:[#allocation2 + $0x4] sm:$0x1] %v1193
      %v1195 = vld [vmem:[%s216] sm:$0x1]
      %1197 = vst [vmem:[#allocation1] ss:$4 sm:$0xff] %v1195
      %v1198 = vld [vmem:[#allocation1] sm:$0xff]
      %1200 = vrot.lane.b32.xlu0 %v1198, 92
      %v1201 = vpop.permute.xlu0 %1200
      %v1203 = vld [vmem:[#allocation2 + $0x4] sm:$0x1]
      %v1204 = vsel %vm331, %v1201, %v1203
      %1205 = vst [vmem:[#allocation2 + $0x4] sm:$0x1] %v1204
      %v1206 = vld [vmem:[#allocation3] sm:$0xff]
      %v1207 = vld [vmem:[%s221] sm:$0xf]
      %v1208 = vld [vmem:[#allocation2] sm:$0xf]
      %v1209 = vld [vmem:[#allocation2 + $0x4] sm:$0x1]
      %v1212 = vunpack.c.l.b16 %v1208
      %v1213 = vunpack.c.l.b16 %v1209
      %v1214 = vpack.c.b16 %v1213, %v1212
      %vm1215 = vcmask 72704
      %v1217 = vsel %vm1215, %v1207, 0
      %vm1219 = vcmask 1043456
      %vm1220 = vcmask 1044480
      %v1221 = vsel %vm1219, 4294967295, 65535
      %v1222 = vsel %vm1220, %v1221, 0
      %v1224 = vand.u32 %v1214, %v1222
      %1226 = vmatpush.bf16.msra.mxu0 0
      %1227 = vmatpush.bf16.msra.mxu0 0
      %1228 = vmatpush.bf16.msra.mxu0 0
      %1229 = vmatpush.bf16.msra.mxu0 0
      %1230 = vmatpush.bf16.msra.mxu0 0
      %1231 = vmatpush.bf16.msra.mxu0 0
      %1232 = vmatpush.bf16.msra.mxu0 0
      %1233 = vmatpush.bf16.msra.mxu0 %v1224
      %1234 = vmatmul.bf16.gmra.mxu0 %v1217
      %v1235 = vpop.f32.mrf.mxu0
      %v1236 = vadd.f32 0.0, %v1235
      %v1237 = vpop.f32.mrf.mxu0
      %1238 = vdwg.mxu0
      %v1239 = vadd.f32 %v1206, %v1236
      %vm1240 = vcmask 523264
      %1241 = vst.msk [vmem:[#allocation3] sm:$0xff] %vm1240, %v1239
      %p1242 = scmp.eq.s32.totalorder %s21, 2
      // Predicated region
      $region37: #{_lambda_.18} parent=31 // pred_check
        %p1243 = pneg %p1242
      $region38: #{_lambda_.18} parent=31 // pred_check_branch
        %1245 = sbr.rel (%p1243) target = $region40
      $region39: #{_lambda_.18} parent=31 // pred_region
        %v1246 = vld [vmem:[#allocation3] sm:$0xff]
        %v1247 = vld [vmem:[%s2] sm:$0xff]
        %1249 = vset.pattern.permute.xlu0 0
        %1250 = vperm.xlu0 %1249, %v1247
        %v1251 = vpop.permute.xlu0 %1250
        %v1253 = vadd.f32 %v1246, %v1251
        %v1254 = vmax.f32 %v1253, 0.0
        %v1255 = vpack.c.bf16 %v1254, %v1254
        %vm1256 = vcmask 519168
        %1257 = vst.msk [vmem:[%s229] sm:$0xf] %vm1256, %v1255
      $region40: #{_lambda_.18} parent=31 // pred_fallthru
        _
      %p1258 = scmp.lt.s32.totalorder %s19, 1
      %s1259 = scalar_select %p1258, %s19, 1
      %p1260 = scmp.lt.s32.totalorder %s20, 7
      %s1261 = scalar_select %p1260, %s20, 7
      %s1262 = smul.addr %s1259, 8
      %s1263 = sadd.s32 %s1261, %s1262
      %s1264 = smul.addr %s1263, 4
      %s1265 = scalar_lea.vmem %s3, %s1264
      // Predicated region
      $region41: #{_lambda_.18} parent=31 // pred_check
        %p1266 = pneg %p130
      $region42: #{_lambda_.18} parent=31 // pred_check_branch
        %1268 = sbr.rel (%p1266) target = $region44
      $region43: #{_lambda_.18} parent=31 // pred_region
        _
      $region44: #{_lambda_.18} parent=31 // pred_fallthru
        _
    $region32: #{_lambda_.18} parent=5 // pred_fallthru
      _
    %p1269 = scmp.le.s32.totalorder 2, %s9
    // Predicated region
    $region45: #{_lambda_.18} parent=5 // pred_check
      %p1270 = pneg %p1269
    $region46: #{_lambda_.18} parent=5 // pred_check_branch
      %1272 = sbr.rel (%p1270) target = $region48
    $region47: #{_lambda_.18} parent=5 // pred_region
      %s1273 = ssub.s32 %s9, 2
      // Predicated region
      $region49: #{_lambda_.18} parent=47 // pred_check
        %p1274 = pneg %p136
      $region50: #{_lambda_.18} parent=47 // pred_check_branch
        %1276 = sbr.rel (%p1274) target = $region52
      $region51: #{_lambda_.18} parent=47 // pred_region
        %p1277 = scmp.lt.s32.totalorder %s22, 1
        %s1278 = scalar_select %p1277, %s22, 1
        %p1279 = scmp.lt.s32.totalorder %s23, 7
        %s1280 = scalar_select %p1279, %s23, 7
        %s1281 = smul.addr %s1278, 8
        %s1282 = sadd.s32 %s1280, %s1281
        %s1283 = smul.addr %s1282, 4
        %s1284 = scalar_lea.vmem %s3, %s1283
      $region52: #{_lambda_.18} parent=47 // pred_fallthru
        _
    $region48: #{_lambda_.18} parent=5 // pred_fallthru
      _
  $region6: #{_lambda_.18} parent=0 // loop_footer
    %s13 = sadd.s32 1, %s9
  $region7: #{_lambda_.18} parent=0 // loop_footer_branch
    %8 = sbr.rel target = $region3
  $region8: #{_lambda_.18} parent=0 // loop_exit
    _

// kernel: _lambda_.19
$region0: #{_lambda_.19}
  #allocation0 [shape = 'u32[]', space=smem, size = 0x4, offset = 0x4, fixed_abs, tag = 'smem constant byte address 0x4 - core index']
  #allocation1 [shape = 'u32[72,128]{1,0:T(1,128)}', space=vmem, size = 0x9000, scoped, tag = 'internal scratch']
  #allocation2 [shape = 'bf16[72,64]{1,0:T(8,128)(2,1)}', space=vmem, size = 0x4800, scoped, tag = 'scratch operand']
  #allocation3 [shape = 'f32[8,64]{1,0:T(8,128)}', space=vmem, size = 0x1000, scoped, tag = 'scratch operand']
  %s0 = inlined_call_operand.vmem [shape: bf16[2,10,8,100], index: 0, kind: input, shape index: {}]
  %s1 = inlined_call_operand.vmem [shape: bf16[3,8,72], index: 1, kind: input, shape index: {}]
  %s2 = inlined_call_operand.vmem [shape: f32[8,1], index: 2, kind: input, shape index: {}]
  %s3 = inlined_call_operand.vmem [shape: bf16[2,8,8,64], index: 3, kind: output, shape index: {}]
  %s4 = sld [smem:[#allocation0]]
  $region53: #{_lambda_.19} parent=0
    _
  %s6 = ssub.s32 1, %s4
  %s7 = scalar_select 0, %s6, %s4
  loop: start=0, step=1, limit=50
  $region2: #{_lambda_.19} parent=0 // loop_pre_header
    _
  $region3: #{_lambda_.19} parent=0 // loop_header
    %s9 = sphi 0, %s13
    %p10 = scmp.ge.s32.totalorder %s9, 50
    %s16 = sphi 0, %s35
    %s17 = sphi 0, %s31
    %s18 = sphi 0, %s27
    %s19 = sphi 0, %s16
    %s20 = sphi 0, %s17
    %s21 = sphi 0, %s18
    %s22 = sphi 0, %s19
    %s23 = sphi 0, %s20
    %s24 = sphi 0, %s21
    %s42 = sphi 0, %s44
    %s45 = sphi 0, %s42
    %s46 = sphi 0, %s45
    %s62 = sphi 0, %s46
    %s68 = sphi 0, %s70
    %s71 = sphi 0, %s68
    %s72 = sphi 0, %s71
    %s88 = sphi 0, %s72
    %s92 = sphi 0, %s92
    %s94 = sphi 0, %s92
    %s95 = sphi 0, %s94
    %s109 = sphi 0, %s95
    %s117 = sphi 0, %s119
    %s120 = sphi 0, %s117
    %s121 = sphi 0, %s120
    %s137 = sphi 0, %s121
  $region4: #{_lambda_.19} parent=0 // loop_header_branch
    %12 = sbr.rel (%p10) target = $region8
  $region5: #{_lambda_.19} parent=0 // loop_body
    %s14 = ssub.s32 %s9, 1
    %s15 = ssub.s32 %s9, 2
    %s25 = sadd.s32 1, %s18
    %p26 = scmp.ge.s32.totalorder %s25, 3
    %s27 = scalar_select %p26, 0, %s25
    %s28 = sadd.s32 1, %s17
    %s29 = scalar_select %p26, %s28, %s17
    %p30 = scmp.ge.s32.totalorder %s29, 8
    %s31 = scalar_select %p30, 0, %s29
    %s32 = sadd.s32 1, %s16
    %s33 = scalar_select %p30, %s32, %s16
    %p34 = scmp.ge.s32.totalorder %s33, 2
    %s35 = scalar_select %p34, 0, %s33
    %s36 = sadd.s32 %s17, %s18
    %s37 = sadd.s32 %s31, %s27
    %s38 = ssub.s32 %s16, %s35
    %s39 = ssub.s32 %s36, %s37
    %s40 = sor.u32 %s38, %s39
    %p41 = scmp.eq.s32.totalorder %s40, 0
    %s43 = sadd.s32 %s42, 1
    %s44 = scalar_select %p41, %s42, %s43
    %p47 = pneg %p41
    %p48 = scmp.eq.s32.totalorder %s9, 47
    %p49 = por %p47, %p48
    %p50 = scmp.ne.s32.totalorder %s42, %s45
    %p51 = scmp.eq.s32.totalorder %s9, 0
    %p52 = por %p50, %p51
    %p53 = scmp.ne.s32.totalorder %s42, %s45
    %p54 = scmp.eq.s32.totalorder %s14, 47
    %p55 = por %p53, %p54
    %p56 = scmp.ne.s32.totalorder %s45, %s46
    %p57 = scmp.eq.s32.totalorder %s14, 0
    %p58 = por %p56, %p57
    %p59 = scmp.ne.s32.totalorder %s45, %s46
    %p60 = scmp.eq.s32.totalorder %s15, 47
    %p61 = por %p59, %p60
    %p63 = scmp.ne.s32.totalorder %s46, %s62
    %p64 = scmp.eq.s32.totalorder %s15, 0
    %p65 = por %p63, %p64
    %s66 = ssub.s32 %s18, %s27
    %p67 = scmp.eq.s32.totalorder %s66, 0
    %s69 = sadd.s32 %s68, 1
    %s70 = scalar_select %p67, %s68, %s69
    %p73 = pneg %p67
    %p74 = scmp.eq.s32.totalorder %s9, 47
    %p75 = por %p73, %p74
    %p76 = scmp.ne.s32.totalorder %s68, %s71
    %p77 = scmp.eq.s32.totalorder %s9, 0
    %p78 = por %p76, %p77
    %p79 = scmp.ne.s32.totalorder %s68, %s71
    %p80 = scmp.eq.s32.totalorder %s14, 47
    %p81 = por %p79, %p80
    %p82 = scmp.ne.s32.totalorder %s71, %s72
    %p83 = scmp.eq.s32.totalorder %s14, 0
    %p84 = por %p82, %p83
    %p85 = scmp.ne.s32.totalorder %s71, %s72
    %p86 = scmp.eq.s32.totalorder %s15, 47
    %p87 = por %p85, %p86
    %p89 = scmp.ne.s32.totalorder %s72, %s88
    %p90 = scmp.eq.s32.totalorder %s15, 0
    %p91 = por %p89, %p90
    %s93 = sadd.s32 %s92, 1
    %p96 = scmp.eq.s32.totalorder %s9, 47
    %p97 = scmp.ne.s32.totalorder %s92, %s94
    %p98 = scmp.eq.s32.totalorder %s9, 0
    %p99 = por %p97, %p98
    %p100 = scmp.ne.s32.totalorder %s92, %s94
    %p101 = scmp.eq.s32.totalorder %s14, 47
    %p102 = por %p100, %p101
    %p103 = scmp.ne.s32.totalorder %s94, %s95
    %p104 = scmp.eq.s32.totalorder %s14, 0
    %p105 = por %p103, %p104
    %p106 = scmp.ne.s32.totalorder %s94, %s95
    %p107 = scmp.eq.s32.totalorder %s15, 47
    %p108 = por %p106, %p107
    %p110 = scmp.ne.s32.totalorder %s95, %s109
    %p111 = scmp.eq.s32.totalorder %s15, 0
    %p112 = por %p110, %p111
    %s113 = ssub.s32 %s16, %s35
    %s114 = ssub.s32 %s17, %s31
    %s115 = sor.u32 %s113, %s114
    %p116 = scmp.eq.s32.totalorder %s115, 0
    %s118 = sadd.s32 %s117, 1
    %s119 = scalar_select %p116, %s117, %s118
    %p122 = pneg %p116
    %p123 = scmp.eq.s32.totalorder %s9, 47
    %p124 = por %p122, %p123
    %p125 = scmp.ne.s32.totalorder %s117, %s120
    %p126 = scmp.eq.s32.totalorder %s9, 0
    %p127 = por %p125, %p126
    %p128 = scmp.ne.s32.totalorder %s117, %s120
    %p129 = scmp.eq.s32.totalorder %s14, 47
    %p130 = por %p128, %p129
    %p131 = scmp.ne.s32.totalorder %s120, %s121
    %p132 = scmp.eq.s32.totalorder %s14, 0
    %p133 = por %p131, %p132
    %p134 = scmp.ne.s32.totalorder %s120, %s121
    %p135 = scmp.eq.s32.totalorder %s15, 47
    %p136 = por %p134, %p135
    %p138 = scmp.ne.s32.totalorder %s121, %s137
    %p139 = scmp.eq.s32.totalorder %s15, 0
    %p140 = por %p138, %p139
    %p141 = scmp.le.s32.totalorder 1, %s9
    %p142 = scmp.lt.s32.totalorder %s9, 49
    %p143 = pnand %p141, %p142
    %p144 = pneg %p143
    // Predicated region
    $region9: #{_lambda_.19} parent=5 // pred_check
      _
    $region10: #{_lambda_.19} parent=5 // pred_check_branch
      %146 = sbr.rel (%p143) target = $region12
    $region11: #{_lambda_.19} parent=5 // pred_region
      %s147 = ssub.s32 %s9, 1
      // Predicated region
      $region13: #{_lambda_.19} parent=11 // pred_check
        %p148 = pneg %p105
      $region14: #{_lambda_.19} parent=11 // pred_check_branch
        %150 = sbr.rel (%p148) target = $region16
      $region15: #{_lambda_.19} parent=11 // pred_region
        _
      $region16: #{_lambda_.19} parent=11 // pred_fallthru
        _
    $region12: #{_lambda_.19} parent=5 // pred_fallthru
      _
    %p151 = scmp.lt.s32.totalorder %s9, 48
    // Predicated region
    $region17: #{_lambda_.19} parent=5 // pred_check
      %p152 = pneg %p151
    $region18: #{_lambda_.19} parent=5 // pred_check_branch
      %154 = sbr.rel (%p152) target = $region20
    $region19: #{_lambda_.19} parent=5 // pred_region
      // Predicated region
      $region21: #{_lambda_.19} parent=19 // pred_check
        %p155 = pneg %p52
      $region22: #{_lambda_.19} parent=19 // pred_check_branch
        %157 = sbr.rel (%p155) target = $region24
      $region23: #{_lambda_.19} parent=19 // pred_region
        %s158 = sadd.s32 %s17, %s18
        %p159 = scmp.lt.s32.totalorder %s16, 1
        %s160 = scalar_select %p159, %s16, 1
        %p161 = scmp.lt.s32.totalorder %s158, 9
        %s162 = scalar_select %p161, %s158, 9
        %s163 = smul.addr %s160, 10
        %s164 = sadd.s32 %s162, %s163
        %s165 = smul.addr %s164, 4
        %s166 = scalar_lea.vmem %s0, %s165
        %s167 = sadd.s32 %s17, %s18
      $region24: #{_lambda_.19} parent=19 // pred_fallthru
        _
      // Predicated region
      $region25: #{_lambda_.19} parent=19 // pred_check
        %p168 = pneg %p78
      $region26: #{_lambda_.19} parent=19 // pred_check_branch
        %170 = sbr.rel (%p168) target = $region28
      $region27: #{_lambda_.19} parent=19 // pred_region
        %p171 = scmp.lt.s32.totalorder %s18, 2
        %s172 = scalar_select %p171, %s18, 2
        %s173 = smul.addr %s172, 4
        %s174 = scalar_lea.vmem %s1, %s173
      $region28: #{_lambda_.19} parent=19 // pred_fallthru
        _
    $region20: #{_lambda_.19} parent=5 // pred_fallthru
      _
    %p175 = scmp.le.s32.totalorder 1, %s9
    %p176 = scmp.lt.s32.totalorder %s9, 49
    %p177 = pnand %p175, %p176
    %p178 = pneg %p177
    // Predicated region
    $region29: #{_lambda_.19} parent=5 // pred_check
      _
    $region30: #{_lambda_.19} parent=5 // pred_check_branch
      %180 = sbr.rel (%p177) target = $region32
    $region31: #{_lambda_.19} parent=5 // pred_region
      %s181 = ssub.s32 %s9, 1
      %s182 = sadd.s32 %s20, %s21
      %p183 = scmp.lt.s32.totalorder %s19, 1
      %s184 = scalar_select %p183, %s19, 1
      %p185 = scmp.lt.s32.totalorder %s182, 9
      %s186 = scalar_select %p185, %s182, 9
      %s187 = smul.addr %s184, 10
      %s188 = sadd.s32 %s186, %s187
      %s189 = smul.addr %s188, 4
      %s190 = scalar_lea.vmem %s0, %s189
      %p191 = pneg %p58
      %p192 = pneg %p55
      %p193 = scmp.lt.s32.totalorder %s21, 2
      %s194 = scalar_select %p193, %s21, 2
      %s195 = smul.addr %s194, 4
      %s196 = scalar_lea.vmem %s1, %s195
      %p197 = pneg %p84
      %p198 = pneg %p81
      %p199 = pneg %p105
      %p200 = pneg %p102
      %p201 = pneg %p133
      %p202 = pneg %p130
      %p203 = scmp.lt.s32.totalorder %s19, 1
      %s204 = scalar_select %p203, %s19, 1
      %p205 = scmp.lt.s32.totalorder %s20, 7
      %s206 = scalar_select %p205, %s20, 7
      %s207 = smul.addr %s204, 8
      %s208 = sadd.s32 %s206, %s207
      %s209 = smul.addr %s208, 4
      %s210 = scalar_lea.vmem %s3, %s209
      %s211 = sadd.s32 %s20, %s21
      %p212 = scmp.lt.s32.totalorder %s19, 1
      %s213 = scalar_select %p212, %s19, 1
      %p214 = scmp.lt.s32.totalorder %s211, 9
      %s215 = scalar_select %p214, %s211, 9
      %s216 = smul.addr %s213, 10
      %s217 = sadd.s32 %s215, %s216
      %s218 = smul.addr %s217, 4
      %s219 = scalar_lea.vmem %s0, %s218
      %s220 = sadd.s32 %s20, %s21
      %p221 = scmp.lt.s32.totalorder %s21, 2
      %s222 = scalar_select %p221, %s21, 2
      %s223 = smul.addr %s222, 4
      %s224 = scalar_lea.vmem %s1, %s223
      %p225 = scmp.lt.s32.totalorder %s19, 1
      %s226 = scalar_select %p225, %s19, 1
      %p227 = scmp.lt.s32.totalorder %s20, 7
      %s228 = scalar_select %p227, %s20, 7
      %s229 = smul.addr %s226, 8
      %s230 = sadd.s32 %s228, %s229
      %s231 = smul.addr %s230, 4
      %s232 = scalar_lea.vmem %s3, %s231
      %p234 = scmp.eq.s32.totalorder %s21, 0
      // Predicated region
      $region33: #{_lambda_.19} parent=31 // pred_check
        %p235 = pneg %p234
      $region34: #{_lambda_.19} parent=31 // pred_check_branch
        %237 = sbr.rel (%p235) target = $region36
      $region35: #{_lambda_.19} parent=31 // pred_region
        %vm238 = vcmask 523264
        %239 = vst.msk [vmem:[#allocation3] sm:$0xff] %vm238, 0.0
      $region36: #{_lambda_.19} parent=31 // pred_fallthru
        _
      %v240 = vld [vmem:[%s219] sm:$0xf]
      %vm241 = vcmask 60416
      %242 = vst.msk [vmem:[#allocation2] sm:$0xf] %vm241, %v240
      %v243 = vld [vmem:[%s219] sm:$0xf]
      %245 = vrot.lane.b32.xlu0 %v243, 126
      %v246 = vpop.permute.xlu0 %245
      %vm248 = vcmask 126016
      %249 = vst.msk [vmem:[#allocation2] sm:$0xf] %vm248, %v246
      %v250 = vld [vmem:[%s219] sm:$0xf]
      %252 = vrot.lane.b32.xlu0 %v250, 124
      %v253 = vpop.permute.xlu0 %252
      %vm255 = vcmask 191616
      %256 = vst.msk [vmem:[#allocation2] sm:$0xf] %vm255, %v253
      %v257 = vld [vmem:[%s219] sm:$0xf]
      %259 = vrot.lane.b32.xlu0 %v257, 122
      %v260 = vpop.permute.xlu0 %259
      %vm262 = vcmask 257216
      %263 = vst.msk [vmem:[#allocation2] sm:$0xf] %vm262, %v260
      %v264 = vld [vmem:[%s219] sm:$0xf]
      %266 = vrot.lane.b32.xlu0 %v264, 120
      %v267 = vpop.permute.xlu0 %266
      %vm269 = vcmask 322816
      %270 = vst.msk [vmem:[#allocation2] sm:$0xf] %vm269, %v267
      %v271 = vld [vmem:[%s219] sm:$0xf]
      %273 = vrot.lane.b32.xlu0 %v271, 118
      %v274 = vpop.permute.xlu0 %273
      %vm276 = vcmask 388416
      %277 = vst.msk [vmem:[#allocation2] sm:$0xf] %vm276, %v274
      %v278 = vld [vmem:[%s219] sm:$0xf]
      %280 = vrot.lane.b32.xlu0 %v278, 116
      %v281 = vpop.permute.xlu0 %280
      %vm283 = vcmask 454016
      %284 = vst.msk [vmem:[#allocation2] sm:$0xf] %vm283, %v281
      %v285 = vld [vmem:[%s219] sm:$0xf]
      %287 = vrot.lane.b32.xlu0 %v285, 114
      %v288 = vpop.permute.xlu0 %287
      %vm290 = vcmask 519616
      %291 = vst.msk [vmem:[#allocation2] sm:$0xf] %vm290, %v288
      %v292 = vld [vmem:[%s219] sm:$0xf]
      %294 = vrot.lane.b32.xlu0 %v292, 127
      %v295 = vpop.permute.xlu0 %294
      %297 = vst.msk [vmem:[#allocation2 + $0x4] sm:$0xf] %vm241, %v295
      %v298 = vld [vmem:[%s219] sm:$0xf]
      %300 = vrot.lane.b32.xlu0 %v298, 125
      %v301 = vpop.permute.xlu0 %300
      %303 = vst.msk [vmem:[#allocation2 + $0x4] sm:$0xf] %vm248, %v301
      %v304 = vld [vmem:[%s219] sm:$0xf]
      %306 = vrot.lane.b32.xlu0 %v304, 123
      %v307 = vpop.permute.xlu0 %306
      %309 = vst.msk [vmem:[#allocation2 + $0x4] sm:$0xf] %vm255, %v307
      %v310 = vld [vmem:[%s219] sm:$0xf]
      %312 = vrot.lane.b32.xlu0 %v310, 121
      %v313 = vpop.permute.xlu0 %312
      %315 = vst.msk [vmem:[#allocation2 + $0x4] sm:$0xf] %vm262, %v313
      %v316 = vld [vmem:[%s219] sm:$0xf]
      %318 = vrot.lane.b32.xlu0 %v316, 119
      %v319 = vpop.permute.xlu0 %318
      %321 = vst.msk [vmem:[#allocation2 + $0x4] sm:$0xf] %vm269, %v319
      %v322 = vld [vmem:[%s219] sm:$0xf]
      %324 = vrot.lane.b32.xlu0 %v322, 117
      %v325 = vpop.permute.xlu0 %324
      %327 = vst.msk [vmem:[#allocation2 + $0x4] sm:$0xf] %vm276, %v325
      %v328 = vld [vmem:[%s219] sm:$0xf]
      %330 = vrot.lane.b32.xlu0 %v328, 115
      %v331 = vpop.permute.xlu0 %330
      %333 = vst.msk [vmem:[#allocation2 + $0x4] sm:$0xf] %vm283, %v331
      %v334 = vld [vmem:[%s219] sm:$0xf]
      %336 = vrot.lane.b32.xlu0 %v334, 113
      %v337 = vpop.permute.xlu0 %336
      %339 = vst.msk [vmem:[#allocation2 + $0x4] sm:$0xf] %vm290, %v337
      %v340 = vld [vmem:[%s219] sm:$0xf]
      %342 = vrot.lane.b32.xlu0 %v340, 126
      %v343 = vpop.permute.xlu0 %342
      %345 = vst.msk [vmem:[#allocation2 + $0x8] sm:$0xf] %vm241, %v343
      %v346 = vld [vmem:[%s219] sm:$0xf]
      %348 = vrot.lane.b32.xlu0 %v346, 124
      %v349 = vpop.permute.xlu0 %348
      %351 = vst.msk [vmem:[#allocation2 + $0x8] sm:$0xf] %vm248, %v349
      %v352 = vld [vmem:[%s219] sm:$0xf]
      %354 = vrot.lane.b32.xlu0 %v352, 122
      %v355 = vpop.permute.xlu0 %354
      %357 = vst.msk [vmem:[#allocation2 + $0x8] sm:$0xf] %vm255, %v355
      %v358 = vld [vmem:[%s219] sm:$0xf]
      %360 = vrot.lane.b32.xlu0 %v358, 120
      %v361 = vpop.permute.xlu0 %360
      %363 = vst.msk [vmem:[#allocation2 + $0x8] sm:$0xf] %vm262, %v361
      %v364 = vld [vmem:[%s219] sm:$0xf]
      %366 = vrot.lane.b32.xlu0 %v364, 118
      %v367 = vpop.permute.xlu0 %366
      %369 = vst.msk [vmem:[#allocation2 + $0x8] sm:$0xf] %vm269, %v367
      %v370 = vld [vmem:[%s219] sm:$0xf]
      %372 = vrot.lane.b32.xlu0 %v370, 116
      %v373 = vpop.permute.xlu0 %372
      %375 = vst.msk [vmem:[#allocation2 + $0x8] sm:$0xf] %vm276, %v373
      %v376 = vld [vmem:[%s219] sm:$0xf]
      %378 = vrot.lane.b32.xlu0 %v376, 114
      %v379 = vpop.permute.xlu0 %378
      %381 = vst.msk [vmem:[#allocation2 + $0x8] sm:$0xf] %vm283, %v379
      %v382 = vld [vmem:[%s219] sm:$0xf]
      %384 = vrot.lane.b32.xlu0 %v382, 112
      %v385 = vpop.permute.xlu0 %384
      %387 = vst.msk [vmem:[#allocation2 + $0x8] sm:$0xf] %vm290, %v385
      %v388 = vld [vmem:[%s219] sm:$0xf]
      %390 = vrot.lane.b32.xlu0 %v388, 118
      %v391 = vpop.permute.xlu0 %390
      %393 = vst.msk [vmem:[#allocation2 + $0xc] sm:$0xf] %vm241, %v391
      %v394 = vld [vmem:[%s219] sm:$0xf]
      %396 = vrot.lane.b32.xlu0 %v394, 116
      %v397 = vpop.permute.xlu0 %396
      %399 = vst.msk [vmem:[#allocation2 + $0xc] sm:$0xf] %vm248, %v397
      %v400 = vld [vmem:[%s219] sm:$0xf]
      %402 = vrot.lane.b32.xlu0 %v400, 114
      %v403 = vpop.permute.xlu0 %402
      %405 = vst.msk [vmem:[#allocation2 + $0xc] sm:$0xf] %vm255, %v403
      %v406 = vld [vmem:[%s219] sm:$0xf]
      %408 = vrot.lane.b32.xlu0 %v406, 112
      %v409 = vpop.permute.xlu0 %408
      %411 = vst.msk [vmem:[#allocation2 + $0xc] sm:$0xf] %vm262, %v409
      %v412 = vld [vmem:[%s219] sm:$0xf]
      %414 = vrot.lane.b32.xlu0 %v412, 110
      %v415 = vpop.permute.xlu0 %414
      %417 = vst.msk [vmem:[#allocation2 + $0xc] sm:$0xf] %vm269, %v415
      %v418 = vld [vmem:[%s219] sm:$0xf]
      %420 = vrot.lane.b32.xlu0 %v418, 108
      %v421 = vpop.permute.xlu0 %420
      %423 = vst.msk [vmem:[#allocation2 + $0xc] sm:$0xf] %vm276, %v421
      %v424 = vld [vmem:[%s219] sm:$0xf]
      %426 = vrot.lane.b32.xlu0 %v424, 106
      %v427 = vpop.permute.xlu0 %426
      %429 = vst.msk [vmem:[#allocation2 + $0xc] sm:$0xf] %vm283, %v427
      %v430 = vld [vmem:[%s219] sm:$0xf]
      %432 = vrot.lane.b32.xlu0 %v430, 104
      %v433 = vpop.permute.xlu0 %432
      %435 = vst.msk [vmem:[#allocation2 + $0xc] sm:$0xf] %vm290, %v433
      %v436 = vld [vmem:[%s219] sm:$0xf]
      %438 = vrot.lane.b32.xlu0 %v436, 117
      %v439 = vpop.permute.xlu0 %438
      %441 = vst.msk [vmem:[#allocation2 + $0x10] sm:$0xf] %vm241, %v439
      %v442 = vld [vmem:[%s219] sm:$0xf]
      %444 = vrot.lane.b32.xlu0 %v442, 115
      %v445 = vpop.permute.xlu0 %444
      %447 = vst.msk [vmem:[#allocation2 + $0x10] sm:$0xf] %vm248, %v445
      %v448 = vld [vmem:[%s219] sm:$0xf]
      %450 = vrot.lane.b32.xlu0 %v448, 113
      %v451 = vpop.permute.xlu0 %450
      %453 = vst.msk [vmem:[#allocation2 + $0x10] sm:$0xf] %vm255, %v451
      %v454 = vld [vmem:[%s219] sm:$0xf]
      %456 = vrot.lane.b32.xlu0 %v454, 111
      %v457 = vpop.permute.xlu0 %456
      %459 = vst.msk [vmem:[#allocation2 + $0x10] sm:$0xf] %vm262, %v457
      %v460 = vld [vmem:[%s219] sm:$0xf]
      %462 = vrot.lane.b32.xlu0 %v460, 109
      %v463 = vpop.permute.xlu0 %462
      %465 = vst.msk [vmem:[#allocation2 + $0x10] sm:$0xf] %vm269, %v463
      %v466 = vld [vmem:[%s219] sm:$0xf]
      %468 = vrot.lane.b32.xlu0 %v466, 107
      %v469 = vpop.permute.xlu0 %468
      %471 = vst.msk [vmem:[#allocation2 + $0x10] sm:$0xf] %vm276, %v469
      %v472 = vld [vmem:[%s219] sm:$0xf]
      %474 = vrot.lane.b32.xlu0 %v472, 105
      %v475 = vpop.permute.xlu0 %474
      %477 = vst.msk [vmem:[#allocation2 + $0x10] sm:$0xf] %vm283, %v475
      %v478 = vld [vmem:[%s219] sm:$0xf]
      %480 = vrot.lane.b32.xlu0 %v478, 103
      %v481 = vpop.permute.xlu0 %480
      %483 = vst.msk [vmem:[#allocation2 + $0x10] sm:$0xf] %vm290, %v481
      %v484 = vld [vmem:[%s219] sm:$0xf]
      %486 = vrot.lane.b32.xlu0 %v484, 116
      %v487 = vpop.permute.xlu0 %486
      %489 = vst.msk [vmem:[#allocation2 + $0x14] sm:$0xf] %vm241, %v487
      %v490 = vld [vmem:[%s219] sm:$0xf]
      %492 = vrot.lane.b32.xlu0 %v490, 114
      %v493 = vpop.permute.xlu0 %492
      %495 = vst.msk [vmem:[#allocation2 + $0x14] sm:$0xf] %vm248, %v493
      %v496 = vld [vmem:[%s219] sm:$0xf]
      %498 = vrot.lane.b32.xlu0 %v496, 112
      %v499 = vpop.permute.xlu0 %498
      %501 = vst.msk [vmem:[#allocation2 + $0x14] sm:$0xf] %vm255, %v499
      %v502 = vld [vmem:[%s219] sm:$0xf]
      %504 = vrot.lane.b32.xlu0 %v502, 110
      %v505 = vpop.permute.xlu0 %504
      %507 = vst.msk [vmem:[#allocation2 + $0x14] sm:$0xf] %vm262, %v505
      %v508 = vld [vmem:[%s219] sm:$0xf]
      %510 = vrot.lane.b32.xlu0 %v508, 108
      %v511 = vpop.permute.xlu0 %510
      %513 = vst.msk [vmem:[#allocation2 + $0x14] sm:$0xf] %vm269, %v511
      %v514 = vld [vmem:[%s219] sm:$0xf]
      %516 = vrot.lane.b32.xlu0 %v514, 106
      %v517 = vpop.permute.xlu0 %516
      %519 = vst.msk [vmem:[#allocation2 + $0x14] sm:$0xf] %vm276, %v517
      %v520 = vld [vmem:[%s219] sm:$0xf]
      %522 = vrot.lane.b32.xlu0 %v520, 104
      %v523 = vpop.permute.xlu0 %522
      %525 = vst.msk [vmem:[#allocation2 + $0x14] sm:$0xf] %vm283, %v523
      %v526 = vld [vmem:[%s219] sm:$0xf]
      %528 = vrot.lane.b32.xlu0 %v526, 102
      %v529 = vpop.permute.xlu0 %528
      %531 = vst.msk [vmem:[#allocation2 + $0x14] sm:$0xf] %vm290, %v529
      %v532 = vld [vmem:[%s219] sm:$0xf]
      %534 = vrot.lane.b32.xlu0 %v532, 108
      %v535 = vpop.permute.xlu0 %534
      %537 = vst.msk [vmem:[#allocation2 + $0x18] sm:$0xf] %vm241, %v535
      %v538 = vld [vmem:[%s219] sm:$0xf]
      %540 = vrot.lane.b32.xlu0 %v538, 106
      %v541 = vpop.permute.xlu0 %540
      %543 = vst.msk [vmem:[#allocation2 + $0x18] sm:$0xf] %vm248, %v541
      %v544 = vld [vmem:[%s219] sm:$0xf]
      %546 = vrot.lane.b32.xlu0 %v544, 104
      %v547 = vpop.permute.xlu0 %546
      %549 = vst.msk [vmem:[#allocation2 + $0x18] sm:$0xf] %vm255, %v547
      %v550 = vld [vmem:[%s219] sm:$0xf]
      %552 = vrot.lane.b32.xlu0 %v550, 102
      %v553 = vpop.permute.xlu0 %552
      %555 = vst.msk [vmem:[#allocation2 + $0x18] sm:$0xf] %vm262, %v553
      %v556 = vld [vmem:[%s219] sm:$0xf]
      %558 = vrot.lane.b32.xlu0 %v556, 100
      %v559 = vpop.permute.xlu0 %558
      %561 = vst.msk [vmem:[#allocation2 + $0x18] sm:$0xf] %vm269, %v559
      %v562 = vld [vmem:[%s219] sm:$0xf]
      %564 = vrot.lane.b32.xlu0 %v562, 98
      %v565 = vpop.permute.xlu0 %564
      %567 = vst.msk [vmem:[#allocation2 + $0x18] sm:$0xf] %vm276, %v565
      %v568 = vld [vmem:[%s219] sm:$0xf]
      %570 = vrot.lane.b32.xlu0 %v568, 96
      %v571 = vpop.permute.xlu0 %570
      %573 = vst.msk [vmem:[#allocation2 + $0x18] sm:$0xf] %vm283, %v571
      %v574 = vld [vmem:[%s219] sm:$0xf]
      %576 = vrot.lane.b32.xlu0 %v574, 94
      %v577 = vpop.permute.xlu0 %576
      %579 = vst.msk [vmem:[#allocation2 + $0x18] sm:$0xf] %vm290, %v577
      %v580 = vld [vmem:[%s219] sm:$0xf]
      %582 = vrot.lane.b32.xlu0 %v580, 107
      %v583 = vpop.permute.xlu0 %582
      %585 = vst.msk [vmem:[#allocation2 + $0x1c] sm:$0xf] %vm241, %v583
      %v586 = vld [vmem:[%s219] sm:$0xf]
      %588 = vrot.lane.b32.xlu0 %v586, 105
      %v589 = vpop.permute.xlu0 %588
      %591 = vst.msk [vmem:[#allocation2 + $0x1c] sm:$0xf] %vm248, %v589
      %v592 = vld [vmem:[%s219] sm:$0xf]
      %594 = vrot.lane.b32.xlu0 %v592, 103
      %v595 = vpop.permute.xlu0 %594
      %597 = vst.msk [vmem:[#allocation2 + $0x1c] sm:$0xf] %vm255, %v595
      %v598 = vld [vmem:[%s219] sm:$0xf]
      %600 = vrot.lane.b32.xlu0 %v598, 101
      %v601 = vpop.permute.xlu0 %600
      %603 = vst.msk [vmem:[#allocation2 + $0x1c] sm:$0xf] %vm262, %v601
      %v604 = vld [vmem:[%s219] sm:$0xf]
      %606 = vrot.lane.b32.xlu0 %v604, 99
      %v607 = vpop.permute.xlu0 %606
      %609 = vst.msk [vmem:[#allocation2 + $0x1c] sm:$0xf] %vm269, %v607
      %v610 = vld [vmem:[%s219] sm:$0xf]
      %612 = vrot.lane.b32.xlu0 %v610, 97
      %v613 = vpop.permute.xlu0 %612
      %615 = vst.msk [vmem:[#allocation2 + $0x1c] sm:$0xf] %vm276, %v613
      %v616 = vld [vmem:[%s219] sm:$0xf]
      %618 = vrot.lane.b32.xlu0 %v616, 95
      %v619 = vpop.permute.xlu0 %618
      %621 = vst.msk [vmem:[#allocation2 + $0x1c] sm:$0xf] %vm283, %v619
      %v622 = vld [vmem:[%s219] sm:$0xf]
      %624 = vrot.lane.b32.xlu0 %v622, 93
      %v625 = vpop.permute.xlu0 %624
      %627 = vst.msk [vmem:[#allocation2 + $0x1c] sm:$0xf] %vm290, %v625
      %v628 = vld [vmem:[%s219] sm:$0xf]
      %630 = vrot.lane.b32.xlu0 %v628, 106
      %v631 = vpop.permute.xlu0 %630
      %633 = vst.msk [vmem:[#allocation2 + $0x20] sm:$0xf] %vm241, %v631
      %v634 = vld [vmem:[%s219] sm:$0xf]
      %636 = vrot.lane.b32.xlu0 %v634, 104
      %v637 = vpop.permute.xlu0 %636
      %639 = vst.msk [vmem:[#allocation2 + $0x20] sm:$0xf] %vm248, %v637
      %v640 = vld [vmem:[%s219] sm:$0xf]
      %642 = vrot.lane.b32.xlu0 %v640, 102
      %v643 = vpop.permute.xlu0 %642
      %645 = vst.msk [vmem:[#allocation2 + $0x20] sm:$0xf] %vm255, %v643
      %v646 = vld [vmem:[%s219] sm:$0xf]
      %648 = vrot.lane.b32.xlu0 %v646, 100
      %v649 = vpop.permute.xlu0 %648
      %651 = vst.msk [vmem:[#allocation2 + $0x20] sm:$0xf] %vm262, %v649
      %v652 = vld [vmem:[%s219] sm:$0xf]
      %654 = vrot.lane.b32.xlu0 %v652, 98
      %v655 = vpop.permute.xlu0 %654
      %657 = vst.msk [vmem:[#allocation2 + $0x20] sm:$0xf] %vm269, %v655
      %v658 = vld [vmem:[%s219] sm:$0xf]
      %660 = vrot.lane.b32.xlu0 %v658, 96
      %v661 = vpop.permute.xlu0 %660
      %663 = vst.msk [vmem:[#allocation2 + $0x20] sm:$0xf] %vm276, %v661
      %v664 = vld [vmem:[%s219] sm:$0xf]
      %666 = vrot.lane.b32.xlu0 %v664, 94
      %v667 = vpop.permute.xlu0 %666
      %669 = vst.msk [vmem:[#allocation2 + $0x20] sm:$0xf] %vm283, %v667
      %v670 = vld [vmem:[%s219] sm:$0xf]
      %672 = vrot.lane.b32.xlu0 %v670, 92
      %v673 = vpop.permute.xlu0 %672
      %675 = vst.msk [vmem:[#allocation2 + $0x20] sm:$0xf] %vm290, %v673
      %v676 = vld [vmem:[#allocation3] sm:$0xff]
      %v677 = vld [vmem:[%s224] sm:$0xf]
      %v678 = vld [vmem:[#allocation2] sm:$0xf]
      %v679 = vld [vmem:[#allocation2 + $0x4] sm:$0xf]
      %v680 = vld [vmem:[#allocation2 + $0x8] sm:$0xf]
      %v681 = vld [vmem:[#allocation2 + $0xc] sm:$0xf]
      %v682 = vld [vmem:[#allocation2 + $0x10] sm:$0xf]
      %v683 = vld [vmem:[#allocation2 + $0x14] sm:$0xf]
      %v684 = vld [vmem:[#allocation2 + $0x18] sm:$0xf]
      %v685 = vld [vmem:[#allocation2 + $0x1c] sm:$0xf]
      %v686 = vld [vmem:[#allocation2 + $0x20] sm:$0xf]
      %v696 = vunpack.c.l.b16 %v678
      %v697 = vunpack.c.l.b16 %v679
      %v698 = vunpack.c.l.b16 %v680
      %v699 = vunpack.c.l.b16 %v681
      %v700 = vunpack.c.l.b16 %v682
      %v701 = vunpack.c.l.b16 %v683
      %v702 = vunpack.c.l.b16 %v684
      %v703 = vunpack.c.l.b16 %v685
      %v704 = vunpack.c.l.b16 %v686
      %v705 = vpack.c.b16 %v697, %v696
      %v706 = vpack.c.b16 %v699, %v698
      %v707 = vpack.c.b16 %v701, %v700
      %v708 = vpack.c.b16 %v703, %v702
      %v709 = vpack.c.b16 %v704, %v704
      %vm714 = vcmask 588800
      %v716 = vsel %vm714, %v677, 0
      %vm718 = vcmask 1043456
      %v720 = vsel %vm718, %v709, 0
      %722 = vmatpush.bf16.msra.mxu0 0
      %723 = vmatpush.bf16.msra.mxu0 0
      %724 = vmatpush.bf16.msra.mxu0 0
      %725 = vmatpush.bf16.msra.mxu0 %v720
      %726 = vmatpush.bf16.msra.mxu0 %v708
      %727 = vmatpush.bf16.msra.mxu0 %v707
      %728 = vmatpush.bf16.msra.mxu0 %v706
      %729 = vmatpush.bf16.msra.mxu0 %v705
      %730 = vmatmul.bf16.gmra.mxu0 %v716
      %v731 = vpop.f32.mrf.mxu0
      %v732 = vadd.f32 0.0, %v731
      %v733 = vpop.f32.mrf.mxu0
      %734 = vdwg.mxu0
      %v735 = vadd.f32 %v676, %v732
      %vm736 = vcmask 523264
      %737 = vst.msk [vmem:[#allocation3] sm:$0xff] %vm736, %v735
      %p738 = scmp.eq.s32.totalorder %s21, 2
      // Predicated region
      $region37: #{_lambda_.19} parent=31 // pred_check
        %p739 = pneg %p738
      $region38: #{_lambda_.19} parent=31 // pred_check_branch
        %741 = sbr.rel (%p739) target = $region40
      $region39: #{_lambda_.19} parent=31 // pred_region
        %v742 = vld [vmem:[#allocation3] sm:$0xff]
        %v743 = vld [vmem:[%s2] sm:$0xff]
        %745 = vset.pattern.permute.xlu0 0
        %746 = vperm.xlu0 %745, %v743
        %v747 = vpop.permute.xlu0 %746
        %v749 = vadd.f32 %v742, %v747
        %v750 = vmax.f32 %v749, 0.0
        %v751 = vpack.c.bf16 %v750, %v750
        %vm752 = vcmask 519168
        %753 = vst.msk [vmem:[%s232] sm:$0xf] %vm752, %v751
      $region40: #{_lambda_.19} parent=31 // pred_fallthru
        _
      %p754 = scmp.lt.s32.totalorder %s19, 1
      %s755 = scalar_select %p754, %s19, 1
      %p756 = scmp.lt.s32.totalorder %s20, 7
      %s757 = scalar_select %p756, %s20, 7
      %s758 = smul.addr %s755, 8
      %s759 = sadd.s32 %s757, %s758
      %s760 = smul.addr %s759, 4
      %s761 = scalar_lea.vmem %s3, %s760
      // Predicated region
      $region41: #{_lambda_.19} parent=31 // pred_check
        %p762 = pneg %p130
      $region42: #{_lambda_.19} parent=31 // pred_check_branch
        %764 = sbr.rel (%p762) target = $region44
      $region43: #{_lambda_.19} parent=31 // pred_region
        _
      $region44: #{_lambda_.19} parent=31 // pred_fallthru
        _
    $region32: #{_lambda_.19} parent=5 // pred_fallthru
      _
    %p765 = scmp.le.s32.totalorder 2, %s9
    // Predicated region
    $region45: #{_lambda_.19} parent=5 // pred_check
      %p766 = pneg %p765
    $region46: #{_lambda_.19} parent=5 // pred_check_branch
      %768 = sbr.rel (%p766) target = $region48
    $region47: #{_lambda_.19} parent=5 // pred_region
      %s769 = ssub.s32 %s9, 2
      // Predicated region
      $region49: #{_lambda_.19} parent=47 // pred_check
        %p770 = pneg %p136
      $region50: #{_lambda_.19} parent=47 // pred_check_branch
        %772 = sbr.rel (%p770) target = $region52
      $region51: #{_lambda_.19} parent=47 // pred_region
        %p773 = scmp.lt.s32.totalorder %s22, 1
        %s774 = scalar_select %p773, %s22, 1
        %p775 = scmp.lt.s32.totalorder %s23, 7
        %s776 = scalar_select %p775, %s23, 7
        %s777 = smul.addr %s774, 8
        %s778 = sadd.s32 %s776, %s777
        %s779 = smul.addr %s778, 4
        %s780 = scalar_lea.vmem %s3, %s779
      $region52: #{_lambda_.19} parent=47 // pred_fallthru
        _
    $region48: #{_lambda_.19} parent=5 // pred_fallthru
      _
  $region6: #{_lambda_.19} parent=0 // loop_footer
    %s13 = sadd.s32 1, %s9
  $region7: #{_lambda_.19} parent=0 // loop_footer_branch
    %8 = sbr.rel target = $region3
  $region8: #{_lambda_.19} parent=0 // loop_exit
    _

// kernel: _lambda_.21
$region0: #{_lambda_.21}
  #allocation0 [shape = 'u32[]', space=smem, size = 0x4, offset = 0x4, fixed_abs, tag = 'smem constant byte address 0x4 - core index']
  #allocation1 [shape = 'u32[72,128]{1,0:T(1,128)}', space=vmem, size = 0x9000, scoped, tag = 'internal scratch']
  %s0 = inlined_call_operand.vmem [shape: bf16[8,216,16], index: 0, kind: input, shape index: {}]
  %s1 = inlined_call_operand.vmem [shape: bf16[16,216], index: 1, kind: input, shape index: {}]
  %s2 = inlined_call_operand.vmem [shape: f32[16,1], index: 2, kind: input, shape index: {}]
  %s3 = inlined_call_operand.vmem [shape: bf16[8,16,16], index: 3, kind: output, shape index: {}]
  %s4 = sld [smem:[#allocation0]]
  $region45: #{_lambda_.21} parent=0
    _
  %s6 = ssub.s32 1, %s4
  %s7 = scalar_select 0, %s6, %s4
  loop: start=0, step=1, limit=10
  $region2: #{_lambda_.21} parent=0 // loop_pre_header
    _
  $region3: #{_lambda_.21} parent=0 // loop_header
    %s9 = sphi 0, %s13
    %p10 = scmp.ge.s32.totalorder %s9, 10
    %s19 = sphi 0, %s21
    %s22 = sphi 0, %s19
    %s23 = sphi 0, %s22
    %s39 = sphi 0, %s23
    %s43 = sphi 0, %s43
    %s45 = sphi 0, %s43
    %s46 = sphi 0, %s45
    %s60 = sphi 0, %s46
    %s64 = sphi 0, %s64
    %s66 = sphi 0, %s64
    %s67 = sphi 0, %s66
    %s81 = sphi 0, %s67
    %s87 = sphi 0, %s89
    %s90 = sphi 0, %s87
    %s91 = sphi 0, %s90
    %s107 = sphi 0, %s91
  $region4: #{_lambda_.21} parent=0 // loop_header_branch
    %12 = sbr.rel (%p10) target = $region8
  $region5: #{_lambda_.21} parent=0 // loop_body
    %s14 = ssub.s32 %s9, 1
    %s15 = ssub.s32 %s9, 2
    %s16 = sadd.s32 %s9, 1
    %s17 = ssub.s32 %s9, %s16
    %p18 = scmp.eq.s32.totalorder %s17, 0
    %s20 = sadd.s32 %s19, 1
    %s21 = scalar_select %p18, %s19, %s20
    %p24 = pneg %p18
    %p25 = scmp.eq.s32.totalorder %s9, 7
    %p26 = por %p24, %p25
    %p27 = scmp.ne.s32.totalorder %s19, %s22
    %p28 = scmp.eq.s32.totalorder %s9, 0
    %p29 = por %p27, %p28
    %p30 = scmp.ne.s32.totalorder %s19, %s22
    %p31 = scmp.eq.s32.totalorder %s14, 7
    %p32 = por %p30, %p31
    %p33 = scmp.ne.s32.totalorder %s22, %s23
    %p34 = scmp.eq.s32.totalorder %s14, 0
    %p35 = por %p33, %p34
    %p36 = scmp.ne.s32.totalorder %s22, %s23
    %p37 = scmp.eq.s32.totalorder %s15, 7
    %p38 = por %p36, %p37
    %p40 = scmp.ne.s32.totalorder %s23, %s39
    %p41 = scmp.eq.s32.totalorder %s15, 0
    %p42 = por %p40, %p41
    %s44 = sadd.s32 %s43, 1
    %p47 = scmp.eq.s32.totalorder %s9, 7
    %p48 = scmp.ne.s32.totalorder %s43, %s45
    %p49 = scmp.eq.s32.totalorder %s9, 0
    %p50 = por %p48, %p49
    %p51 = scmp.ne.s32.totalorder %s43, %s45
    %p52 = scmp.eq.s32.totalorder %s14, 7
    %p53 = por %p51, %p52
    %p54 = scmp.ne.s32.totalorder %s45, %s46
    %p55 = scmp.eq.s32.totalorder %s14, 0
    %p56 = por %p54, %p55
    %p57 = scmp.ne.s32.totalorder %s45, %s46
    %p58 = scmp.eq.s32.totalorder %s15, 7
    %p59 = por %p57, %p58
    %p61 = scmp.ne.s32.totalorder %s46, %s60
    %p62 = scmp.eq.s32.totalorder %s15, 0
    %p63 = por %p61, %p62
    %s65 = sadd.s32 %s64, 1
    %p68 = scmp.eq.s32.totalorder %s9, 7
    %p69 = scmp.ne.s32.totalorder %s64, %s66
    %p70 = scmp.eq.s32.totalorder %s9, 0
    %p71 = por %p69, %p70
    %p72 = scmp.ne.s32.totalorder %s64, %s66
    %p73 = scmp.eq.s32.totalorder %s14, 7
    %p74 = por %p72, %p73
    %p75 = scmp.ne.s32.totalorder %s66, %s67
    %p76 = scmp.eq.s32.totalorder %s14, 0
    %p77 = por %p75, %p76
    %p78 = scmp.ne.s32.totalorder %s66, %s67
    %p79 = scmp.eq.s32.totalorder %s15, 7
    %p80 = por %p78, %p79
    %p82 = scmp.ne.s32.totalorder %s67, %s81
    %p83 = scmp.eq.s32.totalorder %s15, 0
    %p84 = por %p82, %p83
    %s85 = ssub.s32 %s9, %s16
    %p86 = scmp.eq.s32.totalorder %s85, 0
    %s88 = sadd.s32 %s87, 1
    %s89 = scalar_select %p86, %s87, %s88
    %p92 = pneg %p86
    %p93 = scmp.eq.s32.totalorder %s9, 7
    %p94 = por %p92, %p93
    %p95 = scmp.ne.s32.totalorder %s87, %s90
    %p96 = scmp.eq.s32.totalorder %s9, 0
    %p97 = por %p95, %p96
    %p98 = scmp.ne.s32.totalorder %s87, %s90
    %p99 = scmp.eq.s32.totalorder %s14, 7
    %p100 = por %p98, %p99
    %p101 = scmp.ne.s32.totalorder %s90, %s91
    %p102 = scmp.eq.s32.totalorder %s14, 0
    %p103 = por %p101, %p102
    %p104 = scmp.ne.s32.totalorder %s90, %s91
    %p105 = scmp.eq.s32.totalorder %s15, 7
    %p106 = por %p104, %p105
    %p108 = scmp.ne.s32.totalorder %s91, %s107
    %p109 = scmp.eq.s32.totalorder %s15, 0
    %p110 = por %p108, %p109
    %p111 = scmp.le.s32.totalorder 1, %s9
    %p112 = scmp.lt.s32.totalorder %s9, 9
    %p113 = pnand %p111, %p112
    %p114 = pneg %p113
    // Predicated region
    $region9: #{_lambda_.21} parent=5 // pred_check
      _
    $region10: #{_lambda_.21} parent=5 // pred_check_branch
      %116 = sbr.rel (%p113) target = $region12
    $region11: #{_lambda_.21} parent=5 // pred_region
      %s117 = ssub.s32 %s9, 1
      // Predicated region
      $region13: #{_lambda_.21} parent=11 // pred_check
        %p118 = pneg %p56
      $region14: #{_lambda_.21} parent=11 // pred_check_branch
        %120 = sbr.rel (%p118) target = $region16
      $region15: #{_lambda_.21} parent=11 // pred_region
        _
      $region16: #{_lambda_.21} parent=11 // pred_fallthru
        _
      // Predicated region
      $region17: #{_lambda_.21} parent=11 // pred_check
        %p121 = pneg %p77
      $region18: #{_lambda_.21} parent=11 // pred_check_branch
        %123 = sbr.rel (%p121) target = $region20
      $region19: #{_lambda_.21} parent=11 // pred_region
        _
      $region20: #{_lambda_.21} parent=11 // pred_fallthru
        _
    $region12: #{_lambda_.21} parent=5 // pred_fallthru
      _
    %p124 = scmp.lt.s32.totalorder %s9, 8
    // Predicated region
    $region21: #{_lambda_.21} parent=5 // pred_check
      %p125 = pneg %p124
    $region22: #{_lambda_.21} parent=5 // pred_check_branch
      %127 = sbr.rel (%p125) target = $region24
    $region23: #{_lambda_.21} parent=5 // pred_region
      // Predicated region
      $region25: #{_lambda_.21} parent=23 // pred_check
        %p128 = pneg %p29
      $region26: #{_lambda_.21} parent=23 // pred_check_branch
        %130 = sbr.rel (%p128) target = $region28
      $region27: #{_lambda_.21} parent=23 // pred_region
        %p131 = scmp.lt.s32.totalorder %s9, 7
        %s132 = scalar_select %p131, %s9, 7
        %s133 = smul.addr %s132, 27
        %s134 = smul.addr %s133, 4
        %s135 = scalar_lea.vmem %s0, %s134
      $region28: #{_lambda_.21} parent=23 // pred_fallthru
        _
    $region24: #{_lambda_.21} parent=5 // pred_fallthru
      _
    %p136 = scmp.le.s32.totalorder 1, %s9
    %p137 = scmp.lt.s32.totalorder %s9, 9
    %p138 = pnand %p136, %p137
    %p139 = pneg %p138
    // Predicated region
    $region29: #{_lambda_.21} parent=5 // pred_check
      _
    $region30: #{_lambda_.21} parent=5 // pred_check_branch
      %141 = sbr.rel (%p138) target = $region32
    $region31: #{_lambda_.21} parent=5 // pred_region
      %s142 = ssub.s32 %s9, 1
      %p143 = scmp.lt.s32.totalorder %s14, 7
      %s144 = scalar_select %p143, %s14, 7
      %s145 = smul.addr %s144, 27
      %s146 = smul.addr %s145, 4
      %s147 = scalar_lea.vmem %s0, %s146
      %p148 = pneg %p35
      %p149 = pneg %p32
      %p150 = pneg %p56
      %p151 = pneg %p53
      %p152 = pneg %p77
      %p153 = pneg %p74
      %p154 = pneg %p103
      %p155 = pneg %p100
      %p156 = scmp.lt.s32.totalorder %s14, 7
      %s157 = scalar_select %p156, %s14, 7
      %s158 = smul.addr %s157, 2
      %s159 = smul.addr %s158, 4
      %s160 = scalar_lea.vmem %s3, %s159
      %p161 = scmp.lt.s32.totalorder %s14, 7
      %s162 = scalar_select %p161, %s14, 7
      %s163 = smul.addr %s162, 27
      %s164 = smul.addr %s163, 4
      %s165 = scalar_lea.vmem %s0, %s164
      %p166 = scmp.lt.s32.totalorder %s14, 7
      %s167 = scalar_select %p166, %s14, 7
      %s168 = smul.addr %s167, 2
      %s169 = smul.addr %s168, 4
      %s170 = scalar_lea.vmem %s3, %s169
      %v172 = vld [vmem:[%s1] sm:$0xff]
      %v173 = vld [vmem:[%s1 + $0x8] sm:$0xff]
      %v174 = vld [vmem:[%s165] sm:$0xf]
      %v175 = vld [vmem:[%s165 + $0x4] sm:$0xf]
      %v176 = vld [vmem:[%s165 + $0x8] sm:$0xf]
      %v177 = vld [vmem:[%s165 + $0xc] sm:$0xf]
      %v178 = vld [vmem:[%s165 + $0x10] sm:$0xf]
      %v179 = vld [vmem:[%s165 + $0x14] sm:$0xf]
      %v180 = vld [vmem:[%s165 + $0x18] sm:$0xf]
      %v181 = vld [vmem:[%s165 + $0x1c] sm:$0xf]
      %v182 = vld [vmem:[%s165 + $0x20] sm:$0xf]
      %v183 = vld [vmem:[%s165 + $0x24] sm:$0xf]
      %v184 = vld [vmem:[%s165 + $0x28] sm:$0xf]
      %v185 = vld [vmem:[%s165 + $0x2c] sm:$0xf]
      %v186 = vld [vmem:[%s165 + $0x30] sm:$0xf]
      %v187 = vld [vmem:[%s165 + $0x34] sm:$0xf]
      %v188 = vld [vmem:[%s165 + $0x38] sm:$0xf]
      %v189 = vld [vmem:[%s165 + $0x3c] sm:$0xf]
      %v190 = vld [vmem:[%s165 + $0x40] sm:$0xf]
      %v191 = vld [vmem:[%s165 + $0x44] sm:$0xf]
      %v192 = vld [vmem:[%s165 + $0x48] sm:$0xf]
      %v193 = vld [vmem:[%s165 + $0x4c] sm:$0xf]
      %v194 = vld [vmem:[%s165 + $0x50] sm:$0xf]
      %v195 = vld [vmem:[%s165 + $0x54] sm:$0xf]
      %v196 = vld [vmem:[%s165 + $0x58] sm:$0xf]
      %v197 = vld [vmem:[%s165 + $0x5c] sm:$0xf]
      %v198 = vld [vmem:[%s165 + $0x60] sm:$0xf]
      %v199 = vld [vmem:[%s165 + $0x64] sm:$0xf]
      %v200 = vld [vmem:[%s165 + $0x68] sm:$0xf]
      %v201 = vld [vmem:[%s2] sm:$0xff]
      %v202 = vld [vmem:[%s2 + $0x8] sm:$0xff]
      %204 = vset.pattern.permute.xlu0 0
      %205 = vperm.xlu0 %204, %v201
      %v206 = vpop.permute.xlu0 %205
      %209 = vset.pattern.permute.xlu0 0
      %210 = vperm.xlu0 %209, %v202
      %v211 = vpop.permute.xlu0 %210
      %v215 = vunpack.c.l.b16 %v172
      %v216 = vunpack.c.h.b16 %v172
      %v217 = vunpack.c.l.b16 %v173
      %v218 = vunpack.c.h.b16 %v173
      %v219 = vpack.c.b16 %v217, %v215
      %v220 = vpack.c.b16 %v218, %v216
      %v249 = vunpack.c.l.b16 %v174
      %v250 = vunpack.c.l.b16 %v175
      %v251 = vunpack.c.l.b16 %v176
      %v252 = vunpack.c.l.b16 %v177
      %v253 = vunpack.c.l.b16 %v178
      %v254 = vunpack.c.l.b16 %v179
      %v255 = vunpack.c.l.b16 %v180
      %v256 = vunpack.c.l.b16 %v181
      %v257 = vunpack.c.l.b16 %v182
      %v258 = vunpack.c.l.b16 %v183
      %v259 = vunpack.c.l.b16 %v184
      %v260 = vunpack.c.l.b16 %v185
      %v261 = vunpack.c.l.b16 %v186
      %v262 = vunpack.c.l.b16 %v187
      %v263 = vunpack.c.l.b16 %v188
      %v264 = vunpack.c.l.b16 %v189
      %v265 = vunpack.c.l.b16 %v190
      %v266 = vunpack.c.l.b16 %v191
      %v267 = vunpack.c.l.b16 %v192
      %v268 = vunpack.c.l.b16 %v193
      %v269 = vunpack.c.l.b16 %v194
      %v270 = vunpack.c.l.b16 %v195
      %v271 = vunpack.c.l.b16 %v196
      %v272 = vunpack.c.l.b16 %v197
      %v273 = vunpack.c.l.b16 %v198
      %v274 = vunpack.c.l.b16 %v199
      %v275 = vunpack.c.l.b16 %v200
      %v276 = vpack.c.b16 %v250, %v249
      %v277 = vpack.c.b16 %v252, %v251
      %v278 = vpack.c.b16 %v254, %v253
      %v279 = vpack.c.b16 %v256, %v255
      %v280 = vpack.c.b16 %v258, %v257
      %v281 = vpack.c.b16 %v260, %v259
      %v282 = vpack.c.b16 %v262, %v261
      %v283 = vpack.c.b16 %v264, %v263
      %v284 = vpack.c.b16 %v266, %v265
      %v285 = vpack.c.b16 %v268, %v267
      %v286 = vpack.c.b16 %v270, %v269
      %v287 = vpack.c.b16 %v272, %v271
      %v288 = vpack.c.b16 %v274, %v273
      %v289 = vpack.c.b16 %v275, %v275
      %vm303 = vcmask 719872
      %v305 = vsel %vm303, %v220, 0
      %vm307 = vcmask 1043456
      %v309 = vsel %vm307, %v289, 0
      %311 = vmatpush.bf16.msra.mxu0 %v283
      %312 = vmatpush.bf16.msra.mxu0 %v282
      %313 = vmatpush.bf16.msra.mxu0 %v281
      %314 = vmatpush.bf16.msra.mxu0 %v280
      %315 = vmatpush.bf16.msra.mxu0 %v279
      %316 = vmatpush.bf16.msra.mxu0 %v278
      %317 = vmatpush.bf16.msra.mxu0 %v277
      %318 = vmatpush.bf16.msra.mxu0 %v276
      %319 = vmatmul.bf16.gmra.mxu0 %v219
      %v320 = vpop.f32.mrf.mxu0
      %v321 = vadd.f32 %v206, %v320
      %v322 = vpop.f32.mrf.mxu0
      %v323 = vadd.f32 %v211, %v322
      %324 = vdwg.mxu0
      %325 = vmatpush.bf16.msra.mxu0 0
      %326 = vmatpush.bf16.msra.mxu0 0
      %327 = vmatpush.bf16.msra.mxu0 %v309
      %328 = vmatpush.bf16.msra.mxu0 %v288
      %329 = vmatpush.bf16.msra.mxu0 %v287
      %330 = vmatpush.bf16.msra.mxu0 %v286
      %331 = vmatpush.bf16.msra.mxu0 %v285
      %332 = vmatpush.bf16.msra.mxu0 %v284
      %333 = vmatmul.bf16.gmra.mxu0 %v305
      %v334 = vpop.f32.mrf.mxu0
      %v335 = vadd.f32 %v321, %v334
      %v336 = vpop.f32.mrf.mxu0
      %v337 = vadd.f32 %v323, %v336
      %338 = vdwg.mxu0
      %v339 = vmax.f32 %v335, 0.0
      %v340 = vmax.f32 %v337, 0.0
      %v341 = vpack.c.bf16 %v339, %v339
      %v342 = vpack.c.bf16 %v340, %v340
      %vm343 = vcmask 125952
      %344 = vst.msk [vmem:[%s170] sm:$0xf] %vm343, %v341
      %345 = vst.msk [vmem:[%s170 + $0x4] sm:$0xf] %vm343, %v342
      %p346 = scmp.lt.s32.totalorder %s14, 7
      %s347 = scalar_select %p346, %s14, 7
      %s348 = smul.addr %s347, 2
      %s349 = smul.addr %s348, 4
      %s350 = scalar_lea.vmem %s3, %s349
      // Predicated region
      $region33: #{_lambda_.21} parent=31 // pred_check
        %p351 = pneg %p100
      $region34: #{_lambda_.21} parent=31 // pred_check_branch
        %353 = sbr.rel (%p351) target = $region36
      $region35: #{_lambda_.21} parent=31 // pred_region
        _
      $region36: #{_lambda_.21} parent=31 // pred_fallthru
        _
    $region32: #{_lambda_.21} parent=5 // pred_fallthru
      _
    %p354 = scmp.le.s32.totalorder 2, %s9
    // Predicated region
    $region37: #{_lambda_.21} parent=5 // pred_check
      %p355 = pneg %p354
    $region38: #{_lambda_.21} parent=5 // pred_check_branch
      %357 = sbr.rel (%p355) target = $region40
    $region39: #{_lambda_.21} parent=5 // pred_region
      %s358 = ssub.s32 %s9, 2
      // Predicated region
      $region41: #{_lambda_.21} parent=39 // pred_check
        %p359 = pneg %p106
      $region42: #{_lambda_.21} parent=39 // pred_check_branch
        %361 = sbr.rel (%p359) target = $region44
      $region43: #{_lambda_.21} parent=39 // pred_region
        %p362 = scmp.lt.s32.totalorder %s15, 7
        %s363 = scalar_select %p362, %s15, 7
        %s364 = smul.addr %s363, 2
        %s365 = smul.addr %s364, 4
        %s366 = scalar_lea.vmem %s3, %s365
      $region44: #{_lambda_.21} parent=39 // pred_fallthru
        _
    $region40: #{_lambda_.21} parent=5 // pred_fallthru
      _
  $region6: #{_lambda_.21} parent=0 // loop_footer
    %s13 = sadd.s32 1, %s9
  $region7: #{_lambda_.21} parent=0 // loop_footer_branch
    %8 = sbr.rel target = $region3
  $region8: #{_lambda_.21} parent=0 // loop_exit
    _

// kernel: _lambda_.22
$region0: #{_lambda_.22}
  #allocation0 [shape = 'u32[]', space=smem, size = 0x4, offset = 0x4, fixed_abs, tag = 'smem constant byte address 0x4 - core index']
  #allocation1 [shape = 'u32[72,128]{1,0:T(1,128)}', space=vmem, size = 0x9000, scoped, tag = 'internal scratch']
  #allocation2 [shape = 'bf16[144,16]{1,0:T(8,128)(2,1)}', space=vmem, size = 0x9000, scoped, tag = 'scratch operand']
  #allocation3 [shape = 'f32[16,16]{1,0:T(8,128)}', space=vmem, size = 0x2000, scoped, tag = 'scratch operand']
  %s0 = inlined_call_operand.vmem [shape: bf16[2,6,16,36], index: 0, kind: input, shape index: {}]
  %s1 = inlined_call_operand.vmem [shape: bf16[3,16,144], index: 1, kind: input, shape index: {}]
  %s2 = inlined_call_operand.vmem [shape: f32[16,1], index: 2, kind: input, shape index: {}]
  %s3 = inlined_call_operand.vmem [shape: bf16[2,4,16,16], index: 3, kind: output, shape index: {}]
  %s4 = sld [smem:[#allocation0]]
  $region53: #{_lambda_.22} parent=0
    _
  %s6 = ssub.s32 1, %s4
  %s7 = scalar_select 0, %s6, %s4
  loop: start=0, step=1, limit=26
  $region2: #{_lambda_.22} parent=0 // loop_pre_header
    _
  $region3: #{_lambda_.22} parent=0 // loop_header
    %s9 = sphi 0, %s13
    %p10 = scmp.ge.s32.totalorder %s9, 26
    %s16 = sphi 0, %s35
    %s17 = sphi 0, %s31
    %s18 = sphi 0, %s27
    %s19 = sphi 0, %s16
    %s20 = sphi 0, %s17
    %s21 = sphi 0, %s18
    %s22 = sphi 0, %s19
    %s23 = sphi 0, %s20
    %s24 = sphi 0, %s21
    %s42 = sphi 0, %s44
    %s45 = sphi 0, %s42
    %s46 = sphi 0, %s45
    %s62 = sphi 0, %s46
    %s68 = sphi 0, %s70
    %s71 = sphi 0, %s68
    %s72 = sphi 0, %s71
    %s88 = sphi 0, %s72
    %s92 = sphi 0, %s92
    %s94 = sphi 0, %s92
    %s95 = sphi 0, %s94
    %s109 = sphi 0, %s95
    %s117 = sphi 0, %s119
    %s120 = sphi 0, %s117
    %s121 = sphi 0, %s120
    %s137 = sphi 0, %s121
  $region4: #{_lambda_.22} parent=0 // loop_header_branch
    %12 = sbr.rel (%p10) target = $region8
  $region5: #{_lambda_.22} parent=0 // loop_body
    %s14 = ssub.s32 %s9, 1
    %s15 = ssub.s32 %s9, 2
    %s25 = sadd.s32 1, %s18
    %p26 = scmp.ge.s32.totalorder %s25, 3
    %s27 = scalar_select %p26, 0, %s25
    %s28 = sadd.s32 1, %s17
    %s29 = scalar_select %p26, %s28, %s17
    %p30 = scmp.ge.s32.totalorder %s29, 4
    %s31 = scalar_select %p30, 0, %s29
    %s32 = sadd.s32 1, %s16
    %s33 = scalar_select %p30, %s32, %s16
    %p34 = scmp.ge.s32.totalorder %s33, 2
    %s35 = scalar_select %p34, 0, %s33
    %s36 = sadd.s32 %s17, %s18
    %s37 = sadd.s32 %s31, %s27
    %s38 = ssub.s32 %s16, %s35
    %s39 = ssub.s32 %s36, %s37
    %s40 = sor.u32 %s38, %s39
    %p41 = scmp.eq.s32.totalorder %s40, 0
    %s43 = sadd.s32 %s42, 1
    %s44 = scalar_select %p41, %s42, %s43
    %p47 = pneg %p41
    %p48 = scmp.eq.s32.totalorder %s9, 23
    %p49 = por %p47, %p48
    %p50 = scmp.ne.s32.totalorder %s42, %s45
    %p51 = scmp.eq.s32.totalorder %s9, 0
    %p52 = por %p50, %p51
    %p53 = scmp.ne.s32.totalorder %s42, %s45
    %p54 = scmp.eq.s32.totalorder %s14, 23
    %p55 = por %p53, %p54
    %p56 = scmp.ne.s32.totalorder %s45, %s46
    %p57 = scmp.eq.s32.totalorder %s14, 0
    %p58 = por %p56, %p57
    %p59 = scmp.ne.s32.totalorder %s45, %s46
    %p60 = scmp.eq.s32.totalorder %s15, 23
    %p61 = por %p59, %p60
    %p63 = scmp.ne.s32.totalorder %s46, %s62
    %p64 = scmp.eq.s32.totalorder %s15, 0
    %p65 = por %p63, %p64
    %s66 = ssub.s32 %s18, %s27
    %p67 = scmp.eq.s32.totalorder %s66, 0
    %s69 = sadd.s32 %s68, 1
    %s70 = scalar_select %p67, %s68, %s69
    %p73 = pneg %p67
    %p74 = scmp.eq.s32.totalorder %s9, 23
    %p75 = por %p73, %p74
    %p76 = scmp.ne.s32.totalorder %s68, %s71
    %p77 = scmp.eq.s32.totalorder %s9, 0
    %p78 = por %p76, %p77
    %p79 = scmp.ne.s32.totalorder %s68, %s71
    %p80 = scmp.eq.s32.totalorder %s14, 23
    %p81 = por %p79, %p80
    %p82 = scmp.ne.s32.totalorder %s71, %s72
    %p83 = scmp.eq.s32.totalorder %s14, 0
    %p84 = por %p82, %p83
    %p85 = scmp.ne.s32.totalorder %s71, %s72
    %p86 = scmp.eq.s32.totalorder %s15, 23
    %p87 = por %p85, %p86
    %p89 = scmp.ne.s32.totalorder %s72, %s88
    %p90 = scmp.eq.s32.totalorder %s15, 0
    %p91 = por %p89, %p90
    %s93 = sadd.s32 %s92, 1
    %p96 = scmp.eq.s32.totalorder %s9, 23
    %p97 = scmp.ne.s32.totalorder %s92, %s94
    %p98 = scmp.eq.s32.totalorder %s9, 0
    %p99 = por %p97, %p98
    %p100 = scmp.ne.s32.totalorder %s92, %s94
    %p101 = scmp.eq.s32.totalorder %s14, 23
    %p102 = por %p100, %p101
    %p103 = scmp.ne.s32.totalorder %s94, %s95
    %p104 = scmp.eq.s32.totalorder %s14, 0
    %p105 = por %p103, %p104
    %p106 = scmp.ne.s32.totalorder %s94, %s95
    %p107 = scmp.eq.s32.totalorder %s15, 23
    %p108 = por %p106, %p107
    %p110 = scmp.ne.s32.totalorder %s95, %s109
    %p111 = scmp.eq.s32.totalorder %s15, 0
    %p112 = por %p110, %p111
    %s113 = ssub.s32 %s16, %s35
    %s114 = ssub.s32 %s17, %s31
    %s115 = sor.u32 %s113, %s114
    %p116 = scmp.eq.s32.totalorder %s115, 0
    %s118 = sadd.s32 %s117, 1
    %s119 = scalar_select %p116, %s117, %s118
    %p122 = pneg %p116
    %p123 = scmp.eq.s32.totalorder %s9, 23
    %p124 = por %p122, %p123
    %p125 = scmp.ne.s32.totalorder %s117, %s120
    %p126 = scmp.eq.s32.totalorder %s9, 0
    %p127 = por %p125, %p126
    %p128 = scmp.ne.s32.totalorder %s117, %s120
    %p129 = scmp.eq.s32.totalorder %s14, 23
    %p130 = por %p128, %p129
    %p131 = scmp.ne.s32.totalorder %s120, %s121
    %p132 = scmp.eq.s32.totalorder %s14, 0
    %p133 = por %p131, %p132
    %p134 = scmp.ne.s32.totalorder %s120, %s121
    %p135 = scmp.eq.s32.totalorder %s15, 23
    %p136 = por %p134, %p135
    %p138 = scmp.ne.s32.totalorder %s121, %s137
    %p139 = scmp.eq.s32.totalorder %s15, 0
    %p140 = por %p138, %p139
    %p141 = scmp.le.s32.totalorder 1, %s9
    %p142 = scmp.lt.s32.totalorder %s9, 25
    %p143 = pnand %p141, %p142
    %p144 = pneg %p143
    // Predicated region
    $region9: #{_lambda_.22} parent=5 // pred_check
      _
    $region10: #{_lambda_.22} parent=5 // pred_check_branch
      %146 = sbr.rel (%p143) target = $region12
    $region11: #{_lambda_.22} parent=5 // pred_region
      %s147 = ssub.s32 %s9, 1
      // Predicated region
      $region13: #{_lambda_.22} parent=11 // pred_check
        %p148 = pneg %p105
      $region14: #{_lambda_.22} parent=11 // pred_check_branch
        %150 = sbr.rel (%p148) target = $region16
      $region15: #{_lambda_.22} parent=11 // pred_region
        _
      $region16: #{_lambda_.22} parent=11 // pred_fallthru
        _
    $region12: #{_lambda_.22} parent=5 // pred_fallthru
      _
    %p151 = scmp.lt.s32.totalorder %s9, 24
    // Predicated region
    $region17: #{_lambda_.22} parent=5 // pred_check
      %p152 = pneg %p151
    $region18: #{_lambda_.22} parent=5 // pred_check_branch
      %154 = sbr.rel (%p152) target = $region20
    $region19: #{_lambda_.22} parent=5 // pred_region
      // Predicated region
      $region21: #{_lambda_.22} parent=19 // pred_check
        %p155 = pneg %p52
      $region22: #{_lambda_.22} parent=19 // pred_check_branch
        %157 = sbr.rel (%p155) target = $region24
      $region23: #{_lambda_.22} parent=19 // pred_region
        %s158 = sadd.s32 %s17, %s18
        %p159 = scmp.lt.s32.totalorder %s16, 1
        %s160 = scalar_select %p159, %s16, 1
        %p161 = scmp.lt.s32.totalorder %s158, 5
        %s162 = scalar_select %p161, %s158, 5
        %s163 = smul.addr %s162, 2
        %s164 = smul.addr %s160, 12
        %s165 = sadd.s32 %s163, %s164
        %s166 = smul.addr %s165, 4
        %s167 = scalar_lea.vmem %s0, %s166
        %s168 = sadd.s32 %s17, %s18
      $region24: #{_lambda_.22} parent=19 // pred_fallthru
        _
      // Predicated region
      $region25: #{_lambda_.22} parent=19 // pred_check
        %p169 = pneg %p78
      $region26: #{_lambda_.22} parent=19 // pred_check_branch
        %171 = sbr.rel (%p169) target = $region28
      $region27: #{_lambda_.22} parent=19 // pred_region
        %p172 = scmp.lt.s32.totalorder %s18, 2
        %s173 = scalar_select %p172, %s18, 2
        %s174 = smul.addr %s173, 4
        %s175 = smul.addr %s174, 4
        %s176 = scalar_lea.vmem %s1, %s175
      $region28: #{_lambda_.22} parent=19 // pred_fallthru
        _
    $region20: #{_lambda_.22} parent=5 // pred_fallthru
      _
    %p177 = scmp.le.s32.totalorder 1, %s9
    %p178 = scmp.lt.s32.totalorder %s9, 25
    %p179 = pnand %p177, %p178
    %p180 = pneg %p179
    // Predicated region
    $region29: #{_lambda_.22} parent=5 // pred_check
      _
    $region30: #{_lambda_.22} parent=5 // pred_check_branch
      %182 = sbr.rel (%p179) target = $region32
    $region31: #{_lambda_.22} parent=5 // pred_region
      %s183 = ssub.s32 %s9, 1
      %s184 = sadd.s32 %s20, %s21
      %p185 = scmp.lt.s32.totalorder %s19, 1
      %s186 = scalar_select %p185, %s19, 1
      %p187 = scmp.lt.s32.totalorder %s184, 5
      %s188 = scalar_select %p187, %s184, 5
      %s189 = smul.addr %s188, 2
      %s190 = smul.addr %s186, 12
      %s191 = sadd.s32 %s189, %s190
      %s192 = smul.addr %s191, 4
      %s193 = scalar_lea.vmem %s0, %s192
      %p194 = pneg %p58
      %p195 = pneg %p55
      %p196 = scmp.lt.s32.totalorder %s21, 2
      %s197 = scalar_select %p196, %s21, 2
      %s198 = smul.addr %s197, 4
      %s199 = smul.addr %s198, 4
      %s200 = scalar_lea.vmem %s1, %s199
      %p201 = pneg %p84
      %p202 = pneg %p81
      %p203 = pneg %p105
      %p204 = pneg %p102
      %p205 = pneg %p133
      %p206 = pneg %p130
      %p207 = scmp.lt.s32.totalorder %s19, 1
      %s208 = scalar_select %p207, %s19, 1
      %p209 = scmp.lt.s32.totalorder %s20, 3
      %s210 = scalar_select %p209, %s20, 3
      %s211 = smul.addr %s210, 2
      %s212 = smul.addr %s208, 8
      %s213 = sadd.s32 %s211, %s212
      %s214 = smul.addr %s213, 4
      %s215 = scalar_lea.vmem %s3, %s214
      %s216 = sadd.s32 %s20, %s21
      %p217 = scmp.lt.s32.totalorder %s19, 1
      %s218 = scalar_select %p217, %s19, 1
      %p219 = scmp.lt.s32.totalorder %s216, 5
      %s220 = scalar_select %p219, %s216, 5
      %s221 = smul.addr %s220, 2
      %s222 = smul.addr %s218, 12
      %s223 = sadd.s32 %s221, %s222
      %s224 = smul.addr %s223, 4
      %s225 = scalar_lea.vmem %s0, %s224
      %s226 = sadd.s32 %s20, %s21
      %p227 = scmp.lt.s32.totalorder %s21, 2
      %s228 = scalar_select %p227, %s21, 2
      %s229 = smul.addr %s228, 4
      %s230 = smul.addr %s229, 4
      %s231 = scalar_lea.vmem %s1, %s230
      %p232 = scmp.lt.s32.totalorder %s19, 1
      %s233 = scalar_select %p232, %s19, 1
      %p234 = scmp.lt.s32.totalorder %s20, 3
      %s235 = scalar_select %p234, %s20, 3
      %s236 = smul.addr %s235, 2
      %s237 = smul.addr %s233, 8
      %s238 = sadd.s32 %s236, %s237
      %s239 = smul.addr %s238, 4
      %s240 = scalar_lea.vmem %s3, %s239
      %p242 = scmp.eq.s32.totalorder %s21, 0
      // Predicated region
      $region33: #{_lambda_.22} parent=31 // pred_check
        %p243 = pneg %p242
      $region34: #{_lambda_.22} parent=31 // pred_check_branch
        %245 = sbr.rel (%p243) target = $region36
      $region35: #{_lambda_.22} parent=31 // pred_region
        %vm246 = vcmask 130048
        %247 = vst.msk [vmem:[#allocation3] sm:$0xff] %vm246, 0.0
        %248 = vst.msk [vmem:[#allocation3 + $0x8] sm:$0xff] %vm246, 0.0
      $region36: #{_lambda_.22} parent=31 // pred_fallthru
        _
      %v249 = vld [vmem:[%s225] sm:$0xf]
      %v250 = vld [vmem:[%s225 + $0x4] sm:$0xf]
      %vm251 = vcmask 27648
      %252 = vst.msk [vmem:[#allocation2] sm:$0xf] %vm251, %v249
      %253 = vst.msk [vmem:[#allocation2 + $0x4] sm:$0xf] %vm251, %v250
      %v254 = vld [vmem:[%s225] sm:$0xf]
      %v255 = vld [vmem:[%s225 + $0x4] sm:$0xf]
      %258 = vrot.lane.b32.xlu0 %v254, 126
      %v259 = vpop.permute.xlu0 %258
      %260 = vrot.lane.b32.xlu0 %v255, 126
      %v261 = vpop.permute.xlu0 %260
      %vm264 = vcmask 60448
      %265 = vst.msk [vmem:[#allocation2] sm:$0xf] %vm264, %v259
      %266 = vst.msk [vmem:[#allocation2 + $0x4] sm:$0xf] %vm264, %v261
      %v267 = vld [vmem:[%s225] sm:$0xf]
      %v268 = vld [vmem:[%s225 + $0x4] sm:$0xf]
      %271 = vrot.lane.b32.xlu0 %v267, 124
      %v272 = vpop.permute.xlu0 %271
      %273 = vrot.lane.b32.xlu0 %v268, 124
      %v274 = vpop.permute.xlu0 %273
      %vm277 = vcmask 93248
      %278 = vst.msk [vmem:[#allocation2] sm:$0xf] %vm277, %v272
      %279 = vst.msk [vmem:[#allocation2 + $0x4] sm:$0xf] %vm277, %v274
      %v280 = vld [vmem:[%s225] sm:$0xf]
      %v281 = vld [vmem:[%s225 + $0x4] sm:$0xf]
      %284 = vrot.lane.b32.xlu0 %v280, 122
      %v285 = vpop.permute.xlu0 %284
      %286 = vrot.lane.b32.xlu0 %v281, 122
      %v287 = vpop.permute.xlu0 %286
      %vm290 = vcmask 126048
      %291 = vst.msk [vmem:[#allocation2] sm:$0xf] %vm290, %v285
      %292 = vst.msk [vmem:[#allocation2 + $0x4] sm:$0xf] %vm290, %v287
      %v293 = vld [vmem:[%s225] sm:$0xf]
      %v294 = vld [vmem:[%s225 + $0x4] sm:$0xf]
      %297 = vrot.lane.b32.xlu0 %v293, 127
      %v298 = vpop.permute.xlu0 %297
      %299 = vrot.lane.b32.xlu0 %v294, 127
      %v300 = vpop.permute.xlu0 %299
      %303 = vst.msk [vmem:[#allocation2 + $0x8] sm:$0xf] %vm251, %v298
      %304 = vst.msk [vmem:[#allocation2 + $0xc] sm:$0xf] %vm251, %v300
      %v305 = vld [vmem:[%s225] sm:$0xf]
      %v306 = vld [vmem:[%s225 + $0x4] sm:$0xf]
      %309 = vrot.lane.b32.xlu0 %v305, 125
      %v310 = vpop.permute.xlu0 %309
      %311 = vrot.lane.b32.xlu0 %v306, 125
      %v312 = vpop.permute.xlu0 %311
      %315 = vst.msk [vmem:[#allocation2 + $0x8] sm:$0xf] %vm264, %v310
      %316 = vst.msk [vmem:[#allocation2 + $0xc] sm:$0xf] %vm264, %v312
      %v317 = vld [vmem:[%s225] sm:$0xf]
      %v318 = vld [vmem:[%s225 + $0x4] sm:$0xf]
      %321 = vrot.lane.b32.xlu0 %v317, 123
      %v322 = vpop.permute.xlu0 %321
      %323 = vrot.lane.b32.xlu0 %v318, 123
      %v324 = vpop.permute.xlu0 %323
      %327 = vst.msk [vmem:[#allocation2 + $0x8] sm:$0xf] %vm277, %v322
      %328 = vst.msk [vmem:[#allocation2 + $0xc] sm:$0xf] %vm277, %v324
      %v329 = vld [vmem:[%s225] sm:$0xf]
      %v330 = vld [vmem:[%s225 + $0x4] sm:$0xf]
      %333 = vrot.lane.b32.xlu0 %v329, 121
      %v334 = vpop.permute.xlu0 %333
      %335 = vrot.lane.b32.xlu0 %v330, 121
      %v336 = vpop.permute.xlu0 %335
      %339 = vst.msk [vmem:[#allocation2 + $0x8] sm:$0xf] %vm290, %v334
      %340 = vst.msk [vmem:[#allocation2 + $0xc] sm:$0xf] %vm290, %v336
      %v341 = vld [vmem:[%s225] sm:$0xf]
      %v342 = vld [vmem:[%s225 + $0x4] sm:$0xf]
      %345 = vrot.lane.b32.xlu0 %v341, 126
      %v346 = vpop.permute.xlu0 %345
      %347 = vrot.lane.b32.xlu0 %v342, 126
      %v348 = vpop.permute.xlu0 %347
      %351 = vst.msk [vmem:[#allocation2 + $0x10] sm:$0xf] %vm251, %v346
      %352 = vst.msk [vmem:[#allocation2 + $0x14] sm:$0xf] %vm251, %v348
      %v353 = vld [vmem:[%s225] sm:$0xf]
      %v354 = vld [vmem:[%s225 + $0x4] sm:$0xf]
      %357 = vrot.lane.b32.xlu0 %v353, 124
      %v358 = vpop.permute.xlu0 %357
      %359 = vrot.lane.b32.xlu0 %v354, 124
      %v360 = vpop.permute.xlu0 %359
      %363 = vst.msk [vmem:[#allocation2 + $0x10] sm:$0xf] %vm264, %v358
      %364 = vst.msk [vmem:[#allocation2 + $0x14] sm:$0xf] %vm264, %v360
      %v365 = vld [vmem:[%s225] sm:$0xf]
      %v366 = vld [vmem:[%s225 + $0x4] sm:$0xf]
      %369 = vrot.lane.b32.xlu0 %v365, 122
      %v370 = vpop.permute.xlu0 %369
      %371 = vrot.lane.b32.xlu0 %v366, 122
      %v372 = vpop.permute.xlu0 %371
      %375 = vst.msk [vmem:[#allocation2 + $0x10] sm:$0xf] %vm277, %v370
      %376 = vst.msk [vmem:[#allocation2 + $0x14] sm:$0xf] %vm277, %v372
      %v377 = vld [vmem:[%s225] sm:$0xf]
      %v378 = vld [vmem:[%s225 + $0x4] sm:$0xf]
      %381 = vrot.lane.b32.xlu0 %v377, 120
      %v382 = vpop.permute.xlu0 %381
      %383 = vrot.lane.b32.xlu0 %v378, 120
      %v384 = vpop.permute.xlu0 %383
      %387 = vst.msk [vmem:[#allocation2 + $0x10] sm:$0xf] %vm290, %v382
      %388 = vst.msk [vmem:[#allocation2 + $0x14] sm:$0xf] %vm290, %v384
      %v389 = vld [vmem:[%s225] sm:$0xf]
      %v390 = vld [vmem:[%s225 + $0x4] sm:$0xf]
      %393 = vrot.lane.b32.xlu0 %v389, 122
      %v394 = vpop.permute.xlu0 %393
      %395 = vrot.lane.b32.xlu0 %v390, 122
      %v396 = vpop.permute.xlu0 %395
      %399 = vst.msk [vmem:[#allocation2 + $0x18] sm:$0xf] %vm251, %v394
      %400 = vst.msk [vmem:[#allocation2 + $0x1c] sm:$0xf] %vm251, %v396
      %v401 = vld [vmem:[%s225] sm:$0xf]
      %v402 = vld [vmem:[%s225 + $0x4] sm:$0xf]
      %405 = vrot.lane.b32.xlu0 %v401, 120
      %v406 = vpop.permute.xlu0 %405
      %407 = vrot.lane.b32.xlu0 %v402, 120
      %v408 = vpop.permute.xlu0 %407
      %411 = vst.msk [vmem:[#allocation2 + $0x18] sm:$0xf] %vm264, %v406
      %412 = vst.msk [vmem:[#allocation2 + $0x1c] sm:$0xf] %vm264, %v408
      %v413 = vld [vmem:[%s225] sm:$0xf]
      %v414 = vld [vmem:[%s225 + $0x4] sm:$0xf]
      %417 = vrot.lane.b32.xlu0 %v413, 118
      %v418 = vpop.permute.xlu0 %417
      %419 = vrot.lane.b32.xlu0 %v414, 118
      %v420 = vpop.permute.xlu0 %419
      %423 = vst.msk [vmem:[#allocation2 + $0x18] sm:$0xf] %vm277, %v418
      %424 = vst.msk [vmem:[#allocation2 + $0x1c] sm:$0xf] %vm277, %v420
      %v425 = vld [vmem:[%s225] sm:$0xf]
      %v426 = vld [vmem:[%s225 + $0x4] sm:$0xf]
      %429 = vrot.lane.b32.xlu0 %v425, 116
      %v430 = vpop.permute.xlu0 %429
      %431 = vrot.lane.b32.xlu0 %v426, 116
      %v432 = vpop.permute.xlu0 %431
      %435 = vst.msk [vmem:[#allocation2 + $0x18] sm:$0xf] %vm290, %v430
      %436 = vst.msk [vmem:[#allocation2 + $0x1c] sm:$0xf] %vm290, %v432
      %v437 = vld [vmem:[%s225] sm:$0xf]
      %v438 = vld [vmem:[%s225 + $0x4] sm:$0xf]
      %441 = vrot.lane.b32.xlu0 %v437, 121
      %v442 = vpop.permute.xlu0 %441
      %443 = vrot.lane.b32.xlu0 %v438, 121
      %v444 = vpop.permute.xlu0 %443
      %447 = vst.msk [vmem:[#allocation2 + $0x20] sm:$0xf] %vm251, %v442
      %448 = vst.msk [vmem:[#allocation2 + $0x24] sm:$0xf] %vm251, %v444
      %v449 = vld [vmem:[%s225] sm:$0xf]
      %v450 = vld [vmem:[%s225 + $0x4] sm:$0xf]
      %453 = vrot.lane.b32.xlu0 %v449, 119
      %v454 = vpop.permute.xlu0 %453
      %455 = vrot.lane.b32.xlu0 %v450, 119
      %v456 = vpop.permute.xlu0 %455
      %459 = vst.msk [vmem:[#allocation2 + $0x20] sm:$0xf] %vm264, %v454
      %460 = vst.msk [vmem:[#allocation2 + $0x24] sm:$0xf] %vm264, %v456
      %v461 = vld [vmem:[%s225] sm:$0xf]
      %v462 = vld [vmem:[%s225 + $0x4] sm:$0xf]
      %465 = vrot.lane.b32.xlu0 %v461, 117
      %v466 = vpop.permute.xlu0 %465
      %467 = vrot.lane.b32.xlu0 %v462, 117
      %v468 = vpop.permute.xlu0 %467
      %471 = vst.msk [vmem:[#allocation2 + $0x20] sm:$0xf] %vm277, %v466
      %472 = vst.msk [vmem:[#allocation2 + $0x24] sm:$0xf] %vm277, %v468
      %v473 = vld [vmem:[%s225] sm:$0xf]
      %v474 = vld [vmem:[%s225 + $0x4] sm:$0xf]
      %477 = vrot.lane.b32.xlu0 %v473, 115
      %v478 = vpop.permute.xlu0 %477
      %479 = vrot.lane.b32.xlu0 %v474, 115
      %v480 = vpop.permute.xlu0 %479
      %483 = vst.msk [vmem:[#allocation2 + $0x20] sm:$0xf] %vm290, %v478
      %484 = vst.msk [vmem:[#allocation2 + $0x24] sm:$0xf] %vm290, %v480
      %v485 = vld [vmem:[%s225] sm:$0xf]
      %v486 = vld [vmem:[%s225 + $0x4] sm:$0xf]
      %489 = vrot.lane.b32.xlu0 %v485, 120
      %v490 = vpop.permute.xlu0 %489
      %491 = vrot.lane.b32.xlu0 %v486, 120
      %v492 = vpop.permute.xlu0 %491
      %495 = vst.msk [vmem:[#allocation2 + $0x28] sm:$0xf] %vm251, %v490
      %496 = vst.msk [vmem:[#allocation2 + $0x2c] sm:$0xf] %vm251, %v492
      %v497 = vld [vmem:[%s225] sm:$0xf]
      %v498 = vld [vmem:[%s225 + $0x4] sm:$0xf]
      %501 = vrot.lane.b32.xlu0 %v497, 118
      %v502 = vpop.permute.xlu0 %501
      %503 = vrot.lane.b32.xlu0 %v498, 118
      %v504 = vpop.permute.xlu0 %503
      %507 = vst.msk [vmem:[#allocation2 + $0x28] sm:$0xf] %vm264, %v502
      %508 = vst.msk [vmem:[#allocation2 + $0x2c] sm:$0xf] %vm264, %v504
      %v509 = vld [vmem:[%s225] sm:$0xf]
      %v510 = vld [vmem:[%s225 + $0x4] sm:$0xf]
      %513 = vrot.lane.b32.xlu0 %v509, 116
      %v514 = vpop.permute.xlu0 %513
      %515 = vrot.lane.b32.xlu0 %v510, 116
      %v516 = vpop.permute.xlu0 %515
      %519 = vst.msk [vmem:[#allocation2 + $0x28] sm:$0xf] %vm277, %v514
      %520 = vst.msk [vmem:[#allocation2 + $0x2c] sm:$0xf] %vm277, %v516
      %v521 = vld [vmem:[%s225] sm:$0xf]
      %v522 = vld [vmem:[%s225 + $0x4] sm:$0xf]
      %525 = vrot.lane.b32.xlu0 %v521, 114
      %v526 = vpop.permute.xlu0 %525
      %527 = vrot.lane.b32.xlu0 %v522, 114
      %v528 = vpop.permute.xlu0 %527
      %531 = vst.msk [vmem:[#allocation2 + $0x28] sm:$0xf] %vm290, %v526
      %532 = vst.msk [vmem:[#allocation2 + $0x2c] sm:$0xf] %vm290, %v528
      %v533 = vld [vmem:[%s225] sm:$0xf]
      %v534 = vld [vmem:[%s225 + $0x4] sm:$0xf]
      %537 = vrot.lane.b32.xlu0 %v533, 116
      %v538 = vpop.permute.xlu0 %537
      %539 = vrot.lane.b32.xlu0 %v534, 116
      %v540 = vpop.permute.xlu0 %539
      %543 = vst.msk [vmem:[#allocation2 + $0x30] sm:$0xf] %vm251, %v538
      %544 = vst.msk [vmem:[#allocation2 + $0x34] sm:$0xf] %vm251, %v540
      %v545 = vld [vmem:[%s225] sm:$0xf]
      %v546 = vld [vmem:[%s225 + $0x4] sm:$0xf]
      %549 = vrot.lane.b32.xlu0 %v545, 114
      %v550 = vpop.permute.xlu0 %549
      %551 = vrot.lane.b32.xlu0 %v546, 114
      %v552 = vpop.permute.xlu0 %551
      %555 = vst.msk [vmem:[#allocation2 + $0x30] sm:$0xf] %vm264, %v550
      %556 = vst.msk [vmem:[#allocation2 + $0x34] sm:$0xf] %vm264, %v552
      %v557 = vld [vmem:[%s225] sm:$0xf]
      %v558 = vld [vmem:[%s225 + $0x4] sm:$0xf]
      %561 = vrot.lane.b32.xlu0 %v557, 112
      %v562 = vpop.permute.xlu0 %561
      %563 = vrot.lane.b32.xlu0 %v558, 112
      %v564 = vpop.permute.xlu0 %563
      %567 = vst.msk [vmem:[#allocation2 + $0x30] sm:$0xf] %vm277, %v562
      %568 = vst.msk [vmem:[#allocation2 + $0x34] sm:$0xf] %vm277, %v564
      %v569 = vld [vmem:[%s225] sm:$0xf]
      %v570 = vld [vmem:[%s225 + $0x4] sm:$0xf]
      %573 = vrot.lane.b32.xlu0 %v569, 110
      %v574 = vpop.permute.xlu0 %573
      %575 = vrot.lane.b32.xlu0 %v570, 110
      %v576 = vpop.permute.xlu0 %575
      %579 = vst.msk [vmem:[#allocation2 + $0x30] sm:$0xf] %vm290, %v574
      %580 = vst.msk [vmem:[#allocation2 + $0x34] sm:$0xf] %vm290, %v576
      %v581 = vld [vmem:[%s225] sm:$0xf]
      %v582 = vld [vmem:[%s225 + $0x4] sm:$0xf]
      %585 = vrot.lane.b32.xlu0 %v581, 115
      %v586 = vpop.permute.xlu0 %585
      %587 = vrot.lane.b32.xlu0 %v582, 115
      %v588 = vpop.permute.xlu0 %587
      %591 = vst.msk [vmem:[#allocation2 + $0x38] sm:$0xf] %vm251, %v586
      %592 = vst.msk [vmem:[#allocation2 + $0x3c] sm:$0xf] %vm251, %v588
      %v593 = vld [vmem:[%s225] sm:$0xf]
      %v594 = vld [vmem:[%s225 + $0x4] sm:$0xf]
      %597 = vrot.lane.b32.xlu0 %v593, 113
      %v598 = vpop.permute.xlu0 %597
      %599 = vrot.lane.b32.xlu0 %v594, 113
      %v600 = vpop.permute.xlu0 %599
      %603 = vst.msk [vmem:[#allocation2 + $0x38] sm:$0xf] %vm264, %v598
      %604 = vst.msk [vmem:[#allocation2 + $0x3c] sm:$0xf] %vm264, %v600
      %v605 = vld [vmem:[%s225] sm:$0xf]
      %v606 = vld [vmem:[%s225 + $0x4] sm:$0xf]
      %609 = vrot.lane.b32.xlu0 %v605, 111
      %v610 = vpop.permute.xlu0 %609
      %611 = vrot.lane.b32.xlu0 %v606, 111
      %v612 = vpop.permute.xlu0 %611
      %615 = vst.msk [vmem:[#allocation2 + $0x38] sm:$0xf] %vm277, %v610
      %616 = vst.msk [vmem:[#allocation2 + $0x3c] sm:$0xf] %vm277, %v612
      %v617 = vld [vmem:[%s225] sm:$0xf]
      %v618 = vld [vmem:[%s225 + $0x4] sm:$0xf]
      %621 = vrot.lane.b32.xlu0 %v617, 109
      %v622 = vpop.permute.xlu0 %621
      %623 = vrot.lane.b32.xlu0 %v618, 109
      %v624 = vpop.permute.xlu0 %623
      %627 = vst.msk [vmem:[#allocation2 + $0x38] sm:$0xf] %vm290, %v622
      %628 = vst.msk [vmem:[#allocation2 + $0x3c] sm:$0xf] %vm290, %v624
      %v629 = vld [vmem:[%s225] sm:$0xf]
      %v630 = vld [vmem:[%s225 + $0x4] sm:$0xf]
      %633 = vrot.lane.b32.xlu0 %v629, 114
      %v634 = vpop.permute.xlu0 %633
      %635 = vrot.lane.b32.xlu0 %v630, 114
      %v636 = vpop.permute.xlu0 %635
      %639 = vst.msk [vmem:[#allocation2 + $0x40] sm:$0xf] %vm251, %v634
      %640 = vst.msk [vmem:[#allocation2 + $0x44] sm:$0xf] %vm251, %v636
      %v641 = vld [vmem:[%s225] sm:$0xf]
      %v642 = vld [vmem:[%s225 + $0x4] sm:$0xf]
      %645 = vrot.lane.b32.xlu0 %v641, 112
      %v646 = vpop.permute.xlu0 %645
      %647 = vrot.lane.b32.xlu0 %v642, 112
      %v648 = vpop.permute.xlu0 %647
      %651 = vst.msk [vmem:[#allocation2 + $0x40] sm:$0xf] %vm264, %v646
      %652 = vst.msk [vmem:[#allocation2 + $0x44] sm:$0xf] %vm264, %v648
      %v653 = vld [vmem:[%s225] sm:$0xf]
      %v654 = vld [vmem:[%s225 + $0x4] sm:$0xf]
      %657 = vrot.lane.b32.xlu0 %v653, 110
      %v658 = vpop.permute.xlu0 %657
      %659 = vrot.lane.b32.xlu0 %v654, 110
      %v660 = vpop.permute.xlu0 %659
      %663 = vst.msk [vmem:[#allocation2 + $0x40] sm:$0xf] %vm277, %v658
      %664 = vst.msk [vmem:[#allocation2 + $0x44] sm:$0xf] %vm277, %v660
      %v665 = vld [vmem:[%s225] sm:$0xf]
      %v666 = vld [vmem:[%s225 + $0x4] sm:$0xf]
      %669 = vrot.lane.b32.xlu0 %v665, 108
      %v670 = vpop.permute.xlu0 %669
      %671 = vrot.lane.b32.xlu0 %v666, 108
      %v672 = vpop.permute.xlu0 %671
      %675 = vst.msk [vmem:[#allocation2 + $0x40] sm:$0xf] %vm290, %v670
      %676 = vst.msk [vmem:[#allocation2 + $0x44] sm:$0xf] %vm290, %v672
      %v677 = vld [vmem:[#allocation3] sm:$0xff]
      %v678 = vld [vmem:[#allocation3 + $0x8] sm:$0xff]
      %v679 = vld [vmem:[%s231] sm:$0xff]
      %v680 = vld [vmem:[%s231 + $0x8] sm:$0xff]
      %v681 = vld [vmem:[#allocation2] sm:$0xf]
      %v682 = vld [vmem:[#allocation2 + $0x4] sm:$0xf]
      %v683 = vld [vmem:[#allocation2 + $0x8] sm:$0xf]
      %v684 = vld [vmem:[#allocation2 + $0xc] sm:$0xf]
      %v685 = vld [vmem:[#allocation2 + $0x10] sm:$0xf]
      %v686 = vld [vmem:[#allocation2 + $0x14] sm:$0xf]
      %v687 = vld [vmem:[#allocation2 + $0x18] sm:$0xf]
      %v688 = vld [vmem:[#allocation2 + $0x1c] sm:$0xf]
      %v689 = vld [vmem:[#allocation2 + $0x20] sm:$0xf]
      %v690 = vld [vmem:[#allocation2 + $0x24] sm:$0xf]
      %v691 = vld [vmem:[#allocation2 + $0x28] sm:$0xf]
      %v692 = vld [vmem:[#allocation2 + $0x2c] sm:$0xf]
      %v693 = vld [vmem:[#allocation2 + $0x30] sm:$0xf]
      %v694 = vld [vmem:[#allocation2 + $0x34] sm:$0xf]
      %v695 = vld [vmem:[#allocation2 + $0x38] sm:$0xf]
      %v696 = vld [vmem:[#allocation2 + $0x3c] sm:$0xf]
      %v697 = vld [vmem:[#allocation2 + $0x40] sm:$0xf]
      %v698 = vld [vmem:[#allocation2 + $0x44] sm:$0xf]
      %v701 = vunpack.c.l.b16 %v679
      %v702 = vunpack.c.h.b16 %v679
      %v703 = vunpack.c.l.b16 %v680
      %v704 = vunpack.c.h.b16 %v680
      %v705 = vpack.c.b16 %v703, %v701
      %v706 = vpack.c.b16 %v704, %v702
      %v726 = vunpack.c.l.b16 %v681
      %v727 = vunpack.c.l.b16 %v682
      %v728 = vunpack.c.l.b16 %v683
      %v729 = vunpack.c.l.b16 %v684
      %v730 = vunpack.c.l.b16 %v685
      %v731 = vunpack.c.l.b16 %v686
      %v732 = vunpack.c.l.b16 %v687
      %v733 = vunpack.c.l.b16 %v688
      %v734 = vunpack.c.l.b16 %v689
      %v735 = vunpack.c.l.b16 %v690
      %v736 = vunpack.c.l.b16 %v691
      %v737 = vunpack.c.l.b16 %v692
      %v738 = vunpack.c.l.b16 %v693
      %v739 = vunpack.c.l.b16 %v694
      %v740 = vunpack.c.l.b16 %v695
      %v741 = vunpack.c.l.b16 %v696
      %v742 = vunpack.c.l.b16 %v697
      %v743 = vunpack.c.l.b16 %v698
      %v744 = vpack.c.b16 %v727, %v726
      %v745 = vpack.c.b16 %v729, %v728
      %v746 = vpack.c.b16 %v731, %v730
      %v747 = vpack.c.b16 %v733, %v732
      %v748 = vpack.c.b16 %v735, %v734
      %v749 = vpack.c.b16 %v737, %v736
      %v750 = vpack.c.b16 %v739, %v738
      %v751 = vpack.c.b16 %v741, %v740
      %v752 = vpack.c.b16 %v743, %v742
      %vm762 = vcmask 130048
      %v764 = vsel %vm762, %v706, 0
      %766 = vmatpush.bf16.msra.mxu0 %v751
      %767 = vmatpush.bf16.msra.mxu0 %v750
      %768 = vmatpush.bf16.msra.mxu0 %v749
      %769 = vmatpush.bf16.msra.mxu0 %v748
      %770 = vmatpush.bf16.msra.mxu0 %v747
      %771 = vmatpush.bf16.msra.mxu0 %v746
      %772 = vmatpush.bf16.msra.mxu0 %v745
      %773 = vmatpush.bf16.msra.mxu0 %v744
      %774 = vmatmul.bf16.gmra.mxu0 %v705
      %v775 = vpop.f32.mrf.mxu0
      %v776 = vadd.f32 0.0, %v775
      %v777 = vpop.f32.mrf.mxu0
      %v778 = vadd.f32 0.0, %v777
      %779 = vdwg.mxu0
      %780 = vmatpush.bf16.msra.mxu0 0
      %781 = vmatpush.bf16.msra.mxu0 0
      %782 = vmatpush.bf16.msra.mxu0 0
      %783 = vmatpush.bf16.msra.mxu0 0
      %784 = vmatpush.bf16.msra.mxu0 0
      %785 = vmatpush.bf16.msra.mxu0 0
      %786 = vmatpush.bf16.msra.mxu0 0
      %787 = vmatpush.bf16.msra.mxu0 %v752
      %788 = vmatmul.bf16.gmra.mxu0 %v764
      %v789 = vpop.f32.mrf.mxu0
      %v790 = vadd.f32 %v776, %v789
      %v791 = vpop.f32.mrf.mxu0
      %v792 = vadd.f32 %v778, %v791
      %793 = vdwg.mxu0
      %v794 = vadd.f32 %v677, %v790
      %v795 = vadd.f32 %v678, %v792
      %796 = vst.msk [vmem:[#allocation3] sm:$0xff] %vm762, %v794
      %797 = vst.msk [vmem:[#allocation3 + $0x8] sm:$0xff] %vm762, %v795
      %p798 = scmp.eq.s32.totalorder %s21, 2
      // Predicated region
      $region37: #{_lambda_.22} parent=31 // pred_check
        %p799 = pneg %p798
      $region38: #{_lambda_.22} parent=31 // pred_check_branch
        %801 = sbr.rel (%p799) target = $region40
      $region39: #{_lambda_.22} parent=31 // pred_region
        %v802 = vld [vmem:[#allocation3] sm:$0xff]
        %v803 = vld [vmem:[#allocation3 + $0x8] sm:$0xff]
        %v804 = vld [vmem:[%s2] sm:$0xff]
        %v805 = vld [vmem:[%s2 + $0x8] sm:$0xff]
        %807 = vset.pattern.permute.xlu0 0
        %808 = vperm.xlu0 %807, %v804
        %v809 = vpop.permute.xlu0 %808
        %812 = vset.pattern.permute.xlu0 0
        %813 = vperm.xlu0 %812, %v805
        %v814 = vpop.permute.xlu0 %813
        %v816 = vadd.f32 %v802, %v809
        %v817 = vadd.f32 %v803, %v814
        %v818 = vmax.f32 %v816, 0.0
        %v819 = vmax.f32 %v817, 0.0
        %v820 = vpack.c.bf16 %v818, %v818
        %v821 = vpack.c.bf16 %v819, %v819
        %vm822 = vcmask 125952
        %823 = vst.msk [vmem:[%s240] sm:$0xf] %vm822, %v820
        %824 = vst.msk [vmem:[%s240 + $0x4] sm:$0xf] %vm822, %v821
      $region40: #{_lambda_.22} parent=31 // pred_fallthru
        _
      %p825 = scmp.lt.s32.totalorder %s19, 1
      %s826 = scalar_select %p825, %s19, 1
      %p827 = scmp.lt.s32.totalorder %s20, 3
      %s828 = scalar_select %p827, %s20, 3
      %s829 = smul.addr %s828, 2
      %s830 = smul.addr %s826, 8
      %s831 = sadd.s32 %s829, %s830
      %s832 = smul.addr %s831, 4
      %s833 = scalar_lea.vmem %s3, %s832
      // Predicated region
      $region41: #{_lambda_.22} parent=31 // pred_check
        %p834 = pneg %p130
      $region42: #{_lambda_.22} parent=31 // pred_check_branch
        %836 = sbr.rel (%p834) target = $region44
      $region43: #{_lambda_.22} parent=31 // pred_region
        _
      $region44: #{_lambda_.22} parent=31 // pred_fallthru
        _
    $region32: #{_lambda_.22} parent=5 // pred_fallthru
      _
    %p837 = scmp.le.s32.totalorder 2, %s9
    // Predicated region
    $region45: #{_lambda_.22} parent=5 // pred_check
      %p838 = pneg %p837
    $region46: #{_lambda_.22} parent=5 // pred_check_branch
      %840 = sbr.rel (%p838) target = $region48
    $region47: #{_lambda_.22} parent=5 // pred_region
      %s841 = ssub.s32 %s9, 2
      // Predicated region
      $region49: #{_lambda_.22} parent=47 // pred_check
        %p842 = pneg %p136
      $region50: #{_lambda_.22} parent=47 // pred_check_branch
        %844 = sbr.rel (%p842) target = $region52
      $region51: #{_lambda_.22} parent=47 // pred_region
        %p845 = scmp.lt.s32.totalorder %s22, 1
        %s846 = scalar_select %p845, %s22, 1
        %p847 = scmp.lt.s32.totalorder %s23, 3
        %s848 = scalar_select %p847, %s23, 3
        %s849 = smul.addr %s848, 2
        %s850 = smul.addr %s846, 8
        %s851 = sadd.s32 %s849, %s850
        %s852 = smul.addr %s851, 4
        %s853 = scalar_lea.vmem %s3, %s852
      $region52: #{_lambda_.22} parent=47 // pred_fallthru
        _
    $region48: #{_lambda_.22} parent=5 // pred_fallthru
      _
  $region6: #{_lambda_.22} parent=0 // loop_footer
    %s13 = sadd.s32 1, %s9
  $region7: #{_lambda_.22} parent=0 // loop_footer_branch
    %8 = sbr.rel target = $region3
  $region8: #{_lambda_.22} parent=0 // loop_exit
    _

// kernel: _lambda_.24
$region0: #{_lambda_.24}
  #allocation0 [shape = 'u32[]', space=smem, size = 0x4, offset = 0x4, fixed_abs, tag = 'smem constant byte address 0x4 - core index']
  #allocation1 [shape = 'u32[72,128]{1,0:T(1,128)}', space=vmem, size = 0x9000, scoped, tag = 'internal scratch']
  %s0 = inlined_call_operand.vmem [shape: bf16[4,432,4], index: 0, kind: input, shape index: {}]
  %s1 = inlined_call_operand.vmem [shape: bf16[32,432], index: 1, kind: input, shape index: {}]
  %s2 = inlined_call_operand.vmem [shape: f32[32,1], index: 2, kind: input, shape index: {}]
  %s3 = inlined_call_operand.vmem [shape: bf16[4,32,4], index: 3, kind: output, shape index: {}]
  %s4 = sld [smem:[#allocation0]]
  $region45: #{_lambda_.24} parent=0
    _
  %s6 = ssub.s32 1, %s4
  %s7 = scalar_select 0, %s6, %s4
  loop: start=0, step=1, limit=6
  $region2: #{_lambda_.24} parent=0 // loop_pre_header
    _
  $region3: #{_lambda_.24} parent=0 // loop_header
    %s9 = sphi 0, %s13
    %p10 = scmp.ge.s32.totalorder %s9, 6
    %s19 = sphi 0, %s21
    %s22 = sphi 0, %s19
    %s23 = sphi 0, %s22
    %s39 = sphi 0, %s23
    %s43 = sphi 0, %s43
    %s45 = sphi 0, %s43
    %s46 = sphi 0, %s45
    %s60 = sphi 0, %s46
    %s64 = sphi 0, %s64
    %s66 = sphi 0, %s64
    %s67 = sphi 0, %s66
    %s81 = sphi 0, %s67
    %s87 = sphi 0, %s89
    %s90 = sphi 0, %s87
    %s91 = sphi 0, %s90
    %s107 = sphi 0, %s91
  $region4: #{_lambda_.24} parent=0 // loop_header_branch
    %12 = sbr.rel (%p10) target = $region8
  $region5: #{_lambda_.24} parent=0 // loop_body
    %s14 = ssub.s32 %s9, 1
    %s15 = ssub.s32 %s9, 2
    %s16 = sadd.s32 %s9, 1
    %s17 = ssub.s32 %s9, %s16
    %p18 = scmp.eq.s32.totalorder %s17, 0
    %s20 = sadd.s32 %s19, 1
    %s21 = scalar_select %p18, %s19, %s20
    %p24 = pneg %p18
    %p25 = scmp.eq.s32.totalorder %s9, 3
    %p26 = por %p24, %p25
    %p27 = scmp.ne.s32.totalorder %s19, %s22
    %p28 = scmp.eq.s32.totalorder %s9, 0
    %p29 = por %p27, %p28
    %p30 = scmp.ne.s32.totalorder %s19, %s22
    %p31 = scmp.eq.s32.totalorder %s14, 3
    %p32 = por %p30, %p31
    %p33 = scmp.ne.s32.totalorder %s22, %s23
    %p34 = scmp.eq.s32.totalorder %s14, 0
    %p35 = por %p33, %p34
    %p36 = scmp.ne.s32.totalorder %s22, %s23
    %p37 = scmp.eq.s32.totalorder %s15, 3
    %p38 = por %p36, %p37
    %p40 = scmp.ne.s32.totalorder %s23, %s39
    %p41 = scmp.eq.s32.totalorder %s15, 0
    %p42 = por %p40, %p41
    %s44 = sadd.s32 %s43, 1
    %p47 = scmp.eq.s32.totalorder %s9, 3
    %p48 = scmp.ne.s32.totalorder %s43, %s45
    %p49 = scmp.eq.s32.totalorder %s9, 0
    %p50 = por %p48, %p49
    %p51 = scmp.ne.s32.totalorder %s43, %s45
    %p52 = scmp.eq.s32.totalorder %s14, 3
    %p53 = por %p51, %p52
    %p54 = scmp.ne.s32.totalorder %s45, %s46
    %p55 = scmp.eq.s32.totalorder %s14, 0
    %p56 = por %p54, %p55
    %p57 = scmp.ne.s32.totalorder %s45, %s46
    %p58 = scmp.eq.s32.totalorder %s15, 3
    %p59 = por %p57, %p58
    %p61 = scmp.ne.s32.totalorder %s46, %s60
    %p62 = scmp.eq.s32.totalorder %s15, 0
    %p63 = por %p61, %p62
    %s65 = sadd.s32 %s64, 1
    %p68 = scmp.eq.s32.totalorder %s9, 3
    %p69 = scmp.ne.s32.totalorder %s64, %s66
    %p70 = scmp.eq.s32.totalorder %s9, 0
    %p71 = por %p69, %p70
    %p72 = scmp.ne.s32.totalorder %s64, %s66
    %p73 = scmp.eq.s32.totalorder %s14, 3
    %p74 = por %p72, %p73
    %p75 = scmp.ne.s32.totalorder %s66, %s67
    %p76 = scmp.eq.s32.totalorder %s14, 0
    %p77 = por %p75, %p76
    %p78 = scmp.ne.s32.totalorder %s66, %s67
    %p79 = scmp.eq.s32.totalorder %s15, 3
    %p80 = por %p78, %p79
    %p82 = scmp.ne.s32.totalorder %s67, %s81
    %p83 = scmp.eq.s32.totalorder %s15, 0
    %p84 = por %p82, %p83
    %s85 = ssub.s32 %s9, %s16
    %p86 = scmp.eq.s32.totalorder %s85, 0
    %s88 = sadd.s32 %s87, 1
    %s89 = scalar_select %p86, %s87, %s88
    %p92 = pneg %p86
    %p93 = scmp.eq.s32.totalorder %s9, 3
    %p94 = por %p92, %p93
    %p95 = scmp.ne.s32.totalorder %s87, %s90
    %p96 = scmp.eq.s32.totalorder %s9, 0
    %p97 = por %p95, %p96
    %p98 = scmp.ne.s32.totalorder %s87, %s90
    %p99 = scmp.eq.s32.totalorder %s14, 3
    %p100 = por %p98, %p99
    %p101 = scmp.ne.s32.totalorder %s90, %s91
    %p102 = scmp.eq.s32.totalorder %s14, 0
    %p103 = por %p101, %p102
    %p104 = scmp.ne.s32.totalorder %s90, %s91
    %p105 = scmp.eq.s32.totalorder %s15, 3
    %p106 = por %p104, %p105
    %p108 = scmp.ne.s32.totalorder %s91, %s107
    %p109 = scmp.eq.s32.totalorder %s15, 0
    %p110 = por %p108, %p109
    %p111 = scmp.le.s32.totalorder 1, %s9
    %p112 = scmp.lt.s32.totalorder %s9, 5
    %p113 = pnand %p111, %p112
    %p114 = pneg %p113
    // Predicated region
    $region9: #{_lambda_.24} parent=5 // pred_check
      _
    $region10: #{_lambda_.24} parent=5 // pred_check_branch
      %116 = sbr.rel (%p113) target = $region12
    $region11: #{_lambda_.24} parent=5 // pred_region
      %s117 = ssub.s32 %s9, 1
      // Predicated region
      $region13: #{_lambda_.24} parent=11 // pred_check
        %p118 = pneg %p56
      $region14: #{_lambda_.24} parent=11 // pred_check_branch
        %120 = sbr.rel (%p118) target = $region16
      $region15: #{_lambda_.24} parent=11 // pred_region
        _
      $region16: #{_lambda_.24} parent=11 // pred_fallthru
        _
      // Predicated region
      $region17: #{_lambda_.24} parent=11 // pred_check
        %p121 = pneg %p77
      $region18: #{_lambda_.24} parent=11 // pred_check_branch
        %123 = sbr.rel (%p121) target = $region20
      $region19: #{_lambda_.24} parent=11 // pred_region
        _
      $region20: #{_lambda_.24} parent=11 // pred_fallthru
        _
    $region12: #{_lambda_.24} parent=5 // pred_fallthru
      _
    %p124 = scmp.lt.s32.totalorder %s9, 4
    // Predicated region
    $region21: #{_lambda_.24} parent=5 // pred_check
      %p125 = pneg %p124
    $region22: #{_lambda_.24} parent=5 // pred_check_branch
      %127 = sbr.rel (%p125) target = $region24
    $region23: #{_lambda_.24} parent=5 // pred_region
      // Predicated region
      $region25: #{_lambda_.24} parent=23 // pred_check
        %p128 = pneg %p29
      $region26: #{_lambda_.24} parent=23 // pred_check_branch
        %130 = sbr.rel (%p128) target = $region28
      $region27: #{_lambda_.24} parent=23 // pred_region
        %p131 = scmp.lt.s32.totalorder %s9, 3
        %s132 = scalar_select %p131, %s9, 3
        %s133 = smul.addr %s132, 54
        %s134 = smul.addr %s133, 4
        %s135 = scalar_lea.vmem %s0, %s134
      $region28: #{_lambda_.24} parent=23 // pred_fallthru
        _
    $region24: #{_lambda_.24} parent=5 // pred_fallthru
      _
    %p136 = scmp.le.s32.totalorder 1, %s9
    %p137 = scmp.lt.s32.totalorder %s9, 5
    %p138 = pnand %p136, %p137
    %p139 = pneg %p138
    // Predicated region
    $region29: #{_lambda_.24} parent=5 // pred_check
      _
    $region30: #{_lambda_.24} parent=5 // pred_check_branch
      %141 = sbr.rel (%p138) target = $region32
    $region31: #{_lambda_.24} parent=5 // pred_region
      %s142 = ssub.s32 %s9, 1
      %p143 = scmp.lt.s32.totalorder %s14, 3
      %s144 = scalar_select %p143, %s14, 3
      %s145 = smul.addr %s144, 54
      %s146 = smul.addr %s145, 4
      %s147 = scalar_lea.vmem %s0, %s146
      %p148 = pneg %p35
      %p149 = pneg %p32
      %p150 = pneg %p56
      %p151 = pneg %p53
      %p152 = pneg %p77
      %p153 = pneg %p74
      %p154 = pneg %p103
      %p155 = pneg %p100
      %p156 = scmp.lt.s32.totalorder %s14, 3
      %s157 = scalar_select %p156, %s14, 3
      %s158 = smul.addr %s157, 4
      %s159 = smul.addr %s158, 4
      %s160 = scalar_lea.vmem %s3, %s159
      %p161 = scmp.lt.s32.totalorder %s14, 3
      %s162 = scalar_select %p161, %s14, 3
      %s163 = smul.addr %s162, 54
      %s164 = smul.addr %s163, 4
      %s165 = scalar_lea.vmem %s0, %s164
      %p166 = scmp.lt.s32.totalorder %s14, 3
      %s167 = scalar_select %p166, %s14, 3
      %s168 = smul.addr %s167, 4
      %s169 = smul.addr %s168, 4
      %s170 = scalar_lea.vmem %s3, %s169
      %v172 = vld [vmem:[%s1] sm:$0xff]
      %v173 = vld [vmem:[%s1 + $0x8] sm:$0xff]
      %v174 = vld [vmem:[%s1 + $0x10] sm:$0xff]
      %v175 = vld [vmem:[%s1 + $0x18] sm:$0xff]
      %v176 = vld [vmem:[%s1 + $0x20] sm:$0xff]
      %v177 = vld [vmem:[%s1 + $0x28] sm:$0xff]
      %v178 = vld [vmem:[%s1 + $0x30] sm:$0xff]
      %v179 = vld [vmem:[%s1 + $0x38] sm:$0xff]
      %v180 = vld [vmem:[%s165] sm:$0xf]
      %v181 = vld [vmem:[%s165 + $0x4] sm:$0xf]
      %v182 = vld [vmem:[%s165 + $0x8] sm:$0xf]
      %v183 = vld [vmem:[%s165 + $0xc] sm:$0xf]
      %v184 = vld [vmem:[%s165 + $0x10] sm:$0xf]
      %v185 = vld [vmem:[%s165 + $0x14] sm:$0xf]
      %v186 = vld [vmem:[%s165 + $0x18] sm:$0xf]
      %v187 = vld [vmem:[%s165 + $0x1c] sm:$0xf]
      %v188 = vld [vmem:[%s165 + $0x20] sm:$0xf]
      %v189 = vld [vmem:[%s165 + $0x24] sm:$0xf]
      %v190 = vld [vmem:[%s165 + $0x28] sm:$0xf]
      %v191 = vld [vmem:[%s165 + $0x2c] sm:$0xf]
      %v192 = vld [vmem:[%s165 + $0x30] sm:$0xf]
      %v193 = vld [vmem:[%s165 + $0x34] sm:$0xf]
      %v194 = vld [vmem:[%s165 + $0x38] sm:$0xf]
      %v195 = vld [vmem:[%s165 + $0x3c] sm:$0xf]
      %v196 = vld [vmem:[%s165 + $0x40] sm:$0xf]
      %v197 = vld [vmem:[%s165 + $0x44] sm:$0xf]
      %v198 = vld [vmem:[%s165 + $0x48] sm:$0xf]
      %v199 = vld [vmem:[%s165 + $0x4c] sm:$0xf]
      %v200 = vld [vmem:[%s165 + $0x50] sm:$0xf]
      %v201 = vld [vmem:[%s165 + $0x54] sm:$0xf]
      %v202 = vld [vmem:[%s165 + $0x58] sm:$0xf]
      %v203 = vld [vmem:[%s165 + $0x5c] sm:$0xf]
      %v204 = vld [vmem:[%s165 + $0x60] sm:$0xf]
      %v205 = vld [vmem:[%s165 + $0x64] sm:$0xf]
      %v206 = vld [vmem:[%s165 + $0x68] sm:$0xf]
      %v207 = vld [vmem:[%s165 + $0x6c] sm:$0xf]
      %v208 = vld [vmem:[%s165 + $0x70] sm:$0xf]
      %v209 = vld [vmem:[%s165 + $0x74] sm:$0xf]
      %v210 = vld [vmem:[%s165 + $0x78] sm:$0xf]
      %v211 = vld [vmem:[%s165 + $0x7c] sm:$0xf]
      %v212 = vld [vmem:[%s165 + $0x80] sm:$0xf]
      %v213 = vld [vmem:[%s165 + $0x84] sm:$0xf]
      %v214 = vld [vmem:[%s165 + $0x88] sm:$0xf]
      %v215 = vld [vmem:[%s165 + $0x8c] sm:$0xf]
      %v216 = vld [vmem:[%s165 + $0x90] sm:$0xf]
      %v217 = vld [vmem:[%s165 + $0x94] sm:$0xf]
      %v218 = vld [vmem:[%s165 + $0x98] sm:$0xf]
      %v219 = vld [vmem:[%s165 + $0x9c] sm:$0xf]
      %v220 = vld [vmem:[%s165 + $0xa0] sm:$0xf]
      %v221 = vld [vmem:[%s165 + $0xa4] sm:$0xf]
      %v222 = vld [vmem:[%s165 + $0xa8] sm:$0xf]
      %v223 = vld [vmem:[%s165 + $0xac] sm:$0xf]
      %v224 = vld [vmem:[%s165 + $0xb0] sm:$0xf]
      %v225 = vld [vmem:[%s165 + $0xb4] sm:$0xf]
      %v226 = vld [vmem:[%s165 + $0xb8] sm:$0xf]
      %v227 = vld [vmem:[%s165 + $0xbc] sm:$0xf]
      %v228 = vld [vmem:[%s165 + $0xc0] sm:$0xf]
      %v229 = vld [vmem:[%s165 + $0xc4] sm:$0xf]
      %v230 = vld [vmem:[%s165 + $0xc8] sm:$0xf]
      %v231 = vld [vmem:[%s165 + $0xcc] sm:$0xf]
      %v232 = vld [vmem:[%s165 + $0xd0] sm:$0xf]
      %v233 = vld [vmem:[%s165 + $0xd4] sm:$0xf]
      %v234 = vld [vmem:[%s2] sm:$0xff]
      %v235 = vld [vmem:[%s2 + $0x8] sm:$0xff]
      %v236 = vld [vmem:[%s2 + $0x10] sm:$0xff]
      %v237 = vld [vmem:[%s2 + $0x18] sm:$0xff]
      %239 = vset.pattern.permute.xlu0 0
      %240 = vperm.xlu0 %239, %v234
      %v241 = vpop.permute.xlu0 %240
      %244 = vset.pattern.permute.xlu0 0
      %245 = vperm.xlu0 %244, %v235
      %v246 = vpop.permute.xlu0 %245
      %249 = vset.pattern.permute.xlu0 0
      %250 = vperm.xlu0 %249, %v236
      %v251 = vpop.permute.xlu0 %250
      %254 = vset.pattern.permute.xlu0 0
      %255 = vperm.xlu0 %254, %v237
      %v256 = vpop.permute.xlu0 %255
      %v266 = vunpack.c.l.b16 %v172
      %v267 = vunpack.c.h.b16 %v172
      %v268 = vunpack.c.l.b16 %v173
      %v269 = vunpack.c.h.b16 %v173
      %v270 = vunpack.c.l.b16 %v174
      %v271 = vunpack.c.h.b16 %v174
      %v272 = vunpack.c.l.b16 %v175
      %v273 = vunpack.c.h.b16 %v175
      %v274 = vunpack.c.l.b16 %v176
      %v275 = vunpack.c.h.b16 %v176
      %v276 = vunpack.c.l.b16 %v177
      %v277 = vunpack.c.h.b16 %v177
      %v278 = vunpack.c.l.b16 %v178
      %v279 = vunpack.c.h.b16 %v178
      %v280 = vunpack.c.l.b16 %v179
      %v281 = vunpack.c.h.b16 %v179
      %v282 = vpack.c.b16 %v270, %v266
      %v283 = vpack.c.b16 %v271, %v267
      %v284 = vpack.c.b16 %v272, %v268
      %v285 = vpack.c.b16 %v273, %v269
      %v286 = vpack.c.b16 %v278, %v274
      %v287 = vpack.c.b16 %v279, %v275
      %v288 = vpack.c.b16 %v280, %v276
      %v289 = vpack.c.b16 %v281, %v277
      %v350 = vunpack.c.l.b16 %v180
      %v351 = vunpack.c.l.b16 %v181
      %v352 = vunpack.c.l.b16 %v182
      %v353 = vunpack.c.l.b16 %v183
      %v354 = vunpack.c.l.b16 %v184
      %v355 = vunpack.c.l.b16 %v185
      %v356 = vunpack.c.l.b16 %v186
      %v357 = vunpack.c.l.b16 %v187
      %v358 = vunpack.c.l.b16 %v188
      %v359 = vunpack.c.l.b16 %v189
      %v360 = vunpack.c.l.b16 %v190
      %v361 = vunpack.c.l.b16 %v191
      %v362 = vunpack.c.l.b16 %v192
      %v363 = vunpack.c.l.b16 %v193
      %v364 = vunpack.c.l.b16 %v194
      %v365 = vunpack.c.l.b16 %v195
      %v366 = vunpack.c.l.b16 %v196
      %v367 = vunpack.c.l.b16 %v197
      %v368 = vunpack.c.l.b16 %v198
      %v369 = vunpack.c.l.b16 %v199
      %v370 = vunpack.c.l.b16 %v200
      %v371 = vunpack.c.l.b16 %v201
      %v372 = vunpack.c.l.b16 %v202
      %v373 = vunpack.c.l.b16 %v203
      %v374 = vunpack.c.l.b16 %v204
      %v375 = vunpack.c.l.b16 %v205
      %v376 = vunpack.c.l.b16 %v206
      %v377 = vunpack.c.l.b16 %v207
      %v378 = vunpack.c.l.b16 %v208
      %v379 = vunpack.c.l.b16 %v209
      %v380 = vunpack.c.l.b16 %v210
      %v381 = vunpack.c.l.b16 %v211
      %v382 = vunpack.c.l.b16 %v212
      %v383 = vunpack.c.l.b16 %v213
      %v384 = vunpack.c.l.b16 %v214
      %v385 = vunpack.c.l.b16 %v215
      %v386 = vunpack.c.l.b16 %v216
      %v387 = vunpack.c.l.b16 %v217
      %v388 = vunpack.c.l.b16 %v218
      %v389 = vunpack.c.l.b16 %v219
      %v390 = vunpack.c.l.b16 %v220
      %v391 = vunpack.c.l.b16 %v221
      %v392 = vunpack.c.l.b16 %v222
      %v393 = vunpack.c.l.b16 %v223
      %v394 = vunpack.c.l.b16 %v224
      %v395 = vunpack.c.l.b16 %v225
      %v396 = vunpack.c.l.b16 %v226
      %v397 = vunpack.c.l.b16 %v227
      %v398 = vunpack.c.l.b16 %v228
      %v399 = vunpack.c.l.b16 %v229
      %v400 = vunpack.c.l.b16 %v230
      %v401 = vunpack.c.l.b16 %v231
      %v402 = vunpack.c.l.b16 %v232
      %v403 = vunpack.c.l.b16 %v233
      %v404 = vpack.c.b16 %v351, %v350
      %v405 = vpack.c.b16 %v353, %v352
      %v406 = vpack.c.b16 %v355, %v354
      %v407 = vpack.c.b16 %v357, %v356
      %v408 = vpack.c.b16 %v359, %v358
      %v409 = vpack.c.b16 %v361, %v360
      %v410 = vpack.c.b16 %v363, %v362
      %v411 = vpack.c.b16 %v365, %v364
      %v412 = vpack.c.b16 %v367, %v366
      %v413 = vpack.c.b16 %v369, %v368
      %v414 = vpack.c.b16 %v371, %v370
      %v415 = vpack.c.b16 %v373, %v372
      %v416 = vpack.c.b16 %v375, %v374
      %v417 = vpack.c.b16 %v377, %v376
      %v418 = vpack.c.b16 %v379, %v378
      %v419 = vpack.c.b16 %v381, %v380
      %v420 = vpack.c.b16 %v383, %v382
      %v421 = vpack.c.b16 %v385, %v384
      %v422 = vpack.c.b16 %v387, %v386
      %v423 = vpack.c.b16 %v389, %v388
      %v424 = vpack.c.b16 %v391, %v390
      %v425 = vpack.c.b16 %v393, %v392
      %v426 = vpack.c.b16 %v395, %v394
      %v427 = vpack.c.b16 %v397, %v396
      %v428 = vpack.c.b16 %v399, %v398
      %v429 = vpack.c.b16 %v401, %v400
      %v430 = vpack.c.b16 %v403, %v402
      %vm458 = vcmask 392192
      %v460 = vsel %vm458, %v285, 0
      %v463 = vsel %vm458, %v289, 0
      %465 = vmatpush.bf16.msra.mxu0 %v411
      %466 = vmatpush.bf16.msra.mxu0 %v410
      %467 = vmatpush.bf16.msra.mxu0 %v409
      %468 = vmatpush.bf16.msra.mxu0 %v408
      %469 = vmatpush.bf16.msra.mxu0 %v407
      %470 = vmatpush.bf16.msra.mxu0 %v406
      %471 = vmatpush.bf16.msra.mxu0 %v405
      %472 = vmatpush.bf16.msra.mxu0 %v404
      %473 = vmatmul.bf16.gmra.mxu0 %v282
      %v474 = vpop.f32.mrf.mxu0
      %v475 = vadd.f32 %v241, %v474
      %v476 = vpop.f32.mrf.mxu0
      %v477 = vadd.f32 %v246, %v476
      %478 = vmatmul.bf16.gmra.mxu0 %v286
      %v479 = vpop.f32.mrf.mxu0
      %v480 = vadd.f32 %v251, %v479
      %v481 = vpop.f32.mrf.mxu0
      %v482 = vadd.f32 %v256, %v481
      %483 = vdwg.mxu0
      %484 = vmatpush.bf16.msra.mxu0 %v419
      %485 = vmatpush.bf16.msra.mxu0 %v418
      %486 = vmatpush.bf16.msra.mxu0 %v417
      %487 = vmatpush.bf16.msra.mxu0 %v416
      %488 = vmatpush.bf16.msra.mxu0 %v415
      %489 = vmatpush.bf16.msra.mxu0 %v414
      %490 = vmatpush.bf16.msra.mxu0 %v413
      %491 = vmatpush.bf16.msra.mxu0 %v412
      %492 = vmatmul.bf16.gmra.mxu0 %v283
      %v493 = vpop.f32.mrf.mxu0
      %v494 = vadd.f32 %v475, %v493
      %v495 = vpop.f32.mrf.mxu0
      %v496 = vadd.f32 %v477, %v495
      %497 = vmatmul.bf16.gmra.mxu0 %v287
      %v498 = vpop.f32.mrf.mxu0
      %v499 = vadd.f32 %v480, %v498
      %v500 = vpop.f32.mrf.mxu0
      %v501 = vadd.f32 %v482, %v500
      %502 = vdwg.mxu0
      %503 = vmatpush.bf16.msra.mxu0 %v427
      %504 = vmatpush.bf16.msra.mxu0 %v426
      %505 = vmatpush.bf16.msra.mxu0 %v425
      %506 = vmatpush.bf16.msra.mxu0 %v424
      %507 = vmatpush.bf16.msra.mxu0 %v423
      %508 = vmatpush.bf16.msra.mxu0 %v422
      %509 = vmatpush.bf16.msra.mxu0 %v421
      %510 = vmatpush.bf16.msra.mxu0 %v420
      %511 = vmatmul.bf16.gmra.mxu0 %v284
      %v512 = vpop.f32.mrf.mxu0
      %v513 = vadd.f32 %v494, %v512
      %v514 = vpop.f32.mrf.mxu0
      %v515 = vadd.f32 %v496, %v514
      %516 = vmatmul.bf16.gmra.mxu0 %v288
      %v517 = vpop.f32.mrf.mxu0
      %v518 = vadd.f32 %v499, %v517
      %v519 = vpop.f32.mrf.mxu0
      %v520 = vadd.f32 %v501, %v519
      %521 = vdwg.mxu0
      %522 = vmatpush.bf16.msra.mxu0 0
      %523 = vmatpush.bf16.msra.mxu0 0
      %524 = vmatpush.bf16.msra.mxu0 0
      %525 = vmatpush.bf16.msra.mxu0 0
      %526 = vmatpush.bf16.msra.mxu0 0
      %527 = vmatpush.bf16.msra.mxu0 %v430
      %528 = vmatpush.bf16.msra.mxu0 %v429
      %529 = vmatpush.bf16.msra.mxu0 %v428
      %530 = vmatmul.bf16.gmra.mxu0 %v460
      %v531 = vpop.f32.mrf.mxu0
      %v532 = vadd.f32 %v513, %v531
      %v533 = vpop.f32.mrf.mxu0
      %v534 = vadd.f32 %v515, %v533
      %535 = vmatmul.bf16.gmra.mxu0 %v463
      %v536 = vpop.f32.mrf.mxu0
      %v537 = vadd.f32 %v518, %v536
      %v538 = vpop.f32.mrf.mxu0
      %v539 = vadd.f32 %v520, %v538
      %540 = vdwg.mxu0
      %v541 = vmax.f32 %v532, 0.0
      %v542 = vmax.f32 %v534, 0.0
      %v543 = vmax.f32 %v537, 0.0
      %v544 = vmax.f32 %v539, 0.0
      %v545 = vpack.c.bf16 %v541, %v541
      %v546 = vpack.c.bf16 %v542, %v542
      %v547 = vpack.c.bf16 %v543, %v543
      %v548 = vpack.c.bf16 %v544, %v544
      %vm549 = vcmask 27648
      %550 = vst.msk [vmem:[%s170] sm:$0xf] %vm549, %v545
      %551 = vst.msk [vmem:[%s170 + $0x4] sm:$0xf] %vm549, %v546
      %552 = vst.msk [vmem:[%s170 + $0x8] sm:$0xf] %vm549, %v547
      %553 = vst.msk [vmem:[%s170 + $0xc] sm:$0xf] %vm549, %v548
      %p554 = scmp.lt.s32.totalorder %s14, 3
      %s555 = scalar_select %p554, %s14, 3
      %s556 = smul.addr %s555, 4
      %s557 = smul.addr %s556, 4
      %s558 = scalar_lea.vmem %s3, %s557
      // Predicated region
      $region33: #{_lambda_.24} parent=31 // pred_check
        %p559 = pneg %p100
      $region34: #{_lambda_.24} parent=31 // pred_check_branch
        %561 = sbr.rel (%p559) target = $region36
      $region35: #{_lambda_.24} parent=31 // pred_region
        _
      $region36: #{_lambda_.24} parent=31 // pred_fallthru
        _
    $region32: #{_lambda_.24} parent=5 // pred_fallthru
      _
    %p562 = scmp.le.s32.totalorder 2, %s9
    // Predicated region
    $region37: #{_lambda_.24} parent=5 // pred_check
      %p563 = pneg %p562
    $region38: #{_lambda_.24} parent=5 // pred_check_branch
      %565 = sbr.rel (%p563) target = $region40
    $region39: #{_lambda_.24} parent=5 // pred_region
      %s566 = ssub.s32 %s9, 2
      // Predicated region
      $region41: #{_lambda_.24} parent=39 // pred_check
        %p567 = pneg %p106
      $region42: #{_lambda_.24} parent=39 // pred_check_branch
        %569 = sbr.rel (%p567) target = $region44
      $region43: #{_lambda_.24} parent=39 // pred_region
        %p570 = scmp.lt.s32.totalorder %s15, 3
        %s571 = scalar_select %p570, %s15, 3
        %s572 = smul.addr %s571, 4
        %s573 = smul.addr %s572, 4
        %s574 = scalar_lea.vmem %s3, %s573
      $region44: #{_lambda_.24} parent=39 // pred_fallthru
        _
    $region40: #{_lambda_.24} parent=5 // pred_fallthru
      _
  $region6: #{_lambda_.24} parent=0 // loop_footer
    %s13 = sadd.s32 1, %s9
  $region7: #{_lambda_.24} parent=0 // loop_footer_branch
    %8 = sbr.rel target = $region3
  $region8: #{_lambda_.24} parent=0 // loop_exit
    _

// kernel: _lambda_.29
$region0: #{_lambda_.29}
  #allocation0 [shape = 'u32[]', space=smem, size = 0x4, offset = 0x4, fixed_abs, tag = 'smem constant byte address 0x4 - core index']
  #allocation1 [shape = 'u32[72,128]{1,0:T(1,128)}', space=vmem, size = 0x9000, scoped, tag = 'internal scratch']
  %s0 = inlined_call_operand.vmem [shape: bf16[4,32,4], index: 0, kind: input, shape index: {}]
  %s1 = inlined_call_operand.vmem [shape: bf16[128,32], index: 1, kind: input, shape index: {}]
  %s2 = inlined_call_operand.vmem [shape: f32[128,1], index: 2, kind: input, shape index: {}]
  %s3 = inlined_call_operand.vmem [shape: bf16[4,128,4], index: 3, kind: output, shape index: {}]
  %s4 = sld [smem:[#allocation0]]
  $region45: #{_lambda_.29} parent=0
    _
  %s6 = ssub.s32 1, %s4
  %s7 = scalar_select 0, %s6, %s4
  loop: start=0, step=1, limit=6
  $region2: #{_lambda_.29} parent=0 // loop_pre_header
    _
  $region3: #{_lambda_.29} parent=0 // loop_header
    %s9 = sphi 0, %s13
    %p10 = scmp.ge.s32.totalorder %s9, 6
    %s19 = sphi 0, %s21
    %s22 = sphi 0, %s19
    %s23 = sphi 0, %s22
    %s39 = sphi 0, %s23
    %s43 = sphi 0, %s43
    %s45 = sphi 0, %s43
    %s46 = sphi 0, %s45
    %s60 = sphi 0, %s46
    %s64 = sphi 0, %s64
    %s66 = sphi 0, %s64
    %s67 = sphi 0, %s66
    %s81 = sphi 0, %s67
    %s87 = sphi 0, %s89
    %s90 = sphi 0, %s87
    %s91 = sphi 0, %s90
    %s107 = sphi 0, %s91
  $region4: #{_lambda_.29} parent=0 // loop_header_branch
    %12 = sbr.rel (%p10) target = $region8
  $region5: #{_lambda_.29} parent=0 // loop_body
    %s14 = ssub.s32 %s9, 1
    %s15 = ssub.s32 %s9, 2
    %s16 = sadd.s32 %s9, 1
    %s17 = ssub.s32 %s9, %s16
    %p18 = scmp.eq.s32.totalorder %s17, 0
    %s20 = sadd.s32 %s19, 1
    %s21 = scalar_select %p18, %s19, %s20
    %p24 = pneg %p18
    %p25 = scmp.eq.s32.totalorder %s9, 3
    %p26 = por %p24, %p25
    %p27 = scmp.ne.s32.totalorder %s19, %s22
    %p28 = scmp.eq.s32.totalorder %s9, 0
    %p29 = por %p27, %p28
    %p30 = scmp.ne.s32.totalorder %s19, %s22
    %p31 = scmp.eq.s32.totalorder %s14, 3
    %p32 = por %p30, %p31
    %p33 = scmp.ne.s32.totalorder %s22, %s23
    %p34 = scmp.eq.s32.totalorder %s14, 0
    %p35 = por %p33, %p34
    %p36 = scmp.ne.s32.totalorder %s22, %s23
    %p37 = scmp.eq.s32.totalorder %s15, 3
    %p38 = por %p36, %p37
    %p40 = scmp.ne.s32.totalorder %s23, %s39
    %p41 = scmp.eq.s32.totalorder %s15, 0
    %p42 = por %p40, %p41
    %s44 = sadd.s32 %s43, 1
    %p47 = scmp.eq.s32.totalorder %s9, 3
    %p48 = scmp.ne.s32.totalorder %s43, %s45
    %p49 = scmp.eq.s32.totalorder %s9, 0
    %p50 = por %p48, %p49
    %p51 = scmp.ne.s32.totalorder %s43, %s45
    %p52 = scmp.eq.s32.totalorder %s14, 3
    %p53 = por %p51, %p52
    %p54 = scmp.ne.s32.totalorder %s45, %s46
    %p55 = scmp.eq.s32.totalorder %s14, 0
    %p56 = por %p54, %p55
    %p57 = scmp.ne.s32.totalorder %s45, %s46
    %p58 = scmp.eq.s32.totalorder %s15, 3
    %p59 = por %p57, %p58
    %p61 = scmp.ne.s32.totalorder %s46, %s60
    %p62 = scmp.eq.s32.totalorder %s15, 0
    %p63 = por %p61, %p62
    %s65 = sadd.s32 %s64, 1
    %p68 = scmp.eq.s32.totalorder %s9, 3
    %p69 = scmp.ne.s32.totalorder %s64, %s66
    %p70 = scmp.eq.s32.totalorder %s9, 0
    %p71 = por %p69, %p70
    %p72 = scmp.ne.s32.totalorder %s64, %s66
    %p73 = scmp.eq.s32.totalorder %s14, 3
    %p74 = por %p72, %p73
    %p75 = scmp.ne.s32.totalorder %s66, %s67
    %p76 = scmp.eq.s32.totalorder %s14, 0
    %p77 = por %p75, %p76
    %p78 = scmp.ne.s32.totalorder %s66, %s67
    %p79 = scmp.eq.s32.totalorder %s15, 3
    %p80 = por %p78, %p79
    %p82 = scmp.ne.s32.totalorder %s67, %s81
    %p83 = scmp.eq.s32.totalorder %s15, 0
    %p84 = por %p82, %p83
    %s85 = ssub.s32 %s9, %s16
    %p86 = scmp.eq.s32.totalorder %s85, 0
    %s88 = sadd.s32 %s87, 1
    %s89 = scalar_select %p86, %s87, %s88
    %p92 = pneg %p86
    %p93 = scmp.eq.s32.totalorder %s9, 3
    %p94 = por %p92, %p93
    %p95 = scmp.ne.s32.totalorder %s87, %s90
    %p96 = scmp.eq.s32.totalorder %s9, 0
    %p97 = por %p95, %p96
    %p98 = scmp.ne.s32.totalorder %s87, %s90
    %p99 = scmp.eq.s32.totalorder %s14, 3
    %p100 = por %p98, %p99
    %p101 = scmp.ne.s32.totalorder %s90, %s91
    %p102 = scmp.eq.s32.totalorder %s14, 0
    %p103 = por %p101, %p102
    %p104 = scmp.ne.s32.totalorder %s90, %s91
    %p105 = scmp.eq.s32.totalorder %s15, 3
    %p106 = por %p104, %p105
    %p108 = scmp.ne.s32.totalorder %s91, %s107
    %p109 = scmp.eq.s32.totalorder %s15, 0
    %p110 = por %p108, %p109
    %p111 = scmp.le.s32.totalorder 1, %s9
    %p112 = scmp.lt.s32.totalorder %s9, 5
    %p113 = pnand %p111, %p112
    %p114 = pneg %p113
    // Predicated region
    $region9: #{_lambda_.29} parent=5 // pred_check
      _
    $region10: #{_lambda_.29} parent=5 // pred_check_branch
      %116 = sbr.rel (%p113) target = $region12
    $region11: #{_lambda_.29} parent=5 // pred_region
      %s117 = ssub.s32 %s9, 1
      // Predicated region
      $region13: #{_lambda_.29} parent=11 // pred_check
        %p118 = pneg %p56
      $region14: #{_lambda_.29} parent=11 // pred_check_branch
        %120 = sbr.rel (%p118) target = $region16
      $region15: #{_lambda_.29} parent=11 // pred_region
        _
      $region16: #{_lambda_.29} parent=11 // pred_fallthru
        _
      // Predicated region
      $region17: #{_lambda_.29} parent=11 // pred_check
        %p121 = pneg %p77
      $region18: #{_lambda_.29} parent=11 // pred_check_branch
        %123 = sbr.rel (%p121) target = $region20
      $region19: #{_lambda_.29} parent=11 // pred_region
        _
      $region20: #{_lambda_.29} parent=11 // pred_fallthru
        _
    $region12: #{_lambda_.29} parent=5 // pred_fallthru
      _
    %p124 = scmp.lt.s32.totalorder %s9, 4
    // Predicated region
    $region21: #{_lambda_.29} parent=5 // pred_check
      %p125 = pneg %p124
    $region22: #{_lambda_.29} parent=5 // pred_check_branch
      %127 = sbr.rel (%p125) target = $region24
    $region23: #{_lambda_.29} parent=5 // pred_region
      // Predicated region
      $region25: #{_lambda_.29} parent=23 // pred_check
        %p128 = pneg %p29
      $region26: #{_lambda_.29} parent=23 // pred_check_branch
        %130 = sbr.rel (%p128) target = $region28
      $region27: #{_lambda_.29} parent=23 // pred_region
        %p131 = scmp.lt.s32.totalorder %s9, 3
        %s132 = scalar_select %p131, %s9, 3
        %s133 = smul.addr %s132, 4
        %s134 = smul.addr %s133, 4
        %s135 = scalar_lea.vmem %s0, %s134
      $region28: #{_lambda_.29} parent=23 // pred_fallthru
        _
    $region24: #{_lambda_.29} parent=5 // pred_fallthru
      _
    %p136 = scmp.le.s32.totalorder 1, %s9
    %p137 = scmp.lt.s32.totalorder %s9, 5
    %p138 = pnand %p136, %p137
    %p139 = pneg %p138
    // Predicated region
    $region29: #{_lambda_.29} parent=5 // pred_check
      _
    $region30: #{_lambda_.29} parent=5 // pred_check_branch
      %141 = sbr.rel (%p138) target = $region32
    $region31: #{_lambda_.29} parent=5 // pred_region
      %s142 = ssub.s32 %s9, 1
      %p143 = scmp.lt.s32.totalorder %s14, 3
      %s144 = scalar_select %p143, %s14, 3
      %s145 = smul.addr %s144, 4
      %s146 = smul.addr %s145, 4
      %s147 = scalar_lea.vmem %s0, %s146
      %p148 = pneg %p35
      %p149 = pneg %p32
      %p150 = pneg %p56
      %p151 = pneg %p53
      %p152 = pneg %p77
      %p153 = pneg %p74
      %p154 = pneg %p103
      %p155 = pneg %p100
      %p156 = scmp.lt.s32.totalorder %s14, 3
      %s157 = scalar_select %p156, %s14, 3
      %s158 = smul.addr %s157, 16
      %s159 = smul.addr %s158, 4
      %s160 = scalar_lea.vmem %s3, %s159
      %p161 = scmp.lt.s32.totalorder %s14, 3
      %s162 = scalar_select %p161, %s14, 3
      %s163 = smul.addr %s162, 4
      %s164 = smul.addr %s163, 4
      %s165 = scalar_lea.vmem %s0, %s164
      %p166 = scmp.lt.s32.totalorder %s14, 3
      %s167 = scalar_select %p166, %s14, 3
      %s168 = smul.addr %s167, 16
      %s169 = smul.addr %s168, 4
      %s170 = scalar_lea.vmem %s3, %s169
      %v172 = vld [vmem:[%s1] sm:$0xf]
      %v173 = vld [vmem:[%s1 + $0x4] sm:$0xf]
      %v174 = vld [vmem:[%s1 + $0x8] sm:$0xf]
      %v175 = vld [vmem:[%s1 + $0xc] sm:$0xf]
      %v176 = vld [vmem:[%s1 + $0x10] sm:$0xf]
      %v177 = vld [vmem:[%s1 + $0x14] sm:$0xf]
      %v178 = vld [vmem:[%s1 + $0x18] sm:$0xf]
      %v179 = vld [vmem:[%s1 + $0x1c] sm:$0xf]
      %v180 = vld [vmem:[%s1 + $0x20] sm:$0xf]
      %v181 = vld [vmem:[%s1 + $0x24] sm:$0xf]
      %v182 = vld [vmem:[%s1 + $0x28] sm:$0xf]
      %v183 = vld [vmem:[%s1 + $0x2c] sm:$0xf]
      %v184 = vld [vmem:[%s1 + $0x30] sm:$0xf]
      %v185 = vld [vmem:[%s1 + $0x34] sm:$0xf]
      %v186 = vld [vmem:[%s1 + $0x38] sm:$0xf]
      %v187 = vld [vmem:[%s1 + $0x3c] sm:$0xf]
      %v188 = vld [vmem:[%s165] sm:$0xf]
      %v189 = vld [vmem:[%s165 + $0x4] sm:$0xf]
      %v190 = vld [vmem:[%s165 + $0x8] sm:$0xf]
      %v191 = vld [vmem:[%s165 + $0xc] sm:$0xf]
      %v192 = vld [vmem:[%s2] sm:$0xff]
      %v193 = vld [vmem:[%s2 + $0x8] sm:$0xff]
      %v194 = vld [vmem:[%s2 + $0x10] sm:$0xff]
      %v195 = vld [vmem:[%s2 + $0x18] sm:$0xff]
      %v196 = vld [vmem:[%s2 + $0x20] sm:$0xff]
      %v197 = vld [vmem:[%s2 + $0x28] sm:$0xff]
      %v198 = vld [vmem:[%s2 + $0x30] sm:$0xff]
      %v199 = vld [vmem:[%s2 + $0x38] sm:$0xff]
      %v200 = vld [vmem:[%s2 + $0x40] sm:$0xff]
      %v201 = vld [vmem:[%s2 + $0x48] sm:$0xff]
      %v202 = vld [vmem:[%s2 + $0x50] sm:$0xff]
      %v203 = vld [vmem:[%s2 + $0x58] sm:$0xff]
      %v204 = vld [vmem:[%s2 + $0x60] sm:$0xff]
      %v205 = vld [vmem:[%s2 + $0x68] sm:$0xff]
      %v206 = vld [vmem:[%s2 + $0x70] sm:$0xff]
      %v207 = vld [vmem:[%s2 + $0x78] sm:$0xff]
      %209 = vset.pattern.permute.xlu0 0
      %210 = vperm.xlu0 %209, %v192
      %v211 = vpop.permute.xlu0 %210
      %214 = vset.pattern.permute.xlu0 0
      %215 = vperm.xlu0 %214, %v193
      %v216 = vpop.permute.xlu0 %215
      %219 = vset.pattern.permute.xlu0 0
      %220 = vperm.xlu0 %219, %v194
      %v221 = vpop.permute.xlu0 %220
      %224 = vset.pattern.permute.xlu0 0
      %225 = vperm.xlu0 %224, %v195
      %v226 = vpop.permute.xlu0 %225
      %229 = vset.pattern.permute.xlu0 0
      %230 = vperm.xlu0 %229, %v196
      %v231 = vpop.permute.xlu0 %230
      %234 = vset.pattern.permute.xlu0 0
      %235 = vperm.xlu0 %234, %v197
      %v236 = vpop.permute.xlu0 %235
      %239 = vset.pattern.permute.xlu0 0
      %240 = vperm.xlu0 %239, %v198
      %v241 = vpop.permute.xlu0 %240
      %244 = vset.pattern.permute.xlu0 0
      %245 = vperm.xlu0 %244, %v199
      %v246 = vpop.permute.xlu0 %245
      %249 = vset.pattern.permute.xlu0 0
      %250 = vperm.xlu0 %249, %v200
      %v251 = vpop.permute.xlu0 %250
      %254 = vset.pattern.permute.xlu0 0
      %255 = vperm.xlu0 %254, %v201
      %v256 = vpop.permute.xlu0 %255
      %259 = vset.pattern.permute.xlu0 0
      %260 = vperm.xlu0 %259, %v202
      %v261 = vpop.permute.xlu0 %260
      %264 = vset.pattern.permute.xlu0 0
      %265 = vperm.xlu0 %264, %v203
      %v266 = vpop.permute.xlu0 %265
      %269 = vset.pattern.permute.xlu0 0
      %270 = vperm.xlu0 %269, %v204
      %v271 = vpop.permute.xlu0 %270
      %274 = vset.pattern.permute.xlu0 0
      %275 = vperm.xlu0 %274, %v205
      %v276 = vpop.permute.xlu0 %275
      %279 = vset.pattern.permute.xlu0 0
      %280 = vperm.xlu0 %279, %v206
      %v281 = vpop.permute.xlu0 %280
      %284 = vset.pattern.permute.xlu0 0
      %285 = vperm.xlu0 %284, %v207
      %v286 = vpop.permute.xlu0 %285
      %v304 = vunpack.c.l.b16 %v172
      %v305 = vunpack.c.l.b16 %v173
      %v306 = vunpack.c.l.b16 %v174
      %v307 = vunpack.c.l.b16 %v175
      %v308 = vunpack.c.l.b16 %v176
      %v309 = vunpack.c.l.b16 %v177
      %v310 = vunpack.c.l.b16 %v178
      %v311 = vunpack.c.l.b16 %v179
      %v312 = vunpack.c.l.b16 %v180
      %v313 = vunpack.c.l.b16 %v181
      %v314 = vunpack.c.l.b16 %v182
      %v315 = vunpack.c.l.b16 %v183
      %v316 = vunpack.c.l.b16 %v184
      %v317 = vunpack.c.l.b16 %v185
      %v318 = vunpack.c.l.b16 %v186
      %v319 = vunpack.c.l.b16 %v187
      %v320 = vpack.c.b16 %v305, %v304
      %v321 = vpack.c.b16 %v307, %v306
      %v322 = vpack.c.b16 %v309, %v308
      %v323 = vpack.c.b16 %v311, %v310
      %v324 = vpack.c.b16 %v313, %v312
      %v325 = vpack.c.b16 %v315, %v314
      %v326 = vpack.c.b16 %v317, %v316
      %v327 = vpack.c.b16 %v319, %v318
      %v332 = vunpack.c.l.b16 %v188
      %v333 = vunpack.c.l.b16 %v189
      %v334 = vunpack.c.l.b16 %v190
      %v335 = vunpack.c.l.b16 %v191
      %v336 = vpack.c.b16 %v333, %v332
      %v337 = vpack.c.b16 %v335, %v334
      %vm340 = vcmask 261120
      %v342 = vsel %vm340, %v320, 0
      %v345 = vsel %vm340, %v321, 0
      %v348 = vsel %vm340, %v322, 0
      %v351 = vsel %vm340, %v323, 0
      %v354 = vsel %vm340, %v324, 0
      %v357 = vsel %vm340, %v325, 0
      %v360 = vsel %vm340, %v326, 0
      %v363 = vsel %vm340, %v327, 0
      %365 = vmatpush.bf16.msra.mxu0 0
      %366 = vmatpush.bf16.msra.mxu0 0
      %367 = vmatpush.bf16.msra.mxu0 0
      %368 = vmatpush.bf16.msra.mxu0 0
      %369 = vmatpush.bf16.msra.mxu0 0
      %370 = vmatpush.bf16.msra.mxu0 0
      %371 = vmatpush.bf16.msra.mxu0 %v337
      %372 = vmatpush.bf16.msra.mxu0 %v336
      %373 = vmatmul.bf16.gmra.mxu0 %v342
      %v374 = vpop.f32.mrf.mxu0
      %v375 = vadd.f32 %v211, %v374
      %v376 = vpop.f32.mrf.mxu0
      %v377 = vadd.f32 %v216, %v376
      %378 = vmatmul.bf16.gmra.mxu0 %v345
      %v379 = vpop.f32.mrf.mxu0
      %v380 = vadd.f32 %v221, %v379
      %v381 = vpop.f32.mrf.mxu0
      %v382 = vadd.f32 %v226, %v381
      %383 = vmatmul.bf16.gmra.mxu0 %v348
      %v384 = vpop.f32.mrf.mxu0
      %v385 = vadd.f32 %v231, %v384
      %v386 = vpop.f32.mrf.mxu0
      %v387 = vadd.f32 %v236, %v386
      %388 = vmatmul.bf16.gmra.mxu0 %v351
      %v389 = vpop.f32.mrf.mxu0
      %v390 = vadd.f32 %v241, %v389
      %v391 = vpop.f32.mrf.mxu0
      %v392 = vadd.f32 %v246, %v391
      %393 = vmatmul.bf16.gmra.mxu0 %v354
      %v394 = vpop.f32.mrf.mxu0
      %v395 = vadd.f32 %v251, %v394
      %v396 = vpop.f32.mrf.mxu0
      %v397 = vadd.f32 %v256, %v396
      %398 = vmatmul.bf16.gmra.mxu0 %v357
      %v399 = vpop.f32.mrf.mxu0
      %v400 = vadd.f32 %v261, %v399
      %v401 = vpop.f32.mrf.mxu0
      %v402 = vadd.f32 %v266, %v401
      %403 = vmatmul.bf16.gmra.mxu0 %v360
      %v404 = vpop.f32.mrf.mxu0
      %v405 = vadd.f32 %v271, %v404
      %v406 = vpop.f32.mrf.mxu0
      %v407 = vadd.f32 %v276, %v406
      %408 = vmatmul.bf16.gmra.mxu0 %v363
      %v409 = vpop.f32.mrf.mxu0
      %v410 = vadd.f32 %v281, %v409
      %v411 = vpop.f32.mrf.mxu0
      %v412 = vadd.f32 %v286, %v411
      %413 = vdwg.mxu0
      %v414 = vmax.f32 %v375, 0.0
      %v415 = vmax.f32 %v377, 0.0
      %v416 = vmax.f32 %v380, 0.0
      %v417 = vmax.f32 %v382, 0.0
      %v418 = vmax.f32 %v385, 0.0
      %v419 = vmax.f32 %v387, 0.0
      %v420 = vmax.f32 %v390, 0.0
      %v421 = vmax.f32 %v392, 0.0
      %v422 = vmax.f32 %v395, 0.0
      %v423 = vmax.f32 %v397, 0.0
      %v424 = vmax.f32 %v400, 0.0
      %v425 = vmax.f32 %v402, 0.0
      %v426 = vmax.f32 %v405, 0.0
      %v427 = vmax.f32 %v407, 0.0
      %v428 = vmax.f32 %v410, 0.0
      %v429 = vmax.f32 %v412, 0.0
      %v430 = vpack.c.bf16 %v414, %v414
      %v431 = vpack.c.bf16 %v415, %v415
      %v432 = vpack.c.bf16 %v416, %v416
      %v433 = vpack.c.bf16 %v417, %v417
      %v434 = vpack.c.bf16 %v418, %v418
      %v435 = vpack.c.bf16 %v419, %v419
      %v436 = vpack.c.bf16 %v420, %v420
      %v437 = vpack.c.bf16 %v421, %v421
      %v438 = vpack.c.bf16 %v422, %v422
      %v439 = vpack.c.bf16 %v423, %v423
      %v440 = vpack.c.bf16 %v424, %v424
      %v441 = vpack.c.bf16 %v425, %v425
      %v442 = vpack.c.bf16 %v426, %v426
      %v443 = vpack.c.bf16 %v427, %v427
      %v444 = vpack.c.bf16 %v428, %v428
      %v445 = vpack.c.bf16 %v429, %v429
      %vm446 = vcmask 27648
      %447 = vst.msk [vmem:[%s170] sm:$0xf] %vm446, %v430
      %448 = vst.msk [vmem:[%s170 + $0x4] sm:$0xf] %vm446, %v431
      %449 = vst.msk [vmem:[%s170 + $0x8] sm:$0xf] %vm446, %v432
      %450 = vst.msk [vmem:[%s170 + $0xc] sm:$0xf] %vm446, %v433
      %451 = vst.msk [vmem:[%s170 + $0x10] sm:$0xf] %vm446, %v434
      %452 = vst.msk [vmem:[%s170 + $0x14] sm:$0xf] %vm446, %v435
      %453 = vst.msk [vmem:[%s170 + $0x18] sm:$0xf] %vm446, %v436
      %454 = vst.msk [vmem:[%s170 + $0x1c] sm:$0xf] %vm446, %v437
      %455 = vst.msk [vmem:[%s170 + $0x20] sm:$0xf] %vm446, %v438
      %456 = vst.msk [vmem:[%s170 + $0x24] sm:$0xf] %vm446, %v439
      %457 = vst.msk [vmem:[%s170 + $0x28] sm:$0xf] %vm446, %v440
      %458 = vst.msk [vmem:[%s170 + $0x2c] sm:$0xf] %vm446, %v441
      %459 = vst.msk [vmem:[%s170 + $0x30] sm:$0xf] %vm446, %v442
      %460 = vst.msk [vmem:[%s170 + $0x34] sm:$0xf] %vm446, %v443
      %461 = vst.msk [vmem:[%s170 + $0x38] sm:$0xf] %vm446, %v444
      %462 = vst.msk [vmem:[%s170 + $0x3c] sm:$0xf] %vm446, %v445
      %p463 = scmp.lt.s32.totalorder %s14, 3
      %s464 = scalar_select %p463, %s14, 3
      %s465 = smul.addr %s464, 16
      %s466 = smul.addr %s465, 4
      %s467 = scalar_lea.vmem %s3, %s466
      // Predicated region
      $region33: #{_lambda_.29} parent=31 // pred_check
        %p468 = pneg %p100
      $region34: #{_lambda_.29} parent=31 // pred_check_branch
        %470 = sbr.rel (%p468) target = $region36
      $region35: #{_lambda_.29} parent=31 // pred_region
        _
      $region36: #{_lambda_.29} parent=31 // pred_fallthru
        _
    $region32: #{_lambda_.29} parent=5 // pred_fallthru
      _
    %p471 = scmp.le.s32.totalorder 2, %s9
    // Predicated region
    $region37: #{_lambda_.29} parent=5 // pred_check
      %p472 = pneg %p471
    $region38: #{_lambda_.29} parent=5 // pred_check_branch
      %474 = sbr.rel (%p472) target = $region40
    $region39: #{_lambda_.29} parent=5 // pred_region
      %s475 = ssub.s32 %s9, 2
      // Predicated region
      $region41: #{_lambda_.29} parent=39 // pred_check
        %p476 = pneg %p106
      $region42: #{_lambda_.29} parent=39 // pred_check_branch
        %478 = sbr.rel (%p476) target = $region44
      $region43: #{_lambda_.29} parent=39 // pred_region
        %p479 = scmp.lt.s32.totalorder %s15, 3
        %s480 = scalar_select %p479, %s15, 3
        %s481 = smul.addr %s480, 16
        %s482 = smul.addr %s481, 4
        %s483 = scalar_lea.vmem %s3, %s482
      $region44: #{_lambda_.29} parent=39 // pred_fallthru
        _
    $region40: #{_lambda_.29} parent=5 // pred_fallthru
      _
  $region6: #{_lambda_.29} parent=0 // loop_footer
    %s13 = sadd.s32 1, %s9
  $region7: #{_lambda_.29} parent=0 // loop_footer_branch
    %8 = sbr.rel target = $region3
  $region8: #{_lambda_.29} parent=0 // loop_exit
    _

// kernel: _lambda_.25
$region0: #{_lambda_.25}
  #allocation0 [shape = 'u32[]', space=smem, size = 0x4, offset = 0x4, fixed_abs, tag = 'smem constant byte address 0x4 - core index']
  #allocation1 [shape = 'u32[72,128]{1,0:T(1,128)}', space=vmem, size = 0x9000, scoped, tag = 'internal scratch']
  #allocation2 [shape = 'bf16[288,4]{1,0:T(8,128)(2,1)}', space=vmem, size = 0x12000, scoped, tag = 'scratch operand']
  #allocation3 [shape = 'f32[32,4]{1,0:T(8,128)}', space=vmem, size = 0x4000, scoped, tag = 'scratch operand']
  %s0 = inlined_call_operand.vmem [shape: bf16[2,4,32,16], index: 0, kind: input, shape index: {}]
  %s1 = inlined_call_operand.vmem [shape: bf16[3,32,288], index: 1, kind: input, shape index: {}]
  %s2 = inlined_call_operand.vmem [shape: f32[32,1], index: 2, kind: input, shape index: {}]
  %s3 = inlined_call_operand.vmem [shape: bf16[2,2,32,4], index: 3, kind: output, shape index: {}]
  %s4 = sld [smem:[#allocation0]]
  $region53: #{_lambda_.25} parent=0
    _
  %s6 = ssub.s32 1, %s4
  %s7 = scalar_select 0, %s6, %s4
  loop: start=0, step=1, limit=14
  $region2: #{_lambda_.25} parent=0 // loop_pre_header
    _
  $region3: #{_lambda_.25} parent=0 // loop_header
    %s9 = sphi 0, %s13
    %p10 = scmp.ge.s32.totalorder %s9, 14
    %s16 = sphi 0, %s35
    %s17 = sphi 0, %s31
    %s18 = sphi 0, %s27
    %s19 = sphi 0, %s16
    %s20 = sphi 0, %s17
    %s21 = sphi 0, %s18
    %s22 = sphi 0, %s19
    %s23 = sphi 0, %s20
    %s24 = sphi 0, %s21
    %s42 = sphi 0, %s44
    %s45 = sphi 0, %s42
    %s46 = sphi 0, %s45
    %s62 = sphi 0, %s46
    %s68 = sphi 0, %s70
    %s71 = sphi 0, %s68
    %s72 = sphi 0, %s71
    %s88 = sphi 0, %s72
    %s92 = sphi 0, %s92
    %s94 = sphi 0, %s92
    %s95 = sphi 0, %s94
    %s109 = sphi 0, %s95
    %s117 = sphi 0, %s119
    %s120 = sphi 0, %s117
    %s121 = sphi 0, %s120
    %s137 = sphi 0, %s121
  $region4: #{_lambda_.25} parent=0 // loop_header_branch
    %12 = sbr.rel (%p10) target = $region8
  $region5: #{_lambda_.25} parent=0 // loop_body
    %s14 = ssub.s32 %s9, 1
    %s15 = ssub.s32 %s9, 2
    %s25 = sadd.s32 1, %s18
    %p26 = scmp.ge.s32.totalorder %s25, 3
    %s27 = scalar_select %p26, 0, %s25
    %s28 = sadd.s32 1, %s17
    %s29 = scalar_select %p26, %s28, %s17
    %p30 = scmp.ge.s32.totalorder %s29, 2
    %s31 = scalar_select %p30, 0, %s29
    %s32 = sadd.s32 1, %s16
    %s33 = scalar_select %p30, %s32, %s16
    %p34 = scmp.ge.s32.totalorder %s33, 2
    %s35 = scalar_select %p34, 0, %s33
    %s36 = sadd.s32 %s17, %s18
    %s37 = sadd.s32 %s31, %s27
    %s38 = ssub.s32 %s16, %s35
    %s39 = ssub.s32 %s36, %s37
    %s40 = sor.u32 %s38, %s39
    %p41 = scmp.eq.s32.totalorder %s40, 0
    %s43 = sadd.s32 %s42, 1
    %s44 = scalar_select %p41, %s42, %s43
    %p47 = pneg %p41
    %p48 = scmp.eq.s32.totalorder %s9, 11
    %p49 = por %p47, %p48
    %p50 = scmp.ne.s32.totalorder %s42, %s45
    %p51 = scmp.eq.s32.totalorder %s9, 0
    %p52 = por %p50, %p51
    %p53 = scmp.ne.s32.totalorder %s42, %s45
    %p54 = scmp.eq.s32.totalorder %s14, 11
    %p55 = por %p53, %p54
    %p56 = scmp.ne.s32.totalorder %s45, %s46
    %p57 = scmp.eq.s32.totalorder %s14, 0
    %p58 = por %p56, %p57
    %p59 = scmp.ne.s32.totalorder %s45, %s46
    %p60 = scmp.eq.s32.totalorder %s15, 11
    %p61 = por %p59, %p60
    %p63 = scmp.ne.s32.totalorder %s46, %s62
    %p64 = scmp.eq.s32.totalorder %s15, 0
    %p65 = por %p63, %p64
    %s66 = ssub.s32 %s18, %s27
    %p67 = scmp.eq.s32.totalorder %s66, 0
    %s69 = sadd.s32 %s68, 1
    %s70 = scalar_select %p67, %s68, %s69
    %p73 = pneg %p67
    %p74 = scmp.eq.s32.totalorder %s9, 11
    %p75 = por %p73, %p74
    %p76 = scmp.ne.s32.totalorder %s68, %s71
    %p77 = scmp.eq.s32.totalorder %s9, 0
    %p78 = por %p76, %p77
    %p79 = scmp.ne.s32.totalorder %s68, %s71
    %p80 = scmp.eq.s32.totalorder %s14, 11
    %p81 = por %p79, %p80
    %p82 = scmp.ne.s32.totalorder %s71, %s72
    %p83 = scmp.eq.s32.totalorder %s14, 0
    %p84 = por %p82, %p83
    %p85 = scmp.ne.s32.totalorder %s71, %s72
    %p86 = scmp.eq.s32.totalorder %s15, 11
    %p87 = por %p85, %p86
    %p89 = scmp.ne.s32.totalorder %s72, %s88
    %p90 = scmp.eq.s32.totalorder %s15, 0
    %p91 = por %p89, %p90
    %s93 = sadd.s32 %s92, 1
    %p96 = scmp.eq.s32.totalorder %s9, 11
    %p97 = scmp.ne.s32.totalorder %s92, %s94
    %p98 = scmp.eq.s32.totalorder %s9, 0
    %p99 = por %p97, %p98
    %p100 = scmp.ne.s32.totalorder %s92, %s94
    %p101 = scmp.eq.s32.totalorder %s14, 11
    %p102 = por %p100, %p101
    %p103 = scmp.ne.s32.totalorder %s94, %s95
    %p104 = scmp.eq.s32.totalorder %s14, 0
    %p105 = por %p103, %p104
    %p106 = scmp.ne.s32.totalorder %s94, %s95
    %p107 = scmp.eq.s32.totalorder %s15, 11
    %p108 = por %p106, %p107
    %p110 = scmp.ne.s32.totalorder %s95, %s109
    %p111 = scmp.eq.s32.totalorder %s15, 0
    %p112 = por %p110, %p111
    %s113 = ssub.s32 %s16, %s35
    %s114 = ssub.s32 %s17, %s31
    %s115 = sor.u32 %s113, %s114
    %p116 = scmp.eq.s32.totalorder %s115, 0
    %s118 = sadd.s32 %s117, 1
    %s119 = scalar_select %p116, %s117, %s118
    %p122 = pneg %p116
    %p123 = scmp.eq.s32.totalorder %s9, 11
    %p124 = por %p122, %p123
    %p125 = scmp.ne.s32.totalorder %s117, %s120
    %p126 = scmp.eq.s32.totalorder %s9, 0
    %p127 = por %p125, %p126
    %p128 = scmp.ne.s32.totalorder %s117, %s120
    %p129 = scmp.eq.s32.totalorder %s14, 11
    %p130 = por %p128, %p129
    %p131 = scmp.ne.s32.totalorder %s120, %s121
    %p132 = scmp.eq.s32.totalorder %s14, 0
    %p133 = por %p131, %p132
    %p134 = scmp.ne.s32.totalorder %s120, %s121
    %p135 = scmp.eq.s32.totalorder %s15, 11
    %p136 = por %p134, %p135
    %p138 = scmp.ne.s32.totalorder %s121, %s137
    %p139 = scmp.eq.s32.totalorder %s15, 0
    %p140 = por %p138, %p139
    %p141 = scmp.le.s32.totalorder 1, %s9
    %p142 = scmp.lt.s32.totalorder %s9, 13
    %p143 = pnand %p141, %p142
    %p144 = pneg %p143
    // Predicated region
    $region9: #{_lambda_.25} parent=5 // pred_check
      _
    $region10: #{_lambda_.25} parent=5 // pred_check_branch
      %146 = sbr.rel (%p143) target = $region12
    $region11: #{_lambda_.25} parent=5 // pred_region
      %s147 = ssub.s32 %s9, 1
      // Predicated region
      $region13: #{_lambda_.25} parent=11 // pred_check
        %p148 = pneg %p105
      $region14: #{_lambda_.25} parent=11 // pred_check_branch
        %150 = sbr.rel (%p148) target = $region16
      $region15: #{_lambda_.25} parent=11 // pred_region
        _
      $region16: #{_lambda_.25} parent=11 // pred_fallthru
        _
    $region12: #{_lambda_.25} parent=5 // pred_fallthru
      _
    %p151 = scmp.lt.s32.totalorder %s9, 12
    // Predicated region
    $region17: #{_lambda_.25} parent=5 // pred_check
      %p152 = pneg %p151
    $region18: #{_lambda_.25} parent=5 // pred_check_branch
      %154 = sbr.rel (%p152) target = $region20
    $region19: #{_lambda_.25} parent=5 // pred_region
      // Predicated region
      $region21: #{_lambda_.25} parent=19 // pred_check
        %p155 = pneg %p52
      $region22: #{_lambda_.25} parent=19 // pred_check_branch
        %157 = sbr.rel (%p155) target = $region24
      $region23: #{_lambda_.25} parent=19 // pred_region
        %s158 = sadd.s32 %s17, %s18
        %p159 = scmp.lt.s32.totalorder %s16, 1
        %s160 = scalar_select %p159, %s16, 1
        %p161 = scmp.lt.s32.totalorder %s158, 3
        %s162 = scalar_select %p161, %s158, 3
        %s163 = smul.addr %s162, 4
        %s164 = smul.addr %s160, 16
        %s165 = sadd.s32 %s163, %s164
        %s166 = smul.addr %s165, 4
        %s167 = scalar_lea.vmem %s0, %s166
        %s168 = sadd.s32 %s17, %s18
      $region24: #{_lambda_.25} parent=19 // pred_fallthru
        _
      // Predicated region
      $region25: #{_lambda_.25} parent=19 // pred_check
        %p169 = pneg %p78
      $region26: #{_lambda_.25} parent=19 // pred_check_branch
        %171 = sbr.rel (%p169) target = $region28
      $region27: #{_lambda_.25} parent=19 // pred_region
        %p172 = scmp.lt.s32.totalorder %s18, 2
        %s173 = scalar_select %p172, %s18, 2
        %s174 = smul.addr %s173, 12
        %s175 = smul.addr %s174, 4
        %s176 = scalar_lea.vmem %s1, %s175
      $region28: #{_lambda_.25} parent=19 // pred_fallthru
        _
    $region20: #{_lambda_.25} parent=5 // pred_fallthru
      _
    %p177 = scmp.le.s32.totalorder 1, %s9
    %p178 = scmp.lt.s32.totalorder %s9, 13
    %p179 = pnand %p177, %p178
    %p180 = pneg %p179
    // Predicated region
    $region29: #{_lambda_.25} parent=5 // pred_check
      _
    $region30: #{_lambda_.25} parent=5 // pred_check_branch
      %182 = sbr.rel (%p179) target = $region32
    $region31: #{_lambda_.25} parent=5 // pred_region
      %s183 = ssub.s32 %s9, 1
      %s184 = sadd.s32 %s20, %s21
      %p185 = scmp.lt.s32.totalorder %s19, 1
      %s186 = scalar_select %p185, %s19, 1
      %p187 = scmp.lt.s32.totalorder %s184, 3
      %s188 = scalar_select %p187, %s184, 3
      %s189 = smul.addr %s188, 4
      %s190 = smul.addr %s186, 16
      %s191 = sadd.s32 %s189, %s190
      %s192 = smul.addr %s191, 4
      %s193 = scalar_lea.vmem %s0, %s192
      %p194 = pneg %p58
      %p195 = pneg %p55
      %p196 = scmp.lt.s32.totalorder %s21, 2
      %s197 = scalar_select %p196, %s21, 2
      %s198 = smul.addr %s197, 12
      %s199 = smul.addr %s198, 4
      %s200 = scalar_lea.vmem %s1, %s199
      %p201 = pneg %p84
      %p202 = pneg %p81
      %p203 = pneg %p105
      %p204 = pneg %p102
      %p205 = pneg %p133
      %p206 = pneg %p130
      %p207 = scmp.lt.s32.totalorder %s19, 1
      %s208 = scalar_select %p207, %s19, 1
      %p209 = scmp.lt.s32.totalorder %s20, 1
      %s210 = scalar_select %p209, %s20, 1
      %s211 = smul.addr %s210, 4
      %s212 = smul.addr %s208, 8
      %s213 = sadd.s32 %s211, %s212
      %s214 = smul.addr %s213, 4
      %s215 = scalar_lea.vmem %s3, %s214
      %s216 = sadd.s32 %s20, %s21
      %p217 = scmp.lt.s32.totalorder %s19, 1
      %s218 = scalar_select %p217, %s19, 1
      %p219 = scmp.lt.s32.totalorder %s216, 3
      %s220 = scalar_select %p219, %s216, 3
      %s221 = smul.addr %s220, 4
      %s222 = smul.addr %s218, 16
      %s223 = sadd.s32 %s221, %s222
      %s224 = smul.addr %s223, 4
      %s225 = scalar_lea.vmem %s0, %s224
      %s226 = sadd.s32 %s20, %s21
      %p227 = scmp.lt.s32.totalorder %s21, 2
      %s228 = scalar_select %p227, %s21, 2
      %s229 = smul.addr %s228, 12
      %s230 = smul.addr %s229, 4
      %s231 = scalar_lea.vmem %s1, %s230
      %p232 = scmp.lt.s32.totalorder %s19, 1
      %s233 = scalar_select %p232, %s19, 1
      %p234 = scmp.lt.s32.totalorder %s20, 1
      %s235 = scalar_select %p234, %s20, 1
      %s236 = smul.addr %s235, 4
      %s237 = smul.addr %s233, 8
      %s238 = sadd.s32 %s236, %s237
      %s239 = smul.addr %s238, 4
      %s240 = scalar_lea.vmem %s3, %s239
      %p242 = scmp.eq.s32.totalorder %s21, 0
      // Predicated region
      $region33: #{_lambda_.25} parent=31 // pred_check
        %p243 = pneg %p242
      $region34: #{_lambda_.25} parent=31 // pred_check_branch
        %245 = sbr.rel (%p243) target = $region36
      $region35: #{_lambda_.25} parent=31 // pred_region
        %vm246 = vcmask 31744
        %247 = vst.msk [vmem:[#allocation3] sm:$0xff] %vm246, 0.0
        %248 = vst.msk [vmem:[#allocation3 + $0x8] sm:$0xff] %vm246, 0.0
        %249 = vst.msk [vmem:[#allocation3 + $0x10] sm:$0xff] %vm246, 0.0
        %250 = vst.msk [vmem:[#allocation3 + $0x18] sm:$0xff] %vm246, 0.0
      $region36: #{_lambda_.25} parent=31 // pred_fallthru
        _
      %v251 = vld [vmem:[%s225] sm:$0xf]
      %v252 = vld [vmem:[%s225 + $0x4] sm:$0xf]
      %v253 = vld [vmem:[%s225 + $0x8] sm:$0xf]
      %v254 = vld [vmem:[%s225 + $0xc] sm:$0xf]
      %vm255 = vcmask 11264
      %256 = vst.msk [vmem:[#allocation2] sm:$0xf] %vm255, %v251
      %257 = vst.msk [vmem:[#allocation2 + $0x4] sm:$0xf] %vm255, %v252
      %258 = vst.msk [vmem:[#allocation2 + $0x8] sm:$0xf] %vm255, %v253
      %259 = vst.msk [vmem:[#allocation2 + $0xc] sm:$0xf] %vm255, %v254
      %v260 = vld [vmem:[%s225] sm:$0xf]
      %v261 = vld [vmem:[%s225 + $0x4] sm:$0xf]
      %v262 = vld [vmem:[%s225 + $0x8] sm:$0xf]
      %v263 = vld [vmem:[%s225 + $0xc] sm:$0xf]
      %268 = vrot.lane.b32.xlu0 %v260, 126
      %v269 = vpop.permute.xlu0 %268
      %270 = vrot.lane.b32.xlu0 %v261, 126
      %v271 = vpop.permute.xlu0 %270
      %272 = vrot.lane.b32.xlu0 %v262, 126
      %v273 = vpop.permute.xlu0 %272
      %274 = vrot.lane.b32.xlu0 %v263, 126
      %v275 = vpop.permute.xlu0 %274
      %vm280 = vcmask 27664
      %281 = vst.msk [vmem:[#allocation2] sm:$0xf] %vm280, %v269
      %282 = vst.msk [vmem:[#allocation2 + $0x4] sm:$0xf] %vm280, %v271
      %283 = vst.msk [vmem:[#allocation2 + $0x8] sm:$0xf] %vm280, %v273
      %284 = vst.msk [vmem:[#allocation2 + $0xc] sm:$0xf] %vm280, %v275
      %v285 = vld [vmem:[%s225] sm:$0xf]
      %v286 = vld [vmem:[%s225 + $0x4] sm:$0xf]
      %v287 = vld [vmem:[%s225 + $0x8] sm:$0xf]
      %v288 = vld [vmem:[%s225 + $0xc] sm:$0xf]
      %293 = vrot.lane.b32.xlu0 %v285, 127
      %v294 = vpop.permute.xlu0 %293
      %295 = vrot.lane.b32.xlu0 %v286, 127
      %v296 = vpop.permute.xlu0 %295
      %297 = vrot.lane.b32.xlu0 %v287, 127
      %v298 = vpop.permute.xlu0 %297
      %299 = vrot.lane.b32.xlu0 %v288, 127
      %v300 = vpop.permute.xlu0 %299
      %305 = vst.msk [vmem:[#allocation2 + $0x10] sm:$0xf] %vm255, %v294
      %306 = vst.msk [vmem:[#allocation2 + $0x14] sm:$0xf] %vm255, %v296
      %307 = vst.msk [vmem:[#allocation2 + $0x18] sm:$0xf] %vm255, %v298
      %308 = vst.msk [vmem:[#allocation2 + $0x1c] sm:$0xf] %vm255, %v300
      %v309 = vld [vmem:[%s225] sm:$0xf]
      %v310 = vld [vmem:[%s225 + $0x4] sm:$0xf]
      %v311 = vld [vmem:[%s225 + $0x8] sm:$0xf]
      %v312 = vld [vmem:[%s225 + $0xc] sm:$0xf]
      %317 = vrot.lane.b32.xlu0 %v309, 125
      %v318 = vpop.permute.xlu0 %317
      %319 = vrot.lane.b32.xlu0 %v310, 125
      %v320 = vpop.permute.xlu0 %319
      %321 = vrot.lane.b32.xlu0 %v311, 125
      %v322 = vpop.permute.xlu0 %321
      %323 = vrot.lane.b32.xlu0 %v312, 125
      %v324 = vpop.permute.xlu0 %323
      %329 = vst.msk [vmem:[#allocation2 + $0x10] sm:$0xf] %vm280, %v318
      %330 = vst.msk [vmem:[#allocation2 + $0x14] sm:$0xf] %vm280, %v320
      %331 = vst.msk [vmem:[#allocation2 + $0x18] sm:$0xf] %vm280, %v322
      %332 = vst.msk [vmem:[#allocation2 + $0x1c] sm:$0xf] %vm280, %v324
      %v333 = vld [vmem:[%s225] sm:$0xf]
      %v334 = vld [vmem:[%s225 + $0x4] sm:$0xf]
      %v335 = vld [vmem:[%s225 + $0x8] sm:$0xf]
      %v336 = vld [vmem:[%s225 + $0xc] sm:$0xf]
      %341 = vrot.lane.b32.xlu0 %v333, 126
      %v342 = vpop.permute.xlu0 %341
      %343 = vrot.lane.b32.xlu0 %v334, 126
      %v344 = vpop.permute.xlu0 %343
      %345 = vrot.lane.b32.xlu0 %v335, 126
      %v346 = vpop.permute.xlu0 %345
      %347 = vrot.lane.b32.xlu0 %v336, 126
      %v348 = vpop.permute.xlu0 %347
      %353 = vst.msk [vmem:[#allocation2 + $0x20] sm:$0xf] %vm255, %v342
      %354 = vst.msk [vmem:[#allocation2 + $0x24] sm:$0xf] %vm255, %v344
      %355 = vst.msk [vmem:[#allocation2 + $0x28] sm:$0xf] %vm255, %v346
      %356 = vst.msk [vmem:[#allocation2 + $0x2c] sm:$0xf] %vm255, %v348
      %v357 = vld [vmem:[%s225] sm:$0xf]
      %v358 = vld [vmem:[%s225 + $0x4] sm:$0xf]
      %v359 = vld [vmem:[%s225 + $0x8] sm:$0xf]
      %v360 = vld [vmem:[%s225 + $0xc] sm:$0xf]
      %365 = vrot.lane.b32.xlu0 %v357, 124
      %v366 = vpop.permute.xlu0 %365
      %367 = vrot.lane.b32.xlu0 %v358, 124
      %v368 = vpop.permute.xlu0 %367
      %369 = vrot.lane.b32.xlu0 %v359, 124
      %v370 = vpop.permute.xlu0 %369
      %371 = vrot.lane.b32.xlu0 %v360, 124
      %v372 = vpop.permute.xlu0 %371
      %377 = vst.msk [vmem:[#allocation2 + $0x20] sm:$0xf] %vm280, %v366
      %378 = vst.msk [vmem:[#allocation2 + $0x24] sm:$0xf] %vm280, %v368
      %379 = vst.msk [vmem:[#allocation2 + $0x28] sm:$0xf] %vm280, %v370
      %380 = vst.msk [vmem:[#allocation2 + $0x2c] sm:$0xf] %vm280, %v372
      %v381 = vld [vmem:[%s225] sm:$0xf]
      %v382 = vld [vmem:[%s225 + $0x4] sm:$0xf]
      %v383 = vld [vmem:[%s225 + $0x8] sm:$0xf]
      %v384 = vld [vmem:[%s225 + $0xc] sm:$0xf]
      %389 = vrot.lane.b32.xlu0 %v381, 124
      %v390 = vpop.permute.xlu0 %389
      %391 = vrot.lane.b32.xlu0 %v382, 124
      %v392 = vpop.permute.xlu0 %391
      %393 = vrot.lane.b32.xlu0 %v383, 124
      %v394 = vpop.permute.xlu0 %393
      %395 = vrot.lane.b32.xlu0 %v384, 124
      %v396 = vpop.permute.xlu0 %395
      %401 = vst.msk [vmem:[#allocation2 + $0x30] sm:$0xf] %vm255, %v390
      %402 = vst.msk [vmem:[#allocation2 + $0x34] sm:$0xf] %vm255, %v392
      %403 = vst.msk [vmem:[#allocation2 + $0x38] sm:$0xf] %vm255, %v394
      %404 = vst.msk [vmem:[#allocation2 + $0x3c] sm:$0xf] %vm255, %v396
      %v405 = vld [vmem:[%s225] sm:$0xf]
      %v406 = vld [vmem:[%s225 + $0x4] sm:$0xf]
      %v407 = vld [vmem:[%s225 + $0x8] sm:$0xf]
      %v408 = vld [vmem:[%s225 + $0xc] sm:$0xf]
      %413 = vrot.lane.b32.xlu0 %v405, 122
      %v414 = vpop.permute.xlu0 %413
      %415 = vrot.lane.b32.xlu0 %v406, 122
      %v416 = vpop.permute.xlu0 %415
      %417 = vrot.lane.b32.xlu0 %v407, 122
      %v418 = vpop.permute.xlu0 %417
      %419 = vrot.lane.b32.xlu0 %v408, 122
      %v420 = vpop.permute.xlu0 %419
      %425 = vst.msk [vmem:[#allocation2 + $0x30] sm:$0xf] %vm280, %v414
      %426 = vst.msk [vmem:[#allocation2 + $0x34] sm:$0xf] %vm280, %v416
      %427 = vst.msk [vmem:[#allocation2 + $0x38] sm:$0xf] %vm280, %v418
      %428 = vst.msk [vmem:[#allocation2 + $0x3c] sm:$0xf] %vm280, %v420
      %v429 = vld [vmem:[%s225] sm:$0xf]
      %v430 = vld [vmem:[%s225 + $0x4] sm:$0xf]
      %v431 = vld [vmem:[%s225 + $0x8] sm:$0xf]
      %v432 = vld [vmem:[%s225 + $0xc] sm:$0xf]
      %437 = vrot.lane.b32.xlu0 %v429, 123
      %v438 = vpop.permute.xlu0 %437
      %439 = vrot.lane.b32.xlu0 %v430, 123
      %v440 = vpop.permute.xlu0 %439
      %441 = vrot.lane.b32.xlu0 %v431, 123
      %v442 = vpop.permute.xlu0 %441
      %443 = vrot.lane.b32.xlu0 %v432, 123
      %v444 = vpop.permute.xlu0 %443
      %449 = vst.msk [vmem:[#allocation2 + $0x40] sm:$0xf] %vm255, %v438
      %450 = vst.msk [vmem:[#allocation2 + $0x44] sm:$0xf] %vm255, %v440
      %451 = vst.msk [vmem:[#allocation2 + $0x48] sm:$0xf] %vm255, %v442
      %452 = vst.msk [vmem:[#allocation2 + $0x4c] sm:$0xf] %vm255, %v444
      %v453 = vld [vmem:[%s225] sm:$0xf]
      %v454 = vld [vmem:[%s225 + $0x4] sm:$0xf]
      %v455 = vld [vmem:[%s225 + $0x8] sm:$0xf]
      %v456 = vld [vmem:[%s225 + $0xc] sm:$0xf]
      %461 = vrot.lane.b32.xlu0 %v453, 121
      %v462 = vpop.permute.xlu0 %461
      %463 = vrot.lane.b32.xlu0 %v454, 121
      %v464 = vpop.permute.xlu0 %463
      %465 = vrot.lane.b32.xlu0 %v455, 121
      %v466 = vpop.permute.xlu0 %465
      %467 = vrot.lane.b32.xlu0 %v456, 121
      %v468 = vpop.permute.xlu0 %467
      %473 = vst.msk [vmem:[#allocation2 + $0x40] sm:$0xf] %vm280, %v462
      %474 = vst.msk [vmem:[#allocation2 + $0x44] sm:$0xf] %vm280, %v464
      %475 = vst.msk [vmem:[#allocation2 + $0x48] sm:$0xf] %vm280, %v466
      %476 = vst.msk [vmem:[#allocation2 + $0x4c] sm:$0xf] %vm280, %v468
      %v477 = vld [vmem:[%s225] sm:$0xf]
      %v478 = vld [vmem:[%s225 + $0x4] sm:$0xf]
      %v479 = vld [vmem:[%s225 + $0x8] sm:$0xf]
      %v480 = vld [vmem:[%s225 + $0xc] sm:$0xf]
      %485 = vrot.lane.b32.xlu0 %v477, 122
      %v486 = vpop.permute.xlu0 %485
      %487 = vrot.lane.b32.xlu0 %v478, 122
      %v488 = vpop.permute.xlu0 %487
      %489 = vrot.lane.b32.xlu0 %v479, 122
      %v490 = vpop.permute.xlu0 %489
      %491 = vrot.lane.b32.xlu0 %v480, 122
      %v492 = vpop.permute.xlu0 %491
      %497 = vst.msk [vmem:[#allocation2 + $0x50] sm:$0xf] %vm255, %v486
      %498 = vst.msk [vmem:[#allocation2 + $0x54] sm:$0xf] %vm255, %v488
      %499 = vst.msk [vmem:[#allocation2 + $0x58] sm:$0xf] %vm255, %v490
      %500 = vst.msk [vmem:[#allocation2 + $0x5c] sm:$0xf] %vm255, %v492
      %v501 = vld [vmem:[%s225] sm:$0xf]
      %v502 = vld [vmem:[%s225 + $0x4] sm:$0xf]
      %v503 = vld [vmem:[%s225 + $0x8] sm:$0xf]
      %v504 = vld [vmem:[%s225 + $0xc] sm:$0xf]
      %509 = vrot.lane.b32.xlu0 %v501, 120
      %v510 = vpop.permute.xlu0 %509
      %511 = vrot.lane.b32.xlu0 %v502, 120
      %v512 = vpop.permute.xlu0 %511
      %513 = vrot.lane.b32.xlu0 %v503, 120
      %v514 = vpop.permute.xlu0 %513
      %515 = vrot.lane.b32.xlu0 %v504, 120
      %v516 = vpop.permute.xlu0 %515
      %521 = vst.msk [vmem:[#allocation2 + $0x50] sm:$0xf] %vm280, %v510
      %522 = vst.msk [vmem:[#allocation2 + $0x54] sm:$0xf] %vm280, %v512
      %523 = vst.msk [vmem:[#allocation2 + $0x58] sm:$0xf] %vm280, %v514
      %524 = vst.msk [vmem:[#allocation2 + $0x5c] sm:$0xf] %vm280, %v516
      %v525 = vld [vmem:[%s225] sm:$0xf]
      %v526 = vld [vmem:[%s225 + $0x4] sm:$0xf]
      %v527 = vld [vmem:[%s225 + $0x8] sm:$0xf]
      %v528 = vld [vmem:[%s225 + $0xc] sm:$0xf]
      %533 = vrot.lane.b32.xlu0 %v525, 120
      %v534 = vpop.permute.xlu0 %533
      %535 = vrot.lane.b32.xlu0 %v526, 120
      %v536 = vpop.permute.xlu0 %535
      %537 = vrot.lane.b32.xlu0 %v527, 120
      %v538 = vpop.permute.xlu0 %537
      %539 = vrot.lane.b32.xlu0 %v528, 120
      %v540 = vpop.permute.xlu0 %539
      %545 = vst.msk [vmem:[#allocation2 + $0x60] sm:$0xf] %vm255, %v534
      %546 = vst.msk [vmem:[#allocation2 + $0x64] sm:$0xf] %vm255, %v536
      %547 = vst.msk [vmem:[#allocation2 + $0x68] sm:$0xf] %vm255, %v538
      %548 = vst.msk [vmem:[#allocation2 + $0x6c] sm:$0xf] %vm255, %v540
      %v549 = vld [vmem:[%s225] sm:$0xf]
      %v550 = vld [vmem:[%s225 + $0x4] sm:$0xf]
      %v551 = vld [vmem:[%s225 + $0x8] sm:$0xf]
      %v552 = vld [vmem:[%s225 + $0xc] sm:$0xf]
      %557 = vrot.lane.b32.xlu0 %v549, 118
      %v558 = vpop.permute.xlu0 %557
      %559 = vrot.lane.b32.xlu0 %v550, 118
      %v560 = vpop.permute.xlu0 %559
      %561 = vrot.lane.b32.xlu0 %v551, 118
      %v562 = vpop.permute.xlu0 %561
      %563 = vrot.lane.b32.xlu0 %v552, 118
      %v564 = vpop.permute.xlu0 %563
      %569 = vst.msk [vmem:[#allocation2 + $0x60] sm:$0xf] %vm280, %v558
      %570 = vst.msk [vmem:[#allocation2 + $0x64] sm:$0xf] %vm280, %v560
      %571 = vst.msk [vmem:[#allocation2 + $0x68] sm:$0xf] %vm280, %v562
      %572 = vst.msk [vmem:[#allocation2 + $0x6c] sm:$0xf] %vm280, %v564
      %v573 = vld [vmem:[%s225] sm:$0xf]
      %v574 = vld [vmem:[%s225 + $0x4] sm:$0xf]
      %v575 = vld [vmem:[%s225 + $0x8] sm:$0xf]
      %v576 = vld [vmem:[%s225 + $0xc] sm:$0xf]
      %581 = vrot.lane.b32.xlu0 %v573, 119
      %v582 = vpop.permute.xlu0 %581
      %583 = vrot.lane.b32.xlu0 %v574, 119
      %v584 = vpop.permute.xlu0 %583
      %585 = vrot.lane.b32.xlu0 %v575, 119
      %v586 = vpop.permute.xlu0 %585
      %587 = vrot.lane.b32.xlu0 %v576, 119
      %v588 = vpop.permute.xlu0 %587
      %593 = vst.msk [vmem:[#allocation2 + $0x70] sm:$0xf] %vm255, %v582
      %594 = vst.msk [vmem:[#allocation2 + $0x74] sm:$0xf] %vm255, %v584
      %595 = vst.msk [vmem:[#allocation2 + $0x78] sm:$0xf] %vm255, %v586
      %596 = vst.msk [vmem:[#allocation2 + $0x7c] sm:$0xf] %vm255, %v588
      %v597 = vld [vmem:[%s225] sm:$0xf]
      %v598 = vld [vmem:[%s225 + $0x4] sm:$0xf]
      %v599 = vld [vmem:[%s225 + $0x8] sm:$0xf]
      %v600 = vld [vmem:[%s225 + $0xc] sm:$0xf]
      %605 = vrot.lane.b32.xlu0 %v597, 117
      %v606 = vpop.permute.xlu0 %605
      %607 = vrot.lane.b32.xlu0 %v598, 117
      %v608 = vpop.permute.xlu0 %607
      %609 = vrot.lane.b32.xlu0 %v599, 117
      %v610 = vpop.permute.xlu0 %609
      %611 = vrot.lane.b32.xlu0 %v600, 117
      %v612 = vpop.permute.xlu0 %611
      %617 = vst.msk [vmem:[#allocation2 + $0x70] sm:$0xf] %vm280, %v606
      %618 = vst.msk [vmem:[#allocation2 + $0x74] sm:$0xf] %vm280, %v608
      %619 = vst.msk [vmem:[#allocation2 + $0x78] sm:$0xf] %vm280, %v610
      %620 = vst.msk [vmem:[#allocation2 + $0x7c] sm:$0xf] %vm280, %v612
      %v621 = vld [vmem:[%s225] sm:$0xf]
      %v622 = vld [vmem:[%s225 + $0x4] sm:$0xf]
      %v623 = vld [vmem:[%s225 + $0x8] sm:$0xf]
      %v624 = vld [vmem:[%s225 + $0xc] sm:$0xf]
      %629 = vrot.lane.b32.xlu0 %v621, 118
      %v630 = vpop.permute.xlu0 %629
      %631 = vrot.lane.b32.xlu0 %v622, 118
      %v632 = vpop.permute.xlu0 %631
      %633 = vrot.lane.b32.xlu0 %v623, 118
      %v634 = vpop.permute.xlu0 %633
      %635 = vrot.lane.b32.xlu0 %v624, 118
      %v636 = vpop.permute.xlu0 %635
      %641 = vst.msk [vmem:[#allocation2 + $0x80] sm:$0xf] %vm255, %v630
      %642 = vst.msk [vmem:[#allocation2 + $0x84] sm:$0xf] %vm255, %v632
      %643 = vst.msk [vmem:[#allocation2 + $0x88] sm:$0xf] %vm255, %v634
      %644 = vst.msk [vmem:[#allocation2 + $0x8c] sm:$0xf] %vm255, %v636
      %v645 = vld [vmem:[%s225] sm:$0xf]
      %v646 = vld [vmem:[%s225 + $0x4] sm:$0xf]
      %v647 = vld [vmem:[%s225 + $0x8] sm:$0xf]
      %v648 = vld [vmem:[%s225 + $0xc] sm:$0xf]
      %653 = vrot.lane.b32.xlu0 %v645, 116
      %v654 = vpop.permute.xlu0 %653
      %655 = vrot.lane.b32.xlu0 %v646, 116
      %v656 = vpop.permute.xlu0 %655
      %657 = vrot.lane.b32.xlu0 %v647, 116
      %v658 = vpop.permute.xlu0 %657
      %659 = vrot.lane.b32.xlu0 %v648, 116
      %v660 = vpop.permute.xlu0 %659
      %665 = vst.msk [vmem:[#allocation2 + $0x80] sm:$0xf] %vm280, %v654
      %666 = vst.msk [vmem:[#allocation2 + $0x84] sm:$0xf] %vm280, %v656
      %667 = vst.msk [vmem:[#allocation2 + $0x88] sm:$0xf] %vm280, %v658
      %668 = vst.msk [vmem:[#allocation2 + $0x8c] sm:$0xf] %vm280, %v660
      %v669 = vld [vmem:[#allocation3] sm:$0xff]
      %v670 = vld [vmem:[#allocation3 + $0x8] sm:$0xff]
      %v671 = vld [vmem:[#allocation3 + $0x10] sm:$0xff]
      %v672 = vld [vmem:[#allocation3 + $0x18] sm:$0xff]
      %v673 = vld [vmem:[%s231] sm:$0xff]
      %v674 = vld [vmem:[%s231 + $0x8] sm:$0xf]
      %v675 = vld [vmem:[%s231 + $0xc] sm:$0xff]
      %v676 = vld [vmem:[%s231 + $0x14] sm:$0xf]
      %v677 = vld [vmem:[%s231 + $0x18] sm:$0xff]
      %v678 = vld [vmem:[%s231 + $0x20] sm:$0xf]
      %v679 = vld [vmem:[%s231 + $0x24] sm:$0xff]
      %v680 = vld [vmem:[%s231 + $0x2c] sm:$0xf]
      %v681 = vld [vmem:[#allocation2] sm:$0xf]
      %v682 = vld [vmem:[#allocation2 + $0x4] sm:$0xf]
      %v683 = vld [vmem:[#allocation2 + $0x8] sm:$0xf]
      %v684 = vld [vmem:[#allocation2 + $0xc] sm:$0xf]
      %v685 = vld [vmem:[#allocation2 + $0x10] sm:$0xf]
      %v686 = vld [vmem:[#allocation2 + $0x14] sm:$0xf]
      %v687 = vld [vmem:[#allocation2 + $0x18] sm:$0xf]
      %v688 = vld [vmem:[#allocation2 + $0x1c] sm:$0xf]
      %v689 = vld [vmem:[#allocation2 + $0x20] sm:$0xf]
      %v690 = vld [vmem:[#allocation2 + $0x24] sm:$0xf]
      %v691 = vld [vmem:[#allocation2 + $0x28] sm:$0xf]
      %v692 = vld [vmem:[#allocation2 + $0x2c] sm:$0xf]
      %v693 = vld [vmem:[#allocation2 + $0x30] sm:$0xf]
      %v694 = vld [vmem:[#allocation2 + $0x34] sm:$0xf]
      %v695 = vld [vmem:[#allocation2 + $0x38] sm:$0xf]
      %v696 = vld [vmem:[#allocation2 + $0x3c] sm:$0xf]
      %v697 = vld [vmem:[#allocation2 + $0x40] sm:$0xf]
      %v698 = vld [vmem:[#allocation2 + $0x44] sm:$0xf]
      %v699 = vld [vmem:[#allocation2 + $0x48] sm:$0xf]
      %v700 = vld [vmem:[#allocation2 + $0x4c] sm:$0xf]
      %v701 = vld [vmem:[#allocation2 + $0x50] sm:$0xf]
      %v702 = vld [vmem:[#allocation2 + $0x54] sm:$0xf]
      %v703 = vld [vmem:[#allocation2 + $0x58] sm:$0xf]
      %v704 = vld [vmem:[#allocation2 + $0x5c] sm:$0xf]
      %v705 = vld [vmem:[#allocation2 + $0x60] sm:$0xf]
      %v706 = vld [vmem:[#allocation2 + $0x64] sm:$0xf]
      %v707 = vld [vmem:[#allocation2 + $0x68] sm:$0xf]
      %v708 = vld [vmem:[#allocation2 + $0x6c] sm:$0xf]
      %v709 = vld [vmem:[#allocation2 + $0x70] sm:$0xf]
      %v710 = vld [vmem:[#allocation2 + $0x74] sm:$0xf]
      %v711 = vld [vmem:[#allocation2 + $0x78] sm:$0xf]
      %v712 = vld [vmem:[#allocation2 + $0x7c] sm:$0xf]
      %v713 = vld [vmem:[#allocation2 + $0x80] sm:$0xf]
      %v714 = vld [vmem:[#allocation2 + $0x84] sm:$0xf]
      %v715 = vld [vmem:[#allocation2 + $0x88] sm:$0xf]
      %v716 = vld [vmem:[#allocation2 + $0x8c] sm:$0xf]
      %v725 = vunpack.c.l.b16 %v673
      %v726 = vunpack.c.h.b16 %v673
      %v727 = vunpack.c.l.b16 %v674
      %v728 = vunpack.c.l.b16 %v675
      %v729 = vunpack.c.h.b16 %v675
      %v730 = vunpack.c.l.b16 %v676
      %v731 = vunpack.c.l.b16 %v677
      %v732 = vunpack.c.h.b16 %v677
      %v733 = vunpack.c.l.b16 %v678
      %v734 = vunpack.c.l.b16 %v679
      %v735 = vunpack.c.h.b16 %v679
      %v736 = vunpack.c.l.b16 %v680
      %v737 = vpack.c.b16 %v728, %v725
      %v738 = vpack.c.b16 %v729, %v726
      %v739 = vpack.c.b16 %v730, %v727
      %v740 = vpack.c.b16 %v734, %v731
      %v741 = vpack.c.b16 %v735, %v732
      %v742 = vpack.c.b16 %v736, %v733
      %v783 = vunpack.c.l.b16 %v681
      %v784 = vunpack.c.l.b16 %v682
      %v785 = vunpack.c.l.b16 %v683
      %v786 = vunpack.c.l.b16 %v684
      %v787 = vunpack.c.l.b16 %v685
      %v788 = vunpack.c.l.b16 %v686
      %v789 = vunpack.c.l.b16 %v687
      %v790 = vunpack.c.l.b16 %v688
      %v791 = vunpack.c.l.b16 %v689
      %v792 = vunpack.c.l.b16 %v690
      %v793 = vunpack.c.l.b16 %v691
      %v794 = vunpack.c.l.b16 %v692
      %v795 = vunpack.c.l.b16 %v693
      %v796 = vunpack.c.l.b16 %v694
      %v797 = vunpack.c.l.b16 %v695
      %v798 = vunpack.c.l.b16 %v696
      %v799 = vunpack.c.l.b16 %v697
      %v800 = vunpack.c.l.b16 %v698
      %v801 = vunpack.c.l.b16 %v699
      %v802 = vunpack.c.l.b16 %v700
      %v803 = vunpack.c.l.b16 %v701
      %v804 = vunpack.c.l.b16 %v702
      %v805 = vunpack.c.l.b16 %v703
      %v806 = vunpack.c.l.b16 %v704
      %v807 = vunpack.c.l.b16 %v705
      %v808 = vunpack.c.l.b16 %v706
      %v809 = vunpack.c.l.b16 %v707
      %v810 = vunpack.c.l.b16 %v708
      %v811 = vunpack.c.l.b16 %v709
      %v812 = vunpack.c.l.b16 %v710
      %v813 = vunpack.c.l.b16 %v711
      %v814 = vunpack.c.l.b16 %v712
      %v815 = vunpack.c.l.b16 %v713
      %v816 = vunpack.c.l.b16 %v714
      %v817 = vunpack.c.l.b16 %v715
      %v818 = vunpack.c.l.b16 %v716
      %v819 = vpack.c.b16 %v784, %v783
      %v820 = vpack.c.b16 %v786, %v785
      %v821 = vpack.c.b16 %v788, %v787
      %v822 = vpack.c.b16 %v790, %v789
      %v823 = vpack.c.b16 %v792, %v791
      %v824 = vpack.c.b16 %v794, %v793
      %v825 = vpack.c.b16 %v796, %v795
      %v826 = vpack.c.b16 %v798, %v797
      %v827 = vpack.c.b16 %v800, %v799
      %v828 = vpack.c.b16 %v802, %v801
      %v829 = vpack.c.b16 %v804, %v803
      %v830 = vpack.c.b16 %v806, %v805
      %v831 = vpack.c.b16 %v808, %v807
      %v832 = vpack.c.b16 %v810, %v809
      %v833 = vpack.c.b16 %v812, %v811
      %v834 = vpack.c.b16 %v814, %v813
      %v835 = vpack.c.b16 %v816, %v815
      %v836 = vpack.c.b16 %v818, %v817
      %vm855 = vcmask 261120
      %v857 = vsel %vm855, %v739, 0
      %v860 = vsel %vm855, %v742, 0
      %862 = vmatpush.bf16.msra.mxu0 %v826
      %863 = vmatpush.bf16.msra.mxu0 %v825
      %864 = vmatpush.bf16.msra.mxu0 %v824
      %865 = vmatpush.bf16.msra.mxu0 %v823
      %866 = vmatpush.bf16.msra.mxu0 %v822
      %867 = vmatpush.bf16.msra.mxu0 %v821
      %868 = vmatpush.bf16.msra.mxu0 %v820
      %869 = vmatpush.bf16.msra.mxu0 %v819
      %870 = vmatmul.bf16.gmra.mxu0 %v737
      %v871 = vpop.f32.mrf.mxu0
      %v872 = vadd.f32 0.0, %v871
      %v873 = vpop.f32.mrf.mxu0
      %v874 = vadd.f32 0.0, %v873
      %875 = vmatmul.bf16.gmra.mxu0 %v740
      %v876 = vpop.f32.mrf.mxu0
      %v877 = vadd.f32 0.0, %v876
      %v878 = vpop.f32.mrf.mxu0
      %v879 = vadd.f32 0.0, %v878
      %880 = vdwg.mxu0
      %881 = vmatpush.bf16.msra.mxu0 %v834
      %882 = vmatpush.bf16.msra.mxu0 %v833
      %883 = vmatpush.bf16.msra.mxu0 %v832
      %884 = vmatpush.bf16.msra.mxu0 %v831
      %885 = vmatpush.bf16.msra.mxu0 %v830
      %886 = vmatpush.bf16.msra.mxu0 %v829
      %887 = vmatpush.bf16.msra.mxu0 %v828
      %888 = vmatpush.bf16.msra.mxu0 %v827
      %889 = vmatmul.bf16.gmra.mxu0 %v738
      %v890 = vpop.f32.mrf.mxu0
      %v891 = vadd.f32 %v872, %v890
      %v892 = vpop.f32.mrf.mxu0
      %v893 = vadd.f32 %v874, %v892
      %894 = vmatmul.bf16.gmra.mxu0 %v741
      %v895 = vpop.f32.mrf.mxu0
      %v896 = vadd.f32 %v877, %v895
      %v897 = vpop.f32.mrf.mxu0
      %v898 = vadd.f32 %v879, %v897
      %899 = vdwg.mxu0
      %900 = vmatpush.bf16.msra.mxu0 0
      %901 = vmatpush.bf16.msra.mxu0 0
      %902 = vmatpush.bf16.msra.mxu0 0
      %903 = vmatpush.bf16.msra.mxu0 0
      %904 = vmatpush.bf16.msra.mxu0 0
      %905 = vmatpush.bf16.msra.mxu0 0
      %906 = vmatpush.bf16.msra.mxu0 %v836
      %907 = vmatpush.bf16.msra.mxu0 %v835
      %908 = vmatmul.bf16.gmra.mxu0 %v857
      %v909 = vpop.f32.mrf.mxu0
      %v910 = vadd.f32 %v891, %v909
      %v911 = vpop.f32.mrf.mxu0
      %v912 = vadd.f32 %v893, %v911
      %913 = vmatmul.bf16.gmra.mxu0 %v860
      %v914 = vpop.f32.mrf.mxu0
      %v915 = vadd.f32 %v896, %v914
      %v916 = vpop.f32.mrf.mxu0
      %v917 = vadd.f32 %v898, %v916
      %918 = vdwg.mxu0
      %v919 = vadd.f32 %v669, %v910
      %v920 = vadd.f32 %v670, %v912
      %v921 = vadd.f32 %v671, %v915
      %v922 = vadd.f32 %v672, %v917
      %vm923 = vcmask 31744
      %924 = vst.msk [vmem:[#allocation3] sm:$0xff] %vm923, %v919
      %925 = vst.msk [vmem:[#allocation3 + $0x8] sm:$0xff] %vm923, %v920
      %926 = vst.msk [vmem:[#allocation3 + $0x10] sm:$0xff] %vm923, %v921
      %927 = vst.msk [vmem:[#allocation3 + $0x18] sm:$0xff] %vm923, %v922
      %p928 = scmp.eq.s32.totalorder %s21, 2
      // Predicated region
      $region37: #{_lambda_.25} parent=31 // pred_check
        %p929 = pneg %p928
      $region38: #{_lambda_.25} parent=31 // pred_check_branch
        %931 = sbr.rel (%p929) target = $region40
      $region39: #{_lambda_.25} parent=31 // pred_region
        %v932 = vld [vmem:[#allocation3] sm:$0xff]
        %v933 = vld [vmem:[#allocation3 + $0x8] sm:$0xff]
        %v934 = vld [vmem:[#allocation3 + $0x10] sm:$0xff]
        %v935 = vld [vmem:[#allocation3 + $0x18] sm:$0xff]
        %v936 = vld [vmem:[%s2] sm:$0xff]
        %v937 = vld [vmem:[%s2 + $0x8] sm:$0xff]
        %v938 = vld [vmem:[%s2 + $0x10] sm:$0xff]
        %v939 = vld [vmem:[%s2 + $0x18] sm:$0xff]
        %941 = vset.pattern.permute.xlu0 0
        %942 = vperm.xlu0 %941, %v936
        %v943 = vpop.permute.xlu0 %942
        %946 = vset.pattern.permute.xlu0 0
        %947 = vperm.xlu0 %946, %v937
        %v948 = vpop.permute.xlu0 %947
        %951 = vset.pattern.permute.xlu0 0
        %952 = vperm.xlu0 %951, %v938
        %v953 = vpop.permute.xlu0 %952
        %956 = vset.pattern.permute.xlu0 0
        %957 = vperm.xlu0 %956, %v939
        %v958 = vpop.permute.xlu0 %957
        %v960 = vadd.f32 %v932, %v943
        %v961 = vadd.f32 %v933, %v948
        %v962 = vadd.f32 %v934, %v953
        %v963 = vadd.f32 %v935, %v958
        %v964 = vmax.f32 %v960, 0.0
        %v965 = vmax.f32 %v961, 0.0
        %v966 = vmax.f32 %v962, 0.0
        %v967 = vmax.f32 %v963, 0.0
        %v968 = vpack.c.bf16 %v964, %v964
        %v969 = vpack.c.bf16 %v965, %v965
        %v970 = vpack.c.bf16 %v966, %v966
        %v971 = vpack.c.bf16 %v967, %v967
        %vm972 = vcmask 27648
        %973 = vst.msk [vmem:[%s240] sm:$0xf] %vm972, %v968
        %974 = vst.msk [vmem:[%s240 + $0x4] sm:$0xf] %vm972, %v969
        %975 = vst.msk [vmem:[%s240 + $0x8] sm:$0xf] %vm972, %v970
        %976 = vst.msk [vmem:[%s240 + $0xc] sm:$0xf] %vm972, %v971
      $region40: #{_lambda_.25} parent=31 // pred_fallthru
        _
      %p977 = scmp.lt.s32.totalorder %s19, 1
      %s978 = scalar_select %p977, %s19, 1
      %p979 = scmp.lt.s32.totalorder %s20, 1
      %s980 = scalar_select %p979, %s20, 1
      %s981 = smul.addr %s980, 4
      %s982 = smul.addr %s978, 8
      %s983 = sadd.s32 %s981, %s982
      %s984 = smul.addr %s983, 4
      %s985 = scalar_lea.vmem %s3, %s984
      // Predicated region
      $region41: #{_lambda_.25} parent=31 // pred_check
        %p986 = pneg %p130
      $region42: #{_lambda_.25} parent=31 // pred_check_branch
        %988 = sbr.rel (%p986) target = $region44
      $region43: #{_lambda_.25} parent=31 // pred_region
        _
      $region44: #{_lambda_.25} parent=31 // pred_fallthru
        _
    $region32: #{_lambda_.25} parent=5 // pred_fallthru
      _
    %p989 = scmp.le.s32.totalorder 2, %s9
    // Predicated region
    $region45: #{_lambda_.25} parent=5 // pred_check
      %p990 = pneg %p989
    $region46: #{_lambda_.25} parent=5 // pred_check_branch
      %992 = sbr.rel (%p990) target = $region48
    $region47: #{_lambda_.25} parent=5 // pred_region
      %s993 = ssub.s32 %s9, 2
      // Predicated region
      $region49: #{_lambda_.25} parent=47 // pred_check
        %p994 = pneg %p136
      $region50: #{_lambda_.25} parent=47 // pred_check_branch
        %996 = sbr.rel (%p994) target = $region52
      $region51: #{_lambda_.25} parent=47 // pred_region
        %p997 = scmp.lt.s32.totalorder %s22, 1
        %s998 = scalar_select %p997, %s22, 1
        %p999 = scmp.lt.s32.totalorder %s23, 1
        %s1000 = scalar_select %p999, %s23, 1
        %s1001 = smul.addr %s1000, 4
        %s1002 = smul.addr %s998, 8
        %s1003 = sadd.s32 %s1001, %s1002
        %s1004 = smul.addr %s1003, 4
        %s1005 = scalar_lea.vmem %s3, %s1004
      $region52: #{_lambda_.25} parent=47 // pred_fallthru
        _
    $region48: #{_lambda_.25} parent=5 // pred_fallthru
      _
  $region6: #{_lambda_.25} parent=0 // loop_footer
    %s13 = sadd.s32 1, %s9
  $region7: #{_lambda_.25} parent=0 // loop_footer_branch
    %8 = sbr.rel target = $region3
  $region8: #{_lambda_.25} parent=0 // loop_exit
    _

// kernel: _lambda_.32
$region0: #{_lambda_.32}
  #allocation0 [shape = 'u32[]', space=smem, size = 0x4, offset = 0x4, fixed_abs, tag = 'smem constant byte address 0x4 - core index']
  #allocation1 [shape = 'u32[72,128]{1,0:T(1,128)}', space=vmem, size = 0x9000, scoped, tag = 'internal scratch']
  %s0 = inlined_call_operand.vmem [shape: bf16[8,16,16], index: 0, kind: input, shape index: {}]
  %s1 = inlined_call_operand.vmem [shape: bf16[64,16], index: 1, kind: input, shape index: {}]
  %s2 = inlined_call_operand.vmem [shape: f32[64,1], index: 2, kind: input, shape index: {}]
  %s3 = inlined_call_operand.vmem [shape: bf16[8,64,16], index: 3, kind: output, shape index: {}]
  %s4 = sld [smem:[#allocation0]]
  $region45: #{_lambda_.32} parent=0
    _
  %s6 = ssub.s32 1, %s4
  %s7 = scalar_select 0, %s6, %s4
  loop: start=0, step=1, limit=10
  $region2: #{_lambda_.32} parent=0 // loop_pre_header
    _
  $region3: #{_lambda_.32} parent=0 // loop_header
    %s9 = sphi 0, %s13
    %p10 = scmp.ge.s32.totalorder %s9, 10
    %s19 = sphi 0, %s21
    %s22 = sphi 0, %s19
    %s23 = sphi 0, %s22
    %s39 = sphi 0, %s23
    %s43 = sphi 0, %s43
    %s45 = sphi 0, %s43
    %s46 = sphi 0, %s45
    %s60 = sphi 0, %s46
    %s64 = sphi 0, %s64
    %s66 = sphi 0, %s64
    %s67 = sphi 0, %s66
    %s81 = sphi 0, %s67
    %s87 = sphi 0, %s89
    %s90 = sphi 0, %s87
    %s91 = sphi 0, %s90
    %s107 = sphi 0, %s91
  $region4: #{_lambda_.32} parent=0 // loop_header_branch
    %12 = sbr.rel (%p10) target = $region8
  $region5: #{_lambda_.32} parent=0 // loop_body
    %s14 = ssub.s32 %s9, 1
    %s15 = ssub.s32 %s9, 2
    %s16 = sadd.s32 %s9, 1
    %s17 = ssub.s32 %s9, %s16
    %p18 = scmp.eq.s32.totalorder %s17, 0
    %s20 = sadd.s32 %s19, 1
    %s21 = scalar_select %p18, %s19, %s20
    %p24 = pneg %p18
    %p25 = scmp.eq.s32.totalorder %s9, 7
    %p26 = por %p24, %p25
    %p27 = scmp.ne.s32.totalorder %s19, %s22
    %p28 = scmp.eq.s32.totalorder %s9, 0
    %p29 = por %p27, %p28
    %p30 = scmp.ne.s32.totalorder %s19, %s22
    %p31 = scmp.eq.s32.totalorder %s14, 7
    %p32 = por %p30, %p31
    %p33 = scmp.ne.s32.totalorder %s22, %s23
    %p34 = scmp.eq.s32.totalorder %s14, 0
    %p35 = por %p33, %p34
    %p36 = scmp.ne.s32.totalorder %s22, %s23
    %p37 = scmp.eq.s32.totalorder %s15, 7
    %p38 = por %p36, %p37
    %p40 = scmp.ne.s32.totalorder %s23, %s39
    %p41 = scmp.eq.s32.totalorder %s15, 0
    %p42 = por %p40, %p41
    %s44 = sadd.s32 %s43, 1
    %p47 = scmp.eq.s32.totalorder %s9, 7
    %p48 = scmp.ne.s32.totalorder %s43, %s45
    %p49 = scmp.eq.s32.totalorder %s9, 0
    %p50 = por %p48, %p49
    %p51 = scmp.ne.s32.totalorder %s43, %s45
    %p52 = scmp.eq.s32.totalorder %s14, 7
    %p53 = por %p51, %p52
    %p54 = scmp.ne.s32.totalorder %s45, %s46
    %p55 = scmp.eq.s32.totalorder %s14, 0
    %p56 = por %p54, %p55
    %p57 = scmp.ne.s32.totalorder %s45, %s46
    %p58 = scmp.eq.s32.totalorder %s15, 7
    %p59 = por %p57, %p58
    %p61 = scmp.ne.s32.totalorder %s46, %s60
    %p62 = scmp.eq.s32.totalorder %s15, 0
    %p63 = por %p61, %p62
    %s65 = sadd.s32 %s64, 1
    %p68 = scmp.eq.s32.totalorder %s9, 7
    %p69 = scmp.ne.s32.totalorder %s64, %s66
    %p70 = scmp.eq.s32.totalorder %s9, 0
    %p71 = por %p69, %p70
    %p72 = scmp.ne.s32.totalorder %s64, %s66
    %p73 = scmp.eq.s32.totalorder %s14, 7
    %p74 = por %p72, %p73
    %p75 = scmp.ne.s32.totalorder %s66, %s67
    %p76 = scmp.eq.s32.totalorder %s14, 0
    %p77 = por %p75, %p76
    %p78 = scmp.ne.s32.totalorder %s66, %s67
    %p79 = scmp.eq.s32.totalorder %s15, 7
    %p80 = por %p78, %p79
    %p82 = scmp.ne.s32.totalorder %s67, %s81
    %p83 = scmp.eq.s32.totalorder %s15, 0
    %p84 = por %p82, %p83
    %s85 = ssub.s32 %s9, %s16
    %p86 = scmp.eq.s32.totalorder %s85, 0
    %s88 = sadd.s32 %s87, 1
    %s89 = scalar_select %p86, %s87, %s88
    %p92 = pneg %p86
    %p93 = scmp.eq.s32.totalorder %s9, 7
    %p94 = por %p92, %p93
    %p95 = scmp.ne.s32.totalorder %s87, %s90
    %p96 = scmp.eq.s32.totalorder %s9, 0
    %p97 = por %p95, %p96
    %p98 = scmp.ne.s32.totalorder %s87, %s90
    %p99 = scmp.eq.s32.totalorder %s14, 7
    %p100 = por %p98, %p99
    %p101 = scmp.ne.s32.totalorder %s90, %s91
    %p102 = scmp.eq.s32.totalorder %s14, 0
    %p103 = por %p101, %p102
    %p104 = scmp.ne.s32.totalorder %s90, %s91
    %p105 = scmp.eq.s32.totalorder %s15, 7
    %p106 = por %p104, %p105
    %p108 = scmp.ne.s32.totalorder %s91, %s107
    %p109 = scmp.eq.s32.totalorder %s15, 0
    %p110 = por %p108, %p109
    %p111 = scmp.le.s32.totalorder 1, %s9
    %p112 = scmp.lt.s32.totalorder %s9, 9
    %p113 = pnand %p111, %p112
    %p114 = pneg %p113
    // Predicated region
    $region9: #{_lambda_.32} parent=5 // pred_check
      _
    $region10: #{_lambda_.32} parent=5 // pred_check_branch
      %116 = sbr.rel (%p113) target = $region12
    $region11: #{_lambda_.32} parent=5 // pred_region
      %s117 = ssub.s32 %s9, 1
      // Predicated region
      $region13: #{_lambda_.32} parent=11 // pred_check
        %p118 = pneg %p56
      $region14: #{_lambda_.32} parent=11 // pred_check_branch
        %120 = sbr.rel (%p118) target = $region16
      $region15: #{_lambda_.32} parent=11 // pred_region
        _
      $region16: #{_lambda_.32} parent=11 // pred_fallthru
        _
      // Predicated region
      $region17: #{_lambda_.32} parent=11 // pred_check
        %p121 = pneg %p77
      $region18: #{_lambda_.32} parent=11 // pred_check_branch
        %123 = sbr.rel (%p121) target = $region20
      $region19: #{_lambda_.32} parent=11 // pred_region
        _
      $region20: #{_lambda_.32} parent=11 // pred_fallthru
        _
    $region12: #{_lambda_.32} parent=5 // pred_fallthru
      _
    %p124 = scmp.lt.s32.totalorder %s9, 8
    // Predicated region
    $region21: #{_lambda_.32} parent=5 // pred_check
      %p125 = pneg %p124
    $region22: #{_lambda_.32} parent=5 // pred_check_branch
      %127 = sbr.rel (%p125) target = $region24
    $region23: #{_lambda_.32} parent=5 // pred_region
      // Predicated region
      $region25: #{_lambda_.32} parent=23 // pred_check
        %p128 = pneg %p29
      $region26: #{_lambda_.32} parent=23 // pred_check_branch
        %130 = sbr.rel (%p128) target = $region28
      $region27: #{_lambda_.32} parent=23 // pred_region
        %p131 = scmp.lt.s32.totalorder %s9, 7
        %s132 = scalar_select %p131, %s9, 7
        %s133 = smul.addr %s132, 2
        %s134 = smul.addr %s133, 4
        %s135 = scalar_lea.vmem %s0, %s134
      $region28: #{_lambda_.32} parent=23 // pred_fallthru
        _
    $region24: #{_lambda_.32} parent=5 // pred_fallthru
      _
    %p136 = scmp.le.s32.totalorder 1, %s9
    %p137 = scmp.lt.s32.totalorder %s9, 9
    %p138 = pnand %p136, %p137
    %p139 = pneg %p138
    // Predicated region
    $region29: #{_lambda_.32} parent=5 // pred_check
      _
    $region30: #{_lambda_.32} parent=5 // pred_check_branch
      %141 = sbr.rel (%p138) target = $region32
    $region31: #{_lambda_.32} parent=5 // pred_region
      %s142 = ssub.s32 %s9, 1
      %p143 = scmp.lt.s32.totalorder %s14, 7
      %s144 = scalar_select %p143, %s14, 7
      %s145 = smul.addr %s144, 2
      %s146 = smul.addr %s145, 4
      %s147 = scalar_lea.vmem %s0, %s146
      %p148 = pneg %p35
      %p149 = pneg %p32
      %p150 = pneg %p56
      %p151 = pneg %p53
      %p152 = pneg %p77
      %p153 = pneg %p74
      %p154 = pneg %p103
      %p155 = pneg %p100
      %p156 = scmp.lt.s32.totalorder %s14, 7
      %s157 = scalar_select %p156, %s14, 7
      %s158 = smul.addr %s157, 8
      %s159 = smul.addr %s158, 4
      %s160 = scalar_lea.vmem %s3, %s159
      %p161 = scmp.lt.s32.totalorder %s14, 7
      %s162 = scalar_select %p161, %s14, 7
      %s163 = smul.addr %s162, 2
      %s164 = smul.addr %s163, 4
      %s165 = scalar_lea.vmem %s0, %s164
      %p166 = scmp.lt.s32.totalorder %s14, 7
      %s167 = scalar_select %p166, %s14, 7
      %s168 = smul.addr %s167, 8
      %s169 = smul.addr %s168, 4
      %s170 = scalar_lea.vmem %s3, %s169
      %v172 = vld [vmem:[%s1] sm:$0xf]
      %v173 = vld [vmem:[%s1 + $0x4] sm:$0xf]
      %v174 = vld [vmem:[%s1 + $0x8] sm:$0xf]
      %v175 = vld [vmem:[%s1 + $0xc] sm:$0xf]
      %v176 = vld [vmem:[%s1 + $0x10] sm:$0xf]
      %v177 = vld [vmem:[%s1 + $0x14] sm:$0xf]
      %v178 = vld [vmem:[%s1 + $0x18] sm:$0xf]
      %v179 = vld [vmem:[%s1 + $0x1c] sm:$0xf]
      %v180 = vld [vmem:[%s165] sm:$0xf]
      %v181 = vld [vmem:[%s165 + $0x4] sm:$0xf]
      %v182 = vld [vmem:[%s2] sm:$0xff]
      %v183 = vld [vmem:[%s2 + $0x8] sm:$0xff]
      %v184 = vld [vmem:[%s2 + $0x10] sm:$0xff]
      %v185 = vld [vmem:[%s2 + $0x18] sm:$0xff]
      %v186 = vld [vmem:[%s2 + $0x20] sm:$0xff]
      %v187 = vld [vmem:[%s2 + $0x28] sm:$0xff]
      %v188 = vld [vmem:[%s2 + $0x30] sm:$0xff]
      %v189 = vld [vmem:[%s2 + $0x38] sm:$0xff]
      %191 = vset.pattern.permute.xlu0 0
      %192 = vperm.xlu0 %191, %v182
      %v193 = vpop.permute.xlu0 %192
      %196 = vset.pattern.permute.xlu0 0
      %197 = vperm.xlu0 %196, %v183
      %v198 = vpop.permute.xlu0 %197
      %201 = vset.pattern.permute.xlu0 0
      %202 = vperm.xlu0 %201, %v184
      %v203 = vpop.permute.xlu0 %202
      %206 = vset.pattern.permute.xlu0 0
      %207 = vperm.xlu0 %206, %v185
      %v208 = vpop.permute.xlu0 %207
      %211 = vset.pattern.permute.xlu0 0
      %212 = vperm.xlu0 %211, %v186
      %v213 = vpop.permute.xlu0 %212
      %216 = vset.pattern.permute.xlu0 0
      %217 = vperm.xlu0 %216, %v187
      %v218 = vpop.permute.xlu0 %217
      %221 = vset.pattern.permute.xlu0 0
      %222 = vperm.xlu0 %221, %v188
      %v223 = vpop.permute.xlu0 %222
      %226 = vset.pattern.permute.xlu0 0
      %227 = vperm.xlu0 %226, %v189
      %v228 = vpop.permute.xlu0 %227
      %v238 = vunpack.c.l.b16 %v172
      %v239 = vunpack.c.l.b16 %v173
      %v240 = vunpack.c.l.b16 %v174
      %v241 = vunpack.c.l.b16 %v175
      %v242 = vunpack.c.l.b16 %v176
      %v243 = vunpack.c.l.b16 %v177
      %v244 = vunpack.c.l.b16 %v178
      %v245 = vunpack.c.l.b16 %v179
      %v246 = vpack.c.b16 %v239, %v238
      %v247 = vpack.c.b16 %v241, %v240
      %v248 = vpack.c.b16 %v243, %v242
      %v249 = vpack.c.b16 %v245, %v244
      %v252 = vunpack.c.l.b16 %v180
      %v253 = vunpack.c.l.b16 %v181
      %v254 = vpack.c.b16 %v253, %v252
      %vm256 = vcmask 130048
      %v258 = vsel %vm256, %v246, 0
      %v261 = vsel %vm256, %v247, 0
      %v264 = vsel %vm256, %v248, 0
      %v267 = vsel %vm256, %v249, 0
      %269 = vmatpush.bf16.msra.mxu0 0
      %270 = vmatpush.bf16.msra.mxu0 0
      %271 = vmatpush.bf16.msra.mxu0 0
      %272 = vmatpush.bf16.msra.mxu0 0
      %273 = vmatpush.bf16.msra.mxu0 0
      %274 = vmatpush.bf16.msra.mxu0 0
      %275 = vmatpush.bf16.msra.mxu0 0
      %276 = vmatpush.bf16.msra.mxu0 %v254
      %277 = vmatmul.bf16.gmra.mxu0 %v258
      %v278 = vpop.f32.mrf.mxu0
      %v279 = vadd.f32 %v193, %v278
      %v280 = vpop.f32.mrf.mxu0
      %v281 = vadd.f32 %v198, %v280
      %282 = vmatmul.bf16.gmra.mxu0 %v261
      %v283 = vpop.f32.mrf.mxu0
      %v284 = vadd.f32 %v203, %v283
      %v285 = vpop.f32.mrf.mxu0
      %v286 = vadd.f32 %v208, %v285
      %287 = vmatmul.bf16.gmra.mxu0 %v264
      %v288 = vpop.f32.mrf.mxu0
      %v289 = vadd.f32 %v213, %v288
      %v290 = vpop.f32.mrf.mxu0
      %v291 = vadd.f32 %v218, %v290
      %292 = vmatmul.bf16.gmra.mxu0 %v267
      %v293 = vpop.f32.mrf.mxu0
      %v294 = vadd.f32 %v223, %v293
      %v295 = vpop.f32.mrf.mxu0
      %v296 = vadd.f32 %v228, %v295
      %297 = vdwg.mxu0
      %v298 = vmax.f32 %v279, 0.0
      %v299 = vmax.f32 %v281, 0.0
      %v300 = vmax.f32 %v284, 0.0
      %v301 = vmax.f32 %v286, 0.0
      %v302 = vmax.f32 %v289, 0.0
      %v303 = vmax.f32 %v291, 0.0
      %v304 = vmax.f32 %v294, 0.0
      %v305 = vmax.f32 %v296, 0.0
      %v306 = vpack.c.bf16 %v298, %v298
      %v307 = vpack.c.bf16 %v299, %v299
      %v308 = vpack.c.bf16 %v300, %v300
      %v309 = vpack.c.bf16 %v301, %v301
      %v310 = vpack.c.bf16 %v302, %v302
      %v311 = vpack.c.bf16 %v303, %v303
      %v312 = vpack.c.bf16 %v304, %v304
      %v313 = vpack.c.bf16 %v305, %v305
      %vm314 = vcmask 125952
      %315 = vst.msk [vmem:[%s170] sm:$0xf] %vm314, %v306
      %316 = vst.msk [vmem:[%s170 + $0x4] sm:$0xf] %vm314, %v307
      %317 = vst.msk [vmem:[%s170 + $0x8] sm:$0xf] %vm314, %v308
      %318 = vst.msk [vmem:[%s170 + $0xc] sm:$0xf] %vm314, %v309
      %319 = vst.msk [vmem:[%s170 + $0x10] sm:$0xf] %vm314, %v310
      %320 = vst.msk [vmem:[%s170 + $0x14] sm:$0xf] %vm314, %v311
      %321 = vst.msk [vmem:[%s170 + $0x18] sm:$0xf] %vm314, %v312
      %322 = vst.msk [vmem:[%s170 + $0x1c] sm:$0xf] %vm314, %v313
      %p323 = scmp.lt.s32.totalorder %s14, 7
      %s324 = scalar_select %p323, %s14, 7
      %s325 = smul.addr %s324, 8
      %s326 = smul.addr %s325, 4
      %s327 = scalar_lea.vmem %s3, %s326
      // Predicated region
      $region33: #{_lambda_.32} parent=31 // pred_check
        %p328 = pneg %p100
      $region34: #{_lambda_.32} parent=31 // pred_check_branch
        %330 = sbr.rel (%p328) target = $region36
      $region35: #{_lambda_.32} parent=31 // pred_region
        _
      $region36: #{_lambda_.32} parent=31 // pred_fallthru
        _
    $region32: #{_lambda_.32} parent=5 // pred_fallthru
      _
    %p331 = scmp.le.s32.totalorder 2, %s9
    // Predicated region
    $region37: #{_lambda_.32} parent=5 // pred_check
      %p332 = pneg %p331
    $region38: #{_lambda_.32} parent=5 // pred_check_branch
      %334 = sbr.rel (%p332) target = $region40
    $region39: #{_lambda_.32} parent=5 // pred_region
      %s335 = ssub.s32 %s9, 2
      // Predicated region
      $region41: #{_lambda_.32} parent=39 // pred_check
        %p336 = pneg %p106
      $region42: #{_lambda_.32} parent=39 // pred_check_branch
        %338 = sbr.rel (%p336) target = $region44
      $region43: #{_lambda_.32} parent=39 // pred_region
        %p339 = scmp.lt.s32.totalorder %s15, 7
        %s340 = scalar_select %p339, %s15, 7
        %s341 = smul.addr %s340, 8
        %s342 = smul.addr %s341, 4
        %s343 = scalar_lea.vmem %s3, %s342
      $region44: #{_lambda_.32} parent=39 // pred_fallthru
        _
    $region40: #{_lambda_.32} parent=5 // pred_fallthru
      _
  $region6: #{_lambda_.32} parent=0 // loop_footer
    %s13 = sadd.s32 1, %s9
  $region7: #{_lambda_.32} parent=0 // loop_footer_branch
    %8 = sbr.rel target = $region3
  $region8: #{_lambda_.32} parent=0 // loop_exit
    _

// kernel: _lambda_.35
$region0: #{_lambda_.35}
  #allocation0 [shape = 'u32[]', space=smem, size = 0x4, offset = 0x4, fixed_abs, tag = 'smem constant byte address 0x4 - core index']
  #allocation1 [shape = 'u32[72,128]{1,0:T(1,128)}', space=vmem, size = 0x9000, scoped, tag = 'internal scratch']
  #allocation2 [shape = 'f32[1,1]{1,0:T(1,128)S(1)}', space=vmem, size = 0x200, scoped, tag = 'scoped memory for _lambda_.35']
  %s0 = inlined_call_operand.vmem [shape: bf16[16,8,64], index: 0, kind: input, shape index: {}]
  %s1 = inlined_call_operand.vmem [shape: bf16[1,8], index: 1, kind: input, shape index: {}]
  %s2 = inlined_call_operand.<no memory space> [shape: f32[1,1], index: 2, kind: input, shape index: {}]
  %s3 = inlined_call_operand.vmem [shape: f32[16,1,64], index: 3, kind: output, shape index: {}]
  %s4 = sld [smem:[#allocation0]]
  $region45: #{_lambda_.35} parent=0
    _
  %s6 = ssub.s32 1, %s4
  %s7 = scalar_select 0, %s6, %s4
  %v8 = vstv %s2
  %9 = vst [vmem:[#allocation2] sm:$0x1] %v8
  loop: start=0, step=1, limit=18
  $region2: #{_lambda_.35} parent=0 // loop_pre_header
    _
  $region3: #{_lambda_.35} parent=0 // loop_header
    %s11 = sphi 0, %s15
    %p12 = scmp.ge.s32.totalorder %s11, 18
    %s21 = sphi 0, %s23
    %s24 = sphi 0, %s21
    %s25 = sphi 0, %s24
    %s41 = sphi 0, %s25
    %s45 = sphi 0, %s45
    %s47 = sphi 0, %s45
    %s48 = sphi 0, %s47
    %s62 = sphi 0, %s48
    %s66 = sphi 0, %s66
    %s68 = sphi 0, %s66
    %s69 = sphi 0, %s68
    %s83 = sphi 0, %s69
    %s89 = sphi 0, %s91
    %s92 = sphi 0, %s89
    %s93 = sphi 0, %s92
    %s109 = sphi 0, %s93
  $region4: #{_lambda_.35} parent=0 // loop_header_branch
    %14 = sbr.rel (%p12) target = $region8
  $region5: #{_lambda_.35} parent=0 // loop_body
    %s16 = ssub.s32 %s11, 1
    %s17 = ssub.s32 %s11, 2
    %s18 = sadd.s32 %s11, 1
    %s19 = ssub.s32 %s11, %s18
    %p20 = scmp.eq.s32.totalorder %s19, 0
    %s22 = sadd.s32 %s21, 1
    %s23 = scalar_select %p20, %s21, %s22
    %p26 = pneg %p20
    %p27 = scmp.eq.s32.totalorder %s11, 15
    %p28 = por %p26, %p27
    %p29 = scmp.ne.s32.totalorder %s21, %s24
    %p30 = scmp.eq.s32.totalorder %s11, 0
    %p31 = por %p29, %p30
    %p32 = scmp.ne.s32.totalorder %s21, %s24
    %p33 = scmp.eq.s32.totalorder %s16, 15
    %p34 = por %p32, %p33
    %p35 = scmp.ne.s32.totalorder %s24, %s25
    %p36 = scmp.eq.s32.totalorder %s16, 0
    %p37 = por %p35, %p36
    %p38 = scmp.ne.s32.totalorder %s24, %s25
    %p39 = scmp.eq.s32.totalorder %s17, 15
    %p40 = por %p38, %p39
    %p42 = scmp.ne.s32.totalorder %s25, %s41
    %p43 = scmp.eq.s32.totalorder %s17, 0
    %p44 = por %p42, %p43
    %s46 = sadd.s32 %s45, 1
    %p49 = scmp.eq.s32.totalorder %s11, 15
    %p50 = scmp.ne.s32.totalorder %s45, %s47
    %p51 = scmp.eq.s32.totalorder %s11, 0
    %p52 = por %p50, %p51
    %p53 = scmp.ne.s32.totalorder %s45, %s47
    %p54 = scmp.eq.s32.totalorder %s16, 15
    %p55 = por %p53, %p54
    %p56 = scmp.ne.s32.totalorder %s47, %s48
    %p57 = scmp.eq.s32.totalorder %s16, 0
    %p58 = por %p56, %p57
    %p59 = scmp.ne.s32.totalorder %s47, %s48
    %p60 = scmp.eq.s32.totalorder %s17, 15
    %p61 = por %p59, %p60
    %p63 = scmp.ne.s32.totalorder %s48, %s62
    %p64 = scmp.eq.s32.totalorder %s17, 0
    %p65 = por %p63, %p64
    %s67 = sadd.s32 %s66, 1
    %p70 = scmp.eq.s32.totalorder %s11, 15
    %p71 = scmp.ne.s32.totalorder %s66, %s68
    %p72 = scmp.eq.s32.totalorder %s11, 0
    %p73 = por %p71, %p72
    %p74 = scmp.ne.s32.totalorder %s66, %s68
    %p75 = scmp.eq.s32.totalorder %s16, 15
    %p76 = por %p74, %p75
    %p77 = scmp.ne.s32.totalorder %s68, %s69
    %p78 = scmp.eq.s32.totalorder %s16, 0
    %p79 = por %p77, %p78
    %p80 = scmp.ne.s32.totalorder %s68, %s69
    %p81 = scmp.eq.s32.totalorder %s17, 15
    %p82 = por %p80, %p81
    %p84 = scmp.ne.s32.totalorder %s69, %s83
    %p85 = scmp.eq.s32.totalorder %s17, 0
    %p86 = por %p84, %p85
    %s87 = ssub.s32 %s11, %s18
    %p88 = scmp.eq.s32.totalorder %s87, 0
    %s90 = sadd.s32 %s89, 1
    %s91 = scalar_select %p88, %s89, %s90
    %p94 = pneg %p88
    %p95 = scmp.eq.s32.totalorder %s11, 15
    %p96 = por %p94, %p95
    %p97 = scmp.ne.s32.totalorder %s89, %s92
    %p98 = scmp.eq.s32.totalorder %s11, 0
    %p99 = por %p97, %p98
    %p100 = scmp.ne.s32.totalorder %s89, %s92
    %p101 = scmp.eq.s32.totalorder %s16, 15
    %p102 = por %p100, %p101
    %p103 = scmp.ne.s32.totalorder %s92, %s93
    %p104 = scmp.eq.s32.totalorder %s16, 0
    %p105 = por %p103, %p104
    %p106 = scmp.ne.s32.totalorder %s92, %s93
    %p107 = scmp.eq.s32.totalorder %s17, 15
    %p108 = por %p106, %p107
    %p110 = scmp.ne.s32.totalorder %s93, %s109
    %p111 = scmp.eq.s32.totalorder %s17, 0
    %p112 = por %p110, %p111
    %p113 = scmp.le.s32.totalorder 1, %s11
    %p114 = scmp.lt.s32.totalorder %s11, 17
    %p115 = pnand %p113, %p114
    %p116 = pneg %p115
    // Predicated region
    $region9: #{_lambda_.35} parent=5 // pred_check
      _
    $region10: #{_lambda_.35} parent=5 // pred_check_branch
      %118 = sbr.rel (%p115) target = $region12
    $region11: #{_lambda_.35} parent=5 // pred_region
      %s119 = ssub.s32 %s11, 1
      // Predicated region
      $region13: #{_lambda_.35} parent=11 // pred_check
        %p120 = pneg %p58
      $region14: #{_lambda_.35} parent=11 // pred_check_branch
        %122 = sbr.rel (%p120) target = $region16
      $region15: #{_lambda_.35} parent=11 // pred_region
        _
      $region16: #{_lambda_.35} parent=11 // pred_fallthru
        _
      // Predicated region
      $region17: #{_lambda_.35} parent=11 // pred_check
        %p123 = pneg %p79
      $region18: #{_lambda_.35} parent=11 // pred_check_branch
        %125 = sbr.rel (%p123) target = $region20
      $region19: #{_lambda_.35} parent=11 // pred_region
        _
      $region20: #{_lambda_.35} parent=11 // pred_fallthru
        _
    $region12: #{_lambda_.35} parent=5 // pred_fallthru
      _
    %p126 = scmp.lt.s32.totalorder %s11, 16
    // Predicated region
    $region21: #{_lambda_.35} parent=5 // pred_check
      %p127 = pneg %p126
    $region22: #{_lambda_.35} parent=5 // pred_check_branch
      %129 = sbr.rel (%p127) target = $region24
    $region23: #{_lambda_.35} parent=5 // pred_region
      // Predicated region
      $region25: #{_lambda_.35} parent=23 // pred_check
        %p130 = pneg %p31
      $region26: #{_lambda_.35} parent=23 // pred_check_branch
        %132 = sbr.rel (%p130) target = $region28
      $region27: #{_lambda_.35} parent=23 // pred_region
        %p133 = scmp.lt.s32.totalorder %s11, 15
        %s134 = scalar_select %p133, %s11, 15
        %s135 = smul.addr %s134, 4
        %s136 = scalar_lea.vmem %s0, %s135
      $region28: #{_lambda_.35} parent=23 // pred_fallthru
        _
    $region24: #{_lambda_.35} parent=5 // pred_fallthru
      _
    %p137 = scmp.le.s32.totalorder 1, %s11
    %p138 = scmp.lt.s32.totalorder %s11, 17
    %p139 = pnand %p137, %p138
    %p140 = pneg %p139
    // Predicated region
    $region29: #{_lambda_.35} parent=5 // pred_check
      _
    $region30: #{_lambda_.35} parent=5 // pred_check_branch
      %142 = sbr.rel (%p139) target = $region32
    $region31: #{_lambda_.35} parent=5 // pred_region
      %s143 = ssub.s32 %s11, 1
      %p144 = scmp.lt.s32.totalorder %s16, 15
      %s145 = scalar_select %p144, %s16, 15
      %s146 = smul.addr %s145, 4
      %s147 = scalar_lea.vmem %s0, %s146
      %p148 = pneg %p37
      %p149 = pneg %p34
      %p150 = pneg %p58
      %p151 = pneg %p55
      %p152 = pneg %p79
      %p153 = pneg %p76
      %p154 = pneg %p105
      %p155 = pneg %p102
      %p156 = scmp.lt.s32.totalorder %s16, 15
      %s157 = scalar_select %p156, %s16, 15
      %s158 = scalar_lea.vmem %s3, %s157
      %p159 = scmp.lt.s32.totalorder %s16, 15
      %s160 = scalar_select %p159, %s16, 15
      %s161 = smul.addr %s160, 4
      %s162 = scalar_lea.vmem %s0, %s161
      %p163 = scmp.lt.s32.totalorder %s16, 15
      %s164 = scalar_select %p163, %s16, 15
      %s165 = scalar_lea.vmem %s3, %s164
      %v167 = vld [vmem:[%s1] sm:$0x1]
      %v168 = vld [vmem:[%s162] sm:$0xf]
      %v169 = vld [vmem:[#allocation2] sm:$0x1]
      %171 = vset.pattern.permute.xlu0 0
      %172 = vperm.xlu0 %171, %v169
      %v173 = vpop.permute.xlu0 %172
      %v175 = vperm.slane %v173, 0
      %vm176 = vcmask 64512
      %v178 = vsel %vm176, %v167, 0
      %vm180 = vcmask 1043456
      %v182 = vsel %vm180, %v168, 0
      %184 = vmatpush.bf16.msra.mxu0 0
      %185 = vmatpush.bf16.msra.mxu0 0
      %186 = vmatpush.bf16.msra.mxu0 0
      %187 = vmatpush.bf16.msra.mxu0 0
      %188 = vmatpush.bf16.msra.mxu0 0
      %189 = vmatpush.bf16.msra.mxu0 0
      %190 = vmatpush.bf16.msra.mxu0 0
      %191 = vmatpush.bf16.msra.mxu0 %v182
      %192 = vmatmul.bf16.gmra.mxu0 %v178
      %v193 = vpop.f32.mrf.mxu0
      %v194 = vadd.f32 %v175, %v193
      %v195 = vpop.f32.mrf.mxu0
      %196 = vdwg.mxu0
      %v197 = vsub.f32 0.0, %v194
      %v198 = vmul.f32 %v197, 1.442695
      %v199 = vpow.pop %v198
      %v200 = vadd.f32 %v199, 1.0
      %v201 = vrcp.pop %v200
      %v202 = vmax.f32 %v201, 0.0
      %v203 = vmin.f32 %v202, 1.0
      %vm204 = vcmask 516096
      %205 = vst.msk [vmem:[%s165] sm:$0x1] %vm204, %v203
      %p206 = scmp.lt.s32.totalorder %s16, 15
      %s207 = scalar_select %p206, %s16, 15
      %s208 = scalar_lea.vmem %s3, %s207
      // Predicated region
      $region33: #{_lambda_.35} parent=31 // pred_check
        %p209 = pneg %p102
      $region34: #{_lambda_.35} parent=31 // pred_check_branch
        %211 = sbr.rel (%p209) target = $region36
      $region35: #{_lambda_.35} parent=31 // pred_region
        _
      $region36: #{_lambda_.35} parent=31 // pred_fallthru
        _
    $region32: #{_lambda_.35} parent=5 // pred_fallthru
      _
    %p212 = scmp.le.s32.totalorder 2, %s11
    // Predicated region
    $region37: #{_lambda_.35} parent=5 // pred_check
      %p213 = pneg %p212
    $region38: #{_lambda_.35} parent=5 // pred_check_branch
      %215 = sbr.rel (%p213) target = $region40
    $region39: #{_lambda_.35} parent=5 // pred_region
      %s216 = ssub.s32 %s11, 2
      // Predicated region
      $region41: #{_lambda_.35} parent=39 // pred_check
        %p217 = pneg %p108
      $region42: #{_lambda_.35} parent=39 // pred_check_branch
        %219 = sbr.rel (%p217) target = $region44
      $region43: #{_lambda_.35} parent=39 // pred_region
        %p220 = scmp.lt.s32.totalorder %s17, 15
        %s221 = scalar_select %p220, %s17, 15
        %s222 = scalar_lea.vmem %s3, %s221
      $region44: #{_lambda_.35} parent=39 // pred_fallthru
        _
    $region40: #{_lambda_.35} parent=5 // pred_fallthru
      _
  $region6: #{_lambda_.35} parent=0 // loop_footer
    %s15 = sadd.s32 1, %s11
  $region7: #{_lambda_.35} parent=0 // loop_footer_branch
    %10 = sbr.rel target = $region3
  $region8: #{_lambda_.35} parent=0 // loop_exit
    _

</llo_original>
